<compile_context>
chip_gen: v7x
topology: tpu7x:2x2x1
jax: 0.10.0
libtpu: 0.0.40
codegen_flags: <defaults>
</compile_context>

<pallas_src>
import functools

import jax
import jax.numpy as jnp
from jax.experimental import pallas as pl
from jax.experimental.pallas import tpu as pltpu

EPS = 1e-5                        # default eps of F.layer_norm / nn.LayerNorm
VMEM_LIMIT = 48 * 1024 * 1024     # > v5e(16MiB)/v6e(32MiB) default scoped, < v7x 64MiB physical


def _cparams(*sem):
    return pltpu.CompilerParams(dimension_semantics=sem,
                                vmem_limit_bytes=VMEM_LIMIT)


def _pick_tile(n, cap):
    """Largest tile <= cap that divides n and is a multiple of 8 (or n itself)."""
    if n <= cap:
        return n
    t = cap - cap % 8
    while t >= 8:
        if n % t == 0:
            return t
        t -= 8
    return n


def _row_layernorm(v):
    # F.layer_norm over the spatial axis S of a (C, S) tile, no affine.
    # E[x^2]-mu^2 form: the two lane reductions are independent XLU pushes.
    inv_n = 1.0 / v.shape[-1]
    mu = jnp.sum(v, axis=-1, keepdims=True) * inv_n
    ex2 = jnp.sum(v * v, axis=-1, keepdims=True) * inv_n
    var = jnp.maximum(ex2 - mu * mu, 0.0)
    return (v - mu) * jax.lax.rsqrt(var + EPS)


# ----------------- Conv3d (valid, stride 1) via in-VMEM im2col -----------------

def _conv_kernel(x_ref, w_ref, b_ref, o_ref, *, offsets, S, pad_w):
    # x_ref: (1, 1, Cin, S)       input feature map (f32 or bf16)
    # w_ref: (1, TCo, k^3*Cin)    bf16, columns tap-major (dz,dy,dx) then cin
    # b_ref: (1, TCo, 1)          f32
    # o_ref: (1, 1, TCo, S)       bf16; only 'valid' positions (d<Do,h<Ho,w<Wo)
    #                             are meaningful; the rest is filtered by the
    #                             nearest-resample gather downstream.
    xv = x_ref[0, 0].astype(jnp.bfloat16)              # cast once at entry
    cin = xv.shape[0]
    if pad_w:                                          # zero halo lives in VMEM only
        xv = jnp.concatenate(
            [xv, jnp.zeros((cin, pad_w), jnp.bfloat16)], axis=1)
    # k^3 shifted slabs -> one deep-contraction MXU matmul, f32 accumulation.
    patch = jnp.concatenate([xv[:, o:o + S] for o in offsets], axis=0)
    acc = jnp.dot(w_ref[0], patch, preferred_element_type=jnp.float32)
    o_ref[0, 0] = (acc + b_ref[0]).astype(o_ref.dtype)


def conv3d_groups(x, w, b, spatial, k):
    """x:(G,B,Cin,S) float, w:(G,Cout,k^3*Cin) bf16, b:(G,Cout,1) f32
    -> (G,B,Cout,S) bf16 valid-position conv output (lane-dense flat layout)."""
    D, H, W = spatial
    S = D * H * W
    G, B, Cin, _ = x.shape
    _, Cout, KK = w.shape
    offsets = tuple(dz * H * W + dy * W + dx
                    for dz in range(k) for dy in range(k) for dx in range(k))
    max_off = offsets[-1]
    pad_w = ((max_off + 127) // 128) * 128 if max_off else 0
    tco = _pick_tile(Cout, 256)
    kern = functools.partial(_conv_kernel, offsets=offsets, S=S, pad_w=pad_w)
    return pl.pallas_call(
        kern,
        out_shape=jax.ShapeDtypeStruct((G, B, Cout, S), jnp.bfloat16),
        grid=(G, B, Cout // tco),
        in_specs=[pl.BlockSpec((1, 1, Cin, S), lambda g, bi, co: (g, bi, 0, 0)),
                  pl.BlockSpec((1, tco, KK), lambda g, bi, co: (g, co, 0)),
                  pl.BlockSpec((1, tco, 1), lambda g, bi, co: (g, co, 0))],
        out_specs=pl.BlockSpec((1, 1, tco, S), lambda g, bi, co: (g, bi, co, 0)),
        compiler_params=_cparams("parallel", "parallel", "parallel"),
    )(x, w, b)


def nearest_resample_idx(spatial, k):
    # F.interpolate(mode='nearest') back to (D,H,W): src = floor(i * in / out)
    D, H, W = spatial
    Do, Ho, Wo = D - k + 1, H - k + 1, W - k + 1
    sd = (jnp.arange(D) * Do) // D
    sh = (jnp.arange(H) * Ho) // H
    sw = (jnp.arange(W) * Wo) // W
    idx = sd[:, None, None] * (H * W) + sh[None, :, None] * W + sw[None, None, :]
    return idx.reshape(-1)                               # (S,) indices into flat S


def conv_deconv(x, w, b, spatial, k, idx):
    out = conv3d_groups(x, w, b, spatial, k)             # (G,B,Cout,S) bf16
    # TODO(synk): fuse this static-index lane gather into the conv epilogue
    # once an in-kernel lane gather is reliable; kept in XLA glue for safety
    # (bf16 storage already halves this round trip's HBM traffic).
    return jnp.take(out, idx, axis=-1)


# ----------------- fused gates kernel (per batch sample, C-tiled) -----------------

def _gates_kernel(x7_ref, h4_ref, m3_ref, m_ref, g_ref):
    # x7:(1,7,TC,S) [xr,xi,xg,xi',xg',xf',xo]; h4:(1,4,TC,S) [hr,hi,hg,ho]
    # m3:(1,3,TC,S) [mi',mg',mf']; m:(1,TC,S) previous m state
    # out g:(1,4,TC,S) stacked [r, i*g, m_new, xo+ho]  (bf16 storage, f32 math)
    f32 = jnp.float32
    xg = lambda j: x7_ref[0, j].astype(f32)
    hg = lambda j: h4_ref[0, j].astype(f32)
    mg = lambda j: m3_ref[0, j].astype(f32)
    dt = g_ref.dtype

    r = jax.nn.sigmoid(_row_layernorm(xg(0) + hg(0)))
    i = jax.nn.sigmoid(_row_layernorm(xg(1) + hg(1)))
    g = jnp.tanh(_row_layernorm(xg(2) + hg(2)))
    g_ref[0, 0] = r.astype(dt)
    g_ref[0, 1] = (i * g).astype(dt)

    ip = jax.nn.sigmoid(_row_layernorm(xg(3) + mg(0)))
    gp = jnp.tanh(_row_layernorm(xg(4) + mg(1)))
    fp = jax.nn.sigmoid(_row_layernorm(xg(5) + mg(2)))
    g_ref[0, 2] = (ip * gp + fp * m_ref[0].astype(f32)).astype(dt)
    g_ref[0, 3] = (xg(6) + hg(3)).astype(dt)


def gates_stage(xc7, hc4, mc3, m):
    B, _, C, S = xc7.shape
    tc = _pick_tile(C, 256)
    return pl.pallas_call(
        _gates_kernel,
        out_shape=jax.ShapeDtypeStruct((B, 4, C, S), jnp.bfloat16),
        grid=(B, C // tc),
        in_specs=[pl.BlockSpec((1, 7, tc, S), lambda b, c: (b, 0, c, 0)),
                  pl.BlockSpec((1, 4, tc, S), lambda b, c: (b, 0, c, 0)),
                  pl.BlockSpec((1, 3, tc, S), lambda b, c: (b, 0, c, 0)),
                  pl.BlockSpec((1, tc, S), lambda b, c: (b, c, 0))],
        out_specs=pl.BlockSpec((1, 4, tc, S), lambda b, c: (b, 0, c, 0)),
        compiler_params=_cparams("parallel", "parallel"),
    )(xc7, hc4, mc3, m)


# ----------------- c update (batch-tiled; LayerNorm over (C,D,H,W) is per-sample) -----------------

def _c_update_kernel(ig_ref, ch_ref, att_ref, gamma_ref, beta_ref, c_ref,
                     *, newest, inv_n):
    ig = ig_ref[0, 0].astype(jnp.float32)               # i*g, (C, S)
    ch = ch_ref[...][:, 0]                              # (tau, C, S) f32
    att = att_ref[0]                                    # (tau, 1, 1)
    recall = jnp.sum(att * ch, axis=0)                  # (C, S)
    t = ch[newest] + recall                             # c_history[-1] + recall
    mu = jnp.sum(t) * inv_n                             # nn.LayerNorm over (C,D,H,W)
    var = jnp.maximum(jnp.sum(t * t) * inv_n - mu * mu, 0.0)
    norm = (t - mu) * jax.lax.rsqrt(var + EPS)
    c_ref[0] = ig + gamma_ref[...] * norm + beta_ref[...]


def c_update(gates, c_history, att, gamma, beta, tau, newest):
    B, _, C, S = gates.shape
    kern = functools.partial(_c_update_kernel, newest=newest, inv_n=1.0 / (C * S))
    return pl.pallas_call(
        kern,
        out_shape=jax.ShapeDtypeStruct((B, C, S), jnp.float32),
        grid=(B,),
        in_specs=[pl.BlockSpec((1, 1, C, S), lambda b: (b, 1, 0, 0)),     # i*g row
                  pl.BlockSpec((tau, 1, C, S), lambda b: (0, b, 0, 0)),
                  pl.BlockSpec((1, tau, 1, 1), lambda b: (b, 0, 0, 0)),
                  pl.BlockSpec((C, S), lambda b: (0, 0)),
                  pl.BlockSpec((C, S), lambda b: (0, 0))],
        out_specs=pl.BlockSpec((1, C, S), lambda b: (b, 0, 0)),
        compiler_params=_cparams("parallel"),
    )(gates, c_history, att, gamma, beta)


# ----------------- out gate + fused weight_111 (1x1x1 conv, split halves) -----------------

def _out_gate_kernel(g2_ref, como_ref, c_ref, w_ref, b_ref, h_ref):
    # g2:(1,2,C,S) rows [m_new, xo+ho] of the gates array; como:(2,1,C,S) [co, mo]
    # c:(1,C,S) f32; w:(2,C,C) bf16 halves of weight_111; b:(C,1) f32
    f32 = jnp.float32
    m_new = g2_ref[0, 0]                                 # bf16 — direct MXU operand
    xho = g2_ref[0, 1].astype(f32)
    co = como_ref[0, 0].astype(f32)
    mo = como_ref[1, 0].astype(f32)
    o = jax.nn.sigmoid(_row_layernorm(xho + co + mo))
    # weight_111: two (C,C)@(C,S) matmuls instead of one concat'd (C,2C)@(2C,S)
    w111 = (jnp.dot(w_ref[0], c_ref[0].astype(jnp.bfloat16),
                    preferred_element_type=f32)
            + jnp.dot(w_ref[1], m_new, preferred_element_type=f32)
            + b_ref[...])
    h_ref[0] = o * jnp.tanh(w111)


def out_gate(gates, como, c, w111s, b111):
    B, _, C, S = gates.shape
    return pl.pallas_call(
        _out_gate_kernel,
        out_shape=jax.ShapeDtypeStruct((B, C, S), jnp.float32),
        grid=(B,),
        in_specs=[pl.BlockSpec((1, 2, C, S), lambda b: (b, 1, 0, 0)),   # rows 2..3
                  pl.BlockSpec((2, 1, C, S), lambda b: (0, b, 0, 0)),   # [co, mo]
                  pl.BlockSpec((1, C, S), lambda b: (b, 0, 0)),         # c
                  pl.BlockSpec((2, C, C), lambda b: (0, 0, 0)),
                  pl.BlockSpec((C, 1), lambda b: (0, 0))],
        out_specs=pl.BlockSpec((1, C, S), lambda b: (b, 0, 0)),
        compiler_params=_cparams("parallel"),
    )(gates, como, c, w111s, b111)


# ----------------- params / cell / stack (JAX glue) -----------------

def init_cell_params(key, in_channels, hidden, k, spatial):
    D, H, W = spatial
    S = D * H * W
    C = hidden
    ks = jax.random.split(key, 8)

    def conv_w(kk_, cout, cin):
        w = jax.random.normal(kk_, (cout, cin, k, k, k), jnp.float32) * 0.1
        # -> (cout, k^3*cin): columns tap-major (dz,dy,dx) then cin, matching
        # the in-kernel patch row order.
        return jnp.transpose(w, (0, 2, 3, 4, 1)).reshape(
            cout, k * k * k * cin).astype(jnp.bfloat16)

    w111 = jax.random.normal(ks[6], (C, 2 * C), jnp.float32) * 0.1
    return dict(
        Wx=conv_w(ks[0], 7 * C, in_channels)[None],     # [xr,xi,xg,xi',xg',xf',xo]
        bx=(jax.random.normal(ks[1], (7 * C, 1), jnp.float32) * 0.1)[None],
        Wh=conv_w(ks[2], 4 * C, C)[None],               # [hr,hi,hg,ho]  (bias=False)
        bh0=jnp.zeros((1, 4 * C, 1), jnp.float32),
        Wm=conv_w(ks[3], 3 * C, C)[None],               # [mi',mg',mf']  (bias=False)
        bm0=jnp.zeros((1, 3 * C, 1), jnp.float32),
        Wcomo=jnp.stack([conv_w(ks[4], C, C), conv_w(ks[5], C, C)], axis=0),
        bcomo=jnp.zeros((2, C, 1), jnp.float32),
        W111s=jnp.stack([w111[:, :C], w111[:, C:]], axis=0).astype(jnp.bfloat16),
        b111=jax.random.normal(ks[7], (C, 1), jnp.float32) * 0.1,
        ln_gamma=jnp.ones((C, S), jnp.float32),         # nn.LayerNorm([C,D,H,W]) defaults
        ln_beta=jnp.zeros((C, S), jnp.float32),
    )


def cell_forward(p, x_flat, c_history, m, h, spatial, k, idx, layer_idx, tau):
    S = spatial[0] * spatial[1] * spatial[2]
    B, C, _ = h.shape

    xc = conv_deconv(x_flat, p['Wx'], p['bx'], spatial, k, idx)      # (1,B,7C,S) bf16
    hc = conv_deconv(h[None], p['Wh'], p['bh0'], spatial, k, idx)    # (1,B,4C,S) bf16
    mc = conv_deconv(m[None], p['Wm'], p['bm0'], spatial, k, idx)    # (1,B,3C,S) bf16

    gates = gates_stage(xc[0].reshape(B, 7, C, S),
                        hc[0].reshape(B, 4, C, S),
                        mc[0].reshape(B, 3, C, S), m)  # (B,4,C,S) bf16: [r, i*g, m_new, xo+ho]

    # self_attention_fast: scores scaled by 1/sqrt(D*H*W), softmax over dim=0
    # (the BATCH axis — exactly the reference's quirk); cross-sample, so it
    # stays in XLA glue.
    r = gates[:, 0].astype(jnp.float32)
    scores = jnp.einsum('bcs,lbcs->bl', r, c_history) * (1.0 / (S ** 0.5))
    att = jax.nn.softmax(scores, axis=0).reshape(B, tau, 1, 1)

    newest = (layer_idx - 1) % tau           # ring-buffer slot of c_history[-1]
    c = c_update(gates, c_history, att, p['ln_gamma'], p['ln_beta'], tau, newest)
    m_new = gates[:, 2]                                              # (B,C,S) bf16

    # weight_co(c) / weight_mo(m_new) batched into one conv via the group axis
    cm = jnp.stack([c.astype(jnp.bfloat16), m_new], axis=0)          # (2,B,C,S) bf16
    como = conv_deconv(cm, p['Wcomo'], p['bcomo'], spatial, k, idx)  # (2,B,C,S) bf16

    h_new = out_gate(gates, como, c, p['W111s'], p['b111'])          # (B,C,S) f32

    # in-place ring-buffer update at a static slot (layer loop is unrolled)
    c_history = c_history.at[layer_idx % tau].set(c)
    return c_history, m_new, h_new


def e3dlstm_forward(params_list, x, hidden, k, tau):
    B, Cin, D, H, W = x.shape
    C = hidden
    S = D * H * W
    spatial = (D, H, W)
    idx = nearest_resample_idx(spatial, k)
    x_flat = x.reshape(B, Cin, S)[None]       # (1,B,Cin,S); shared by every layer

    c_history = jnp.zeros((tau, B, C, S), jnp.float32)
    m = jnp.zeros((B, C, S), jnp.bfloat16)
    h = jnp.zeros((B, C, S), jnp.float32)
    h_states = []
    for li, p in enumerate(params_list):      # x stays the raw input, as in the reference
        c_history, m, h = cell_forward(p, x_flat, c_history, m, h,
                                       spatial, k, idx, li, tau)
        h_states.append(h)
    out = jnp.concatenate(h_states, axis=1)   # (B, L*C, S)
    return out.reshape(B, len(params_list) * C, D, H, W)


if __name__ == "__main__":
    B = 2
    in_channels = 1              # input_shape[0] (the "T" of the BTDDD input)
    D = H = W = 8
    hidden = 8
    num_layers = 2
    kernel_size = 3
    tau = 2

    root = jax.random.PRNGKey(0)
    kx, kp = jax.random.split(root)
    x = jax.random.normal(kx, (B, in_channels, D, H, W), jnp.float32)

    layer_keys = jax.random.split(kp, num_layers)
    params_list = [init_cell_params(kk, in_channels, hidden, kernel_size,
                                    (D, H, W)) for kk in layer_keys]

    fwd = jax.jit(functools.partial(e3dlstm_forward, hidden=hidden,
                                    k=kernel_size, tau=tau))
    out = jax.block_until_ready(fwd(params_list, x))
    assert out.shape == (B, num_layers * hidden, D, H, W), out.shape
    assert bool(jnp.all(jnp.isfinite(out)))
    print("KERNEL_OK")
</pallas_src>

<mosaic_0001>
module attributes {stable_mosaic.version = 11 : i64} {
  func.func @_conv_kernel(%arg0: i32, %arg1: i32, %arg2: i32, %arg3: memref<1x1x1x512xf32, #tpu.memory_space<vmem>>, %arg4: memref<1x56x27xbf16, #tpu.memory_space<vmem>>, %arg5: memref<1x56x1xf32, #tpu.memory_space<vmem>>, %arg6: memref<1x1x56x512xbf16, #tpu.memory_space<vmem>>) attributes {dimension_semantics = [#tpu.dimension_semantics<parallel>, #tpu.dimension_semantics<parallel>, #tpu.dimension_semantics<parallel>], iteration_bounds = array<i64: 1, 2, 1>, scalar_prefetch = 0 : i64, scratch_operands = 0 : i64, tpu.core_type = #tpu.core_type<tc>, window_params = [{transform_indices = @transform_0, window_bounds = array<i64: 1, 1, 1, 512>}, {transform_indices = @transform_1, window_bounds = array<i64: 1, 56, 27>}, {transform_indices = @transform_2, window_bounds = array<i64: 1, 56, 1>}, {transform_indices = @transform_3, window_bounds = array<i64: 1, 1, 56, 512>}]} {
    %c0 = arith.constant 0 : index
    %c0_0 = arith.constant 0 : index
    %c0_1 = arith.constant 0 : index
    %c0_2 = arith.constant 0 : index
    %0 = vector.load %arg3[%c0, %c0_0, %c0_1, %c0_2] : memref<1x1x1x512xf32, #tpu.memory_space<vmem>>, vector<1x1x1x512xf32>
    %1 = vector.shape_cast %0 : vector<1x1x1x512xf32> to vector<1x512xf32>
    %2 = arith.truncf %1 : vector<1x512xf32> to vector<1x512xbf16>
    %cst = arith.constant 0.000000e+00 : bf16
    %3 = vector.broadcast %cst : bf16 to vector<1x256xbf16>
    %4 = tpu.concatenate %2, %3 in 1 : vector<1x512xbf16>, vector<1x256xbf16> -> vector<1x768xbf16>
    %5 = vector.extract_strided_slice %4 {offsets = [0, 0], sizes = [1, 512], strides = [1, 1]} : vector<1x768xbf16> to vector<1x512xbf16>
    %6 = vector.extract_strided_slice %4 {offsets = [0, 1], sizes = [1, 512], strides = [1, 1]} : vector<1x768xbf16> to vector<1x512xbf16>
    %7 = vector.extract_strided_slice %4 {offsets = [0, 2], sizes = [1, 512], strides = [1, 1]} : vector<1x768xbf16> to vector<1x512xbf16>
    %8 = vector.extract_strided_slice %4 {offsets = [0, 8], sizes = [1, 512], strides = [1, 1]} : vector<1x768xbf16> to vector<1x512xbf16>
    %9 = vector.extract_strided_slice %4 {offsets = [0, 9], sizes = [1, 512], strides = [1, 1]} : vector<1x768xbf16> to vector<1x512xbf16>
    %10 = vector.extract_strided_slice %4 {offsets = [0, 10], sizes = [1, 512], strides = [1, 1]} : vector<1x768xbf16> to vector<1x512xbf16>
    %11 = vector.extract_strided_slice %4 {offsets = [0, 16], sizes = [1, 512], strides = [1, 1]} : vector<1x768xbf16> to vector<1x512xbf16>
    %12 = vector.extract_strided_slice %4 {offsets = [0, 17], sizes = [1, 512], strides = [1, 1]} : vector<1x768xbf16> to vector<1x512xbf16>
    %13 = vector.extract_strided_slice %4 {offsets = [0, 18], sizes = [1, 512], strides = [1, 1]} : vector<1x768xbf16> to vector<1x512xbf16>
    %14 = vector.extract_strided_slice %4 {offsets = [0, 64], sizes = [1, 512], strides = [1, 1]} : vector<1x768xbf16> to vector<1x512xbf16>
    %15 = vector.extract_strided_slice %4 {offsets = [0, 65], sizes = [1, 512], strides = [1, 1]} : vector<1x768xbf16> to vector<1x512xbf16>
    %16 = vector.extract_strided_slice %4 {offsets = [0, 66], sizes = [1, 512], strides = [1, 1]} : vector<1x768xbf16> to vector<1x512xbf16>
    %17 = vector.extract_strided_slice %4 {offsets = [0, 72], sizes = [1, 512], strides = [1, 1]} : vector<1x768xbf16> to vector<1x512xbf16>
    %18 = vector.extract_strided_slice %4 {offsets = [0, 73], sizes = [1, 512], strides = [1, 1]} : vector<1x768xbf16> to vector<1x512xbf16>
    %19 = vector.extract_strided_slice %4 {offsets = [0, 74], sizes = [1, 512], strides = [1, 1]} : vector<1x768xbf16> to vector<1x512xbf16>
    %20 = vector.extract_strided_slice %4 {offsets = [0, 80], sizes = [1, 512], strides = [1, 1]} : vector<1x768xbf16> to vector<1x512xbf16>
    %21 = vector.extract_strided_slice %4 {offsets = [0, 81], sizes = [1, 512], strides = [1, 1]} : vector<1x768xbf16> to vector<1x512xbf16>
    %22 = vector.extract_strided_slice %4 {offsets = [0, 82], sizes = [1, 512], strides = [1, 1]} : vector<1x768xbf16> to vector<1x512xbf16>
    %23 = vector.extract_strided_slice %4 {offsets = [0, 128], sizes = [1, 512], strides = [1, 1]} : vector<1x768xbf16> to vector<1x512xbf16>
    %24 = vector.extract_strided_slice %4 {offsets = [0, 129], sizes = [1, 512], strides = [1, 1]} : vector<1x768xbf16> to vector<1x512xbf16>
    %25 = vector.extract_strided_slice %4 {offsets = [0, 130], sizes = [1, 512], strides = [1, 1]} : vector<1x768xbf16> to vector<1x512xbf16>
    %26 = vector.extract_strided_slice %4 {offsets = [0, 136], sizes = [1, 512], strides = [1, 1]} : vector<1x768xbf16> to vector<1x512xbf16>
    %27 = vector.extract_strided_slice %4 {offsets = [0, 137], sizes = [1, 512], strides = [1, 1]} : vector<1x768xbf16> to vector<1x512xbf16>
    %28 = vector.extract_strided_slice %4 {offsets = [0, 138], sizes = [1, 512], strides = [1, 1]} : vector<1x768xbf16> to vector<1x512xbf16>
    %29 = vector.extract_strided_slice %4 {offsets = [0, 144], sizes = [1, 512], strides = [1, 1]} : vector<1x768xbf16> to vector<1x512xbf16>
    %30 = vector.extract_strided_slice %4 {offsets = [0, 145], sizes = [1, 512], strides = [1, 1]} : vector<1x768xbf16> to vector<1x512xbf16>
    %31 = vector.extract_strided_slice %4 {offsets = [0, 146], sizes = [1, 512], strides = [1, 1]} : vector<1x768xbf16> to vector<1x512xbf16>
    %32 = tpu.concatenate %5, %6, %7, %8, %9, %10, %11, %12, %13, %14, %15, %16, %17, %18, %19, %20 in 0 : vector<1x512xbf16>, vector<1x512xbf16>, vector<1x512xbf16>, vector<1x512xbf16>, vector<1x512xbf16>, vector<1x512xbf16>, vector<1x512xbf16>, vector<1x512xbf16>, vector<1x512xbf16>, vector<1x512xbf16>, vector<1x512xbf16>, vector<1x512xbf16>, vector<1x512xbf16>, vector<1x512xbf16>, vector<1x512xbf16>, vector<1x512xbf16> -> vector<16x512xbf16>
    %33 = tpu.concatenate %21, %22, %23, %24, %25, %26, %27, %28, %29, %30, %31 in 0 : vector<1x512xbf16>, vector<1x512xbf16>, vector<1x512xbf16>, vector<1x512xbf16>, vector<1x512xbf16>, vector<1x512xbf16>, vector<1x512xbf16>, vector<1x512xbf16>, vector<1x512xbf16>, vector<1x512xbf16>, vector<1x512xbf16> -> vector<11x512xbf16>
    %34 = tpu.concatenate %32, %33 in 0 : vector<16x512xbf16>, vector<11x512xbf16> -> vector<27x512xbf16>
    %c0_3 = arith.constant 0 : index
    %c0_4 = arith.constant 0 : index
    %c0_5 = arith.constant 0 : index
    %35 = vector.load %arg4[%c0_3, %c0_4, %c0_5] : memref<1x56x27xbf16, #tpu.memory_space<vmem>>, vector<1x56x27xbf16>
    %36 = vector.shape_cast %35 : vector<1x56x27xbf16> to vector<56x27xbf16>
    %cst_6 = arith.constant dense<0.000000e+00> : vector<56x512xf32>
    %37 = tpu.matmul %36, %34, %cst_6 {dimension_numbers = #tpu.dot_dimension_numbers<[1], [0], [0], [1], [0, 0, 1, 1], [], []>} : vector<56x27xbf16>, vector<27x512xbf16>, vector<56x512xf32> -> vector<56x512xf32>
    %c0_7 = arith.constant 0 : index
    %c0_8 = arith.constant 0 : index
    %c0_9 = arith.constant 0 : index
    %38 = vector.load %arg5[%c0_7, %c0_8, %c0_9] : memref<1x56x1xf32, #tpu.memory_space<vmem>>, vector<1x56x1xf32>
    %39 = vector.shape_cast %38 : vector<1x56x1xf32> to vector<56x1xf32>
    %40 = vector.broadcast %39 : vector<56x1xf32> to vector<56x512xf32>
    %41 = arith.addf %37, %40 : vector<56x512xf32>
    %42 = arith.truncf %41 : vector<56x512xf32> to vector<56x512xbf16>
    %c0_10 = arith.constant 0 : index
    %c0_11 = arith.constant 0 : index
    %c0_12 = arith.constant 0 : index
    %c0_13 = arith.constant 0 : index
    %43 = vector.load %arg6[%c0_10, %c0_11, %c0_12, %c0_13] : memref<1x1x56x512xbf16, #tpu.memory_space<vmem>>, vector<1x1x56x512xbf16>
    %44 = vector.shape_cast %43 : vector<1x1x56x512xbf16> to vector<56x512xbf16>
    %45 = vector.shape_cast %42 : vector<56x512xbf16> to vector<1x1x56x512xbf16>
    tpu.vector_store %arg6[%c0_10, %c0_11, %c0_12, %c0_13], %45 {strides = array<i32>} : memref<1x1x56x512xbf16, #tpu.memory_space<vmem>>, vector<1x1x56x512xbf16>,
    return
  }
  func.func @transform_0(%arg0: i32, %arg1: i32, %arg2: i32) -> (i32, i32, i32, i32) {
    %c0_i32 = arith.constant 0 : i32
    %c0_i32_0 = arith.constant 0 : i32
    %c0_i32_1 = arith.constant 0 : i32
    return %arg0, %arg1, %c0_i32, %c0_i32_0 : i32, i32, i32, i32
  }
  func.func @transform_1(%arg0: i32, %arg1: i32, %arg2: i32) -> (i32, i32, i32) {
    %c0_i32 = arith.constant 0 : i32
    %c0_i32_0 = arith.constant 0 : i32
    return %arg0, %arg2, %c0_i32 : i32, i32, i32
  }
  func.func @transform_2(%arg0: i32, %arg1: i32, %arg2: i32) -> (i32, i32, i32) {
    %c0_i32 = arith.constant 0 : i32
    %c0_i32_0 = arith.constant 0 : i32
    return %arg0, %arg2, %c0_i32 : i32, i32, i32
  }
  func.func @transform_3(%arg0: i32, %arg1: i32, %arg2: i32) -> (i32, i32, i32, i32) {
    %c0_i32 = arith.constant 0 : i32
    %c0_i32_0 = arith.constant 0 : i32
    return %arg0, %arg1, %arg2, %c0_i32 : i32, i32, i32, i32
  }
}

module attributes {stable_mosaic.version = 11 : i64} {
  func.func @_conv_kernel(%arg0: i32, %arg1: i32, %arg2: i32, %arg3: memref<1x1x8x512xf32, #tpu.memory_space<vmem>>, %arg4: memref<1x32x216xbf16, #tpu.memory_space<vmem>>, %arg5: memref<1x32x1xf32, #tpu.memory_space<vmem>>, %arg6: memref<1x1x32x512xbf16, #tpu.memory_space<vmem>>) attributes {dimension_semantics = [#tpu.dimension_semantics<parallel>, #tpu.dimension_semantics<parallel>, #tpu.dimension_semantics<parallel>], iteration_bounds = array<i64: 1, 2, 1>, scalar_prefetch = 0 : i64, scratch_operands = 0 : i64, tpu.core_type = #tpu.core_type<tc>, window_params = [{transform_indices = @transform_0, window_bounds = array<i64: 1, 1, 8, 512>}, {transform_indices = @transform_1, window_bounds = array<i64: 1, 32, 216>}, {transform_indices = @transform_2, window_bounds = array<i64: 1, 32, 1>}, {transform_indices = @transform_3, window_bounds = array<i64: 1, 1, 32, 512>}]} {
    %c0 = arith.constant 0 : index
    %c0_0 = arith.constant 0 : index
    %c0_1 = arith.constant 0 : index
    %c0_2 = arith.constant 0 : index
    %0 = vector.load %arg3[%c0, %c0_0, %c0_1, %c0_2] : memref<1x1x8x512xf32, #tpu.memory_space<vmem>>, vector<1x1x8x512xf32>
    %1 = vector.shape_cast %0 : vector<1x1x8x512xf32> to vector<8x512xf32>
    %2 = arith.truncf %1 : vector<8x512xf32> to vector<8x512xbf16>
    %cst = arith.constant 0.000000e+00 : bf16
    %3 = vector.broadcast %cst : bf16 to vector<8x256xbf16>
    %4 = tpu.concatenate %2, %3 in 1 : vector<8x512xbf16>, vector<8x256xbf16> -> vector<8x768xbf16>
    %5 = vector.extract_strided_slice %4 {offsets = [0, 0], sizes = [8, 512], strides = [1, 1]} : vector<8x768xbf16> to vector<8x512xbf16>
    %6 = vector.extract_strided_slice %4 {offsets = [0, 1], sizes = [8, 512], strides = [1, 1]} : vector<8x768xbf16> to vector<8x512xbf16>
    %7 = vector.extract_strided_slice %4 {offsets = [0, 2], sizes = [8, 512], strides = [1, 1]} : vector<8x768xbf16> to vector<8x512xbf16>
    %8 = vector.extract_strided_slice %4 {offsets = [0, 8], sizes = [8, 512], strides = [1, 1]} : vector<8x768xbf16> to vector<8x512xbf16>
    %9 = vector.extract_strided_slice %4 {offsets = [0, 9], sizes = [8, 512], strides = [1, 1]} : vector<8x768xbf16> to vector<8x512xbf16>
    %10 = vector.extract_strided_slice %4 {offsets = [0, 10], sizes = [8, 512], strides = [1, 1]} : vector<8x768xbf16> to vector<8x512xbf16>
    %11 = vector.extract_strided_slice %4 {offsets = [0, 16], sizes = [8, 512], strides = [1, 1]} : vector<8x768xbf16> to vector<8x512xbf16>
    %12 = vector.extract_strided_slice %4 {offsets = [0, 17], sizes = [8, 512], strides = [1, 1]} : vector<8x768xbf16> to vector<8x512xbf16>
    %13 = vector.extract_strided_slice %4 {offsets = [0, 18], sizes = [8, 512], strides = [1, 1]} : vector<8x768xbf16> to vector<8x512xbf16>
    %14 = vector.extract_strided_slice %4 {offsets = [0, 64], sizes = [8, 512], strides = [1, 1]} : vector<8x768xbf16> to vector<8x512xbf16>
    %15 = vector.extract_strided_slice %4 {offsets = [0, 65], sizes = [8, 512], strides = [1, 1]} : vector<8x768xbf16> to vector<8x512xbf16>
    %16 = vector.extract_strided_slice %4 {offsets = [0, 66], sizes = [8, 512], strides = [1, 1]} : vector<8x768xbf16> to vector<8x512xbf16>
    %17 = vector.extract_strided_slice %4 {offsets = [0, 72], sizes = [8, 512], strides = [1, 1]} : vector<8x768xbf16> to vector<8x512xbf16>
    %18 = vector.extract_strided_slice %4 {offsets = [0, 73], sizes = [8, 512], strides = [1, 1]} : vector<8x768xbf16> to vector<8x512xbf16>
    %19 = vector.extract_strided_slice %4 {offsets = [0, 74], sizes = [8, 512], strides = [1, 1]} : vector<8x768xbf16> to vector<8x512xbf16>
    %20 = vector.extract_strided_slice %4 {offsets = [0, 80], sizes = [8, 512], strides = [1, 1]} : vector<8x768xbf16> to vector<8x512xbf16>
    %21 = vector.extract_strided_slice %4 {offsets = [0, 81], sizes = [8, 512], strides = [1, 1]} : vector<8x768xbf16> to vector<8x512xbf16>
    %22 = vector.extract_strided_slice %4 {offsets = [0, 82], sizes = [8, 512], strides = [1, 1]} : vector<8x768xbf16> to vector<8x512xbf16>
    %23 = vector.extract_strided_slice %4 {offsets = [0, 128], sizes = [8, 512], strides = [1, 1]} : vector<8x768xbf16> to vector<8x512xbf16>
    %24 = vector.extract_strided_slice %4 {offsets = [0, 129], sizes = [8, 512], strides = [1, 1]} : vector<8x768xbf16> to vector<8x512xbf16>
    %25 = vector.extract_strided_slice %4 {offsets = [0, 130], sizes = [8, 512], strides = [1, 1]} : vector<8x768xbf16> to vector<8x512xbf16>
    %26 = vector.extract_strided_slice %4 {offsets = [0, 136], sizes = [8, 512], strides = [1, 1]} : vector<8x768xbf16> to vector<8x512xbf16>
    %27 = vector.extract_strided_slice %4 {offsets = [0, 137], sizes = [8, 512], strides = [1, 1]} : vector<8x768xbf16> to vector<8x512xbf16>
    %28 = vector.extract_strided_slice %4 {offsets = [0, 138], sizes = [8, 512], strides = [1, 1]} : vector<8x768xbf16> to vector<8x512xbf16>
    %29 = vector.extract_strided_slice %4 {offsets = [0, 144], sizes = [8, 512], strides = [1, 1]} : vector<8x768xbf16> to vector<8x512xbf16>
    %30 = vector.extract_strided_slice %4 {offsets = [0, 145], sizes = [8, 512], strides = [1, 1]} : vector<8x768xbf16> to vector<8x512xbf16>
    %31 = vector.extract_strided_slice %4 {offsets = [0, 146], sizes = [8, 512], strides = [1, 1]} : vector<8x768xbf16> to vector<8x512xbf16>
    %32 = tpu.concatenate %5, %6, %7, %8, %9, %10, %11, %12, %13, %14, %15, %16, %17, %18, %19, %20 in 0 : vector<8x512xbf16>, vector<8x512xbf16>, vector<8x512xbf16>, vector<8x512xbf16>, vector<8x512xbf16>, vector<8x512xbf16>, vector<8x512xbf16>, vector<8x512xbf16>, vector<8x512xbf16>, vector<8x512xbf16>, vector<8x512xbf16>, vector<8x512xbf16>, vector<8x512xbf16>, vector<8x512xbf16>, vector<8x512xbf16>, vector<8x512xbf16> -> vector<128x512xbf16>
    %33 = tpu.concatenate %21, %22, %23, %24, %25, %26, %27, %28, %29, %30, %31 in 0 : vector<8x512xbf16>, vector<8x512xbf16>, vector<8x512xbf16>, vector<8x512xbf16>, vector<8x512xbf16>, vector<8x512xbf16>, vector<8x512xbf16>, vector<8x512xbf16>, vector<8x512xbf16>, vector<8x512xbf16>, vector<8x512xbf16> -> vector<88x512xbf16>
    %34 = tpu.concatenate %32, %33 in 0 : vector<128x512xbf16>, vector<88x512xbf16> -> vector<216x512xbf16>
    %c0_3 = arith.constant 0 : index
    %c0_4 = arith.constant 0 : index
    %c0_5 = arith.constant 0 : index
    %35 = vector.load %arg4[%c0_3, %c0_4, %c0_5] : memref<1x32x216xbf16, #tpu.memory_space<vmem>>, vector<1x32x216xbf16>
    %36 = vector.shape_cast %35 : vector<1x32x216xbf16> to vector<32x216xbf16>
    %cst_6 = arith.constant dense<0.000000e+00> : vector<32x512xf32>
    %37 = tpu.matmul %36, %34, %cst_6 {dimension_numbers = #tpu.dot_dimension_numbers<[1], [0], [0], [1], [0, 0, 1, 1], [], []>} : vector<32x216xbf16>, vector<216x512xbf16>, vector<32x512xf32> -> vector<32x512xf32>
    %c0_7 = arith.constant 0 : index
    %c0_8 = arith.constant 0 : index
    %c0_9 = arith.constant 0 : index
    %38 = vector.load %arg5[%c0_7, %c0_8, %c0_9] : memref<1x32x1xf32, #tpu.memory_space<vmem>>, vector<1x32x1xf32>
    %39 = vector.shape_cast %38 : vector<1x32x1xf32> to vector<32x1xf32>
    %40 = vector.broadcast %39 : vector<32x1xf32> to vector<32x512xf32>
    %41 = arith.addf %37, %40 : vector<32x512xf32>
    %42 = arith.truncf %41 : vector<32x512xf32> to vector<32x512xbf16>
    %c0_10 = arith.constant 0 : index
    %c0_11 = arith.constant 0 : index
    %c0_12 = arith.constant 0 : index
    %c0_13 = arith.constant 0 : index
    %43 = vector.load %arg6[%c0_10, %c0_11, %c0_12, %c0_13] : memref<1x1x32x512xbf16, #tpu.memory_space<vmem>>, vector<1x1x32x512xbf16>
    %44 = vector.shape_cast %43 : vector<1x1x32x512xbf16> to vector<32x512xbf16>
    %45 = vector.shape_cast %42 : vector<32x512xbf16> to vector<1x1x32x512xbf16>
    tpu.vector_store %arg6[%c0_10, %c0_11, %c0_12, %c0_13], %45 {strides = array<i32>} : memref<1x1x32x512xbf16, #tpu.memory_space<vmem>>, vector<1x1x32x512xbf16>,
    return
  }
  func.func @transform_0(%arg0: i32, %arg1: i32, %arg2: i32) -> (i32, i32, i32, i32) {
    %c0_i32 = arith.constant 0 : i32
    %c0_i32_0 = arith.constant 0 : i32
    %c0_i32_1 = arith.constant 0 : i32
    return %arg0, %arg1, %c0_i32, %c0_i32_0 : i32, i32, i32, i32
  }
  func.func @transform_1(%arg0: i32, %arg1: i32, %arg2: i32) -> (i32, i32, i32) {
    %c0_i32 = arith.constant 0 : i32
    %c0_i32_0 = arith.constant 0 : i32
    return %arg0, %arg2, %c0_i32 : i32, i32, i32
  }
  func.func @transform_2(%arg0: i32, %arg1: i32, %arg2: i32) -> (i32, i32, i32) {
    %c0_i32 = arith.constant 0 : i32
    %c0_i32_0 = arith.constant 0 : i32
    return %arg0, %arg2, %c0_i32 : i32, i32, i32
  }
  func.func @transform_3(%arg0: i32, %arg1: i32, %arg2: i32) -> (i32, i32, i32, i32) {
    %c0_i32 = arith.constant 0 : i32
    %c0_i32_0 = arith.constant 0 : i32
    return %arg0, %arg1, %arg2, %c0_i32 : i32, i32, i32, i32
  }
}

module attributes {stable_mosaic.version = 11 : i64} {
  func.func @_conv_kernel(%arg0: i32, %arg1: i32, %arg2: i32, %arg3: memref<1x1x8x512xbf16, #tpu.memory_space<vmem>>, %arg4: memref<1x24x216xbf16, #tpu.memory_space<vmem>>, %arg5: memref<1x24x1xf32, #tpu.memory_space<vmem>>, %arg6: memref<1x1x24x512xbf16, #tpu.memory_space<vmem>>) attributes {dimension_semantics = [#tpu.dimension_semantics<parallel>, #tpu.dimension_semantics<parallel>, #tpu.dimension_semantics<parallel>], iteration_bounds = array<i64: 1, 2, 1>, scalar_prefetch = 0 : i64, scratch_operands = 0 : i64, tpu.core_type = #tpu.core_type<tc>, window_params = [{transform_indices = @transform_0, window_bounds = array<i64: 1, 1, 8, 512>}, {transform_indices = @transform_1, window_bounds = array<i64: 1, 24, 216>}, {transform_indices = @transform_2, window_bounds = array<i64: 1, 24, 1>}, {transform_indices = @transform_3, window_bounds = array<i64: 1, 1, 24, 512>}]} {
    %c0 = arith.constant 0 : index
    %c0_0 = arith.constant 0 : index
    %c0_1 = arith.constant 0 : index
    %c0_2 = arith.constant 0 : index
    %0 = vector.load %arg3[%c0, %c0_0, %c0_1, %c0_2] : memref<1x1x8x512xbf16, #tpu.memory_space<vmem>>, vector<1x1x8x512xbf16>
    %1 = vector.shape_cast %0 : vector<1x1x8x512xbf16> to vector<8x512xbf16>
    %cst = arith.constant 0.000000e+00 : bf16
    %2 = vector.broadcast %cst : bf16 to vector<8x256xbf16>
    %3 = tpu.concatenate %1, %2 in 1 : vector<8x512xbf16>, vector<8x256xbf16> -> vector<8x768xbf16>
    %4 = vector.extract_strided_slice %3 {offsets = [0, 0], sizes = [8, 512], strides = [1, 1]} : vector<8x768xbf16> to vector<8x512xbf16>
    %5 = vector.extract_strided_slice %3 {offsets = [0, 1], sizes = [8, 512], strides = [1, 1]} : vector<8x768xbf16> to vector<8x512xbf16>
    %6 = vector.extract_strided_slice %3 {offsets = [0, 2], sizes = [8, 512], strides = [1, 1]} : vector<8x768xbf16> to vector<8x512xbf16>
    %7 = vector.extract_strided_slice %3 {offsets = [0, 8], sizes = [8, 512], strides = [1, 1]} : vector<8x768xbf16> to vector<8x512xbf16>
    %8 = vector.extract_strided_slice %3 {offsets = [0, 9], sizes = [8, 512], strides = [1, 1]} : vector<8x768xbf16> to vector<8x512xbf16>
    %9 = vector.extract_strided_slice %3 {offsets = [0, 10], sizes = [8, 512], strides = [1, 1]} : vector<8x768xbf16> to vector<8x512xbf16>
    %10 = vector.extract_strided_slice %3 {offsets = [0, 16], sizes = [8, 512], strides = [1, 1]} : vector<8x768xbf16> to vector<8x512xbf16>
    %11 = vector.extract_strided_slice %3 {offsets = [0, 17], sizes = [8, 512], strides = [1, 1]} : vector<8x768xbf16> to vector<8x512xbf16>
    %12 = vector.extract_strided_slice %3 {offsets = [0, 18], sizes = [8, 512], strides = [1, 1]} : vector<8x768xbf16> to vector<8x512xbf16>
    %13 = vector.extract_strided_slice %3 {offsets = [0, 64], sizes = [8, 512], strides = [1, 1]} : vector<8x768xbf16> to vector<8x512xbf16>
    %14 = vector.extract_strided_slice %3 {offsets = [0, 65], sizes = [8, 512], strides = [1, 1]} : vector<8x768xbf16> to vector<8x512xbf16>
    %15 = vector.extract_strided_slice %3 {offsets = [0, 66], sizes = [8, 512], strides = [1, 1]} : vector<8x768xbf16> to vector<8x512xbf16>
    %16 = vector.extract_strided_slice %3 {offsets = [0, 72], sizes = [8, 512], strides = [1, 1]} : vector<8x768xbf16> to vector<8x512xbf16>
    %17 = vector.extract_strided_slice %3 {offsets = [0, 73], sizes = [8, 512], strides = [1, 1]} : vector<8x768xbf16> to vector<8x512xbf16>
    %18 = vector.extract_strided_slice %3 {offsets = [0, 74], sizes = [8, 512], strides = [1, 1]} : vector<8x768xbf16> to vector<8x512xbf16>
    %19 = vector.extract_strided_slice %3 {offsets = [0, 80], sizes = [8, 512], strides = [1, 1]} : vector<8x768xbf16> to vector<8x512xbf16>
    %20 = vector.extract_strided_slice %3 {offsets = [0, 81], sizes = [8, 512], strides = [1, 1]} : vector<8x768xbf16> to vector<8x512xbf16>
    %21 = vector.extract_strided_slice %3 {offsets = [0, 82], sizes = [8, 512], strides = [1, 1]} : vector<8x768xbf16> to vector<8x512xbf16>
    %22 = vector.extract_strided_slice %3 {offsets = [0, 128], sizes = [8, 512], strides = [1, 1]} : vector<8x768xbf16> to vector<8x512xbf16>
    %23 = vector.extract_strided_slice %3 {offsets = [0, 129], sizes = [8, 512], strides = [1, 1]} : vector<8x768xbf16> to vector<8x512xbf16>
    %24 = vector.extract_strided_slice %3 {offsets = [0, 130], sizes = [8, 512], strides = [1, 1]} : vector<8x768xbf16> to vector<8x512xbf16>
    %25 = vector.extract_strided_slice %3 {offsets = [0, 136], sizes = [8, 512], strides = [1, 1]} : vector<8x768xbf16> to vector<8x512xbf16>
    %26 = vector.extract_strided_slice %3 {offsets = [0, 137], sizes = [8, 512], strides = [1, 1]} : vector<8x768xbf16> to vector<8x512xbf16>
    %27 = vector.extract_strided_slice %3 {offsets = [0, 138], sizes = [8, 512], strides = [1, 1]} : vector<8x768xbf16> to vector<8x512xbf16>
    %28 = vector.extract_strided_slice %3 {offsets = [0, 144], sizes = [8, 512], strides = [1, 1]} : vector<8x768xbf16> to vector<8x512xbf16>
    %29 = vector.extract_strided_slice %3 {offsets = [0, 145], sizes = [8, 512], strides = [1, 1]} : vector<8x768xbf16> to vector<8x512xbf16>
    %30 = vector.extract_strided_slice %3 {offsets = [0, 146], sizes = [8, 512], strides = [1, 1]} : vector<8x768xbf16> to vector<8x512xbf16>
    %31 = tpu.concatenate %4, %5, %6, %7, %8, %9, %10, %11, %12, %13, %14, %15, %16, %17, %18, %19 in 0 : vector<8x512xbf16>, vector<8x512xbf16>, vector<8x512xbf16>, vector<8x512xbf16>, vector<8x512xbf16>, vector<8x512xbf16>, vector<8x512xbf16>, vector<8x512xbf16>, vector<8x512xbf16>, vector<8x512xbf16>, vector<8x512xbf16>, vector<8x512xbf16>, vector<8x512xbf16>, vector<8x512xbf16>, vector<8x512xbf16>, vector<8x512xbf16> -> vector<128x512xbf16>
    %32 = tpu.concatenate %20, %21, %22, %23, %24, %25, %26, %27, %28, %29, %30 in 0 : vector<8x512xbf16>, vector<8x512xbf16>, vector<8x512xbf16>, vector<8x512xbf16>, vector<8x512xbf16>, vector<8x512xbf16>, vector<8x512xbf16>, vector<8x512xbf16>, vector<8x512xbf16>, vector<8x512xbf16>, vector<8x512xbf16> -> vector<88x512xbf16>
    %33 = tpu.concatenate %31, %32 in 0 : vector<128x512xbf16>, vector<88x512xbf16> -> vector<216x512xbf16>
    %c0_3 = arith.constant 0 : index
    %c0_4 = arith.constant 0 : index
    %c0_5 = arith.constant 0 : index
    %34 = vector.load %arg4[%c0_3, %c0_4, %c0_5] : memref<1x24x216xbf16, #tpu.memory_space<vmem>>, vector<1x24x216xbf16>
    %35 = vector.shape_cast %34 : vector<1x24x216xbf16> to vector<24x216xbf16>
    %cst_6 = arith.constant dense<0.000000e+00> : vector<24x512xf32>
    %36 = tpu.matmul %35, %33, %cst_6 {dimension_numbers = #tpu.dot_dimension_numbers<[1], [0], [0], [1], [0, 0, 1, 1], [], []>} : vector<24x216xbf16>, vector<216x512xbf16>, vector<24x512xf32> -> vector<24x512xf32>
    %c0_7 = arith.constant 0 : index
    %c0_8 = arith.constant 0 : index
    %c0_9 = arith.constant 0 : index
    %37 = vector.load %arg5[%c0_7, %c0_8, %c0_9] : memref<1x24x1xf32, #tpu.memory_space<vmem>>, vector<1x24x1xf32>
    %38 = vector.shape_cast %37 : vector<1x24x1xf32> to vector<24x1xf32>
    %39 = vector.broadcast %38 : vector<24x1xf32> to vector<24x512xf32>
    %40 = arith.addf %36, %39 : vector<24x512xf32>
    %41 = arith.truncf %40 : vector<24x512xf32> to vector<24x512xbf16>
    %c0_10 = arith.constant 0 : index
    %c0_11 = arith.constant 0 : index
    %c0_12 = arith.constant 0 : index
    %c0_13 = arith.constant 0 : index
    %42 = vector.load %arg6[%c0_10, %c0_11, %c0_12, %c0_13] : memref<1x1x24x512xbf16, #tpu.memory_space<vmem>>, vector<1x1x24x512xbf16>
    %43 = vector.shape_cast %42 : vector<1x1x24x512xbf16> to vector<24x512xbf16>
    %44 = vector.shape_cast %41 : vector<24x512xbf16> to vector<1x1x24x512xbf16>
    tpu.vector_store %arg6[%c0_10, %c0_11, %c0_12, %c0_13], %44 {strides = array<i32>} : memref<1x1x24x512xbf16, #tpu.memory_space<vmem>>, vector<1x1x24x512xbf16>,
    return
  }
  func.func @transform_0(%arg0: i32, %arg1: i32, %arg2: i32) -> (i32, i32, i32, i32) {
    %c0_i32 = arith.constant 0 : i32
    %c0_i32_0 = arith.constant 0 : i32
    %c0_i32_1 = arith.constant 0 : i32
    return %arg0, %arg1, %c0_i32, %c0_i32_0 : i32, i32, i32, i32
  }
  func.func @transform_1(%arg0: i32, %arg1: i32, %arg2: i32) -> (i32, i32, i32) {
    %c0_i32 = arith.constant 0 : i32
    %c0_i32_0 = arith.constant 0 : i32
    return %arg0, %arg2, %c0_i32 : i32, i32, i32
  }
  func.func @transform_2(%arg0: i32, %arg1: i32, %arg2: i32) -> (i32, i32, i32) {
    %c0_i32 = arith.constant 0 : i32
    %c0_i32_0 = arith.constant 0 : i32
    return %arg0, %arg2, %c0_i32 : i32, i32, i32
  }
  func.func @transform_3(%arg0: i32, %arg1: i32, %arg2: i32) -> (i32, i32, i32, i32) {
    %c0_i32 = arith.constant 0 : i32
    %c0_i32_0 = arith.constant 0 : i32
    return %arg0, %arg1, %arg2, %c0_i32 : i32, i32, i32, i32
  }
}

module attributes {stable_mosaic.version = 11 : i64} {
  func.func @_gates_kernel(%arg0: i32, %arg1: i32, %arg2: memref<1x7x8x512xbf16, #tpu.memory_space<vmem>>, %arg3: memref<1x4x8x512xbf16, #tpu.memory_space<vmem>>, %arg4: memref<1x3x8x512xbf16, #tpu.memory_space<vmem>>, %arg5: memref<1x8x512xbf16, #tpu.memory_space<vmem>>, %arg6: memref<1x4x8x512xbf16, #tpu.memory_space<vmem>>) attributes {dimension_semantics = [#tpu.dimension_semantics<parallel>, #tpu.dimension_semantics<parallel>], iteration_bounds = array<i64: 2, 1>, scalar_prefetch = 0 : i64, scratch_operands = 0 : i64, tpu.core_type = #tpu.core_type<tc>, window_params = [{transform_indices = @transform_0, window_bounds = array<i64: 1, 7, 8, 512>}, {transform_indices = @transform_1, window_bounds = array<i64: 1, 4, 8, 512>}, {transform_indices = @transform_2, window_bounds = array<i64: 1, 3, 8, 512>}, {transform_indices = @transform_3, window_bounds = array<i64: 1, 8, 512>}, {transform_indices = @transform_4, window_bounds = array<i64: 1, 4, 8, 512>}]} {
    %c0 = arith.constant 0 : index
    %c0_0 = arith.constant 0 : index
    %c0_1 = arith.constant 0 : index
    %c0_2 = arith.constant 0 : index
    %0 = vector.load %arg2[%c0, %c0_0, %c0_1, %c0_2] : memref<1x7x8x512xbf16, #tpu.memory_space<vmem>>, vector<1x1x8x512xbf16>
    %1 = vector.shape_cast %0 : vector<1x1x8x512xbf16> to vector<8x512xbf16>
    %2 = arith.extf %1 : vector<8x512xbf16> to vector<8x512xf32>
    %c0_3 = arith.constant 0 : index
    %c0_4 = arith.constant 0 : index
    %c0_5 = arith.constant 0 : index
    %c0_6 = arith.constant 0 : index
    %3 = vector.load %arg3[%c0_3, %c0_4, %c0_5, %c0_6] : memref<1x4x8x512xbf16, #tpu.memory_space<vmem>>, vector<1x1x8x512xbf16>
    %4 = vector.shape_cast %3 : vector<1x1x8x512xbf16> to vector<8x512xbf16>
    %5 = arith.extf %4 : vector<8x512xbf16> to vector<8x512xf32>
    %6 = arith.addf %2, %5 : vector<8x512xf32>
    %cst = arith.constant dense<0.000000e+00> : vector<8xf32>
    %7 = vector.multi_reduction <add>, %6, %cst [1] : vector<8x512xf32> to vector<8xf32>
    %8 = vector.shape_cast %7 : vector<8xf32> to vector<8x1xf32>
    %cst_7 = arith.constant 0.001953125 : f32
    %9 = vector.broadcast %cst_7 : f32 to vector<8x1xf32>
    %10 = arith.mulf %8, %9 : vector<8x1xf32>
    %11 = arith.mulf %6, %6 : vector<8x512xf32>
    %cst_8 = arith.constant dense<0.000000e+00> : vector<8xf32>
    %12 = vector.multi_reduction <add>, %11, %cst_8 [1] : vector<8x512xf32> to vector<8xf32>
    %13 = vector.shape_cast %12 : vector<8xf32> to vector<8x1xf32>
    %cst_9 = arith.constant 0.001953125 : f32
    %14 = vector.broadcast %cst_9 : f32 to vector<8x1xf32>
    %15 = arith.mulf %13, %14 : vector<8x1xf32>
    %16 = arith.mulf %10, %10 : vector<8x1xf32>
    %17 = arith.subf %15, %16 : vector<8x1xf32>
    %cst_10 = arith.constant 0.000000e+00 : f32
    %18 = vector.broadcast %cst_10 : f32 to vector<8x1xf32>
    %19 = arith.maximumf %17, %18 : vector<8x1xf32>
    %20 = vector.broadcast %10 : vector<8x1xf32> to vector<8x512xf32>
    %21 = arith.subf %6, %20 : vector<8x512xf32>
    %cst_11 = arith.constant 9.99999974E-6 : f32
    %22 = vector.broadcast %cst_11 : f32 to vector<8x1xf32>
    %23 = arith.addf %19, %22 : vector<8x1xf32>
    %24 = math.rsqrt %23 : vector<8x1xf32>
    %25 = vector.broadcast %24 : vector<8x1xf32> to vector<8x512xf32>
    %26 = arith.mulf %21, %25 : vector<8x512xf32>
    %27 = arith.negf %26 : vector<8x512xf32>
    %28 = math.exp %27 : vector<8x512xf32>
    %cst_12 = arith.constant 1.000000e+00 : f32
    %29 = vector.broadcast %cst_12 : f32 to vector<8x512xf32>
    %30 = arith.addf %29, %28 : vector<8x512xf32>
    %31 = arith.divf %29, %30 : vector<8x512xf32>
    %c0_13 = arith.constant 0 : index
    %c1 = arith.constant 1 : index
    %c0_14 = arith.constant 0 : index
    %c0_15 = arith.constant 0 : index
    %32 = vector.load %arg2[%c0_13, %c1, %c0_14, %c0_15] : memref<1x7x8x512xbf16, #tpu.memory_space<vmem>>, vector<1x1x8x512xbf16>
    %33 = vector.shape_cast %32 : vector<1x1x8x512xbf16> to vector<8x512xbf16>
    %34 = arith.extf %33 : vector<8x512xbf16> to vector<8x512xf32>
    %c0_16 = arith.constant 0 : index
    %c1_17 = arith.constant 1 : index
    %c0_18 = arith.constant 0 : index
    %c0_19 = arith.constant 0 : index
    %35 = vector.load %arg3[%c0_16, %c1_17, %c0_18, %c0_19] : memref<1x4x8x512xbf16, #tpu.memory_space<vmem>>, vector<1x1x8x512xbf16>
    %36 = vector.shape_cast %35 : vector<1x1x8x512xbf16> to vector<8x512xbf16>
    %37 = arith.extf %36 : vector<8x512xbf16> to vector<8x512xf32>
    %38 = arith.addf %34, %37 : vector<8x512xf32>
    %cst_20 = arith.constant dense<0.000000e+00> : vector<8xf32>
    %39 = vector.multi_reduction <add>, %38, %cst_20 [1] : vector<8x512xf32> to vector<8xf32>
    %40 = vector.shape_cast %39 : vector<8xf32> to vector<8x1xf32>
    %cst_21 = arith.constant 0.001953125 : f32
    %41 = vector.broadcast %cst_21 : f32 to vector<8x1xf32>
    %42 = arith.mulf %40, %41 : vector<8x1xf32>
    %43 = arith.mulf %38, %38 : vector<8x512xf32>
    %cst_22 = arith.constant dense<0.000000e+00> : vector<8xf32>
    %44 = vector.multi_reduction <add>, %43, %cst_22 [1] : vector<8x512xf32> to vector<8xf32>
    %45 = vector.shape_cast %44 : vector<8xf32> to vector<8x1xf32>
    %cst_23 = arith.constant 0.001953125 : f32
    %46 = vector.broadcast %cst_23 : f32 to vector<8x1xf32>
    %47 = arith.mulf %45, %46 : vector<8x1xf32>
    %48 = arith.mulf %42, %42 : vector<8x1xf32>
    %49 = arith.subf %47, %48 : vector<8x1xf32>
    %cst_24 = arith.constant 0.000000e+00 : f32
    %50 = vector.broadcast %cst_24 : f32 to vector<8x1xf32>
    %51 = arith.maximumf %49, %50 : vector<8x1xf32>
    %52 = vector.broadcast %42 : vector<8x1xf32> to vector<8x512xf32>
    %53 = arith.subf %38, %52 : vector<8x512xf32>
    %cst_25 = arith.constant 9.99999974E-6 : f32
    %54 = vector.broadcast %cst_25 : f32 to vector<8x1xf32>
    %55 = arith.addf %51, %54 : vector<8x1xf32>
    %56 = math.rsqrt %55 : vector<8x1xf32>
    %57 = vector.broadcast %56 : vector<8x1xf32> to vector<8x512xf32>
    %58 = arith.mulf %53, %57 : vector<8x512xf32>
    %59 = arith.negf %58 : vector<8x512xf32>
    %60 = math.exp %59 : vector<8x512xf32>
    %cst_26 = arith.constant 1.000000e+00 : f32
    %61 = vector.broadcast %cst_26 : f32 to vector<8x512xf32>
    %62 = arith.addf %61, %60 : vector<8x512xf32>
    %63 = arith.divf %61, %62 : vector<8x512xf32>
    %c0_27 = arith.constant 0 : index
    %c2 = arith.constant 2 : index
    %c0_28 = arith.constant 0 : index
    %c0_29 = arith.constant 0 : index
    %64 = vector.load %arg2[%c0_27, %c2, %c0_28, %c0_29] : memref<1x7x8x512xbf16, #tpu.memory_space<vmem>>, vector<1x1x8x512xbf16>
    %65 = vector.shape_cast %64 : vector<1x1x8x512xbf16> to vector<8x512xbf16>
    %66 = arith.extf %65 : vector<8x512xbf16> to vector<8x512xf32>
    %c0_30 = arith.constant 0 : index
    %c2_31 = arith.constant 2 : index
    %c0_32 = arith.constant 0 : index
    %c0_33 = arith.constant 0 : index
    %67 = vector.load %arg3[%c0_30, %c2_31, %c0_32, %c0_33] : memref<1x4x8x512xbf16, #tpu.memory_space<vmem>>, vector<1x1x8x512xbf16>
    %68 = vector.shape_cast %67 : vector<1x1x8x512xbf16> to vector<8x512xbf16>
    %69 = arith.extf %68 : vector<8x512xbf16> to vector<8x512xf32>
    %70 = arith.addf %66, %69 : vector<8x512xf32>
    %cst_34 = arith.constant dense<0.000000e+00> : vector<8xf32>
    %71 = vector.multi_reduction <add>, %70, %cst_34 [1] : vector<8x512xf32> to vector<8xf32>
    %72 = vector.shape_cast %71 : vector<8xf32> to vector<8x1xf32>
    %cst_35 = arith.constant 0.001953125 : f32
    %73 = vector.broadcast %cst_35 : f32 to vector<8x1xf32>
    %74 = arith.mulf %72, %73 : vector<8x1xf32>
    %75 = arith.mulf %70, %70 : vector<8x512xf32>
    %cst_36 = arith.constant dense<0.000000e+00> : vector<8xf32>
    %76 = vector.multi_reduction <add>, %75, %cst_36 [1] : vector<8x512xf32> to vector<8xf32>
    %77 = vector.shape_cast %76 : vector<8xf32> to vector<8x1xf32>
    %cst_37 = arith.constant 0.001953125 : f32
    %78 = vector.broadcast %cst_37 : f32 to vector<8x1xf32>
    %79 = arith.mulf %77, %78 : vector<8x1xf32>
    %80 = arith.mulf %74, %74 : vector<8x1xf32>
    %81 = arith.subf %79, %80 : vector<8x1xf32>
    %cst_38 = arith.constant 0.000000e+00 : f32
    %82 = vector.broadcast %cst_38 : f32 to vector<8x1xf32>
    %83 = arith.maximumf %81, %82 : vector<8x1xf32>
    %84 = vector.broadcast %74 : vector<8x1xf32> to vector<8x512xf32>
    %85 = arith.subf %70, %84 : vector<8x512xf32>
    %cst_39 = arith.constant 9.99999974E-6 : f32
    %86 = vector.broadcast %cst_39 : f32 to vector<8x1xf32>
    %87 = arith.addf %83, %86 : vector<8x1xf32>
    %88 = math.rsqrt %87 : vector<8x1xf32>
    %89 = vector.broadcast %88 : vector<8x1xf32> to vector<8x512xf32>
    %90 = arith.mulf %85, %89 : vector<8x512xf32>
    %91 = math.tanh %90 : vector<8x512xf32>
    %92 = arith.truncf %31 : vector<8x512xf32> to vector<8x512xbf16>
    %c0_40 = arith.constant 0 : index
    %c0_41 = arith.constant 0 : index
    %c0_42 = arith.constant 0 : index
    %c0_43 = arith.constant 0 : index
    %93 = vector.load %arg6[%c0_40, %c0_41, %c0_42, %c0_43] : memref<1x4x8x512xbf16, #tpu.memory_space<vmem>>, vector<1x1x8x512xbf16>
    %94 = vector.shape_cast %93 : vector<1x1x8x512xbf16> to vector<8x512xbf16>
    %95 = vector.shape_cast %92 : vector<8x512xbf16> to vector<1x1x8x512xbf16>
    tpu.vector_store %arg6[%c0_40, %c0_41, %c0_42, %c0_43], %95 {strides = array<i32>} : memref<1x4x8x512xbf16, #tpu.memory_space<vmem>>, vector<1x1x8x512xbf16>,
    %96 = arith.mulf %63, %91 : vector<8x512xf32>
    %97 = arith.truncf %96 : vector<8x512xf32> to vector<8x512xbf16>
    %c0_44 = arith.constant 0 : index
    %c1_45 = arith.constant 1 : index
    %c0_46 = arith.constant 0 : index
    %c0_47 = arith.constant 0 : index
    %98 = vector.load %arg6[%c0_44, %c1_45, %c0_46, %c0_47] : memref<1x4x8x512xbf16, #tpu.memory_space<vmem>>, vector<1x1x8x512xbf16>
    %99 = vector.shape_cast %98 : vector<1x1x8x512xbf16> to vector<8x512xbf16>
    %100 = vector.shape_cast %97 : vector<8x512xbf16> to vector<1x1x8x512xbf16>
    tpu.vector_store %arg6[%c0_44, %c1_45, %c0_46, %c0_47], %100 {strides = array<i32>} : memref<1x4x8x512xbf16, #tpu.memory_space<vmem>>, vector<1x1x8x512xbf16>,
    %c0_48 = arith.constant 0 : index
    %c3 = arith.constant 3 : index
    %c0_49 = arith.constant 0 : index
    %c0_50 = arith.constant 0 : index
    %101 = vector.load %arg2[%c0_48, %c3, %c0_49, %c0_50] : memref<1x7x8x512xbf16, #tpu.memory_space<vmem>>, vector<1x1x8x512xbf16>
    %102 = vector.shape_cast %101 : vector<1x1x8x512xbf16> to vector<8x512xbf16>
    %103 = arith.extf %102 : vector<8x512xbf16> to vector<8x512xf32>
    %c0_51 = arith.constant 0 : index
    %c0_52 = arith.constant 0 : index
    %c0_53 = arith.constant 0 : index
    %c0_54 = arith.constant 0 : index
    %104 = vector.load %arg4[%c0_51, %c0_52, %c0_53, %c0_54] : memref<1x3x8x512xbf16, #tpu.memory_space<vmem>>, vector<1x1x8x512xbf16>
    %105 = vector.shape_cast %104 : vector<1x1x8x512xbf16> to vector<8x512xbf16>
    %106 = arith.extf %105 : vector<8x512xbf16> to vector<8x512xf32>
    %107 = arith.addf %103, %106 : vector<8x512xf32>
    %cst_55 = arith.constant dense<0.000000e+00> : vector<8xf32>
    %108 = vector.multi_reduction <add>, %107, %cst_55 [1] : vector<8x512xf32> to vector<8xf32>
    %109 = vector.shape_cast %108 : vector<8xf32> to vector<8x1xf32>
    %cst_56 = arith.constant 0.001953125 : f32
    %110 = vector.broadcast %cst_56 : f32 to vector<8x1xf32>
    %111 = arith.mulf %109, %110 : vector<8x1xf32>
    %112 = arith.mulf %107, %107 : vector<8x512xf32>
    %cst_57 = arith.constant dense<0.000000e+00> : vector<8xf32>
    %113 = vector.multi_reduction <add>, %112, %cst_57 [1] : vector<8x512xf32> to vector<8xf32>
    %114 = vector.shape_cast %113 : vector<8xf32> to vector<8x1xf32>
    %cst_58 = arith.constant 0.001953125 : f32
    %115 = vector.broadcast %cst_58 : f32 to vector<8x1xf32>
    %116 = arith.mulf %114, %115 : vector<8x1xf32>
    %117 = arith.mulf %111, %111 : vector<8x1xf32>
    %118 = arith.subf %116, %117 : vector<8x1xf32>
    %cst_59 = arith.constant 0.000000e+00 : f32
    %119 = vector.broadcast %cst_59 : f32 to vector<8x1xf32>
    %120 = arith.maximumf %118, %119 : vector<8x1xf32>
    %121 = vector.broadcast %111 : vector<8x1xf32> to vector<8x512xf32>
    %122 = arith.subf %107, %121 : vector<8x512xf32>
    %cst_60 = arith.constant 9.99999974E-6 : f32
    %123 = vector.broadcast %cst_60 : f32 to vector<8x1xf32>
    %124 = arith.addf %120, %123 : vector<8x1xf32>
    %125 = math.rsqrt %124 : vector<8x1xf32>
    %126 = vector.broadcast %125 : vector<8x1xf32> to vector<8x512xf32>
    %127 = arith.mulf %122, %126 : vector<8x512xf32>
    %128 = arith.negf %127 : vector<8x512xf32>
    %129 = math.exp %128 : vector<8x512xf32>
    %cst_61 = arith.constant 1.000000e+00 : f32
    %130 = vector.broadcast %cst_61 : f32 to vector<8x512xf32>
    %131 = arith.addf %130, %129 : vector<8x512xf32>
    %132 = arith.divf %130, %131 : vector<8x512xf32>
    %c0_62 = arith.constant 0 : index
    %c4 = arith.constant 4 : index
    %c0_63 = arith.constant 0 : index
    %c0_64 = arith.constant 0 : index
    %133 = vector.load %arg2[%c0_62, %c4, %c0_63, %c0_64] : memref<1x7x8x512xbf16, #tpu.memory_space<vmem>>, vector<1x1x8x512xbf16>
    %134 = vector.shape_cast %133 : vector<1x1x8x512xbf16> to vector<8x512xbf16>
    %135 = arith.extf %134 : vector<8x512xbf16> to vector<8x512xf32>
    %c0_65 = arith.constant 0 : index
    %c1_66 = arith.constant 1 : index
    %c0_67 = arith.constant 0 : index
    %c0_68 = arith.constant 0 : index
    %136 = vector.load %arg4[%c0_65, %c1_66, %c0_67, %c0_68] : memref<1x3x8x512xbf16, #tpu.memory_space<vmem>>, vector<1x1x8x512xbf16>
    %137 = vector.shape_cast %136 : vector<1x1x8x512xbf16> to vector<8x512xbf16>
    %138 = arith.extf %137 : vector<8x512xbf16> to vector<8x512xf32>
    %139 = arith.addf %135, %138 : vector<8x512xf32>
    %cst_69 = arith.constant dense<0.000000e+00> : vector<8xf32>
    %140 = vector.multi_reduction <add>, %139, %cst_69 [1] : vector<8x512xf32> to vector<8xf32>
    %141 = vector.shape_cast %140 : vector<8xf32> to vector<8x1xf32>
    %cst_70 = arith.constant 0.001953125 : f32
    %142 = vector.broadcast %cst_70 : f32 to vector<8x1xf32>
    %143 = arith.mulf %141, %142 : vector<8x1xf32>
    %144 = arith.mulf %139, %139 : vector<8x512xf32>
    %cst_71 = arith.constant dense<0.000000e+00> : vector<8xf32>
    %145 = vector.multi_reduction <add>, %144, %cst_71 [1] : vector<8x512xf32> to vector<8xf32>
    %146 = vector.shape_cast %145 : vector<8xf32> to vector<8x1xf32>
    %cst_72 = arith.constant 0.001953125 : f32
    %147 = vector.broadcast %cst_72 : f32 to vector<8x1xf32>
    %148 = arith.mulf %146, %147 : vector<8x1xf32>
    %149 = arith.mulf %143, %143 : vector<8x1xf32>
    %150 = arith.subf %148, %149 : vector<8x1xf32>
    %cst_73 = arith.constant 0.000000e+00 : f32
    %151 = vector.broadcast %cst_73 : f32 to vector<8x1xf32>
    %152 = arith.maximumf %150, %151 : vector<8x1xf32>
    %153 = vector.broadcast %143 : vector<8x1xf32> to vector<8x512xf32>
    %154 = arith.subf %139, %153 : vector<8x512xf32>
    %cst_74 = arith.constant 9.99999974E-6 : f32
    %155 = vector.broadcast %cst_74 : f32 to vector<8x1xf32>
    %156 = arith.addf %152, %155 : vector<8x1xf32>
    %157 = math.rsqrt %156 : vector<8x1xf32>
    %158 = vector.broadcast %157 : vector<8x1xf32> to vector<8x512xf32>
    %159 = arith.mulf %154, %158 : vector<8x512xf32>
    %160 = math.tanh %159 : vector<8x512xf32>
    %c0_75 = arith.constant 0 : index
    %c5 = arith.constant 5 : index
    %c0_76 = arith.constant 0 : index
    %c0_77 = arith.constant 0 : index
    %161 = vector.load %arg2[%c0_75, %c5, %c0_76, %c0_77] : memref<1x7x8x512xbf16, #tpu.memory_space<vmem>>, vector<1x1x8x512xbf16>
    %162 = vector.shape_cast %161 : vector<1x1x8x512xbf16> to vector<8x512xbf16>
    %163 = arith.extf %162 : vector<8x512xbf16> to vector<8x512xf32>
    %c0_78 = arith.constant 0 : index
    %c2_79 = arith.constant 2 : index
    %c0_80 = arith.constant 0 : index
    %c0_81 = arith.constant 0 : index
    %164 = vector.load %arg4[%c0_78, %c2_79, %c0_80, %c0_81] : memref<1x3x8x512xbf16, #tpu.memory_space<vmem>>, vector<1x1x8x512xbf16>
    %165 = vector.shape_cast %164 : vector<1x1x8x512xbf16> to vector<8x512xbf16>
    %166 = arith.extf %165 : vector<8x512xbf16> to vector<8x512xf32>
    %167 = arith.addf %163, %166 : vector<8x512xf32>
    %cst_82 = arith.constant dense<0.000000e+00> : vector<8xf32>
    %168 = vector.multi_reduction <add>, %167, %cst_82 [1] : vector<8x512xf32> to vector<8xf32>
    %169 = vector.shape_cast %168 : vector<8xf32> to vector<8x1xf32>
    %cst_83 = arith.constant 0.001953125 : f32
    %170 = vector.broadcast %cst_83 : f32 to vector<8x1xf32>
    %171 = arith.mulf %169, %170 : vector<8x1xf32>
    %172 = arith.mulf %167, %167 : vector<8x512xf32>
    %cst_84 = arith.constant dense<0.000000e+00> : vector<8xf32>
    %173 = vector.multi_reduction <add>, %172, %cst_84 [1] : vector<8x512xf32> to vector<8xf32>
    %174 = vector.shape_cast %173 : vector<8xf32> to vector<8x1xf32>
    %cst_85 = arith.constant 0.001953125 : f32
    %175 = vector.broadcast %cst_85 : f32 to vector<8x1xf32>
    %176 = arith.mulf %174, %175 : vector<8x1xf32>
    %177 = arith.mulf %171, %171 : vector<8x1xf32>
    %178 = arith.subf %176, %177 : vector<8x1xf32>
    %cst_86 = arith.constant 0.000000e+00 : f32
    %179 = vector.broadcast %cst_86 : f32 to vector<8x1xf32>
    %180 = arith.maximumf %178, %179 : vector<8x1xf32>
    %181 = vector.broadcast %171 : vector<8x1xf32> to vector<8x512xf32>
    %182 = arith.subf %167, %181 : vector<8x512xf32>
    %cst_87 = arith.constant 9.99999974E-6 : f32
    %183 = vector.broadcast %cst_87 : f32 to vector<8x1xf32>
    %184 = arith.addf %180, %183 : vector<8x1xf32>
    %185 = math.rsqrt %184 : vector<8x1xf32>
    %186 = vector.broadcast %185 : vector<8x1xf32> to vector<8x512xf32>
    %187 = arith.mulf %182, %186 : vector<8x512xf32>
    %188 = arith.negf %187 : vector<8x512xf32>
    %189 = math.exp %188 : vector<8x512xf32>
    %cst_88 = arith.constant 1.000000e+00 : f32
    %190 = vector.broadcast %cst_88 : f32 to vector<8x512xf32>
    %191 = arith.addf %190, %189 : vector<8x512xf32>
    %192 = arith.divf %190, %191 : vector<8x512xf32>
    %193 = arith.mulf %132, %160 : vector<8x512xf32>
    %c0_89 = arith.constant 0 : index
    %c0_90 = arith.constant 0 : index
    %c0_91 = arith.constant 0 : index
    %194 = vector.load %arg5[%c0_89, %c0_90, %c0_91] : memref<1x8x512xbf16, #tpu.memory_space<vmem>>, vector<1x8x512xbf16>
    %195 = vector.shape_cast %194 : vector<1x8x512xbf16> to vector<8x512xbf16>
    %196 = arith.extf %195 : vector<8x512xbf16> to vector<8x512xf32>
    %197 = arith.mulf %192, %196 : vector<8x512xf32>
    %198 = arith.addf %193, %197 : vector<8x512xf32>
    %199 = arith.truncf %198 : vector<8x512xf32> to vector<8x512xbf16>
    %c0_92 = arith.constant 0 : index
    %c2_93 = arith.constant 2 : index
    %c0_94 = arith.constant 0 : index
    %c0_95 = arith.constant 0 : index
    %200 = vector.load %arg6[%c0_92, %c2_93, %c0_94, %c0_95] : memref<1x4x8x512xbf16, #tpu.memory_space<vmem>>, vector<1x1x8x512xbf16>
    %201 = vector.shape_cast %200 : vector<1x1x8x512xbf16> to vector<8x512xbf16>
    %202 = vector.shape_cast %199 : vector<8x512xbf16> to vector<1x1x8x512xbf16>
    tpu.vector_store %arg6[%c0_92, %c2_93, %c0_94, %c0_95], %202 {strides = array<i32>} : memref<1x4x8x512xbf16, #tpu.memory_space<vmem>>, vector<1x1x8x512xbf16>,
    %c0_96 = arith.constant 0 : index
    %c6 = arith.constant 6 : index
    %c0_97 = arith.constant 0 : index
    %c0_98 = arith.constant 0 : index
    %203 = vector.load %arg2[%c0_96, %c6, %c0_97, %c0_98] : memref<1x7x8x512xbf16, #tpu.memory_space<vmem>>, vector<1x1x8x512xbf16>
    %204 = vector.shape_cast %203 : vector<1x1x8x512xbf16> to vector<8x512xbf16>
    %205 = arith.extf %204 : vector<8x512xbf16> to vector<8x512xf32>
    %c0_99 = arith.constant 0 : index
    %c3_100 = arith.constant 3 : index
    %c0_101 = arith.constant 0 : index
    %c0_102 = arith.constant 0 : index
    %206 = vector.load %arg3[%c0_99, %c3_100, %c0_101, %c0_102] : memref<1x4x8x512xbf16, #tpu.memory_space<vmem>>, vector<1x1x8x512xbf16>
    %207 = vector.shape_cast %206 : vector<1x1x8x512xbf16> to vector<8x512xbf16>
    %208 = arith.extf %207 : vector<8x512xbf16> to vector<8x512xf32>
    %209 = arith.addf %205, %208 : vector<8x512xf32>
    %210 = arith.truncf %209 : vector<8x512xf32> to vector<8x512xbf16>
    %c0_103 = arith.constant 0 : index
    %c3_104 = arith.constant 3 : index
    %c0_105 = arith.constant 0 : index
    %c0_106 = arith.constant 0 : index
    %211 = vector.load %arg6[%c0_103, %c3_104, %c0_105, %c0_106] : memref<1x4x8x512xbf16, #tpu.memory_space<vmem>>, vector<1x1x8x512xbf16>
    %212 = vector.shape_cast %211 : vector<1x1x8x512xbf16> to vector<8x512xbf16>
    %213 = vector.shape_cast %210 : vector<8x512xbf16> to vector<1x1x8x512xbf16>
    tpu.vector_store %arg6[%c0_103, %c3_104, %c0_105, %c0_106], %213 {strides = array<i32>} : memref<1x4x8x512xbf16, #tpu.memory_space<vmem>>, vector<1x1x8x512xbf16>,
    return
  }
  func.func @transform_0(%arg0: i32, %arg1: i32) -> (i32, i32, i32, i32) {
    %c0_i32 = arith.constant 0 : i32
    %c0_i32_0 = arith.constant 0 : i32
    %c0_i32_1 = arith.constant 0 : i32
    return %arg0, %c0_i32, %arg1, %c0_i32_0 : i32, i32, i32, i32
  }
  func.func @transform_1(%arg0: i32, %arg1: i32) -> (i32, i32, i32, i32) {
    %c0_i32 = arith.constant 0 : i32
    %c0_i32_0 = arith.constant 0 : i32
    %c0_i32_1 = arith.constant 0 : i32
    return %arg0, %c0_i32, %arg1, %c0_i32_0 : i32, i32, i32, i32
  }
  func.func @transform_2(%arg0: i32, %arg1: i32) -> (i32, i32, i32, i32) {
    %c0_i32 = arith.constant 0 : i32
    %c0_i32_0 = arith.constant 0 : i32
    %c0_i32_1 = arith.constant 0 : i32
    return %arg0, %c0_i32, %arg1, %c0_i32_0 : i32, i32, i32, i32
  }
  func.func @transform_3(%arg0: i32, %arg1: i32) -> (i32, i32, i32) {
    %c0_i32 = arith.constant 0 : i32
    %c0_i32_0 = arith.constant 0 : i32
    return %arg0, %arg1, %c0_i32 : i32, i32, i32
  }
  func.func @transform_4(%arg0: i32, %arg1: i32) -> (i32, i32, i32, i32) {
    %c0_i32 = arith.constant 0 : i32
    %c0_i32_0 = arith.constant 0 : i32
    %c0_i32_1 = arith.constant 0 : i32
    return %arg0, %c0_i32, %arg1, %c0_i32_0 : i32, i32, i32, i32
  }
}

module attributes {stable_mosaic.version = 11 : i64} {
  func.func @_c_update_kernel(%arg0: i32, %arg1: memref<1x1x8x512xbf16, #tpu.memory_space<vmem>>, %arg2: memref<2x1x8x512xf32, #tpu.memory_space<vmem>>, %arg3: memref<1x2x1x1xf32, #tpu.memory_space<vmem>>, %arg4: memref<8x512xf32, #tpu.memory_space<vmem>>, %arg5: memref<8x512xf32, #tpu.memory_space<vmem>>, %arg6: memref<1x8x512xf32, #tpu.memory_space<vmem>>) attributes {dimension_semantics = [#tpu.dimension_semantics<parallel>], iteration_bounds = array<i64: 2>, scalar_prefetch = 0 : i64, scratch_operands = 0 : i64, tpu.core_type = #tpu.core_type<tc>, window_params = [{transform_indices = @transform_0, window_bounds = array<i64: 1, 1, 8, 512>}, {transform_indices = @transform_1, window_bounds = array<i64: 2, 1, 8, 512>}, {transform_indices = @transform_2, window_bounds = array<i64: 1, 2, 1, 1>}, {pipeline_mode = #tpu.pipeline_mode<synchronous>, transform_indices = @transform_3, window_bounds = array<i64: 8, 512>}, {pipeline_mode = #tpu.pipeline_mode<synchronous>, transform_indices = @transform_4, window_bounds = array<i64: 8, 512>}, {transform_indices = @transform_5, window_bounds = array<i64: 1, 8, 512>}]} {
    %c0 = arith.constant 0 : index
    %c0_0 = arith.constant 0 : index
    %c0_1 = arith.constant 0 : index
    %c0_2 = arith.constant 0 : index
    %0 = vector.load %arg1[%c0, %c0_0, %c0_1, %c0_2] : memref<1x1x8x512xbf16, #tpu.memory_space<vmem>>, vector<1x1x8x512xbf16>
    %1 = vector.shape_cast %0 : vector<1x1x8x512xbf16> to vector<8x512xbf16>
    %2 = arith.extf %1 : vector<8x512xbf16> to vector<8x512xf32>
    %c0_3 = arith.constant 0 : index
    %c0_4 = arith.constant 0 : index
    %c0_5 = arith.constant 0 : index
    %c0_6 = arith.constant 0 : index
    %3 = vector.load %arg2[%c0_3, %c0_4, %c0_5, %c0_6] : memref<2x1x8x512xf32, #tpu.memory_space<vmem>>, vector<2x1x8x512xf32>
    %4 = vector.shape_cast %3 : vector<2x1x8x512xf32> to vector<2x8x512xf32>
    %c0_7 = arith.constant 0 : index
    %c0_8 = arith.constant 0 : index
    %c0_9 = arith.constant 0 : index
    %c0_10 = arith.constant 0 : index
    %5 = vector.load %arg3[%c0_7, %c0_8, %c0_9, %c0_10] : memref<1x2x1x1xf32, #tpu.memory_space<vmem>>, vector<1x2x1x1xf32>
    %6 = vector.shape_cast %5 : vector<1x2x1x1xf32> to vector<2x1x1xf32>
    %7 = vector.broadcast %6 : vector<2x1x1xf32> to vector<2x8x512xf32>
    %8 = arith.mulf %7, %4 : vector<2x8x512xf32>
    %cst = arith.constant dense<0.000000e+00> : vector<8x512xf32>
    %9 = vector.multi_reduction <add>, %8, %cst [0] : vector<2x8x512xf32> to vector<8x512xf32>
    %10 = vector.extract_strided_slice %4 {offsets = [1, 0, 0], sizes = [1, 8, 512], strides = [1, 1, 1]} : vector<2x8x512xf32> to vector<1x8x512xf32>
    %11 = vector.shape_cast %10 : vector<1x8x512xf32> to vector<8x512xf32>
    %12 = arith.addf %11, %9 : vector<8x512xf32>
    %13 = vector.shape_cast %12 : vector<8x512xf32> to vector<1x8x512xf32>
    %cst_11 = arith.constant dense<0.000000e+00> : vector<1xf32>
    %14 = vector.multi_reduction <add>, %13, %cst_11 [1, 2] : vector<1x8x512xf32> to vector<1xf32>
    %15 = vector.shape_cast %14 : vector<1xf32> to vector<1x1x1xf32>
    %16 = vector.extract %15[0, 0, 0] : f32 from vector<1x1x1xf32>
    %cst_12 = arith.constant 2.44140625E-4 : f32
    %17 = arith.mulf %16, %cst_12 : f32
    %18 = arith.mulf %12, %12 : vector<8x512xf32>
    %19 = vector.shape_cast %18 : vector<8x512xf32> to vector<1x8x512xf32>
    %cst_13 = arith.constant dense<0.000000e+00> : vector<1xf32>
    %20 = vector.multi_reduction <add>, %19, %cst_13 [1, 2] : vector<1x8x512xf32> to vector<1xf32>
    %21 = vector.shape_cast %20 : vector<1xf32> to vector<1x1x1xf32>
    %22 = vector.extract %21[0, 0, 0] : f32 from vector<1x1x1xf32>
    %cst_14 = arith.constant 2.44140625E-4 : f32
    %23 = arith.mulf %22, %cst_14 : f32
    %24 = arith.mulf %17, %17 : f32
    %25 = arith.subf %23, %24 : f32
    %cst_15 = arith.constant 0.000000e+00 : f32
    %26 = arith.maximumf %25, %cst_15 : f32
    %27 = vector.broadcast %17 : f32 to vector<8x512xf32>
    %28 = arith.subf %12, %27 : vector<8x512xf32>
    %cst_16 = arith.constant 9.99999974E-6 : f32
    %29 = arith.addf %26, %cst_16 : f32
    %30 = math.rsqrt %29 : f32
    %31 = vector.broadcast %30 : f32 to vector<8x512xf32>
    %32 = arith.mulf %28, %31 : vector<8x512xf32>
    %c0_17 = arith.constant 0 : index
    %c0_18 = arith.constant 0 : index
    %33 = vector.load %arg4[%c0_17, %c0_18] : memref<8x512xf32, #tpu.memory_space<vmem>>, vector<8x512xf32>
    %34 = arith.mulf %33, %32 : vector<8x512xf32>
    %35 = arith.addf %2, %34 : vector<8x512xf32>
    %c0_19 = arith.constant 0 : index
    %c0_20 = arith.constant 0 : index
    %36 = vector.load %arg5[%c0_19, %c0_20] : memref<8x512xf32, #tpu.memory_space<vmem>>, vector<8x512xf32>
    %37 = arith.addf %35, %36 : vector<8x512xf32>
    %c0_21 = arith.constant 0 : index
    %c0_22 = arith.constant 0 : index
    %c0_23 = arith.constant 0 : index
    %38 = vector.load %arg6[%c0_21, %c0_22, %c0_23] : memref<1x8x512xf32, #tpu.memory_space<vmem>>, vector<1x8x512xf32>
    %39 = vector.shape_cast %38 : vector<1x8x512xf32> to vector<8x512xf32>
    %40 = vector.shape_cast %37 : vector<8x512xf32> to vector<1x8x512xf32>
    tpu.vector_store %arg6[%c0_21, %c0_22, %c0_23], %40 {strides = array<i32>} : memref<1x8x512xf32, #tpu.memory_space<vmem>>, vector<1x8x512xf32>,
    return
  }
  func.func @transform_0(%arg0: i32) -> (i32, i32, i32, i32) {
    %c1_i32 = arith.constant 1 : i32
    %c0_i32 = arith.constant 0 : i32
    %c0_i32_0 = arith.constant 0 : i32
    %c0_i32_1 = arith.constant 0 : i32
    return %arg0, %c1_i32, %c0_i32, %c0_i32_0 : i32, i32, i32, i32
  }
  func.func @transform_1(%arg0: i32) -> (i32, i32, i32, i32) {
    %c0_i32 = arith.constant 0 : i32
    %c0_i32_0 = arith.constant 0 : i32
    %c0_i32_1 = arith.constant 0 : i32
    %c0_i32_2 = arith.constant 0 : i32
    return %c0_i32, %arg0, %c0_i32_0, %c0_i32_1 : i32, i32, i32, i32
  }
  func.func @transform_2(%arg0: i32) -> (i32, i32, i32, i32) {
    %c0_i32 = arith.constant 0 : i32
    %c0_i32_0 = arith.constant 0 : i32
    %c0_i32_1 = arith.constant 0 : i32
    %c0_i32_2 = arith.constant 0 : i32
    return %arg0, %c0_i32, %c0_i32_0, %c0_i32_1 : i32, i32, i32, i32
  }
  func.func @transform_3(%arg0: i32) -> (i32, i32) {
    %c0_i32 = arith.constant 0 : i32
    %c0_i32_0 = arith.constant 0 : i32
    %c0_i32_1 = arith.constant 0 : i32
    return %c0_i32, %c0_i32_0 : i32, i32
  }
  func.func @transform_4(%arg0: i32) -> (i32, i32) {
    %c0_i32 = arith.constant 0 : i32
    %c0_i32_0 = arith.constant 0 : i32
    %c0_i32_1 = arith.constant 0 : i32
    return %c0_i32, %c0_i32_0 : i32, i32
  }
  func.func @transform_5(%arg0: i32) -> (i32, i32, i32) {
    %c0_i32 = arith.constant 0 : i32
    %c0_i32_0 = arith.constant 0 : i32
    %c0_i32_1 = arith.constant 0 : i32
    return %arg0, %c0_i32, %c0_i32_0 : i32, i32, i32
  }
}

module attributes {stable_mosaic.version = 11 : i64} {
  func.func @_conv_kernel(%arg0: i32, %arg1: i32, %arg2: i32, %arg3: memref<1x1x8x512xbf16, #tpu.memory_space<vmem>>, %arg4: memref<1x8x216xbf16, #tpu.memory_space<vmem>>, %arg5: memref<1x8x1xf32, #tpu.memory_space<vmem>>, %arg6: memref<1x1x8x512xbf16, #tpu.memory_space<vmem>>) attributes {dimension_semantics = [#tpu.dimension_semantics<parallel>, #tpu.dimension_semantics<parallel>, #tpu.dimension_semantics<parallel>], iteration_bounds = array<i64: 2, 2, 1>, scalar_prefetch = 0 : i64, scratch_operands = 0 : i64, tpu.core_type = #tpu.core_type<tc>, window_params = [{transform_indices = @transform_0, window_bounds = array<i64: 1, 1, 8, 512>}, {transform_indices = @transform_1, window_bounds = array<i64: 1, 8, 216>}, {transform_indices = @transform_2, window_bounds = array<i64: 1, 8, 1>}, {transform_indices = @transform_3, window_bounds = array<i64: 1, 1, 8, 512>}]} {
    %c0 = arith.constant 0 : index
    %c0_0 = arith.constant 0 : index
    %c0_1 = arith.constant 0 : index
    %c0_2 = arith.constant 0 : index
    %0 = vector.load %arg3[%c0, %c0_0, %c0_1, %c0_2] : memref<1x1x8x512xbf16, #tpu.memory_space<vmem>>, vector<1x1x8x512xbf16>
    %1 = vector.shape_cast %0 : vector<1x1x8x512xbf16> to vector<8x512xbf16>
    %cst = arith.constant 0.000000e+00 : bf16
    %2 = vector.broadcast %cst : bf16 to vector<8x256xbf16>
    %3 = tpu.concatenate %1, %2 in 1 : vector<8x512xbf16>, vector<8x256xbf16> -> vector<8x768xbf16>
    %4 = vector.extract_strided_slice %3 {offsets = [0, 0], sizes = [8, 512], strides = [1, 1]} : vector<8x768xbf16> to vector<8x512xbf16>
    %5 = vector.extract_strided_slice %3 {offsets = [0, 1], sizes = [8, 512], strides = [1, 1]} : vector<8x768xbf16> to vector<8x512xbf16>
    %6 = vector.extract_strided_slice %3 {offsets = [0, 2], sizes = [8, 512], strides = [1, 1]} : vector<8x768xbf16> to vector<8x512xbf16>
    %7 = vector.extract_strided_slice %3 {offsets = [0, 8], sizes = [8, 512], strides = [1, 1]} : vector<8x768xbf16> to vector<8x512xbf16>
    %8 = vector.extract_strided_slice %3 {offsets = [0, 9], sizes = [8, 512], strides = [1, 1]} : vector<8x768xbf16> to vector<8x512xbf16>
    %9 = vector.extract_strided_slice %3 {offsets = [0, 10], sizes = [8, 512], strides = [1, 1]} : vector<8x768xbf16> to vector<8x512xbf16>
    %10 = vector.extract_strided_slice %3 {offsets = [0, 16], sizes = [8, 512], strides = [1, 1]} : vector<8x768xbf16> to vector<8x512xbf16>
    %11 = vector.extract_strided_slice %3 {offsets = [0, 17], sizes = [8, 512], strides = [1, 1]} : vector<8x768xbf16> to vector<8x512xbf16>
    %12 = vector.extract_strided_slice %3 {offsets = [0, 18], sizes = [8, 512], strides = [1, 1]} : vector<8x768xbf16> to vector<8x512xbf16>
    %13 = vector.extract_strided_slice %3 {offsets = [0, 64], sizes = [8, 512], strides = [1, 1]} : vector<8x768xbf16> to vector<8x512xbf16>
    %14 = vector.extract_strided_slice %3 {offsets = [0, 65], sizes = [8, 512], strides = [1, 1]} : vector<8x768xbf16> to vector<8x512xbf16>
    %15 = vector.extract_strided_slice %3 {offsets = [0, 66], sizes = [8, 512], strides = [1, 1]} : vector<8x768xbf16> to vector<8x512xbf16>
    %16 = vector.extract_strided_slice %3 {offsets = [0, 72], sizes = [8, 512], strides = [1, 1]} : vector<8x768xbf16> to vector<8x512xbf16>
    %17 = vector.extract_strided_slice %3 {offsets = [0, 73], sizes = [8, 512], strides = [1, 1]} : vector<8x768xbf16> to vector<8x512xbf16>
    %18 = vector.extract_strided_slice %3 {offsets = [0, 74], sizes = [8, 512], strides = [1, 1]} : vector<8x768xbf16> to vector<8x512xbf16>
    %19 = vector.extract_strided_slice %3 {offsets = [0, 80], sizes = [8, 512], strides = [1, 1]} : vector<8x768xbf16> to vector<8x512xbf16>
    %20 = vector.extract_strided_slice %3 {offsets = [0, 81], sizes = [8, 512], strides = [1, 1]} : vector<8x768xbf16> to vector<8x512xbf16>
    %21 = vector.extract_strided_slice %3 {offsets = [0, 82], sizes = [8, 512], strides = [1, 1]} : vector<8x768xbf16> to vector<8x512xbf16>
    %22 = vector.extract_strided_slice %3 {offsets = [0, 128], sizes = [8, 512], strides = [1, 1]} : vector<8x768xbf16> to vector<8x512xbf16>
    %23 = vector.extract_strided_slice %3 {offsets = [0, 129], sizes = [8, 512], strides = [1, 1]} : vector<8x768xbf16> to vector<8x512xbf16>
    %24 = vector.extract_strided_slice %3 {offsets = [0, 130], sizes = [8, 512], strides = [1, 1]} : vector<8x768xbf16> to vector<8x512xbf16>
    %25 = vector.extract_strided_slice %3 {offsets = [0, 136], sizes = [8, 512], strides = [1, 1]} : vector<8x768xbf16> to vector<8x512xbf16>
    %26 = vector.extract_strided_slice %3 {offsets = [0, 137], sizes = [8, 512], strides = [1, 1]} : vector<8x768xbf16> to vector<8x512xbf16>
    %27 = vector.extract_strided_slice %3 {offsets = [0, 138], sizes = [8, 512], strides = [1, 1]} : vector<8x768xbf16> to vector<8x512xbf16>
    %28 = vector.extract_strided_slice %3 {offsets = [0, 144], sizes = [8, 512], strides = [1, 1]} : vector<8x768xbf16> to vector<8x512xbf16>
    %29 = vector.extract_strided_slice %3 {offsets = [0, 145], sizes = [8, 512], strides = [1, 1]} : vector<8x768xbf16> to vector<8x512xbf16>
    %30 = vector.extract_strided_slice %3 {offsets = [0, 146], sizes = [8, 512], strides = [1, 1]} : vector<8x768xbf16> to vector<8x512xbf16>
    %31 = tpu.concatenate %4, %5, %6, %7, %8, %9, %10, %11, %12, %13, %14, %15, %16, %17, %18, %19 in 0 : vector<8x512xbf16>, vector<8x512xbf16>, vector<8x512xbf16>, vector<8x512xbf16>, vector<8x512xbf16>, vector<8x512xbf16>, vector<8x512xbf16>, vector<8x512xbf16>, vector<8x512xbf16>, vector<8x512xbf16>, vector<8x512xbf16>, vector<8x512xbf16>, vector<8x512xbf16>, vector<8x512xbf16>, vector<8x512xbf16>, vector<8x512xbf16> -> vector<128x512xbf16>
    %32 = tpu.concatenate %20, %21, %22, %23, %24, %25, %26, %27, %28, %29, %30 in 0 : vector<8x512xbf16>, vector<8x512xbf16>, vector<8x512xbf16>, vector<8x512xbf16>, vector<8x512xbf16>, vector<8x512xbf16>, vector<8x512xbf16>, vector<8x512xbf16>, vector<8x512xbf16>, vector<8x512xbf16>, vector<8x512xbf16> -> vector<88x512xbf16>
    %33 = tpu.concatenate %31, %32 in 0 : vector<128x512xbf16>, vector<88x512xbf16> -> vector<216x512xbf16>
    %c0_3 = arith.constant 0 : index
    %c0_4 = arith.constant 0 : index
    %c0_5 = arith.constant 0 : index
    %34 = vector.load %arg4[%c0_3, %c0_4, %c0_5] : memref<1x8x216xbf16, #tpu.memory_space<vmem>>, vector<1x8x216xbf16>
    %35 = vector.shape_cast %34 : vector<1x8x216xbf16> to vector<8x216xbf16>
    %cst_6 = arith.constant dense<0.000000e+00> : vector<8x512xf32>
    %36 = tpu.matmul %35, %33, %cst_6 {dimension_numbers = #tpu.dot_dimension_numbers<[1], [0], [0], [1], [0, 0, 1, 1], [], []>} : vector<8x216xbf16>, vector<216x512xbf16>, vector<8x512xf32> -> vector<8x512xf32>
    %c0_7 = arith.constant 0 : index
    %c0_8 = arith.constant 0 : index
    %c0_9 = arith.constant 0 : index
    %37 = vector.load %arg5[%c0_7, %c0_8, %c0_9] : memref<1x8x1xf32, #tpu.memory_space<vmem>>, vector<1x8x1xf32>
    %38 = vector.shape_cast %37 : vector<1x8x1xf32> to vector<8x1xf32>
    %39 = vector.broadcast %38 : vector<8x1xf32> to vector<8x512xf32>
    %40 = arith.addf %36, %39 : vector<8x512xf32>
    %41 = arith.truncf %40 : vector<8x512xf32> to vector<8x512xbf16>
    %c0_10 = arith.constant 0 : index
    %c0_11 = arith.constant 0 : index
    %c0_12 = arith.constant 0 : index
    %c0_13 = arith.constant 0 : index
    %42 = vector.load %arg6[%c0_10, %c0_11, %c0_12, %c0_13] : memref<1x1x8x512xbf16, #tpu.memory_space<vmem>>, vector<1x1x8x512xbf16>
    %43 = vector.shape_cast %42 : vector<1x1x8x512xbf16> to vector<8x512xbf16>
    %44 = vector.shape_cast %41 : vector<8x512xbf16> to vector<1x1x8x512xbf16>
    tpu.vector_store %arg6[%c0_10, %c0_11, %c0_12, %c0_13], %44 {strides = array<i32>} : memref<1x1x8x512xbf16, #tpu.memory_space<vmem>>, vector<1x1x8x512xbf16>,
    return
  }
  func.func @transform_0(%arg0: i32, %arg1: i32, %arg2: i32) -> (i32, i32, i32, i32) {
    %c0_i32 = arith.constant 0 : i32
    %c0_i32_0 = arith.constant 0 : i32
    %c0_i32_1 = arith.constant 0 : i32
    return %arg0, %arg1, %c0_i32, %c0_i32_0 : i32, i32, i32, i32
  }
  func.func @transform_1(%arg0: i32, %arg1: i32, %arg2: i32) -> (i32, i32, i32) {
    %c0_i32 = arith.constant 0 : i32
    %c0_i32_0 = arith.constant 0 : i32
    return %arg0, %arg2, %c0_i32 : i32, i32, i32
  }
  func.func @transform_2(%arg0: i32, %arg1: i32, %arg2: i32) -> (i32, i32, i32) {
    %c0_i32 = arith.constant 0 : i32
    %c0_i32_0 = arith.constant 0 : i32
    return %arg0, %arg2, %c0_i32 : i32, i32, i32
  }
  func.func @transform_3(%arg0: i32, %arg1: i32, %arg2: i32) -> (i32, i32, i32, i32) {
    %c0_i32 = arith.constant 0 : i32
    %c0_i32_0 = arith.constant 0 : i32
    return %arg0, %arg1, %arg2, %c0_i32 : i32, i32, i32, i32
  }
}

module attributes {stable_mosaic.version = 11 : i64} {
  func.func @_out_gate_kernel(%arg0: i32, %arg1: memref<1x2x8x512xbf16, #tpu.memory_space<vmem>>, %arg2: memref<2x1x8x512xbf16, #tpu.memory_space<vmem>>, %arg3: memref<1x8x512xf32, #tpu.memory_space<vmem>>, %arg4: memref<2x8x8xbf16, #tpu.memory_space<vmem>>, %arg5: memref<8x1xf32, #tpu.memory_space<vmem>>, %arg6: memref<1x8x512xf32, #tpu.memory_space<vmem>>) attributes {dimension_semantics = [#tpu.dimension_semantics<parallel>], iteration_bounds = array<i64: 2>, scalar_prefetch = 0 : i64, scratch_operands = 0 : i64, tpu.core_type = #tpu.core_type<tc>, window_params = [{transform_indices = @transform_0, window_bounds = array<i64: 1, 2, 8, 512>}, {transform_indices = @transform_1, window_bounds = array<i64: 2, 1, 8, 512>}, {transform_indices = @transform_2, window_bounds = array<i64: 1, 8, 512>}, {pipeline_mode = #tpu.pipeline_mode<synchronous>, transform_indices = @transform_3, window_bounds = array<i64: 2, 8, 8>}, {pipeline_mode = #tpu.pipeline_mode<synchronous>, transform_indices = @transform_4, window_bounds = array<i64: 8, 1>}, {transform_indices = @transform_5, window_bounds = array<i64: 1, 8, 512>}]} {
    %c0 = arith.constant 0 : index
    %c0_0 = arith.constant 0 : index
    %c0_1 = arith.constant 0 : index
    %c0_2 = arith.constant 0 : index
    %0 = vector.load %arg1[%c0, %c0_0, %c0_1, %c0_2] : memref<1x2x8x512xbf16, #tpu.memory_space<vmem>>, vector<1x1x8x512xbf16>
    %1 = vector.shape_cast %0 : vector<1x1x8x512xbf16> to vector<8x512xbf16>
    %c0_3 = arith.constant 0 : index
    %c1 = arith.constant 1 : index
    %c0_4 = arith.constant 0 : index
    %c0_5 = arith.constant 0 : index
    %2 = vector.load %arg1[%c0_3, %c1, %c0_4, %c0_5] : memref<1x2x8x512xbf16, #tpu.memory_space<vmem>>, vector<1x1x8x512xbf16>
    %3 = vector.shape_cast %2 : vector<1x1x8x512xbf16> to vector<8x512xbf16>
    %4 = arith.extf %3 : vector<8x512xbf16> to vector<8x512xf32>
    %c0_6 = arith.constant 0 : index
    %c0_7 = arith.constant 0 : index
    %c0_8 = arith.constant 0 : index
    %c0_9 = arith.constant 0 : index
    %5 = vector.load %arg2[%c0_6, %c0_7, %c0_8, %c0_9] : memref<2x1x8x512xbf16, #tpu.memory_space<vmem>>, vector<1x1x8x512xbf16>
    %6 = vector.shape_cast %5 : vector<1x1x8x512xbf16> to vector<8x512xbf16>
    %7 = arith.extf %6 : vector<8x512xbf16> to vector<8x512xf32>
    %c1_10 = arith.constant 1 : index
    %c0_11 = arith.constant 0 : index
    %c0_12 = arith.constant 0 : index
    %c0_13 = arith.constant 0 : index
    %8 = vector.load %arg2[%c1_10, %c0_11, %c0_12, %c0_13] : memref<2x1x8x512xbf16, #tpu.memory_space<vmem>>, vector<1x1x8x512xbf16>
    %9 = vector.shape_cast %8 : vector<1x1x8x512xbf16> to vector<8x512xbf16>
    %10 = arith.extf %9 : vector<8x512xbf16> to vector<8x512xf32>
    %11 = arith.addf %4, %7 : vector<8x512xf32>
    %12 = arith.addf %11, %10 : vector<8x512xf32>
    %cst = arith.constant dense<0.000000e+00> : vector<8xf32>
    %13 = vector.multi_reduction <add>, %12, %cst [1] : vector<8x512xf32> to vector<8xf32>
    %14 = vector.shape_cast %13 : vector<8xf32> to vector<8x1xf32>
    %cst_14 = arith.constant 0.001953125 : f32
    %15 = vector.broadcast %cst_14 : f32 to vector<8x1xf32>
    %16 = arith.mulf %14, %15 : vector<8x1xf32>
    %17 = arith.mulf %12, %12 : vector<8x512xf32>
    %cst_15 = arith.constant dense<0.000000e+00> : vector<8xf32>
    %18 = vector.multi_reduction <add>, %17, %cst_15 [1] : vector<8x512xf32> to vector<8xf32>
    %19 = vector.shape_cast %18 : vector<8xf32> to vector<8x1xf32>
    %cst_16 = arith.constant 0.001953125 : f32
    %20 = vector.broadcast %cst_16 : f32 to vector<8x1xf32>
    %21 = arith.mulf %19, %20 : vector<8x1xf32>
    %22 = arith.mulf %16, %16 : vector<8x1xf32>
    %23 = arith.subf %21, %22 : vector<8x1xf32>
    %cst_17 = arith.constant 0.000000e+00 : f32
    %24 = vector.broadcast %cst_17 : f32 to vector<8x1xf32>
    %25 = arith.maximumf %23, %24 : vector<8x1xf32>
    %26 = vector.broadcast %16 : vector<8x1xf32> to vector<8x512xf32>
    %27 = arith.subf %12, %26 : vector<8x512xf32>
    %cst_18 = arith.constant 9.99999974E-6 : f32
    %28 = vector.broadcast %cst_18 : f32 to vector<8x1xf32>
    %29 = arith.addf %25, %28 : vector<8x1xf32>
    %30 = math.rsqrt %29 : vector<8x1xf32>
    %31 = vector.broadcast %30 : vector<8x1xf32> to vector<8x512xf32>
    %32 = arith.mulf %27, %31 : vector<8x512xf32>
    %33 = arith.negf %32 : vector<8x512xf32>
    %34 = math.exp %33 : vector<8x512xf32>
    %cst_19 = arith.constant 1.000000e+00 : f32
    %35 = vector.broadcast %cst_19 : f32 to vector<8x512xf32>
    %36 = arith.addf %35, %34 : vector<8x512xf32>
    %37 = arith.divf %35, %36 : vector<8x512xf32>
    %c0_20 = arith.constant 0 : index
    %c0_21 = arith.constant 0 : index
    %c0_22 = arith.constant 0 : index
    %38 = vector.load %arg4[%c0_20, %c0_21, %c0_22] : memref<2x8x8xbf16, #tpu.memory_space<vmem>>, vector<1x8x8xbf16>
    %39 = vector.shape_cast %38 : vector<1x8x8xbf16> to vector<8x8xbf16>
    %c0_23 = arith.constant 0 : index
    %c0_24 = arith.constant 0 : index
    %c0_25 = arith.constant 0 : index
    %40 = vector.load %arg3[%c0_23, %c0_24, %c0_25] : memref<1x8x512xf32, #tpu.memory_space<vmem>>, vector<1x8x512xf32>
    %41 = vector.shape_cast %40 : vector<1x8x512xf32> to vector<8x512xf32>
    %42 = arith.truncf %41 : vector<8x512xf32> to vector<8x512xbf16>
    %cst_26 = arith.constant dense<0.000000e+00> : vector<8x512xf32>
    %43 = tpu.matmul %39, %42, %cst_26 {dimension_numbers = #tpu.dot_dimension_numbers<[1], [0], [0], [1], [0, 0, 1, 1], [], []>} : vector<8x8xbf16>, vector<8x512xbf16>, vector<8x512xf32> -> vector<8x512xf32>
    %c1_27 = arith.constant 1 : index
    %c0_28 = arith.constant 0 : index
    %c0_29 = arith.constant 0 : index
    %44 = vector.load %arg4[%c1_27, %c0_28, %c0_29] : memref<2x8x8xbf16, #tpu.memory_space<vmem>>, vector<1x8x8xbf16>
    %45 = vector.shape_cast %44 : vector<1x8x8xbf16> to vector<8x8xbf16>
    %cst_30 = arith.constant dense<0.000000e+00> : vector<8x512xf32>
    %46 = tpu.matmul %45, %1, %cst_30 {dimension_numbers = #tpu.dot_dimension_numbers<[1], [0], [0], [1], [0, 0, 1, 1], [], []>} : vector<8x8xbf16>, vector<8x512xbf16>, vector<8x512xf32> -> vector<8x512xf32>
    %47 = arith.addf %43, %46 : vector<8x512xf32>
    %c0_31 = arith.constant 0 : index
    %c0_32 = arith.constant 0 : index
    %48 = vector.load %arg5[%c0_31, %c0_32] : memref<8x1xf32, #tpu.memory_space<vmem>>, vector<8x1xf32>
    %49 = vector.broadcast %48 : vector<8x1xf32> to vector<8x512xf32>
    %50 = arith.addf %47, %49 : vector<8x512xf32>
    %51 = math.tanh %50 : vector<8x512xf32>
    %52 = arith.mulf %37, %51 : vector<8x512xf32>
    %c0_33 = arith.constant 0 : index
    %c0_34 = arith.constant 0 : index
    %c0_35 = arith.constant 0 : index
    %53 = vector.load %arg6[%c0_33, %c0_34, %c0_35] : memref<1x8x512xf32, #tpu.memory_space<vmem>>, vector<1x8x512xf32>
    %54 = vector.shape_cast %53 : vector<1x8x512xf32> to vector<8x512xf32>
    %55 = vector.shape_cast %52 : vector<8x512xf32> to vector<1x8x512xf32>
    tpu.vector_store %arg6[%c0_33, %c0_34, %c0_35], %55 {strides = array<i32>} : memref<1x8x512xf32, #tpu.memory_space<vmem>>, vector<1x8x512xf32>,
    return
  }
  func.func @transform_0(%arg0: i32) -> (i32, i32, i32, i32) {
    %c1_i32 = arith.constant 1 : i32
    %c0_i32 = arith.constant 0 : i32
    %c0_i32_0 = arith.constant 0 : i32
    %c0_i32_1 = arith.constant 0 : i32
    return %arg0, %c1_i32, %c0_i32, %c0_i32_0 : i32, i32, i32, i32
  }
  func.func @transform_1(%arg0: i32) -> (i32, i32, i32, i32) {
    %c0_i32 = arith.constant 0 : i32
    %c0_i32_0 = arith.constant 0 : i32
    %c0_i32_1 = arith.constant 0 : i32
    %c0_i32_2 = arith.constant 0 : i32
    return %c0_i32, %arg0, %c0_i32_0, %c0_i32_1 : i32, i32, i32, i32
  }
  func.func @transform_2(%arg0: i32) -> (i32, i32, i32) {
    %c0_i32 = arith.constant 0 : i32
    %c0_i32_0 = arith.constant 0 : i32
    %c0_i32_1 = arith.constant 0 : i32
    return %arg0, %c0_i32, %c0_i32_0 : i32, i32, i32
  }
  func.func @transform_3(%arg0: i32) -> (i32, i32, i32) {
    %c0_i32 = arith.constant 0 : i32
    %c0_i32_0 = arith.constant 0 : i32
    %c0_i32_1 = arith.constant 0 : i32
    %c0_i32_2 = arith.constant 0 : i32
    return %c0_i32, %c0_i32_0, %c0_i32_1 : i32, i32, i32
  }
  func.func @transform_4(%arg0: i32) -> (i32, i32) {
    %c0_i32 = arith.constant 0 : i32
    %c0_i32_0 = arith.constant 0 : i32
    %c0_i32_1 = arith.constant 0 : i32
    return %c0_i32, %c0_i32_0 : i32, i32
  }
  func.func @transform_5(%arg0: i32) -> (i32, i32, i32) {
    %c0_i32 = arith.constant 0 : i32
    %c0_i32_0 = arith.constant 0 : i32
    %c0_i32_1 = arith.constant 0 : i32
    return %arg0, %c0_i32, %c0_i32_0 : i32, i32, i32
  }
}

module attributes {stable_mosaic.version = 11 : i64} {
  func.func @_c_update_kernel(%arg0: i32, %arg1: memref<1x1x8x512xbf16, #tpu.memory_space<vmem>>, %arg2: memref<2x1x8x512xf32, #tpu.memory_space<vmem>>, %arg3: memref<1x2x1x1xf32, #tpu.memory_space<vmem>>, %arg4: memref<8x512xf32, #tpu.memory_space<vmem>>, %arg5: memref<8x512xf32, #tpu.memory_space<vmem>>, %arg6: memref<1x8x512xf32, #tpu.memory_space<vmem>>) attributes {dimension_semantics = [#tpu.dimension_semantics<parallel>], iteration_bounds = array<i64: 2>, scalar_prefetch = 0 : i64, scratch_operands = 0 : i64, tpu.core_type = #tpu.core_type<tc>, window_params = [{transform_indices = @transform_0, window_bounds = array<i64: 1, 1, 8, 512>}, {transform_indices = @transform_1, window_bounds = array<i64: 2, 1, 8, 512>}, {transform_indices = @transform_2, window_bounds = array<i64: 1, 2, 1, 1>}, {pipeline_mode = #tpu.pipeline_mode<synchronous>, transform_indices = @transform_3, window_bounds = array<i64: 8, 512>}, {pipeline_mode = #tpu.pipeline_mode<synchronous>, transform_indices = @transform_4, window_bounds = array<i64: 8, 512>}, {transform_indices = @transform_5, window_bounds = array<i64: 1, 8, 512>}]} {
    %c0 = arith.constant 0 : index
    %c0_0 = arith.constant 0 : index
    %c0_1 = arith.constant 0 : index
    %c0_2 = arith.constant 0 : index
    %0 = vector.load %arg1[%c0, %c0_0, %c0_1, %c0_2] : memref<1x1x8x512xbf16, #tpu.memory_space<vmem>>, vector<1x1x8x512xbf16>
    %1 = vector.shape_cast %0 : vector<1x1x8x512xbf16> to vector<8x512xbf16>
    %2 = arith.extf %1 : vector<8x512xbf16> to vector<8x512xf32>
    %c0_3 = arith.constant 0 : index
    %c0_4 = arith.constant 0 : index
    %c0_5 = arith.constant 0 : index
    %c0_6 = arith.constant 0 : index
    %3 = vector.load %arg2[%c0_3, %c0_4, %c0_5, %c0_6] : memref<2x1x8x512xf32, #tpu.memory_space<vmem>>, vector<2x1x8x512xf32>
    %4 = vector.shape_cast %3 : vector<2x1x8x512xf32> to vector<2x8x512xf32>
    %c0_7 = arith.constant 0 : index
    %c0_8 = arith.constant 0 : index
    %c0_9 = arith.constant 0 : index
    %c0_10 = arith.constant 0 : index
    %5 = vector.load %arg3[%c0_7, %c0_8, %c0_9, %c0_10] : memref<1x2x1x1xf32, #tpu.memory_space<vmem>>, vector<1x2x1x1xf32>
    %6 = vector.shape_cast %5 : vector<1x2x1x1xf32> to vector<2x1x1xf32>
    %7 = vector.broadcast %6 : vector<2x1x1xf32> to vector<2x8x512xf32>
    %8 = arith.mulf %7, %4 : vector<2x8x512xf32>
    %cst = arith.constant dense<0.000000e+00> : vector<8x512xf32>
    %9 = vector.multi_reduction <add>, %8, %cst [0] : vector<2x8x512xf32> to vector<8x512xf32>
    %10 = vector.extract_strided_slice %4 {offsets = [0, 0, 0], sizes = [1, 8, 512], strides = [1, 1, 1]} : vector<2x8x512xf32> to vector<1x8x512xf32>
    %11 = vector.shape_cast %10 : vector<1x8x512xf32> to vector<8x512xf32>
    %12 = arith.addf %11, %9 : vector<8x512xf32>
    %13 = vector.shape_cast %12 : vector<8x512xf32> to vector<1x8x512xf32>
    %cst_11 = arith.constant dense<0.000000e+00> : vector<1xf32>
    %14 = vector.multi_reduction <add>, %13, %cst_11 [1, 2] : vector<1x8x512xf32> to vector<1xf32>
    %15 = vector.shape_cast %14 : vector<1xf32> to vector<1x1x1xf32>
    %16 = vector.extract %15[0, 0, 0] : f32 from vector<1x1x1xf32>
    %cst_12 = arith.constant 2.44140625E-4 : f32
    %17 = arith.mulf %16, %cst_12 : f32
    %18 = arith.mulf %12, %12 : vector<8x512xf32>
    %19 = vector.shape_cast %18 : vector<8x512xf32> to vector<1x8x512xf32>
    %cst_13 = arith.constant dense<0.000000e+00> : vector<1xf32>
    %20 = vector.multi_reduction <add>, %19, %cst_13 [1, 2] : vector<1x8x512xf32> to vector<1xf32>
    %21 = vector.shape_cast %20 : vector<1xf32> to vector<1x1x1xf32>
    %22 = vector.extract %21[0, 0, 0] : f32 from vector<1x1x1xf32>
    %cst_14 = arith.constant 2.44140625E-4 : f32
    %23 = arith.mulf %22, %cst_14 : f32
    %24 = arith.mulf %17, %17 : f32
    %25 = arith.subf %23, %24 : f32
    %cst_15 = arith.constant 0.000000e+00 : f32
    %26 = arith.maximumf %25, %cst_15 : f32
    %27 = vector.broadcast %17 : f32 to vector<8x512xf32>
    %28 = arith.subf %12, %27 : vector<8x512xf32>
    %cst_16 = arith.constant 9.99999974E-6 : f32
    %29 = arith.addf %26, %cst_16 : f32
    %30 = math.rsqrt %29 : f32
    %31 = vector.broadcast %30 : f32 to vector<8x512xf32>
    %32 = arith.mulf %28, %31 : vector<8x512xf32>
    %c0_17 = arith.constant 0 : index
    %c0_18 = arith.constant 0 : index
    %33 = vector.load %arg4[%c0_17, %c0_18] : memref<8x512xf32, #tpu.memory_space<vmem>>, vector<8x512xf32>
    %34 = arith.mulf %33, %32 : vector<8x512xf32>
    %35 = arith.addf %2, %34 : vector<8x512xf32>
    %c0_19 = arith.constant 0 : index
    %c0_20 = arith.constant 0 : index
    %36 = vector.load %arg5[%c0_19, %c0_20] : memref<8x512xf32, #tpu.memory_space<vmem>>, vector<8x512xf32>
    %37 = arith.addf %35, %36 : vector<8x512xf32>
    %c0_21 = arith.constant 0 : index
    %c0_22 = arith.constant 0 : index
    %c0_23 = arith.constant 0 : index
    %38 = vector.load %arg6[%c0_21, %c0_22, %c0_23] : memref<1x8x512xf32, #tpu.memory_space<vmem>>, vector<1x8x512xf32>
    %39 = vector.shape_cast %38 : vector<1x8x512xf32> to vector<8x512xf32>
    %40 = vector.shape_cast %37 : vector<8x512xf32> to vector<1x8x512xf32>
    tpu.vector_store %arg6[%c0_21, %c0_22, %c0_23], %40 {strides = array<i32>} : memref<1x8x512xf32, #tpu.memory_space<vmem>>, vector<1x8x512xf32>,
    return
  }
  func.func @transform_0(%arg0: i32) -> (i32, i32, i32, i32) {
    %c1_i32 = arith.constant 1 : i32
    %c0_i32 = arith.constant 0 : i32
    %c0_i32_0 = arith.constant 0 : i32
    %c0_i32_1 = arith.constant 0 : i32
    return %arg0, %c1_i32, %c0_i32, %c0_i32_0 : i32, i32, i32, i32
  }
  func.func @transform_1(%arg0: i32) -> (i32, i32, i32, i32) {
    %c0_i32 = arith.constant 0 : i32
    %c0_i32_0 = arith.constant 0 : i32
    %c0_i32_1 = arith.constant 0 : i32
    %c0_i32_2 = arith.constant 0 : i32
    return %c0_i32, %arg0, %c0_i32_0, %c0_i32_1 : i32, i32, i32, i32
  }
  func.func @transform_2(%arg0: i32) -> (i32, i32, i32, i32) {
    %c0_i32 = arith.constant 0 : i32
    %c0_i32_0 = arith.constant 0 : i32
    %c0_i32_1 = arith.constant 0 : i32
    %c0_i32_2 = arith.constant 0 : i32
    return %arg0, %c0_i32, %c0_i32_0, %c0_i32_1 : i32, i32, i32, i32
  }
  func.func @transform_3(%arg0: i32) -> (i32, i32) {
    %c0_i32 = arith.constant 0 : i32
    %c0_i32_0 = arith.constant 0 : i32
    %c0_i32_1 = arith.constant 0 : i32
    return %c0_i32, %c0_i32_0 : i32, i32
  }
  func.func @transform_4(%arg0: i32) -> (i32, i32) {
    %c0_i32 = arith.constant 0 : i32
    %c0_i32_0 = arith.constant 0 : i32
    %c0_i32_1 = arith.constant 0 : i32
    return %c0_i32, %c0_i32_0 : i32, i32
  }
  func.func @transform_5(%arg0: i32) -> (i32, i32, i32) {
    %c0_i32 = arith.constant 0 : i32
    %c0_i32_0 = arith.constant 0 : i32
    %c0_i32_1 = arith.constant 0 : i32
    return %arg0, %c0_i32, %c0_i32_0 : i32, i32, i32
  }
}

</mosaic_0001>

<llo_original>
// kernel: e3dlstm_forward.14
$region0: #{e3dlstm_forward.14}
  #allocation0 [shape = 'u32[]', space=smem, size = 0x4, offset = 0x4, fixed_abs, tag = 'smem constant byte address 0x4 - core index']
  #allocation1 [shape = 'u32[144,128]{1,0:T(1,128)}', space=vmem, size = 0x12000, scoped, tag = 'internal scratch']
  %s0 = inlined_call_operand.vmem [shape: f32[1,2,1,512], index: 0, kind: input, shape index: {}]
  %s1 = inlined_call_operand.vmem [shape: bf16[1,56,27], index: 1, kind: input, shape index: {}]
  %s2 = inlined_call_operand.vmem [shape: f32[1,56,1], index: 2, kind: input, shape index: {}]
  %s3 = inlined_call_operand.vmem [shape: bf16[1,2,56,512], index: 3, kind: output, shape index: {}]
  %s4 = sld [smem:[#allocation0]]
  $region45: #{e3dlstm_forward.14} parent=0
    _
  %s6 = ssub.s32 1, %s4
  %s7 = scalar_select 0, %s6, %s4
  loop: start=0, step=1, limit=4
  $region2: #{e3dlstm_forward.14} parent=0 // loop_pre_header
    _
  $region3: #{e3dlstm_forward.14} parent=0 // loop_header
    %s9 = sphi 0, %s13
    %p10 = scmp.ge.s32.totalorder %s9, 4
    %s16 = sphi 0, %s35
    %s17 = sphi 0, %s31
    %s18 = sphi 0, %s27
    %s19 = sphi 0, %s16
    %s20 = sphi 0, %s17
    %s21 = sphi 0, %s18
    %s22 = sphi 0, %s19
    %s23 = sphi 0, %s20
    %s24 = sphi 0, %s21
    %s40 = sphi 0, %s42
    %s43 = sphi 0, %s40
    %s44 = sphi 0, %s43
    %s60 = sphi 0, %s44
    %s68 = sphi 0, %s70
    %s71 = sphi 0, %s68
    %s72 = sphi 0, %s71
    %s88 = sphi 0, %s72
    %s96 = sphi 0, %s98
    %s99 = sphi 0, %s96
    %s100 = sphi 0, %s99
    %s116 = sphi 0, %s100
    %s126 = sphi 0, %s128
    %s129 = sphi 0, %s126
    %s130 = sphi 0, %s129
    %s146 = sphi 0, %s130
  $region4: #{e3dlstm_forward.14} parent=0 // loop_header_branch
    %12 = sbr.rel (%p10) target = $region8
  $region5: #{e3dlstm_forward.14} parent=0 // loop_body
    %s14 = ssub.s32 %s9, 1
    %s15 = ssub.s32 %s9, 2
    %s25 = sadd.s32 1, %s18
    %p26 = scmp.ge.s32.totalorder %s25, 1
    %s27 = scalar_select %p26, 0, %s25
    %s28 = sadd.s32 1, %s17
    %s29 = scalar_select %p26, %s28, %s17
    %p30 = scmp.ge.s32.totalorder %s29, 2
    %s31 = scalar_select %p30, 0, %s29
    %s32 = sadd.s32 1, %s16
    %s33 = scalar_select %p30, %s32, %s16
    %p34 = scmp.ge.s32.totalorder %s33, 1
    %s35 = scalar_select %p34, 0, %s33
    %s36 = ssub.s32 %s16, %s35
    %s37 = ssub.s32 %s17, %s31
    %s38 = sor.u32 %s36, %s37
    %p39 = scmp.eq.s32.totalorder %s38, 0
    %s41 = sadd.s32 %s40, 1
    %s42 = scalar_select %p39, %s40, %s41
    %p45 = pneg %p39
    %p46 = scmp.eq.s32.totalorder %s9, 1
    %p47 = por %p45, %p46
    %p48 = scmp.ne.s32.totalorder %s40, %s43
    %p49 = scmp.eq.s32.totalorder %s9, 0
    %p50 = por %p48, %p49
    %p51 = scmp.ne.s32.totalorder %s40, %s43
    %p52 = scmp.eq.s32.totalorder %s14, 1
    %p53 = por %p51, %p52
    %p54 = scmp.ne.s32.totalorder %s43, %s44
    %p55 = scmp.eq.s32.totalorder %s14, 0
    %p56 = por %p54, %p55
    %p57 = scmp.ne.s32.totalorder %s43, %s44
    %p58 = scmp.eq.s32.totalorder %s15, 1
    %p59 = por %p57, %p58
    %p61 = scmp.ne.s32.totalorder %s44, %s60
    %p62 = scmp.eq.s32.totalorder %s15, 0
    %p63 = por %p61, %p62
    %s64 = ssub.s32 %s16, %s35
    %s65 = ssub.s32 %s18, %s27
    %s66 = sor.u32 %s64, %s65
    %p67 = scmp.eq.s32.totalorder %s66, 0
    %s69 = sadd.s32 %s68, 1
    %s70 = scalar_select %p67, %s68, %s69
    %p73 = pneg %p67
    %p74 = scmp.eq.s32.totalorder %s9, 1
    %p75 = por %p73, %p74
    %p76 = scmp.ne.s32.totalorder %s68, %s71
    %p77 = scmp.eq.s32.totalorder %s9, 0
    %p78 = por %p76, %p77
    %p79 = scmp.ne.s32.totalorder %s68, %s71
    %p80 = scmp.eq.s32.totalorder %s14, 1
    %p81 = por %p79, %p80
    %p82 = scmp.ne.s32.totalorder %s71, %s72
    %p83 = scmp.eq.s32.totalorder %s14, 0
    %p84 = por %p82, %p83
    %p85 = scmp.ne.s32.totalorder %s71, %s72
    %p86 = scmp.eq.s32.totalorder %s15, 1
    %p87 = por %p85, %p86
    %p89 = scmp.ne.s32.totalorder %s72, %s88
    %p90 = scmp.eq.s32.totalorder %s15, 0
    %p91 = por %p89, %p90
    %s92 = ssub.s32 %s16, %s35
    %s93 = ssub.s32 %s18, %s27
    %s94 = sor.u32 %s92, %s93
    %p95 = scmp.eq.s32.totalorder %s94, 0
    %s97 = sadd.s32 %s96, 1
    %s98 = scalar_select %p95, %s96, %s97
    %p101 = pneg %p95
    %p102 = scmp.eq.s32.totalorder %s9, 1
    %p103 = por %p101, %p102
    %p104 = scmp.ne.s32.totalorder %s96, %s99
    %p105 = scmp.eq.s32.totalorder %s9, 0
    %p106 = por %p104, %p105
    %p107 = scmp.ne.s32.totalorder %s96, %s99
    %p108 = scmp.eq.s32.totalorder %s14, 1
    %p109 = por %p107, %p108
    %p110 = scmp.ne.s32.totalorder %s99, %s100
    %p111 = scmp.eq.s32.totalorder %s14, 0
    %p112 = por %p110, %p111
    %p113 = scmp.ne.s32.totalorder %s99, %s100
    %p114 = scmp.eq.s32.totalorder %s15, 1
    %p115 = por %p113, %p114
    %p117 = scmp.ne.s32.totalorder %s100, %s116
    %p118 = scmp.eq.s32.totalorder %s15, 0
    %p119 = por %p117, %p118
    %s120 = ssub.s32 %s16, %s35
    %s121 = ssub.s32 %s17, %s31
    %s122 = sor.u32 %s120, %s121
    %s123 = ssub.s32 %s18, %s27
    %s124 = sor.u32 %s122, %s123
    %p125 = scmp.eq.s32.totalorder %s124, 0
    %s127 = sadd.s32 %s126, 1
    %s128 = scalar_select %p125, %s126, %s127
    %p131 = pneg %p125
    %p132 = scmp.eq.s32.totalorder %s9, 1
    %p133 = por %p131, %p132
    %p134 = scmp.ne.s32.totalorder %s126, %s129
    %p135 = scmp.eq.s32.totalorder %s9, 0
    %p136 = por %p134, %p135
    %p137 = scmp.ne.s32.totalorder %s126, %s129
    %p138 = scmp.eq.s32.totalorder %s14, 1
    %p139 = por %p137, %p138
    %p140 = scmp.ne.s32.totalorder %s129, %s130
    %p141 = scmp.eq.s32.totalorder %s14, 0
    %p142 = por %p140, %p141
    %p143 = scmp.ne.s32.totalorder %s129, %s130
    %p144 = scmp.eq.s32.totalorder %s15, 1
    %p145 = por %p143, %p144
    %p147 = scmp.ne.s32.totalorder %s130, %s146
    %p148 = scmp.eq.s32.totalorder %s15, 0
    %p149 = por %p147, %p148
    %p150 = scmp.le.s32.totalorder 1, %s9
    %p151 = scmp.lt.s32.totalorder %s9, 3
    %p152 = pnand %p150, %p151
    %p153 = pneg %p152
    // Predicated region
    $region9: #{e3dlstm_forward.14} parent=5 // pred_check
      _
    $region10: #{e3dlstm_forward.14} parent=5 // pred_check_branch
      %155 = sbr.rel (%p152) target = $region12
    $region11: #{e3dlstm_forward.14} parent=5 // pred_region
      %s156 = ssub.s32 %s9, 1
      // Predicated region
      $region13: #{e3dlstm_forward.14} parent=11 // pred_check
        %p157 = pneg %p84
      $region14: #{e3dlstm_forward.14} parent=11 // pred_check_branch
        %159 = sbr.rel (%p157) target = $region16
      $region15: #{e3dlstm_forward.14} parent=11 // pred_region
        %s160 = smul.u32 7, %s21
        %p161 = scmp.lt.s32.totalorder %s19, 0
        %s162 = scalar_select %p161, %s19, 0
        %p163 = scmp.lt.s32.totalorder %s160, 6
        %s164 = scalar_select %p163, %s160, 6
        %s165 = smul.addr %s162, 7
        %s166 = sadd.s32 %s164, %s165
        %s167 = smul.addr %s166, 4
        %s168 = scalar_lea.vmem %s1, %s167
        %s169 = smul.u32 7, %s21
      $region16: #{e3dlstm_forward.14} parent=11 // pred_fallthru
        _
      // Predicated region
      $region17: #{e3dlstm_forward.14} parent=11 // pred_check
        %p170 = pneg %p112
      $region18: #{e3dlstm_forward.14} parent=11 // pred_check_branch
        %172 = sbr.rel (%p170) target = $region20
      $region19: #{e3dlstm_forward.14} parent=11 // pred_region
        %s173 = smul.u32 7, %s21
        %p174 = scmp.lt.s32.totalorder %s19, 0
        %s175 = scalar_select %p174, %s19, 0
        %p176 = scmp.lt.s32.totalorder %s173, 6
        %s177 = scalar_select %p176, %s173, 6
        %s178 = smul.addr %s175, 7
        %s179 = sadd.s32 %s177, %s178
        %s180 = smul.addr %s179, 8
        %s181 = scalar_lea.vmem %s2, %s180
        %s182 = smul.u32 7, %s21
      $region20: #{e3dlstm_forward.14} parent=11 // pred_fallthru
        _
    $region12: #{e3dlstm_forward.14} parent=5 // pred_fallthru
      _
    %p183 = scmp.lt.s32.totalorder %s9, 2
    // Predicated region
    $region21: #{e3dlstm_forward.14} parent=5 // pred_check
      %p184 = pneg %p183
    $region22: #{e3dlstm_forward.14} parent=5 // pred_check_branch
      %186 = sbr.rel (%p184) target = $region24
    $region23: #{e3dlstm_forward.14} parent=5 // pred_region
      // Predicated region
      $region25: #{e3dlstm_forward.14} parent=23 // pred_check
        %p187 = pneg %p50
      $region26: #{e3dlstm_forward.14} parent=23 // pred_check_branch
        %189 = sbr.rel (%p187) target = $region28
      $region27: #{e3dlstm_forward.14} parent=23 // pred_region
        %p190 = scmp.lt.s32.totalorder %s16, 0
        %s191 = scalar_select %p190, %s16, 0
        %p192 = scmp.lt.s32.totalorder %s17, 1
        %s193 = scalar_select %p192, %s17, 1
        %s194 = smul.addr %s193, 4
        %s195 = smul.addr %s191, 8
        %s196 = sadd.s32 %s194, %s195
        %s197 = scalar_lea.vmem %s0, %s196
      $region28: #{e3dlstm_forward.14} parent=23 // pred_fallthru
        _
    $region24: #{e3dlstm_forward.14} parent=5 // pred_fallthru
      _
    %p198 = scmp.le.s32.totalorder 1, %s9
    %p199 = scmp.lt.s32.totalorder %s9, 3
    %p200 = pnand %p198, %p199
    %p201 = pneg %p200
    // Predicated region
    $region29: #{e3dlstm_forward.14} parent=5 // pred_check
      _
    $region30: #{e3dlstm_forward.14} parent=5 // pred_check_branch
      %203 = sbr.rel (%p200) target = $region32
    $region31: #{e3dlstm_forward.14} parent=5 // pred_region
      %s204 = ssub.s32 %s9, 1
      %p205 = scmp.lt.s32.totalorder %s19, 0
      %s206 = scalar_select %p205, %s19, 0
      %p207 = scmp.lt.s32.totalorder %s20, 1
      %s208 = scalar_select %p207, %s20, 1
      %s209 = smul.addr %s208, 4
      %s210 = smul.addr %s206, 8
      %s211 = sadd.s32 %s209, %s210
      %s212 = scalar_lea.vmem %s0, %s211
      %p213 = pneg %p56
      %p214 = pneg %p53
      %s215 = smul.u32 7, %s21
      %p216 = scmp.lt.s32.totalorder %s19, 0
      %s217 = scalar_select %p216, %s19, 0
      %p218 = scmp.lt.s32.totalorder %s215, 6
      %s219 = scalar_select %p218, %s215, 6
      %s220 = smul.addr %s217, 7
      %s221 = sadd.s32 %s219, %s220
      %s222 = smul.addr %s221, 4
      %s223 = scalar_lea.vmem %s1, %s222
      %p224 = pneg %p84
      %p225 = pneg %p81
      %s226 = smul.u32 7, %s21
      %p227 = scmp.lt.s32.totalorder %s19, 0
      %s228 = scalar_select %p227, %s19, 0
      %p229 = scmp.lt.s32.totalorder %s226, 6
      %s230 = scalar_select %p229, %s226, 6
      %s231 = smul.addr %s228, 7
      %s232 = sadd.s32 %s230, %s231
      %s233 = smul.addr %s232, 8
      %s234 = scalar_lea.vmem %s2, %s233
      %p235 = pneg %p112
      %p236 = pneg %p109
      %p237 = pneg %p142
      %p238 = pneg %p139
      %s239 = smul.u32 7, %s21
      %p240 = scmp.lt.s32.totalorder %s19, 0
      %s241 = scalar_select %p240, %s19, 0
      %p242 = scmp.lt.s32.totalorder %s20, 1
      %s243 = scalar_select %p242, %s20, 1
      %p244 = scmp.lt.s32.totalorder %s239, 6
      %s245 = scalar_select %p244, %s239, 6
      %s246 = smul.addr %s245, 4
      %s247 = smul.addr %s243, 28
      %s248 = sadd.s32 %s246, %s247
      %s249 = smul.addr %s241, 56
      %s250 = sadd.s32 %s248, %s249
      %s251 = smul.addr %s250, 4
      %s252 = scalar_lea.vmem %s3, %s251
      %p253 = scmp.lt.s32.totalorder %s19, 0
      %s254 = scalar_select %p253, %s19, 0
      %p255 = scmp.lt.s32.totalorder %s20, 1
      %s256 = scalar_select %p255, %s20, 1
      %s257 = smul.addr %s256, 4
      %s258 = smul.addr %s254, 8
      %s259 = sadd.s32 %s257, %s258
      %s260 = scalar_lea.vmem %s0, %s259
      %s261 = smul.u32 7, %s21
      %p262 = scmp.lt.s32.totalorder %s19, 0
      %s263 = scalar_select %p262, %s19, 0
      %p264 = scmp.lt.s32.totalorder %s261, 6
      %s265 = scalar_select %p264, %s261, 6
      %s266 = smul.addr %s263, 7
      %s267 = sadd.s32 %s265, %s266
      %s268 = smul.addr %s267, 4
      %s269 = scalar_lea.vmem %s1, %s268
      %s270 = smul.u32 7, %s21
      %s271 = smul.u32 7, %s21
      %p272 = scmp.lt.s32.totalorder %s19, 0
      %s273 = scalar_select %p272, %s19, 0
      %p274 = scmp.lt.s32.totalorder %s271, 6
      %s275 = scalar_select %p274, %s271, 6
      %s276 = smul.addr %s273, 7
      %s277 = sadd.s32 %s275, %s276
      %s278 = smul.addr %s277, 8
      %s279 = scalar_lea.vmem %s2, %s278
      %s280 = smul.u32 7, %s21
      %s281 = smul.u32 7, %s21
      %p282 = scmp.lt.s32.totalorder %s19, 0
      %s283 = scalar_select %p282, %s19, 0
      %p284 = scmp.lt.s32.totalorder %s20, 1
      %s285 = scalar_select %p284, %s20, 1
      %p286 = scmp.lt.s32.totalorder %s281, 6
      %s287 = scalar_select %p286, %s281, 6
      %s288 = smul.addr %s287, 4
      %s289 = smul.addr %s285, 28
      %s290 = sadd.s32 %s288, %s289
      %s291 = smul.addr %s283, 56
      %s292 = sadd.s32 %s290, %s291
      %s293 = smul.addr %s292, 4
      %s294 = scalar_lea.vmem %s3, %s293
      %s295 = smul.u32 7, %s21
      %v297 = vld [vmem:[%s260] sm:$0xf]
      %v299 = vlaneseq
      %v300 = vshrl.u32 %v299, 7
      %v301 = vsub.s32 0, %v300
      %v302 = vrot.slane %v297, %v301
      %v303 = vlaneseq
      %v304 = vshrl.u32 %v303, 7
      %v305 = vsub.s32 1, %v304
      %v306 = vrot.slane %v297, %v305
      %v307 = vlaneseq
      %v308 = vshrl.u32 %v307, 7
      %v309 = vsub.s32 2, %v308
      %v310 = vrot.slane %v297, %v309
      %v311 = vlaneseq
      %v312 = vshrl.u32 %v311, 7
      %v313 = vsub.s32 3, %v312
      %v314 = vrot.slane %v297, %v313
      %v319 = vpack.c.bf16 %v302, %v302
      %v320 = vpack.c.bf16 %v306, %v306
      %v321 = vpack.c.bf16 %v310, %v310
      %v322 = vpack.c.bf16 %v314, %v314
      %v324 = vshll.u32 %v319, 16
      %v327 = vshll.u32 %v320, 16
      %v330 = vshll.u32 %v321, 16
      %v333 = vshll.u32 %v322, 16
      %v336 = vshll.u32 0, 16
      %338 = vrot.lane.b32.xlu0 %v324, 127
      %v339 = vpop.permute.xlu0 %338
      %340 = vrot.lane.b32.xlu0 %v327, 127
      %v341 = vpop.permute.xlu0 %340
      %342 = vrot.lane.b32.xlu0 %v330, 127
      %v343 = vpop.permute.xlu0 %342
      %344 = vrot.lane.b32.xlu0 %v333, 127
      %v345 = vpop.permute.xlu0 %344
      %346 = vrot.lane.b32.xlu0 %v336, 127
      %v347 = vpop.permute.xlu0 %346
      %vm348 = vcmask 1039360
      %v349 = vsel %vm348, %v339, %v341
      %v350 = vsel %vm348, %v341, %v343
      %v351 = vsel %vm348, %v343, %v345
      %v352 = vsel %vm348, %v345, %v347
      %v362 = vrot.slane %v319, 7
      %v363 = vrot.slane %v320, 7
      %v364 = vrot.slane %v321, 7
      %v365 = vrot.slane %v322, 7
      %v366 = vrot.slane 0, 7
      %367 = vrot.lane.b32.xlu0 %v362, 126
      %v368 = vpop.permute.xlu0 %367
      %369 = vrot.lane.b32.xlu0 %v363, 126
      %v370 = vpop.permute.xlu0 %369
      %371 = vrot.lane.b32.xlu0 %v364, 126
      %v372 = vpop.permute.xlu0 %371
      %373 = vrot.lane.b32.xlu0 %v365, 126
      %v374 = vpop.permute.xlu0 %373
      %375 = vrot.lane.b32.xlu0 %v366, 126
      %v376 = vpop.permute.xlu0 %375
      %vm377 = vcmask 1031168
      %v378 = vsel %vm377, %v368, %v370
      %v379 = vsel %vm377, %v370, %v372
      %v380 = vsel %vm377, %v372, %v374
      %v381 = vsel %vm377, %v374, %v376
      %v382 = vrot.slane %v324, 7
      %v383 = vrot.slane %v327, 7
      %v384 = vrot.slane %v330, 7
      %v385 = vrot.slane %v333, 7
      %v386 = vrot.slane %v336, 7
      %387 = vrot.lane.b32.xlu0 %v382, 120
      %v388 = vpop.permute.xlu0 %387
      %389 = vrot.lane.b32.xlu0 %v383, 120
      %v390 = vpop.permute.xlu0 %389
      %391 = vrot.lane.b32.xlu0 %v384, 120
      %v392 = vpop.permute.xlu0 %391
      %393 = vrot.lane.b32.xlu0 %v385, 120
      %v394 = vpop.permute.xlu0 %393
      %395 = vrot.lane.b32.xlu0 %v386, 120
      %v396 = vpop.permute.xlu0 %395
      %vm397 = vcmask 982016
      %v398 = vsel %vm397, %v388, %v390
      %v399 = vsel %vm397, %v390, %v392
      %v400 = vsel %vm397, %v392, %v394
      %v401 = vsel %vm397, %v394, %v396
      %v406 = vrot.slane %v319, 6
      %v407 = vrot.slane %v320, 6
      %v408 = vrot.slane %v321, 6
      %v409 = vrot.slane %v322, 6
      %v410 = vrot.slane 0, 6
      %411 = vrot.lane.b32.xlu0 %v406, 119
      %v412 = vpop.permute.xlu0 %411
      %413 = vrot.lane.b32.xlu0 %v407, 119
      %v414 = vpop.permute.xlu0 %413
      %415 = vrot.lane.b32.xlu0 %v408, 119
      %v416 = vpop.permute.xlu0 %415
      %417 = vrot.lane.b32.xlu0 %v409, 119
      %v418 = vpop.permute.xlu0 %417
      %419 = vrot.lane.b32.xlu0 %v410, 119
      %v420 = vpop.permute.xlu0 %419
      %vm421 = vcmask 973824
      %v422 = vsel %vm421, %v412, %v414
      %v423 = vsel %vm421, %v414, %v416
      %v424 = vsel %vm421, %v416, %v418
      %v425 = vsel %vm421, %v418, %v420
      %v426 = vrot.slane %v324, 6
      %v427 = vrot.slane %v327, 6
      %v428 = vrot.slane %v330, 6
      %v429 = vrot.slane %v333, 6
      %v430 = vrot.slane %v336, 6
      %431 = vrot.lane.b32.xlu0 %v426, 118
      %v432 = vpop.permute.xlu0 %431
      %433 = vrot.lane.b32.xlu0 %v427, 118
      %v434 = vpop.permute.xlu0 %433
      %435 = vrot.lane.b32.xlu0 %v428, 118
      %v436 = vpop.permute.xlu0 %435
      %437 = vrot.lane.b32.xlu0 %v429, 118
      %v438 = vpop.permute.xlu0 %437
      %439 = vrot.lane.b32.xlu0 %v430, 118
      %v440 = vpop.permute.xlu0 %439
      %vm441 = vcmask 965632
      %v442 = vsel %vm441, %v432, %v434
      %v443 = vsel %vm441, %v434, %v436
      %v444 = vsel %vm441, %v436, %v438
      %v445 = vsel %vm441, %v438, %v440
      %v450 = vrot.slane %v319, 5
      %v451 = vrot.slane %v320, 5
      %v452 = vrot.slane %v321, 5
      %v453 = vrot.slane %v322, 5
      %v454 = vrot.slane 0, 5
      %455 = vrot.lane.b32.xlu0 %v450, 112
      %v456 = vpop.permute.xlu0 %455
      %457 = vrot.lane.b32.xlu0 %v451, 112
      %v458 = vpop.permute.xlu0 %457
      %459 = vrot.lane.b32.xlu0 %v452, 112
      %v460 = vpop.permute.xlu0 %459
      %461 = vrot.lane.b32.xlu0 %v453, 112
      %v462 = vpop.permute.xlu0 %461
      %463 = vrot.lane.b32.xlu0 %v454, 112
      %v464 = vpop.permute.xlu0 %463
      %vm465 = vcmask 916480
      %v466 = vsel %vm465, %v456, %v458
      %v467 = vsel %vm465, %v458, %v460
      %v468 = vsel %vm465, %v460, %v462
      %v469 = vsel %vm465, %v462, %v464
      %v470 = vrot.slane %v324, 5
      %v471 = vrot.slane %v327, 5
      %v472 = vrot.slane %v330, 5
      %v473 = vrot.slane %v333, 5
      %v474 = vrot.slane %v336, 5
      %475 = vrot.lane.b32.xlu0 %v470, 111
      %v476 = vpop.permute.xlu0 %475
      %477 = vrot.lane.b32.xlu0 %v471, 111
      %v478 = vpop.permute.xlu0 %477
      %479 = vrot.lane.b32.xlu0 %v472, 111
      %v480 = vpop.permute.xlu0 %479
      %481 = vrot.lane.b32.xlu0 %v473, 111
      %v482 = vpop.permute.xlu0 %481
      %483 = vrot.lane.b32.xlu0 %v474, 111
      %v484 = vpop.permute.xlu0 %483
      %vm485 = vcmask 908288
      %v486 = vsel %vm485, %v476, %v478
      %v487 = vsel %vm485, %v478, %v480
      %v488 = vsel %vm485, %v480, %v482
      %v489 = vsel %vm485, %v482, %v484
      %v494 = vrot.slane %v319, 4
      %v495 = vrot.slane %v320, 4
      %v496 = vrot.slane %v321, 4
      %v497 = vrot.slane %v322, 4
      %v498 = vrot.slane 0, 4
      %499 = vrot.lane.b32.xlu0 %v494, 110
      %v500 = vpop.permute.xlu0 %499
      %501 = vrot.lane.b32.xlu0 %v495, 110
      %v502 = vpop.permute.xlu0 %501
      %503 = vrot.lane.b32.xlu0 %v496, 110
      %v504 = vpop.permute.xlu0 %503
      %505 = vrot.lane.b32.xlu0 %v497, 110
      %v506 = vpop.permute.xlu0 %505
      %507 = vrot.lane.b32.xlu0 %v498, 110
      %v508 = vpop.permute.xlu0 %507
      %vm509 = vcmask 900096
      %v510 = vsel %vm509, %v500, %v502
      %v511 = vsel %vm509, %v502, %v504
      %v512 = vsel %vm509, %v504, %v506
      %v513 = vsel %vm509, %v506, %v508
      %v514 = vrot.slane %v324, 4
      %v515 = vrot.slane %v327, 4
      %v516 = vrot.slane %v330, 4
      %v517 = vrot.slane %v333, 4
      %v518 = vrot.slane %v336, 4
      %519 = vrot.lane.b32.xlu0 %v514, 64
      %v520 = vpop.permute.xlu0 %519
      %521 = vrot.lane.b32.xlu0 %v515, 64
      %v522 = vpop.permute.xlu0 %521
      %523 = vrot.lane.b32.xlu0 %v516, 64
      %v524 = vpop.permute.xlu0 %523
      %525 = vrot.lane.b32.xlu0 %v517, 64
      %v526 = vpop.permute.xlu0 %525
      %527 = vrot.lane.b32.xlu0 %v518, 64
      %v528 = vpop.permute.xlu0 %527
      %vm529 = vcmask 523264
      %v530 = vsel %vm529, %v520, %v522
      %v531 = vsel %vm529, %v522, %v524
      %v532 = vsel %vm529, %v524, %v526
      %v533 = vsel %vm529, %v526, %v528
      %v538 = vrot.slane %v319, 3
      %v539 = vrot.slane %v320, 3
      %v540 = vrot.slane %v321, 3
      %v541 = vrot.slane %v322, 3
      %v542 = vrot.slane 0, 3
      %543 = vrot.lane.b32.xlu0 %v538, 63
      %v544 = vpop.permute.xlu0 %543
      %545 = vrot.lane.b32.xlu0 %v539, 63
      %v546 = vpop.permute.xlu0 %545
      %547 = vrot.lane.b32.xlu0 %v540, 63
      %v548 = vpop.permute.xlu0 %547
      %549 = vrot.lane.b32.xlu0 %v541, 63
      %v550 = vpop.permute.xlu0 %549
      %551 = vrot.lane.b32.xlu0 %v542, 63
      %v552 = vpop.permute.xlu0 %551
      %vm553 = vcmask 515072
      %v554 = vsel %vm553, %v544, %v546
      %v555 = vsel %vm553, %v546, %v548
      %v556 = vsel %vm553, %v548, %v550
      %v557 = vsel %vm553, %v550, %v552
      %v558 = vrot.slane %v324, 3
      %v559 = vrot.slane %v327, 3
      %v560 = vrot.slane %v330, 3
      %v561 = vrot.slane %v333, 3
      %v562 = vrot.slane %v336, 3
      %563 = vrot.lane.b32.xlu0 %v558, 62
      %v564 = vpop.permute.xlu0 %563
      %565 = vrot.lane.b32.xlu0 %v559, 62
      %v566 = vpop.permute.xlu0 %565
      %567 = vrot.lane.b32.xlu0 %v560, 62
      %v568 = vpop.permute.xlu0 %567
      %569 = vrot.lane.b32.xlu0 %v561, 62
      %v570 = vpop.permute.xlu0 %569
      %571 = vrot.lane.b32.xlu0 %v562, 62
      %v572 = vpop.permute.xlu0 %571
      %vm573 = vcmask 506880
      %v574 = vsel %vm573, %v564, %v566
      %v575 = vsel %vm573, %v566, %v568
      %v576 = vsel %vm573, %v568, %v570
      %v577 = vsel %vm573, %v570, %v572
      %v582 = vrot.slane %v319, 2
      %v583 = vrot.slane %v320, 2
      %v584 = vrot.slane %v321, 2
      %v585 = vrot.slane %v322, 2
      %v586 = vrot.slane 0, 2
      %587 = vrot.lane.b32.xlu0 %v582, 56
      %v588 = vpop.permute.xlu0 %587
      %589 = vrot.lane.b32.xlu0 %v583, 56
      %v590 = vpop.permute.xlu0 %589
      %591 = vrot.lane.b32.xlu0 %v584, 56
      %v592 = vpop.permute.xlu0 %591
      %593 = vrot.lane.b32.xlu0 %v585, 56
      %v594 = vpop.permute.xlu0 %593
      %595 = vrot.lane.b32.xlu0 %v586, 56
      %v596 = vpop.permute.xlu0 %595
      %vm597 = vcmask 457728
      %v598 = vsel %vm597, %v588, %v590
      %v599 = vsel %vm597, %v590, %v592
      %v600 = vsel %vm597, %v592, %v594
      %v601 = vsel %vm597, %v594, %v596
      %v602 = vrot.slane %v324, 2
      %v603 = vrot.slane %v327, 2
      %v604 = vrot.slane %v330, 2
      %v605 = vrot.slane %v333, 2
      %v606 = vrot.slane %v336, 2
      %607 = vrot.lane.b32.xlu0 %v602, 55
      %v608 = vpop.permute.xlu0 %607
      %609 = vrot.lane.b32.xlu0 %v603, 55
      %v610 = vpop.permute.xlu0 %609
      %611 = vrot.lane.b32.xlu0 %v604, 55
      %v612 = vpop.permute.xlu0 %611
      %613 = vrot.lane.b32.xlu0 %v605, 55
      %v614 = vpop.permute.xlu0 %613
      %615 = vrot.lane.b32.xlu0 %v606, 55
      %v616 = vpop.permute.xlu0 %615
      %vm617 = vcmask 449536
      %v618 = vsel %vm617, %v608, %v610
      %v619 = vsel %vm617, %v610, %v612
      %v620 = vsel %vm617, %v612, %v614
      %v621 = vsel %vm617, %v614, %v616
      %v626 = vrot.slane %v319, 1
      %v627 = vrot.slane %v320, 1
      %v628 = vrot.slane %v321, 1
      %v629 = vrot.slane %v322, 1
      %v630 = vrot.slane 0, 1
      %631 = vrot.lane.b32.xlu0 %v626, 54
      %v632 = vpop.permute.xlu0 %631
      %633 = vrot.lane.b32.xlu0 %v627, 54
      %v634 = vpop.permute.xlu0 %633
      %635 = vrot.lane.b32.xlu0 %v628, 54
      %v636 = vpop.permute.xlu0 %635
      %637 = vrot.lane.b32.xlu0 %v629, 54
      %v638 = vpop.permute.xlu0 %637
      %639 = vrot.lane.b32.xlu0 %v630, 54
      %v640 = vpop.permute.xlu0 %639
      %vm641 = vcmask 441344
      %v642 = vsel %vm641, %v632, %v634
      %v643 = vsel %vm641, %v634, %v636
      %v644 = vsel %vm641, %v636, %v638
      %v645 = vsel %vm641, %v638, %v640
      %v646 = vrot.slane %v324, 1
      %v647 = vrot.slane %v327, 1
      %v648 = vrot.slane %v330, 1
      %v649 = vrot.slane %v333, 1
      %v650 = vrot.slane %v336, 1
      %651 = vrot.lane.b32.xlu0 %v646, 48
      %v652 = vpop.permute.xlu0 %651
      %653 = vrot.lane.b32.xlu0 %v647, 48
      %v654 = vpop.permute.xlu0 %653
      %655 = vrot.lane.b32.xlu0 %v648, 48
      %v656 = vpop.permute.xlu0 %655
      %657 = vrot.lane.b32.xlu0 %v649, 48
      %v658 = vpop.permute.xlu0 %657
      %659 = vrot.lane.b32.xlu0 %v650, 48
      %v660 = vpop.permute.xlu0 %659
      %vm661 = vcmask 392192
      %v662 = vsel %vm661, %v652, %v654
      %v663 = vsel %vm661, %v654, %v656
      %v664 = vsel %vm661, %v656, %v658
      %v665 = vsel %vm661, %v658, %v660
      %vm670 = vcmask 1040384
      %vm671 = vsmask.f32 256
      %vm672 = vmand %vm670, %vm671
      %v673 = vsel %vm672, %v319, %v349
      %v674 = vsel %vm672, %v320, %v350
      %v675 = vsel %vm672, %v321, %v351
      %v676 = vsel %vm672, %v322, %v352
      %vm677 = vcmask 1040384
      %v680 = vsel %vm677, %v673, %v378
      %v684 = vsel %vm677, %v674, %v379
      %v688 = vsel %vm677, %v675, %v380
      %v692 = vsel %vm677, %v676, %v381
      %vm694 = vcmask 1041408
      %vm695 = vsmask.f32 1280
      %vm696 = vmand %vm694, %vm695
      %v697 = vsel %vm696, %v680, %v398
      %v698 = vsel %vm696, %v684, %v399
      %v699 = vsel %vm696, %v688, %v400
      %v700 = vsel %vm696, %v692, %v401
      %vm701 = vcmask 1041408
      %v704 = vsel %vm701, %v697, %v422
      %v708 = vsel %vm701, %v698, %v423
      %v712 = vsel %vm701, %v699, %v424
      %v716 = vsel %vm701, %v700, %v425
      %vm718 = vcmask 1042432
      %vm719 = vsmask.f32 2304
      %vm720 = vmand %vm718, %vm719
      %v721 = vsel %vm720, %v704, %v442
      %v722 = vsel %vm720, %v708, %v443
      %v723 = vsel %vm720, %v712, %v444
      %v724 = vsel %vm720, %v716, %v445
      %vm725 = vcmask 1042432
      %v728 = vsel %vm725, %v721, %v466
      %v732 = vsel %vm725, %v722, %v467
      %v736 = vsel %vm725, %v723, %v468
      %v740 = vsel %vm725, %v724, %v469
      %vm742 = vcmask 1043456
      %vm743 = vsmask.f32 3328
      %vm744 = vmand %vm742, %vm743
      %v745 = vsel %vm744, %v728, %v486
      %v746 = vsel %vm744, %v732, %v487
      %v747 = vsel %vm744, %v736, %v488
      %v748 = vsel %vm744, %v740, %v489
      %vm749 = vcmask 1043456
      %v752 = vsel %vm749, %v745, %v510
      %v756 = vsel %vm749, %v746, %v511
      %v760 = vsel %vm749, %v747, %v512
      %v764 = vsel %vm749, %v748, %v513
      %vm766 = vcmask 1044480
      %vm767 = vsmask.f32 4352
      %vm768 = vmand %vm766, %vm767
      %v769 = vsel %vm768, %v752, %v530
      %v770 = vsel %vm768, %v756, %v531
      %v771 = vsel %vm768, %v760, %v532
      %v772 = vsel %vm768, %v764, %v533
      %vm773 = vcmask 1044480
      %v776 = vsel %vm773, %v769, %v554
      %v780 = vsel %vm773, %v770, %v555
      %v784 = vsel %vm773, %v771, %v556
      %v788 = vsel %vm773, %v772, %v557
      %vm790 = vcmask 1045504
      %vm791 = vsmask.f32 5376
      %vm792 = vmand %vm790, %vm791
      %v793 = vsel %vm792, %v776, %v574
      %v794 = vsel %vm792, %v780, %v575
      %v795 = vsel %vm792, %v784, %v576
      %v796 = vsel %vm792, %v788, %v577
      %vm797 = vcmask 1045504
      %v800 = vsel %vm797, %v793, %v598
      %v804 = vsel %vm797, %v794, %v599
      %v808 = vsel %vm797, %v795, %v600
      %v812 = vsel %vm797, %v796, %v601
      %vm814 = vcmask 1046528
      %vm815 = vsmask.f32 6400
      %vm816 = vmand %vm814, %vm815
      %v817 = vsel %vm816, %v800, %v618
      %v818 = vsel %vm816, %v804, %v619
      %v819 = vsel %vm816, %v808, %v620
      %v820 = vsel %vm816, %v812, %v621
      %vm821 = vcmask 1046528
      %v824 = vsel %vm821, %v817, %v642
      %v828 = vsel %vm821, %v818, %v643
      %v832 = vsel %vm821, %v819, %v644
      %v836 = vsel %vm821, %v820, %v645
      %vm838 = vcmask 1047552
      %vm839 = vsmask.f32 7424
      %vm840 = vmand %vm838, %vm839
      %v841 = vsel %vm840, %v824, %v662
      %v842 = vsel %vm840, %v828, %v663
      %v843 = vsel %vm840, %v832, %v664
      %v844 = vsel %vm840, %v836, %v665
      %846 = vrot.lane.b32.xlu0 %v363, 81
      %v847 = vpop.permute.xlu0 %846
      %848 = vrot.lane.b32.xlu0 %v364, 81
      %v849 = vpop.permute.xlu0 %848
      %850 = vrot.lane.b32.xlu0 %v365, 81
      %v851 = vpop.permute.xlu0 %850
      %852 = vrot.lane.b32.xlu0 %v366, 81
      %v853 = vpop.permute.xlu0 %852
      %vm854 = vcmask 662528
      %v855 = vsel %vm854, %v847, %v849
      %v856 = vsel %vm854, %v849, %v851
      %v857 = vsel %vm854, %v851, %v853
      %858 = vrot.lane.b32.xlu0 %v383, 80
      %v859 = vpop.permute.xlu0 %858
      %860 = vrot.lane.b32.xlu0 %v384, 80
      %v861 = vpop.permute.xlu0 %860
      %862 = vrot.lane.b32.xlu0 %v385, 80
      %v863 = vpop.permute.xlu0 %862
      %864 = vrot.lane.b32.xlu0 %v386, 80
      %v865 = vpop.permute.xlu0 %864
      %vm866 = vcmask 654336
      %v867 = vsel %vm866, %v859, %v861
      %v868 = vsel %vm866, %v861, %v863
      %v869 = vsel %vm866, %v863, %v865
      %875 = vrot.lane.b32.xlu0 %v407, 79
      %v876 = vpop.permute.xlu0 %875
      %877 = vrot.lane.b32.xlu0 %v408, 79
      %v878 = vpop.permute.xlu0 %877
      %879 = vrot.lane.b32.xlu0 %v409, 79
      %v880 = vpop.permute.xlu0 %879
      %881 = vrot.lane.b32.xlu0 %v410, 79
      %v882 = vpop.permute.xlu0 %881
      %vm883 = vcmask 646144
      %v884 = vsel %vm883, %v876, %v878
      %v885 = vsel %vm883, %v878, %v880
      %v886 = vsel %vm883, %v880, %v882
      %887 = vrot.lane.b32.xlu0 %v427, 73
      %v888 = vpop.permute.xlu0 %887
      %889 = vrot.lane.b32.xlu0 %v428, 73
      %v890 = vpop.permute.xlu0 %889
      %891 = vrot.lane.b32.xlu0 %v429, 73
      %v892 = vpop.permute.xlu0 %891
      %893 = vrot.lane.b32.xlu0 %v430, 73
      %v894 = vpop.permute.xlu0 %893
      %vm895 = vcmask 596992
      %v896 = vsel %vm895, %v888, %v890
      %v897 = vsel %vm895, %v890, %v892
      %v898 = vsel %vm895, %v892, %v894
      %904 = vrot.lane.b32.xlu0 %v451, 72
      %v905 = vpop.permute.xlu0 %904
      %906 = vrot.lane.b32.xlu0 %v452, 72
      %v907 = vpop.permute.xlu0 %906
      %908 = vrot.lane.b32.xlu0 %v453, 72
      %v909 = vpop.permute.xlu0 %908
      %910 = vrot.lane.b32.xlu0 %v454, 72
      %v911 = vpop.permute.xlu0 %910
      %vm912 = vcmask 588800
      %v913 = vsel %vm912, %v905, %v907
      %v914 = vsel %vm912, %v907, %v909
      %v915 = vsel %vm912, %v909, %v911
      %916 = vrot.lane.b32.xlu0 %v471, 71
      %v917 = vpop.permute.xlu0 %916
      %918 = vrot.lane.b32.xlu0 %v472, 71
      %v919 = vpop.permute.xlu0 %918
      %920 = vrot.lane.b32.xlu0 %v473, 71
      %v921 = vpop.permute.xlu0 %920
      %922 = vrot.lane.b32.xlu0 %v474, 71
      %v923 = vpop.permute.xlu0 %922
      %vm924 = vcmask 580608
      %v925 = vsel %vm924, %v917, %v919
      %v926 = vsel %vm924, %v919, %v921
      %v927 = vsel %vm924, %v921, %v923
      %933 = vrot.lane.b32.xlu0 %v495, 65
      %v934 = vpop.permute.xlu0 %933
      %935 = vrot.lane.b32.xlu0 %v496, 65
      %v936 = vpop.permute.xlu0 %935
      %937 = vrot.lane.b32.xlu0 %v497, 65
      %v938 = vpop.permute.xlu0 %937
      %939 = vrot.lane.b32.xlu0 %v498, 65
      %v940 = vpop.permute.xlu0 %939
      %vm941 = vcmask 531456
      %v942 = vsel %vm941, %v934, %v936
      %v943 = vsel %vm941, %v936, %v938
      %v944 = vsel %vm941, %v938, %v940
      %v947 = vsel %vm672, 0, %v347
      %v949 = vsel %vm677, %v673, %v847
      %v952 = vsel %vm677, %v674, %v855
      %v955 = vsel %vm677, %v675, %v856
      %v958 = vsel %vm677, %v676, %v857
      %v962 = vsel %vm677, %v947, %v853
      %v964 = vsel %vm696, %v949, %v859
      %v965 = vsel %vm696, %v952, %v867
      %v966 = vsel %vm696, %v955, %v868
      %v967 = vsel %vm696, %v958, %v869
      %v968 = vsel %vm696, %v962, %v865
      %v971 = vsel %vm701, %v964, %v876
      %v975 = vsel %vm701, %v965, %v884
      %v979 = vsel %vm701, %v966, %v885
      %v983 = vsel %vm701, %v967, %v886
      %v987 = vsel %vm701, %v968, %v882
      %v989 = vsel %vm720, %v971, %v888
      %v990 = vsel %vm720, %v975, %v896
      %v991 = vsel %vm720, %v979, %v897
      %v992 = vsel %vm720, %v983, %v898
      %v993 = vsel %vm720, %v987, %v894
      %v996 = vsel %vm725, %v989, %v905
      %v1000 = vsel %vm725, %v990, %v913
      %v1004 = vsel %vm725, %v991, %v914
      %v1008 = vsel %vm725, %v992, %v915
      %v1012 = vsel %vm725, %v993, %v911
      %v1014 = vsel %vm744, %v996, %v917
      %v1015 = vsel %vm744, %v1000, %v925
      %v1016 = vsel %vm744, %v1004, %v926
      %v1017 = vsel %vm744, %v1008, %v927
      %v1018 = vsel %vm744, %v1012, %v923
      %v1021 = vsel %vm749, %v1014, %v934
      %v1025 = vsel %vm749, %v1015, %v942
      %v1029 = vsel %vm749, %v1016, %v943
      %v1033 = vsel %vm749, %v1017, %v944
      %v1037 = vsel %vm749, %v1018, %v940
      %v1039 = vsel %vm768, %v1021, %v522
      %v1040 = vsel %vm768, %v1025, %v531
      %v1041 = vsel %vm768, %v1029, %v532
      %v1042 = vsel %vm768, %v1033, %v533
      %v1043 = vsel %vm768, %v1037, %v528
      %v1046 = vsel %vm773, %v1039, %v546
      %v1048 = vsel %vm773, %v1040, %v555
      %v1050 = vsel %vm773, %v1041, %v556
      %v1052 = vsel %vm773, %v1042, %v557
      %v1055 = vsel %vm773, %v1043, %v552
      %1061 = vrot.lane.b32.xlu0 %v1046, 47
      %v1062 = vpop.permute.xlu0 %1061
      %1063 = vrot.lane.b32.xlu0 %v1048, 47
      %v1064 = vpop.permute.xlu0 %1063
      %1065 = vrot.lane.b32.xlu0 %v1050, 47
      %v1066 = vpop.permute.xlu0 %1065
      %1067 = vrot.lane.b32.xlu0 %v1052, 47
      %v1068 = vpop.permute.xlu0 %1067
      %1069 = vrot.lane.b32.xlu0 %v1055, 47
      %v1070 = vpop.permute.xlu0 %1069
      %vm1071 = vcmask 384000
      %v1072 = vsel %vm1071, %v1062, %v1064
      %v1073 = vsel %vm1071, %v1064, %v1066
      %v1074 = vsel %vm1071, %v1066, %v1068
      %v1075 = vsel %vm1071, %v1068, %v1070
      %v1076 = vld [vmem:[%s269] sm:$0xf]
      %v1077 = vld [vmem:[%s269 + $0x4] sm:$0xf]
      %v1078 = vld [vmem:[%s269 + $0x8] sm:$0xf]
      %v1079 = vld [vmem:[%s269 + $0xc] sm:$0xf]
      %v1080 = vld [vmem:[%s269 + $0x10] sm:$0xf]
      %v1081 = vld [vmem:[%s269 + $0x14] sm:$0xf]
      %v1082 = vld [vmem:[%s269 + $0x18] sm:$0xf]
      %v1083 = vld [vmem:[%s279] sm:$0xff]
      %v1084 = vld [vmem:[%s279 + $0x8] sm:$0xff]
      %v1085 = vld [vmem:[%s279 + $0x10] sm:$0xff]
      %v1086 = vld [vmem:[%s279 + $0x18] sm:$0xff]
      %v1087 = vld [vmem:[%s279 + $0x20] sm:$0xff]
      %v1088 = vld [vmem:[%s279 + $0x28] sm:$0xff]
      %v1089 = vld [vmem:[%s279 + $0x30] sm:$0xff]
      %1091 = vset.pattern.permute.xlu0 0
      %1092 = vperm.xlu0 %1091, %v1083
      %v1093 = vpop.permute.xlu0 %1092
      %1096 = vset.pattern.permute.xlu0 0
      %1097 = vperm.xlu0 %1096, %v1084
      %v1098 = vpop.permute.xlu0 %1097
      %1101 = vset.pattern.permute.xlu0 0
      %1102 = vperm.xlu0 %1101, %v1085
      %v1103 = vpop.permute.xlu0 %1102
      %1106 = vset.pattern.permute.xlu0 0
      %1107 = vperm.xlu0 %1106, %v1086
      %v1108 = vpop.permute.xlu0 %1107
      %1111 = vset.pattern.permute.xlu0 0
      %1112 = vperm.xlu0 %1111, %v1087
      %v1113 = vpop.permute.xlu0 %1112
      %1116 = vset.pattern.permute.xlu0 0
      %1117 = vperm.xlu0 %1116, %v1088
      %v1118 = vpop.permute.xlu0 %1117
      %1121 = vset.pattern.permute.xlu0 0
      %1122 = vperm.xlu0 %1121, %v1089
      %v1123 = vpop.permute.xlu0 %1122
      %v1132 = vunpack.c.l.b16 %v1076
      %v1133 = vunpack.c.l.b16 %v1077
      %v1134 = vunpack.c.l.b16 %v1078
      %v1135 = vunpack.c.l.b16 %v1079
      %v1136 = vunpack.c.l.b16 %v1080
      %v1137 = vunpack.c.l.b16 %v1081
      %v1138 = vunpack.c.l.b16 %v1082
      %v1139 = vpack.c.b16 %v1133, %v1132
      %v1140 = vpack.c.b16 %v1135, %v1134
      %v1141 = vpack.c.b16 %v1137, %v1136
      %v1142 = vpack.c.b16 %v1138, %v1138
      %vm1143 = vcmask 220160
      %v1145 = vsel %vm1143, %v1139, 0
      %v1148 = vsel %vm1143, %v1140, 0
      %v1151 = vsel %vm1143, %v1141, 0
      %v1154 = vsel %vm1143, %v1142, 0
      %v1156 = vsel %vm773, 4294967295, 65535
      %v1157 = vsel %vm797, %v1156, 0
      %v1159 = vand.u32 %v1072, %v1157
      %v1162 = vand.u32 %v1073, %v1157
      %v1165 = vand.u32 %v1074, %v1157
      %v1168 = vand.u32 %v1075, %v1157
      %1170 = vmatprep.subr.bf16.mxu0 %v842
      %1171 = vmatpush1.bf16.msra.mxu0 %v841
      %1172 = vmatprep.subr.bf16.mxu0 %v1162
      %1173 = vmatpush1.bf16.msra.mxu0 %v1159
      %1174 = vmatprep.subr.bf16.mxu0 0
      %1175 = vmatpush1.bf16.msra.mxu0 0
      %1176 = vmatprep.subr.bf16.mxu0 0
      %1177 = vmatpush1.bf16.msra.mxu0 0
      %1178 = vmatprep.subr.bf16.mxu0 0
      %1179 = vmatpush1.bf16.msra.mxu0 0
      %1180 = vmatprep.subr.bf16.mxu0 0
      %1181 = vmatpush1.bf16.msra.mxu0 0
      %1182 = vmatprep.subr.bf16.mxu0 0
      %1183 = vmatpush1.bf16.msra.mxu0 0
      %1184 = vmatprep.subr.bf16.mxu0 0
      %1185 = vmatpush1.bf16.msra.mxu0 0
      %1186 = vmatprep.subr.bf16.mxu0 0
      %1187 = vmatpush1.bf16.msra.mxu0 0
      %1188 = vmatprep.subr.bf16.mxu0 0
      %1189 = vmatpush1.bf16.msra.mxu0 0
      %1190 = vmatprep.subr.bf16.mxu0 0
      %1191 = vmatpush1.bf16.msra.mxu0 0
      %1192 = vmatprep.subr.bf16.mxu0 0
      %1193 = vmatpush1.bf16.msra.mxu0 0
      %1194 = vmatprep.subr.bf16.mxu0 0
      %1195 = vmatpush1.bf16.msra.mxu0 0
      %1196 = vmatprep.subr.bf16.mxu0 0
      %1197 = vmatpush1.bf16.msra.mxu0 0
      %1198 = vmatprep.subr.bf16.mxu0 0
      %1199 = vmatpush1.bf16.msra.mxu0 0
      %1200 = vmatprep.subr.bf16.mxu0 0
      %1201 = vmatpush1.bf16.msra.mxu0 0
      %1202 = vmatprep.mubr.bf16.mxu0 0
      %1203 = vmatmul.mubr.bf16.gmra.mrb[0].mxu0 %v1145
      %v1204 = vpop.f32.mrb[0].mxu0
      %v1205 = vadd.f32 %v1093, %v1204
      %v1206 = vpop.f32.mrb[0].mxu0
      %v1207 = vadd.f32 %v1093, %v1206
      %v1208 = vpop.f32.mrb[0].mxu0
      %v1209 = vadd.f32 %v1098, %v1208
      %v1210 = vpop.f32.mrb[0].mxu0
      %v1211 = vadd.f32 %v1098, %v1210
      %1212 = vmatprep.mubr.bf16.mxu0 0
      %1213 = vmatmul.mubr.bf16.gmra.mrb[0].mxu0 %v1148
      %v1214 = vpop.f32.mrb[0].mxu0
      %v1215 = vadd.f32 %v1103, %v1214
      %v1216 = vpop.f32.mrb[0].mxu0
      %v1217 = vadd.f32 %v1103, %v1216
      %v1218 = vpop.f32.mrb[0].mxu0
      %v1219 = vadd.f32 %v1108, %v1218
      %v1220 = vpop.f32.mrb[0].mxu0
      %v1221 = vadd.f32 %v1108, %v1220
      %1222 = vmatprep.mubr.bf16.mxu0 0
      %1223 = vmatmul.mubr.bf16.gmra.mrb[0].mxu0 %v1151
      %v1224 = vpop.f32.mrb[0].mxu0
      %v1225 = vadd.f32 %v1113, %v1224
      %v1226 = vpop.f32.mrb[0].mxu0
      %v1227 = vadd.f32 %v1113, %v1226
      %v1228 = vpop.f32.mrb[0].mxu0
      %v1229 = vadd.f32 %v1118, %v1228
      %v1230 = vpop.f32.mrb[0].mxu0
      %v1231 = vadd.f32 %v1118, %v1230
      %1232 = vmatprep.mubr.bf16.mxu0 0
      %1233 = vmatmul.mubr.bf16.gmra.mrb[0].mxu0 %v1154
      %v1234 = vpop.f32.mrb[0].mxu0
      %v1235 = vadd.f32 %v1123, %v1234
      %v1236 = vpop.f32.mrb[0].mxu0
      %v1237 = vadd.f32 %v1123, %v1236
      %v1238 = vpop.f32.mrb[0].mxu0
      %v1239 = vpop.f32.mrb[0].mxu0
      %1240 = vdwg.mxu0
      %1241 = vmatprep.subr.bf16.mxu0 %v844
      %1242 = vmatpush1.bf16.msra.mxu0 %v843
      %1243 = vmatprep.subr.bf16.mxu0 %v1168
      %1244 = vmatpush1.bf16.msra.mxu0 %v1165
      %1245 = vmatprep.subr.bf16.mxu0 0
      %1246 = vmatpush1.bf16.msra.mxu0 0
      %1247 = vmatprep.subr.bf16.mxu0 0
      %1248 = vmatpush1.bf16.msra.mxu0 0
      %1249 = vmatprep.subr.bf16.mxu0 0
      %1250 = vmatpush1.bf16.msra.mxu0 0
      %1251 = vmatprep.subr.bf16.mxu0 0
      %1252 = vmatpush1.bf16.msra.mxu0 0
      %1253 = vmatprep.subr.bf16.mxu0 0
      %1254 = vmatpush1.bf16.msra.mxu0 0
      %1255 = vmatprep.subr.bf16.mxu0 0
      %1256 = vmatpush1.bf16.msra.mxu0 0
      %1257 = vmatprep.subr.bf16.mxu0 0
      %1258 = vmatpush1.bf16.msra.mxu0 0
      %1259 = vmatprep.subr.bf16.mxu0 0
      %1260 = vmatpush1.bf16.msra.mxu0 0
      %1261 = vmatprep.subr.bf16.mxu0 0
      %1262 = vmatpush1.bf16.msra.mxu0 0
      %1263 = vmatprep.subr.bf16.mxu0 0
      %1264 = vmatpush1.bf16.msra.mxu0 0
      %1265 = vmatprep.subr.bf16.mxu0 0
      %1266 = vmatpush1.bf16.msra.mxu0 0
      %1267 = vmatprep.subr.bf16.mxu0 0
      %1268 = vmatpush1.bf16.msra.mxu0 0
      %1269 = vmatprep.subr.bf16.mxu0 0
      %1270 = vmatpush1.bf16.msra.mxu0 0
      %1271 = vmatprep.subr.bf16.mxu0 0
      %1272 = vmatpush1.bf16.msra.mxu0 0
      %1273 = vmatprep.mubr.bf16.mxu0 0
      %1274 = vmatmul.mubr.bf16.gmra.mrb[0].mxu0 %v1145
      %v1275 = vpop.f32.mrb[0].mxu0
      %v1276 = vadd.f32 %v1093, %v1275
      %v1277 = vpop.f32.mrb[0].mxu0
      %v1278 = vadd.f32 %v1093, %v1277
      %v1279 = vpop.f32.mrb[0].mxu0
      %v1280 = vadd.f32 %v1098, %v1279
      %v1281 = vpop.f32.mrb[0].mxu0
      %v1282 = vadd.f32 %v1098, %v1281
      %1283 = vmatprep.mubr.bf16.mxu0 0
      %1284 = vmatmul.mubr.bf16.gmra.mrb[0].mxu0 %v1148
      %v1285 = vpop.f32.mrb[0].mxu0
      %v1286 = vadd.f32 %v1103, %v1285
      %v1287 = vpop.f32.mrb[0].mxu0
      %v1288 = vadd.f32 %v1103, %v1287
      %v1289 = vpop.f32.mrb[0].mxu0
      %v1290 = vadd.f32 %v1108, %v1289
      %v1291 = vpop.f32.mrb[0].mxu0
      %v1292 = vadd.f32 %v1108, %v1291
      %1293 = vmatprep.mubr.bf16.mxu0 0
      %1294 = vmatmul.mubr.bf16.gmra.mrb[0].mxu0 %v1151
      %v1295 = vpop.f32.mrb[0].mxu0
      %v1296 = vadd.f32 %v1113, %v1295
      %v1297 = vpop.f32.mrb[0].mxu0
      %v1298 = vadd.f32 %v1113, %v1297
      %v1299 = vpop.f32.mrb[0].mxu0
      %v1300 = vadd.f32 %v1118, %v1299
      %v1301 = vpop.f32.mrb[0].mxu0
      %v1302 = vadd.f32 %v1118, %v1301
      %1303 = vmatprep.mubr.bf16.mxu0 0
      %1304 = vmatmul.mubr.bf16.gmra.mrb[0].mxu0 %v1154
      %v1305 = vpop.f32.mrb[0].mxu0
      %v1306 = vadd.f32 %v1123, %v1305
      %v1307 = vpop.f32.mrb[0].mxu0
      %v1308 = vadd.f32 %v1123, %v1307
      %v1309 = vpop.f32.mrb[0].mxu0
      %v1310 = vpop.f32.mrb[0].mxu0
      %1311 = vdwg.mxu0
      %v1312 = vpack.c.bf16 %v1209, %v1205
      %v1313 = vpack.c.bf16 %v1211, %v1207
      %v1314 = vpack.c.bf16 %v1280, %v1276
      %v1315 = vpack.c.bf16 %v1282, %v1278
      %v1316 = vpack.c.bf16 %v1219, %v1215
      %v1317 = vpack.c.bf16 %v1221, %v1217
      %v1318 = vpack.c.bf16 %v1290, %v1286
      %v1319 = vpack.c.bf16 %v1292, %v1288
      %v1320 = vpack.c.bf16 %v1229, %v1225
      %v1321 = vpack.c.bf16 %v1231, %v1227
      %v1322 = vpack.c.bf16 %v1300, %v1296
      %v1323 = vpack.c.bf16 %v1302, %v1298
      %v1324 = vpack.c.bf16 %v1235, %v1235
      %v1325 = vpack.c.bf16 %v1237, %v1237
      %v1326 = vpack.c.bf16 %v1306, %v1306
      %v1327 = vpack.c.bf16 %v1308, %v1308
      %v1344 = vunpack.c.l.b16 %v1312
      %v1345 = vunpack.c.l.b16 %v1313
      %v1346 = vunpack.c.l.b16 %v1314
      %v1347 = vunpack.c.l.b16 %v1315
      %v1348 = vunpack.c.h.b16 %v1312
      %v1349 = vunpack.c.h.b16 %v1313
      %v1350 = vunpack.c.h.b16 %v1314
      %v1351 = vunpack.c.h.b16 %v1315
      %v1352 = vunpack.c.l.b16 %v1316
      %v1353 = vunpack.c.l.b16 %v1317
      %v1354 = vunpack.c.l.b16 %v1318
      %v1355 = vunpack.c.l.b16 %v1319
      %v1356 = vunpack.c.h.b16 %v1316
      %v1357 = vunpack.c.h.b16 %v1317
      %v1358 = vunpack.c.h.b16 %v1318
      %v1359 = vunpack.c.h.b16 %v1319
      %v1360 = vunpack.c.l.b16 %v1320
      %v1361 = vunpack.c.l.b16 %v1321
      %v1362 = vunpack.c.l.b16 %v1322
      %v1363 = vunpack.c.l.b16 %v1323
      %v1364 = vunpack.c.h.b16 %v1320
      %v1365 = vunpack.c.h.b16 %v1321
      %v1366 = vunpack.c.h.b16 %v1322
      %v1367 = vunpack.c.h.b16 %v1323
      %v1368 = vunpack.c.l.b16 %v1324
      %v1369 = vunpack.c.l.b16 %v1325
      %v1370 = vunpack.c.l.b16 %v1326
      %v1371 = vunpack.c.l.b16 %v1327
      %v1372 = vpack.c.b16 %v1345, %v1344
      %v1373 = vpack.c.b16 %v1347, %v1346
      %v1374 = vpack.c.b16 %v1349, %v1348
      %v1375 = vpack.c.b16 %v1351, %v1350
      %v1376 = vpack.c.b16 %v1353, %v1352
      %v1377 = vpack.c.b16 %v1355, %v1354
      %v1378 = vpack.c.b16 %v1357, %v1356
      %v1379 = vpack.c.b16 %v1359, %v1358
      %v1380 = vpack.c.b16 %v1361, %v1360
      %v1381 = vpack.c.b16 %v1363, %v1362
      %v1382 = vpack.c.b16 %v1365, %v1364
      %v1383 = vpack.c.b16 %v1367, %v1366
      %v1384 = vpack.c.b16 %v1369, %v1368
      %v1385 = vpack.c.b16 %v1371, %v1370
      %1400 = vst [vmem:[%s294] sm:$0xff] %v1372
      %1401 = vst [vmem:[%s294 + $0x8] sm:$0xff] %v1373
      %1402 = vst [vmem:[%s294 + $0x10] sm:$0xff] %v1374
      %1403 = vst [vmem:[%s294 + $0x18] sm:$0xff] %v1375
      %1404 = vst [vmem:[%s294 + $0x20] sm:$0xff] %v1376
      %1405 = vst [vmem:[%s294 + $0x28] sm:$0xff] %v1377
      %1406 = vst [vmem:[%s294 + $0x30] sm:$0xff] %v1378
      %1407 = vst [vmem:[%s294 + $0x38] sm:$0xff] %v1379
      %1408 = vst [vmem:[%s294 + $0x40] sm:$0xff] %v1380
      %1409 = vst [vmem:[%s294 + $0x48] sm:$0xff] %v1381
      %1410 = vst [vmem:[%s294 + $0x50] sm:$0xff] %v1382
      %1411 = vst [vmem:[%s294 + $0x58] sm:$0xff] %v1383
      %1412 = vst [vmem:[%s294 + $0x60] sm:$0xff] %v1384
      %1413 = vst [vmem:[%s294 + $0x68] sm:$0xff] %v1385
      %s1414 = smul.u32 7, %s21
      %p1415 = scmp.lt.s32.totalorder %s19, 0
      %s1416 = scalar_select %p1415, %s19, 0
      %p1417 = scmp.lt.s32.totalorder %s20, 1
      %s1418 = scalar_select %p1417, %s20, 1
      %p1419 = scmp.lt.s32.totalorder %s1414, 6
      %s1420 = scalar_select %p1419, %s1414, 6
      %s1421 = smul.addr %s1420, 4
      %s1422 = smul.addr %s1418, 28
      %s1423 = sadd.s32 %s1421, %s1422
      %s1424 = smul.addr %s1416, 56
      %s1425 = sadd.s32 %s1423, %s1424
      %s1426 = smul.addr %s1425, 4
      %s1427 = scalar_lea.vmem %s3, %s1426
      // Predicated region
      $region33: #{e3dlstm_forward.14} parent=31 // pred_check
        %p1428 = pneg %p139
      $region34: #{e3dlstm_forward.14} parent=31 // pred_check_branch
        %1430 = sbr.rel (%p1428) target = $region36
      $region35: #{e3dlstm_forward.14} parent=31 // pred_region
        %s1431 = smul.u32 7, %s21
      $region36: #{e3dlstm_forward.14} parent=31 // pred_fallthru
        _
    $region32: #{e3dlstm_forward.14} parent=5 // pred_fallthru
      _
    %p1432 = scmp.le.s32.totalorder 2, %s9
    // Predicated region
    $region37: #{e3dlstm_forward.14} parent=5 // pred_check
      %p1433 = pneg %p1432
    $region38: #{e3dlstm_forward.14} parent=5 // pred_check_branch
      %1435 = sbr.rel (%p1433) target = $region40
    $region39: #{e3dlstm_forward.14} parent=5 // pred_region
      %s1436 = ssub.s32 %s9, 2
      // Predicated region
      $region41: #{e3dlstm_forward.14} parent=39 // pred_check
        %p1437 = pneg %p145
      $region42: #{e3dlstm_forward.14} parent=39 // pred_check_branch
        %1439 = sbr.rel (%p1437) target = $region44
      $region43: #{e3dlstm_forward.14} parent=39 // pred_region
        %s1440 = smul.u32 7, %s24
        %p1441 = scmp.lt.s32.totalorder %s22, 0
        %s1442 = scalar_select %p1441, %s22, 0
        %p1443 = scmp.lt.s32.totalorder %s23, 1
        %s1444 = scalar_select %p1443, %s23, 1
        %p1445 = scmp.lt.s32.totalorder %s1440, 6
        %s1446 = scalar_select %p1445, %s1440, 6
        %s1447 = smul.addr %s1446, 4
        %s1448 = smul.addr %s1444, 28
        %s1449 = sadd.s32 %s1447, %s1448
        %s1450 = smul.addr %s1442, 56
        %s1451 = sadd.s32 %s1449, %s1450
        %s1452 = smul.addr %s1451, 4
        %s1453 = scalar_lea.vmem %s3, %s1452
      $region44: #{e3dlstm_forward.14} parent=39 // pred_fallthru
        _
    $region40: #{e3dlstm_forward.14} parent=5 // pred_fallthru
      _
  $region6: #{e3dlstm_forward.14} parent=0 // loop_footer
    %s13 = sadd.s32 1, %s9
  $region7: #{e3dlstm_forward.14} parent=0 // loop_footer_branch
    %8 = sbr.rel target = $region3
  $region8: #{e3dlstm_forward.14} parent=0 // loop_exit
    _

// kernel: e3dlstm_forward.15
$region0: #{e3dlstm_forward.15}
  #allocation0 [shape = 'u32[]', space=smem, size = 0x4, offset = 0x4, fixed_abs, tag = 'smem constant byte address 0x4 - core index']
  #allocation1 [shape = 'u32[144,128]{1,0:T(1,128)}', space=vmem, size = 0x12000, scoped, tag = 'internal scratch']
  %s0 = inlined_call_operand.vmem [shape: f32[1,2,8,512], index: 0, kind: input, shape index: {}]
  %s1 = inlined_call_operand.vmem [shape: bf16[1,32,216], index: 1, kind: input, shape index: {}]
  %s2 = inlined_call_operand.vmem [shape: f32[1,32,1], index: 2, kind: input, shape index: {}]
  %s3 = inlined_call_operand.vmem [shape: bf16[1,2,32,512], index: 3, kind: output, shape index: {}]
  %s4 = sld [smem:[#allocation0]]
  $region45: #{e3dlstm_forward.15} parent=0
    _
  %s6 = ssub.s32 1, %s4
  %s7 = scalar_select 0, %s6, %s4
  loop: start=0, step=1, limit=4
  $region2: #{e3dlstm_forward.15} parent=0 // loop_pre_header
    _
  $region3: #{e3dlstm_forward.15} parent=0 // loop_header
    %s9 = sphi 0, %s13
    %p10 = scmp.ge.s32.totalorder %s9, 4
    %s16 = sphi 0, %s35
    %s17 = sphi 0, %s31
    %s18 = sphi 0, %s27
    %s19 = sphi 0, %s16
    %s20 = sphi 0, %s17
    %s21 = sphi 0, %s18
    %s22 = sphi 0, %s19
    %s23 = sphi 0, %s20
    %s24 = sphi 0, %s21
    %s40 = sphi 0, %s42
    %s43 = sphi 0, %s40
    %s44 = sphi 0, %s43
    %s60 = sphi 0, %s44
    %s68 = sphi 0, %s70
    %s71 = sphi 0, %s68
    %s72 = sphi 0, %s71
    %s88 = sphi 0, %s72
    %s96 = sphi 0, %s98
    %s99 = sphi 0, %s96
    %s100 = sphi 0, %s99
    %s116 = sphi 0, %s100
    %s126 = sphi 0, %s128
    %s129 = sphi 0, %s126
    %s130 = sphi 0, %s129
    %s146 = sphi 0, %s130
  $region4: #{e3dlstm_forward.15} parent=0 // loop_header_branch
    %12 = sbr.rel (%p10) target = $region8
  $region5: #{e3dlstm_forward.15} parent=0 // loop_body
    %s14 = ssub.s32 %s9, 1
    %s15 = ssub.s32 %s9, 2
    %s25 = sadd.s32 1, %s18
    %p26 = scmp.ge.s32.totalorder %s25, 1
    %s27 = scalar_select %p26, 0, %s25
    %s28 = sadd.s32 1, %s17
    %s29 = scalar_select %p26, %s28, %s17
    %p30 = scmp.ge.s32.totalorder %s29, 2
    %s31 = scalar_select %p30, 0, %s29
    %s32 = sadd.s32 1, %s16
    %s33 = scalar_select %p30, %s32, %s16
    %p34 = scmp.ge.s32.totalorder %s33, 1
    %s35 = scalar_select %p34, 0, %s33
    %s36 = ssub.s32 %s16, %s35
    %s37 = ssub.s32 %s17, %s31
    %s38 = sor.u32 %s36, %s37
    %p39 = scmp.eq.s32.totalorder %s38, 0
    %s41 = sadd.s32 %s40, 1
    %s42 = scalar_select %p39, %s40, %s41
    %p45 = pneg %p39
    %p46 = scmp.eq.s32.totalorder %s9, 1
    %p47 = por %p45, %p46
    %p48 = scmp.ne.s32.totalorder %s40, %s43
    %p49 = scmp.eq.s32.totalorder %s9, 0
    %p50 = por %p48, %p49
    %p51 = scmp.ne.s32.totalorder %s40, %s43
    %p52 = scmp.eq.s32.totalorder %s14, 1
    %p53 = por %p51, %p52
    %p54 = scmp.ne.s32.totalorder %s43, %s44
    %p55 = scmp.eq.s32.totalorder %s14, 0
    %p56 = por %p54, %p55
    %p57 = scmp.ne.s32.totalorder %s43, %s44
    %p58 = scmp.eq.s32.totalorder %s15, 1
    %p59 = por %p57, %p58
    %p61 = scmp.ne.s32.totalorder %s44, %s60
    %p62 = scmp.eq.s32.totalorder %s15, 0
    %p63 = por %p61, %p62
    %s64 = ssub.s32 %s16, %s35
    %s65 = ssub.s32 %s18, %s27
    %s66 = sor.u32 %s64, %s65
    %p67 = scmp.eq.s32.totalorder %s66, 0
    %s69 = sadd.s32 %s68, 1
    %s70 = scalar_select %p67, %s68, %s69
    %p73 = pneg %p67
    %p74 = scmp.eq.s32.totalorder %s9, 1
    %p75 = por %p73, %p74
    %p76 = scmp.ne.s32.totalorder %s68, %s71
    %p77 = scmp.eq.s32.totalorder %s9, 0
    %p78 = por %p76, %p77
    %p79 = scmp.ne.s32.totalorder %s68, %s71
    %p80 = scmp.eq.s32.totalorder %s14, 1
    %p81 = por %p79, %p80
    %p82 = scmp.ne.s32.totalorder %s71, %s72
    %p83 = scmp.eq.s32.totalorder %s14, 0
    %p84 = por %p82, %p83
    %p85 = scmp.ne.s32.totalorder %s71, %s72
    %p86 = scmp.eq.s32.totalorder %s15, 1
    %p87 = por %p85, %p86
    %p89 = scmp.ne.s32.totalorder %s72, %s88
    %p90 = scmp.eq.s32.totalorder %s15, 0
    %p91 = por %p89, %p90
    %s92 = ssub.s32 %s16, %s35
    %s93 = ssub.s32 %s18, %s27
    %s94 = sor.u32 %s92, %s93
    %p95 = scmp.eq.s32.totalorder %s94, 0
    %s97 = sadd.s32 %s96, 1
    %s98 = scalar_select %p95, %s96, %s97
    %p101 = pneg %p95
    %p102 = scmp.eq.s32.totalorder %s9, 1
    %p103 = por %p101, %p102
    %p104 = scmp.ne.s32.totalorder %s96, %s99
    %p105 = scmp.eq.s32.totalorder %s9, 0
    %p106 = por %p104, %p105
    %p107 = scmp.ne.s32.totalorder %s96, %s99
    %p108 = scmp.eq.s32.totalorder %s14, 1
    %p109 = por %p107, %p108
    %p110 = scmp.ne.s32.totalorder %s99, %s100
    %p111 = scmp.eq.s32.totalorder %s14, 0
    %p112 = por %p110, %p111
    %p113 = scmp.ne.s32.totalorder %s99, %s100
    %p114 = scmp.eq.s32.totalorder %s15, 1
    %p115 = por %p113, %p114
    %p117 = scmp.ne.s32.totalorder %s100, %s116
    %p118 = scmp.eq.s32.totalorder %s15, 0
    %p119 = por %p117, %p118
    %s120 = ssub.s32 %s16, %s35
    %s121 = ssub.s32 %s17, %s31
    %s122 = sor.u32 %s120, %s121
    %s123 = ssub.s32 %s18, %s27
    %s124 = sor.u32 %s122, %s123
    %p125 = scmp.eq.s32.totalorder %s124, 0
    %s127 = sadd.s32 %s126, 1
    %s128 = scalar_select %p125, %s126, %s127
    %p131 = pneg %p125
    %p132 = scmp.eq.s32.totalorder %s9, 1
    %p133 = por %p131, %p132
    %p134 = scmp.ne.s32.totalorder %s126, %s129
    %p135 = scmp.eq.s32.totalorder %s9, 0
    %p136 = por %p134, %p135
    %p137 = scmp.ne.s32.totalorder %s126, %s129
    %p138 = scmp.eq.s32.totalorder %s14, 1
    %p139 = por %p137, %p138
    %p140 = scmp.ne.s32.totalorder %s129, %s130
    %p141 = scmp.eq.s32.totalorder %s14, 0
    %p142 = por %p140, %p141
    %p143 = scmp.ne.s32.totalorder %s129, %s130
    %p144 = scmp.eq.s32.totalorder %s15, 1
    %p145 = por %p143, %p144
    %p147 = scmp.ne.s32.totalorder %s130, %s146
    %p148 = scmp.eq.s32.totalorder %s15, 0
    %p149 = por %p147, %p148
    %p150 = scmp.le.s32.totalorder 1, %s9
    %p151 = scmp.lt.s32.totalorder %s9, 3
    %p152 = pnand %p150, %p151
    %p153 = pneg %p152
    // Predicated region
    $region9: #{e3dlstm_forward.15} parent=5 // pred_check
      _
    $region10: #{e3dlstm_forward.15} parent=5 // pred_check_branch
      %155 = sbr.rel (%p152) target = $region12
    $region11: #{e3dlstm_forward.15} parent=5 // pred_region
      %s156 = ssub.s32 %s9, 1
      // Predicated region
      $region13: #{e3dlstm_forward.15} parent=11 // pred_check
        %p157 = pneg %p84
      $region14: #{e3dlstm_forward.15} parent=11 // pred_check_branch
        %159 = sbr.rel (%p157) target = $region16
      $region15: #{e3dlstm_forward.15} parent=11 // pred_region
        %s160 = smul.u32 4, %s21
        %p161 = scmp.lt.s32.totalorder %s19, 0
        %s162 = scalar_select %p161, %s19, 0
        %p163 = scmp.lt.s32.totalorder %s160, 3
        %s164 = scalar_select %p163, %s160, 3
        %s165 = smul.addr %s164, 2
        %s166 = smul.addr %s162, 8
        %s167 = sadd.s32 %s165, %s166
        %s168 = smul.addr %s167, 4
        %s169 = scalar_lea.vmem %s1, %s168
        %s170 = smul.u32 4, %s21
      $region16: #{e3dlstm_forward.15} parent=11 // pred_fallthru
        _
      // Predicated region
      $region17: #{e3dlstm_forward.15} parent=11 // pred_check
        %p171 = pneg %p112
      $region18: #{e3dlstm_forward.15} parent=11 // pred_check_branch
        %173 = sbr.rel (%p171) target = $region20
      $region19: #{e3dlstm_forward.15} parent=11 // pred_region
        %s174 = smul.u32 4, %s21
        %p175 = scmp.lt.s32.totalorder %s19, 0
        %s176 = scalar_select %p175, %s19, 0
        %p177 = scmp.lt.s32.totalorder %s174, 3
        %s178 = scalar_select %p177, %s174, 3
        %s179 = smul.addr %s176, 4
        %s180 = sadd.s32 %s178, %s179
        %s181 = smul.addr %s180, 8
        %s182 = scalar_lea.vmem %s2, %s181
        %s183 = smul.u32 4, %s21
      $region20: #{e3dlstm_forward.15} parent=11 // pred_fallthru
        _
    $region12: #{e3dlstm_forward.15} parent=5 // pred_fallthru
      _
    %p184 = scmp.lt.s32.totalorder %s9, 2
    // Predicated region
    $region21: #{e3dlstm_forward.15} parent=5 // pred_check
      %p185 = pneg %p184
    $region22: #{e3dlstm_forward.15} parent=5 // pred_check_branch
      %187 = sbr.rel (%p185) target = $region24
    $region23: #{e3dlstm_forward.15} parent=5 // pred_region
      // Predicated region
      $region25: #{e3dlstm_forward.15} parent=23 // pred_check
        %p188 = pneg %p50
      $region26: #{e3dlstm_forward.15} parent=23 // pred_check_branch
        %190 = sbr.rel (%p188) target = $region28
      $region27: #{e3dlstm_forward.15} parent=23 // pred_region
        %p191 = scmp.lt.s32.totalorder %s16, 0
        %s192 = scalar_select %p191, %s16, 0
        %p193 = scmp.lt.s32.totalorder %s17, 1
        %s194 = scalar_select %p193, %s17, 1
        %s195 = smul.addr %s194, 4
        %s196 = smul.addr %s192, 8
        %s197 = sadd.s32 %s195, %s196
        %s198 = smul.addr %s197, 8
        %s199 = scalar_lea.vmem %s0, %s198
      $region28: #{e3dlstm_forward.15} parent=23 // pred_fallthru
        _
    $region24: #{e3dlstm_forward.15} parent=5 // pred_fallthru
      _
    %p200 = scmp.le.s32.totalorder 1, %s9
    %p201 = scmp.lt.s32.totalorder %s9, 3
    %p202 = pnand %p200, %p201
    %p203 = pneg %p202
    // Predicated region
    $region29: #{e3dlstm_forward.15} parent=5 // pred_check
      _
    $region30: #{e3dlstm_forward.15} parent=5 // pred_check_branch
      %205 = sbr.rel (%p202) target = $region32
    $region31: #{e3dlstm_forward.15} parent=5 // pred_region
      %s206 = ssub.s32 %s9, 1
      %p207 = scmp.lt.s32.totalorder %s19, 0
      %s208 = scalar_select %p207, %s19, 0
      %p209 = scmp.lt.s32.totalorder %s20, 1
      %s210 = scalar_select %p209, %s20, 1
      %s211 = smul.addr %s210, 4
      %s212 = smul.addr %s208, 8
      %s213 = sadd.s32 %s211, %s212
      %s214 = smul.addr %s213, 8
      %s215 = scalar_lea.vmem %s0, %s214
      %p216 = pneg %p56
      %p217 = pneg %p53
      %s218 = smul.u32 4, %s21
      %p219 = scmp.lt.s32.totalorder %s19, 0
      %s220 = scalar_select %p219, %s19, 0
      %p221 = scmp.lt.s32.totalorder %s218, 3
      %s222 = scalar_select %p221, %s218, 3
      %s223 = smul.addr %s222, 2
      %s224 = smul.addr %s220, 8
      %s225 = sadd.s32 %s223, %s224
      %s226 = smul.addr %s225, 4
      %s227 = scalar_lea.vmem %s1, %s226
      %p228 = pneg %p84
      %p229 = pneg %p81
      %s230 = smul.u32 4, %s21
      %p231 = scmp.lt.s32.totalorder %s19, 0
      %s232 = scalar_select %p231, %s19, 0
      %p233 = scmp.lt.s32.totalorder %s230, 3
      %s234 = scalar_select %p233, %s230, 3
      %s235 = smul.addr %s232, 4
      %s236 = sadd.s32 %s234, %s235
      %s237 = smul.addr %s236, 8
      %s238 = scalar_lea.vmem %s2, %s237
      %p239 = pneg %p112
      %p240 = pneg %p109
      %p241 = pneg %p142
      %p242 = pneg %p139
      %s243 = smul.u32 4, %s21
      %p244 = scmp.lt.s32.totalorder %s19, 0
      %s245 = scalar_select %p244, %s19, 0
      %p246 = scmp.lt.s32.totalorder %s20, 1
      %s247 = scalar_select %p246, %s20, 1
      %p248 = scmp.lt.s32.totalorder %s243, 3
      %s249 = scalar_select %p248, %s243, 3
      %s250 = smul.addr %s249, 4
      %s251 = smul.addr %s247, 16
      %s252 = sadd.s32 %s250, %s251
      %s253 = smul.addr %s245, 32
      %s254 = sadd.s32 %s252, %s253
      %s255 = smul.addr %s254, 4
      %s256 = scalar_lea.vmem %s3, %s255
      %p257 = scmp.lt.s32.totalorder %s19, 0
      %s258 = scalar_select %p257, %s19, 0
      %p259 = scmp.lt.s32.totalorder %s20, 1
      %s260 = scalar_select %p259, %s20, 1
      %s261 = smul.addr %s260, 4
      %s262 = smul.addr %s258, 8
      %s263 = sadd.s32 %s261, %s262
      %s264 = smul.addr %s263, 8
      %s265 = scalar_lea.vmem %s0, %s264
      %s266 = smul.u32 4, %s21
      %p267 = scmp.lt.s32.totalorder %s19, 0
      %s268 = scalar_select %p267, %s19, 0
      %p269 = scmp.lt.s32.totalorder %s266, 3
      %s270 = scalar_select %p269, %s266, 3
      %s271 = smul.addr %s270, 2
      %s272 = smul.addr %s268, 8
      %s273 = sadd.s32 %s271, %s272
      %s274 = smul.addr %s273, 4
      %s275 = scalar_lea.vmem %s1, %s274
      %s276 = smul.u32 4, %s21
      %s277 = smul.u32 4, %s21
      %p278 = scmp.lt.s32.totalorder %s19, 0
      %s279 = scalar_select %p278, %s19, 0
      %p280 = scmp.lt.s32.totalorder %s277, 3
      %s281 = scalar_select %p280, %s277, 3
      %s282 = smul.addr %s279, 4
      %s283 = sadd.s32 %s281, %s282
      %s284 = smul.addr %s283, 8
      %s285 = scalar_lea.vmem %s2, %s284
      %s286 = smul.u32 4, %s21
      %s287 = smul.u32 4, %s21
      %p288 = scmp.lt.s32.totalorder %s19, 0
      %s289 = scalar_select %p288, %s19, 0
      %p290 = scmp.lt.s32.totalorder %s20, 1
      %s291 = scalar_select %p290, %s20, 1
      %p292 = scmp.lt.s32.totalorder %s287, 3
      %s293 = scalar_select %p292, %s287, 3
      %s294 = smul.addr %s293, 4
      %s295 = smul.addr %s291, 16
      %s296 = sadd.s32 %s294, %s295
      %s297 = smul.addr %s289, 32
      %s298 = sadd.s32 %s296, %s297
      %s299 = smul.addr %s298, 4
      %s300 = scalar_lea.vmem %s3, %s299
      %s301 = smul.u32 4, %s21
      %v303 = vld [vmem:[%s265] sm:$0xff]
      %v304 = vld [vmem:[%s265 + $0x8] sm:$0xff]
      %v305 = vld [vmem:[%s265 + $0x10] sm:$0xff]
      %v306 = vld [vmem:[%s265 + $0x18] sm:$0xff]
      %v307 = vpack.c.bf16 %v303, %v303
      %v308 = vpack.c.bf16 %v304, %v304
      %v309 = vpack.c.bf16 %v305, %v305
      %v310 = vpack.c.bf16 %v306, %v306
      %v316 = vrot.slane %v307, 4
      %v317 = vrot.slane %v308, 4
      %v318 = vrot.slane %v309, 4
      %v319 = vrot.slane %v310, 4
      %v320 = vrot.slane 0, 4
      %321 = vrot.lane.b32.xlu0 %v316, 127
      %v322 = vpop.permute.xlu0 %321
      %323 = vrot.lane.b32.xlu0 %v317, 127
      %v324 = vpop.permute.xlu0 %323
      %325 = vrot.lane.b32.xlu0 %v318, 127
      %v326 = vpop.permute.xlu0 %325
      %327 = vrot.lane.b32.xlu0 %v319, 127
      %v328 = vpop.permute.xlu0 %327
      %329 = vrot.lane.b32.xlu0 %v320, 127
      %v330 = vpop.permute.xlu0 %329
      %vm331 = vcmask 1039360
      %v332 = vsel %vm331, %v322, %v324
      %v333 = vsel %vm331, %v324, %v326
      %v334 = vsel %vm331, %v326, %v328
      %v335 = vsel %vm331, %v328, %v330
      %336 = vrot.lane.b32.xlu0 %v307, 126
      %v337 = vpop.permute.xlu0 %336
      %338 = vrot.lane.b32.xlu0 %v308, 126
      %v339 = vpop.permute.xlu0 %338
      %340 = vrot.lane.b32.xlu0 %v309, 126
      %v341 = vpop.permute.xlu0 %340
      %342 = vrot.lane.b32.xlu0 %v310, 126
      %v343 = vpop.permute.xlu0 %342
      %344 = vrot.lane.b32.xlu0 0, 126
      %v345 = vpop.permute.xlu0 %344
      %vm346 = vcmask 1031168
      %v347 = vsel %vm346, %v337, %v339
      %v348 = vsel %vm346, %v339, %v341
      %v349 = vsel %vm346, %v341, %v343
      %v350 = vsel %vm346, %v343, %v345
      %351 = vrot.lane.b32.xlu0 %v316, 120
      %v352 = vpop.permute.xlu0 %351
      %353 = vrot.lane.b32.xlu0 %v317, 120
      %v354 = vpop.permute.xlu0 %353
      %355 = vrot.lane.b32.xlu0 %v318, 120
      %v356 = vpop.permute.xlu0 %355
      %357 = vrot.lane.b32.xlu0 %v319, 120
      %v358 = vpop.permute.xlu0 %357
      %359 = vrot.lane.b32.xlu0 %v320, 120
      %v360 = vpop.permute.xlu0 %359
      %vm361 = vcmask 982016
      %v362 = vsel %vm361, %v352, %v354
      %v363 = vsel %vm361, %v354, %v356
      %v364 = vsel %vm361, %v356, %v358
      %v365 = vsel %vm361, %v358, %v360
      %366 = vrot.lane.b32.xlu0 %v307, 119
      %v367 = vpop.permute.xlu0 %366
      %368 = vrot.lane.b32.xlu0 %v308, 119
      %v369 = vpop.permute.xlu0 %368
      %370 = vrot.lane.b32.xlu0 %v309, 119
      %v371 = vpop.permute.xlu0 %370
      %372 = vrot.lane.b32.xlu0 %v310, 119
      %v373 = vpop.permute.xlu0 %372
      %374 = vrot.lane.b32.xlu0 0, 119
      %v375 = vpop.permute.xlu0 %374
      %vm376 = vcmask 973824
      %v377 = vsel %vm376, %v367, %v369
      %v378 = vsel %vm376, %v369, %v371
      %v379 = vsel %vm376, %v371, %v373
      %v380 = vsel %vm376, %v373, %v375
      %381 = vrot.lane.b32.xlu0 %v316, 118
      %v382 = vpop.permute.xlu0 %381
      %383 = vrot.lane.b32.xlu0 %v317, 118
      %v384 = vpop.permute.xlu0 %383
      %385 = vrot.lane.b32.xlu0 %v318, 118
      %v386 = vpop.permute.xlu0 %385
      %387 = vrot.lane.b32.xlu0 %v319, 118
      %v388 = vpop.permute.xlu0 %387
      %389 = vrot.lane.b32.xlu0 %v320, 118
      %v390 = vpop.permute.xlu0 %389
      %vm391 = vcmask 965632
      %v392 = vsel %vm391, %v382, %v384
      %v393 = vsel %vm391, %v384, %v386
      %v394 = vsel %vm391, %v386, %v388
      %v395 = vsel %vm391, %v388, %v390
      %396 = vrot.lane.b32.xlu0 %v307, 112
      %v397 = vpop.permute.xlu0 %396
      %398 = vrot.lane.b32.xlu0 %v308, 112
      %v399 = vpop.permute.xlu0 %398
      %400 = vrot.lane.b32.xlu0 %v309, 112
      %v401 = vpop.permute.xlu0 %400
      %402 = vrot.lane.b32.xlu0 %v310, 112
      %v403 = vpop.permute.xlu0 %402
      %404 = vrot.lane.b32.xlu0 0, 112
      %v405 = vpop.permute.xlu0 %404
      %vm406 = vcmask 916480
      %v407 = vsel %vm406, %v397, %v399
      %v408 = vsel %vm406, %v399, %v401
      %v409 = vsel %vm406, %v401, %v403
      %v410 = vsel %vm406, %v403, %v405
      %411 = vrot.lane.b32.xlu0 %v316, 111
      %v412 = vpop.permute.xlu0 %411
      %413 = vrot.lane.b32.xlu0 %v317, 111
      %v414 = vpop.permute.xlu0 %413
      %415 = vrot.lane.b32.xlu0 %v318, 111
      %v416 = vpop.permute.xlu0 %415
      %417 = vrot.lane.b32.xlu0 %v319, 111
      %v418 = vpop.permute.xlu0 %417
      %419 = vrot.lane.b32.xlu0 %v320, 111
      %v420 = vpop.permute.xlu0 %419
      %vm421 = vcmask 908288
      %v422 = vsel %vm421, %v412, %v414
      %v423 = vsel %vm421, %v414, %v416
      %v424 = vsel %vm421, %v416, %v418
      %v425 = vsel %vm421, %v418, %v420
      %426 = vrot.lane.b32.xlu0 %v307, 110
      %v427 = vpop.permute.xlu0 %426
      %428 = vrot.lane.b32.xlu0 %v308, 110
      %v429 = vpop.permute.xlu0 %428
      %430 = vrot.lane.b32.xlu0 %v309, 110
      %v431 = vpop.permute.xlu0 %430
      %432 = vrot.lane.b32.xlu0 %v310, 110
      %v433 = vpop.permute.xlu0 %432
      %434 = vrot.lane.b32.xlu0 0, 110
      %v435 = vpop.permute.xlu0 %434
      %vm436 = vcmask 900096
      %v437 = vsel %vm436, %v427, %v429
      %v438 = vsel %vm436, %v429, %v431
      %v439 = vsel %vm436, %v431, %v433
      %v440 = vsel %vm436, %v433, %v435
      %441 = vrot.lane.b32.xlu0 %v316, 64
      %v442 = vpop.permute.xlu0 %441
      %443 = vrot.lane.b32.xlu0 %v317, 64
      %v444 = vpop.permute.xlu0 %443
      %445 = vrot.lane.b32.xlu0 %v318, 64
      %v446 = vpop.permute.xlu0 %445
      %447 = vrot.lane.b32.xlu0 %v319, 64
      %v448 = vpop.permute.xlu0 %447
      %449 = vrot.lane.b32.xlu0 %v320, 64
      %v450 = vpop.permute.xlu0 %449
      %vm451 = vcmask 523264
      %v452 = vsel %vm451, %v442, %v444
      %v453 = vsel %vm451, %v444, %v446
      %v454 = vsel %vm451, %v446, %v448
      %v455 = vsel %vm451, %v448, %v450
      %456 = vrot.lane.b32.xlu0 %v307, 63
      %v457 = vpop.permute.xlu0 %456
      %458 = vrot.lane.b32.xlu0 %v308, 63
      %v459 = vpop.permute.xlu0 %458
      %460 = vrot.lane.b32.xlu0 %v309, 63
      %v461 = vpop.permute.xlu0 %460
      %462 = vrot.lane.b32.xlu0 %v310, 63
      %v463 = vpop.permute.xlu0 %462
      %464 = vrot.lane.b32.xlu0 0, 63
      %v465 = vpop.permute.xlu0 %464
      %vm466 = vcmask 515072
      %v467 = vsel %vm466, %v457, %v459
      %v468 = vsel %vm466, %v459, %v461
      %v469 = vsel %vm466, %v461, %v463
      %v470 = vsel %vm466, %v463, %v465
      %471 = vrot.lane.b32.xlu0 %v316, 62
      %v472 = vpop.permute.xlu0 %471
      %473 = vrot.lane.b32.xlu0 %v317, 62
      %v474 = vpop.permute.xlu0 %473
      %475 = vrot.lane.b32.xlu0 %v318, 62
      %v476 = vpop.permute.xlu0 %475
      %477 = vrot.lane.b32.xlu0 %v319, 62
      %v478 = vpop.permute.xlu0 %477
      %479 = vrot.lane.b32.xlu0 %v320, 62
      %v480 = vpop.permute.xlu0 %479
      %vm481 = vcmask 506880
      %v482 = vsel %vm481, %v472, %v474
      %v483 = vsel %vm481, %v474, %v476
      %v484 = vsel %vm481, %v476, %v478
      %v485 = vsel %vm481, %v478, %v480
      %486 = vrot.lane.b32.xlu0 %v307, 56
      %v487 = vpop.permute.xlu0 %486
      %488 = vrot.lane.b32.xlu0 %v308, 56
      %v489 = vpop.permute.xlu0 %488
      %490 = vrot.lane.b32.xlu0 %v309, 56
      %v491 = vpop.permute.xlu0 %490
      %492 = vrot.lane.b32.xlu0 %v310, 56
      %v493 = vpop.permute.xlu0 %492
      %494 = vrot.lane.b32.xlu0 0, 56
      %v495 = vpop.permute.xlu0 %494
      %vm496 = vcmask 457728
      %v497 = vsel %vm496, %v487, %v489
      %v498 = vsel %vm496, %v489, %v491
      %v499 = vsel %vm496, %v491, %v493
      %v500 = vsel %vm496, %v493, %v495
      %501 = vrot.lane.b32.xlu0 %v316, 55
      %v502 = vpop.permute.xlu0 %501
      %503 = vrot.lane.b32.xlu0 %v317, 55
      %v504 = vpop.permute.xlu0 %503
      %505 = vrot.lane.b32.xlu0 %v318, 55
      %v506 = vpop.permute.xlu0 %505
      %507 = vrot.lane.b32.xlu0 %v319, 55
      %v508 = vpop.permute.xlu0 %507
      %509 = vrot.lane.b32.xlu0 %v320, 55
      %v510 = vpop.permute.xlu0 %509
      %vm511 = vcmask 449536
      %v512 = vsel %vm511, %v502, %v504
      %v513 = vsel %vm511, %v504, %v506
      %v514 = vsel %vm511, %v506, %v508
      %v515 = vsel %vm511, %v508, %v510
      %516 = vrot.lane.b32.xlu0 %v307, 54
      %v517 = vpop.permute.xlu0 %516
      %518 = vrot.lane.b32.xlu0 %v308, 54
      %v519 = vpop.permute.xlu0 %518
      %520 = vrot.lane.b32.xlu0 %v309, 54
      %v521 = vpop.permute.xlu0 %520
      %522 = vrot.lane.b32.xlu0 %v310, 54
      %v523 = vpop.permute.xlu0 %522
      %524 = vrot.lane.b32.xlu0 0, 54
      %v525 = vpop.permute.xlu0 %524
      %vm526 = vcmask 441344
      %v527 = vsel %vm526, %v517, %v519
      %v528 = vsel %vm526, %v519, %v521
      %v529 = vsel %vm526, %v521, %v523
      %v530 = vsel %vm526, %v523, %v525
      %531 = vrot.lane.b32.xlu0 %v316, 48
      %v532 = vpop.permute.xlu0 %531
      %533 = vrot.lane.b32.xlu0 %v317, 48
      %v534 = vpop.permute.xlu0 %533
      %535 = vrot.lane.b32.xlu0 %v318, 48
      %v536 = vpop.permute.xlu0 %535
      %537 = vrot.lane.b32.xlu0 %v319, 48
      %v538 = vpop.permute.xlu0 %537
      %539 = vrot.lane.b32.xlu0 %v320, 48
      %v540 = vpop.permute.xlu0 %539
      %vm541 = vcmask 392192
      %v542 = vsel %vm541, %v532, %v534
      %v543 = vsel %vm541, %v534, %v536
      %v544 = vsel %vm541, %v536, %v538
      %v545 = vsel %vm541, %v538, %v540
      %vm546 = vcmask 1043456
      %v549 = vsel %vm546, %v307, %v332
      %v553 = vsel %vm546, %v308, %v333
      %v557 = vsel %vm546, %v309, %v334
      %v561 = vsel %vm546, %v310, %v335
      %v565 = vsel %vm546, %v347, %v362
      %v569 = vsel %vm546, %v348, %v363
      %v573 = vsel %vm546, %v349, %v364
      %v577 = vsel %vm546, %v350, %v365
      %v581 = vsel %vm546, %v377, %v392
      %v585 = vsel %vm546, %v378, %v393
      %v589 = vsel %vm546, %v379, %v394
      %v593 = vsel %vm546, %v380, %v395
      %v597 = vsel %vm546, %v407, %v422
      %v601 = vsel %vm546, %v408, %v423
      %v605 = vsel %vm546, %v409, %v424
      %v609 = vsel %vm546, %v410, %v425
      %v613 = vsel %vm546, %v437, %v452
      %v617 = vsel %vm546, %v438, %v453
      %v621 = vsel %vm546, %v439, %v454
      %v625 = vsel %vm546, %v440, %v455
      %v629 = vsel %vm546, %v467, %v482
      %v633 = vsel %vm546, %v468, %v483
      %v637 = vsel %vm546, %v469, %v484
      %v641 = vsel %vm546, %v470, %v485
      %v645 = vsel %vm546, %v497, %v512
      %v649 = vsel %vm546, %v498, %v513
      %v653 = vsel %vm546, %v499, %v514
      %v657 = vsel %vm546, %v500, %v515
      %v661 = vsel %vm546, %v527, %v542
      %v665 = vsel %vm546, %v528, %v543
      %v669 = vsel %vm546, %v529, %v544
      %v673 = vsel %vm546, %v530, %v545
      %675 = vrot.lane.b32.xlu0 %v308, 81
      %v676 = vpop.permute.xlu0 %675
      %677 = vrot.lane.b32.xlu0 %v309, 81
      %v678 = vpop.permute.xlu0 %677
      %679 = vrot.lane.b32.xlu0 %v310, 81
      %v680 = vpop.permute.xlu0 %679
      %681 = vrot.lane.b32.xlu0 0, 81
      %v682 = vpop.permute.xlu0 %681
      %vm683 = vcmask 662528
      %v684 = vsel %vm683, %v676, %v678
      %v685 = vsel %vm683, %v678, %v680
      %v686 = vsel %vm683, %v680, %v682
      %687 = vrot.lane.b32.xlu0 %v317, 80
      %v688 = vpop.permute.xlu0 %687
      %689 = vrot.lane.b32.xlu0 %v318, 80
      %v690 = vpop.permute.xlu0 %689
      %691 = vrot.lane.b32.xlu0 %v319, 80
      %v692 = vpop.permute.xlu0 %691
      %693 = vrot.lane.b32.xlu0 %v320, 80
      %v694 = vpop.permute.xlu0 %693
      %vm695 = vcmask 654336
      %v696 = vsel %vm695, %v688, %v690
      %v697 = vsel %vm695, %v690, %v692
      %v698 = vsel %vm695, %v692, %v694
      %699 = vrot.lane.b32.xlu0 %v308, 79
      %v700 = vpop.permute.xlu0 %699
      %701 = vrot.lane.b32.xlu0 %v309, 79
      %v702 = vpop.permute.xlu0 %701
      %703 = vrot.lane.b32.xlu0 %v310, 79
      %v704 = vpop.permute.xlu0 %703
      %705 = vrot.lane.b32.xlu0 0, 79
      %v706 = vpop.permute.xlu0 %705
      %vm707 = vcmask 646144
      %v708 = vsel %vm707, %v700, %v702
      %v709 = vsel %vm707, %v702, %v704
      %v710 = vsel %vm707, %v704, %v706
      %711 = vrot.lane.b32.xlu0 %v317, 73
      %v712 = vpop.permute.xlu0 %711
      %713 = vrot.lane.b32.xlu0 %v318, 73
      %v714 = vpop.permute.xlu0 %713
      %715 = vrot.lane.b32.xlu0 %v319, 73
      %v716 = vpop.permute.xlu0 %715
      %717 = vrot.lane.b32.xlu0 %v320, 73
      %v718 = vpop.permute.xlu0 %717
      %vm719 = vcmask 596992
      %v720 = vsel %vm719, %v712, %v714
      %v721 = vsel %vm719, %v714, %v716
      %v722 = vsel %vm719, %v716, %v718
      %723 = vrot.lane.b32.xlu0 %v308, 72
      %v724 = vpop.permute.xlu0 %723
      %725 = vrot.lane.b32.xlu0 %v309, 72
      %v726 = vpop.permute.xlu0 %725
      %727 = vrot.lane.b32.xlu0 %v310, 72
      %v728 = vpop.permute.xlu0 %727
      %729 = vrot.lane.b32.xlu0 0, 72
      %v730 = vpop.permute.xlu0 %729
      %vm731 = vcmask 588800
      %v732 = vsel %vm731, %v724, %v726
      %v733 = vsel %vm731, %v726, %v728
      %v734 = vsel %vm731, %v728, %v730
      %735 = vrot.lane.b32.xlu0 %v317, 71
      %v736 = vpop.permute.xlu0 %735
      %737 = vrot.lane.b32.xlu0 %v318, 71
      %v738 = vpop.permute.xlu0 %737
      %739 = vrot.lane.b32.xlu0 %v319, 71
      %v740 = vpop.permute.xlu0 %739
      %741 = vrot.lane.b32.xlu0 %v320, 71
      %v742 = vpop.permute.xlu0 %741
      %vm743 = vcmask 580608
      %v744 = vsel %vm743, %v736, %v738
      %v745 = vsel %vm743, %v738, %v740
      %v746 = vsel %vm743, %v740, %v742
      %747 = vrot.lane.b32.xlu0 %v308, 65
      %v748 = vpop.permute.xlu0 %747
      %749 = vrot.lane.b32.xlu0 %v309, 65
      %v750 = vpop.permute.xlu0 %749
      %751 = vrot.lane.b32.xlu0 %v310, 65
      %v752 = vpop.permute.xlu0 %751
      %753 = vrot.lane.b32.xlu0 0, 65
      %v754 = vpop.permute.xlu0 %753
      %vm755 = vcmask 531456
      %v756 = vsel %vm755, %v748, %v750
      %v757 = vsel %vm755, %v750, %v752
      %v758 = vsel %vm755, %v752, %v754
      %v761 = vsel %vm546, 0, %v330
      %v764 = vsel %vm546, %v676, %v688
      %v767 = vsel %vm546, %v684, %v696
      %v770 = vsel %vm546, %v685, %v697
      %v773 = vsel %vm546, %v686, %v698
      %v776 = vsel %vm546, %v682, %v694
      %v779 = vsel %vm546, %v700, %v712
      %v782 = vsel %vm546, %v708, %v720
      %v785 = vsel %vm546, %v709, %v721
      %v788 = vsel %vm546, %v710, %v722
      %v791 = vsel %vm546, %v706, %v718
      %v794 = vsel %vm546, %v724, %v736
      %v797 = vsel %vm546, %v732, %v744
      %v800 = vsel %vm546, %v733, %v745
      %v803 = vsel %vm546, %v734, %v746
      %v806 = vsel %vm546, %v730, %v742
      %v809 = vsel %vm546, %v748, %v444
      %v811 = vsel %vm546, %v756, %v453
      %v813 = vsel %vm546, %v757, %v454
      %v815 = vsel %vm546, %v758, %v455
      %v818 = vsel %vm546, %v754, %v450
      %844 = vrot.lane.b32.xlu0 %v549, 47
      %v845 = vpop.permute.xlu0 %844
      %846 = vrot.lane.b32.xlu0 %v553, 47
      %v847 = vpop.permute.xlu0 %846
      %848 = vrot.lane.b32.xlu0 %v557, 47
      %v849 = vpop.permute.xlu0 %848
      %850 = vrot.lane.b32.xlu0 %v561, 47
      %v851 = vpop.permute.xlu0 %850
      %852 = vrot.lane.b32.xlu0 %v761, 47
      %v853 = vpop.permute.xlu0 %852
      %854 = vrot.lane.b32.xlu0 %v764, 47
      %v855 = vpop.permute.xlu0 %854
      %856 = vrot.lane.b32.xlu0 %v767, 47
      %v857 = vpop.permute.xlu0 %856
      %858 = vrot.lane.b32.xlu0 %v770, 47
      %v859 = vpop.permute.xlu0 %858
      %860 = vrot.lane.b32.xlu0 %v773, 47
      %v861 = vpop.permute.xlu0 %860
      %862 = vrot.lane.b32.xlu0 %v776, 47
      %v863 = vpop.permute.xlu0 %862
      %864 = vrot.lane.b32.xlu0 %v779, 47
      %v865 = vpop.permute.xlu0 %864
      %866 = vrot.lane.b32.xlu0 %v782, 47
      %v867 = vpop.permute.xlu0 %866
      %868 = vrot.lane.b32.xlu0 %v785, 47
      %v869 = vpop.permute.xlu0 %868
      %870 = vrot.lane.b32.xlu0 %v788, 47
      %v871 = vpop.permute.xlu0 %870
      %872 = vrot.lane.b32.xlu0 %v791, 47
      %v873 = vpop.permute.xlu0 %872
      %874 = vrot.lane.b32.xlu0 %v794, 47
      %v875 = vpop.permute.xlu0 %874
      %876 = vrot.lane.b32.xlu0 %v797, 47
      %v877 = vpop.permute.xlu0 %876
      %878 = vrot.lane.b32.xlu0 %v800, 47
      %v879 = vpop.permute.xlu0 %878
      %880 = vrot.lane.b32.xlu0 %v803, 47
      %v881 = vpop.permute.xlu0 %880
      %882 = vrot.lane.b32.xlu0 %v806, 47
      %v883 = vpop.permute.xlu0 %882
      %884 = vrot.lane.b32.xlu0 %v809, 47
      %v885 = vpop.permute.xlu0 %884
      %886 = vrot.lane.b32.xlu0 %v811, 47
      %v887 = vpop.permute.xlu0 %886
      %888 = vrot.lane.b32.xlu0 %v813, 47
      %v889 = vpop.permute.xlu0 %888
      %890 = vrot.lane.b32.xlu0 %v815, 47
      %v891 = vpop.permute.xlu0 %890
      %892 = vrot.lane.b32.xlu0 %v818, 47
      %v893 = vpop.permute.xlu0 %892
      %894 = vrot.lane.b32.xlu0 %v459, 47
      %v895 = vpop.permute.xlu0 %894
      %896 = vrot.lane.b32.xlu0 %v468, 47
      %v897 = vpop.permute.xlu0 %896
      %898 = vrot.lane.b32.xlu0 %v469, 47
      %v899 = vpop.permute.xlu0 %898
      %900 = vrot.lane.b32.xlu0 %v470, 47
      %v901 = vpop.permute.xlu0 %900
      %902 = vrot.lane.b32.xlu0 %v465, 47
      %v903 = vpop.permute.xlu0 %902
      %vm904 = vcmask 384000
      %v905 = vsel %vm904, %v845, %v847
      %v906 = vsel %vm904, %v847, %v849
      %v907 = vsel %vm904, %v849, %v851
      %v908 = vsel %vm904, %v851, %v853
      %v909 = vsel %vm904, %v855, %v857
      %v910 = vsel %vm904, %v857, %v859
      %v911 = vsel %vm904, %v859, %v861
      %v912 = vsel %vm904, %v861, %v863
      %v913 = vsel %vm904, %v865, %v867
      %v914 = vsel %vm904, %v867, %v869
      %v915 = vsel %vm904, %v869, %v871
      %v916 = vsel %vm904, %v871, %v873
      %v917 = vsel %vm904, %v875, %v877
      %v918 = vsel %vm904, %v877, %v879
      %v919 = vsel %vm904, %v879, %v881
      %v920 = vsel %vm904, %v881, %v883
      %v921 = vsel %vm904, %v885, %v887
      %v922 = vsel %vm904, %v887, %v889
      %v923 = vsel %vm904, %v889, %v891
      %v924 = vsel %vm904, %v891, %v893
      %v925 = vsel %vm904, %v895, %v897
      %v926 = vsel %vm904, %v897, %v899
      %v927 = vsel %vm904, %v899, %v901
      %v928 = vsel %vm904, %v901, %v903
      %v949 = vld [vmem:[%s275] sm:$0xff]
      %v950 = vld [vmem:[%s275 + $0x8] sm:$0xff]
      %v951 = vld [vmem:[%s275 + $0x10] sm:$0xff]
      %v952 = vld [vmem:[%s275 + $0x18] sm:$0xff]
      %v953 = vld [vmem:[%s285] sm:$0xff]
      %v954 = vld [vmem:[%s285 + $0x8] sm:$0xff]
      %v955 = vld [vmem:[%s285 + $0x10] sm:$0xff]
      %v956 = vld [vmem:[%s285 + $0x18] sm:$0xff]
      %958 = vset.pattern.permute.xlu0 0
      %959 = vperm.xlu0 %958, %v953
      %v960 = vpop.permute.xlu0 %959
      %963 = vset.pattern.permute.xlu0 0
      %964 = vperm.xlu0 %963, %v954
      %v965 = vpop.permute.xlu0 %964
      %968 = vset.pattern.permute.xlu0 0
      %969 = vperm.xlu0 %968, %v955
      %v970 = vpop.permute.xlu0 %969
      %973 = vset.pattern.permute.xlu0 0
      %974 = vperm.xlu0 %973, %v956
      %v975 = vpop.permute.xlu0 %974
      %v981 = vunpack.c.l.b16 %v949
      %v982 = vunpack.c.h.b16 %v949
      %v983 = vunpack.c.l.b16 %v950
      %v984 = vunpack.c.h.b16 %v950
      %v985 = vunpack.c.l.b16 %v951
      %v986 = vunpack.c.h.b16 %v951
      %v987 = vunpack.c.l.b16 %v952
      %v988 = vunpack.c.h.b16 %v952
      %v989 = vpack.c.b16 %v983, %v981
      %v990 = vpack.c.b16 %v984, %v982
      %v991 = vpack.c.b16 %v987, %v985
      %v992 = vpack.c.b16 %v988, %v986
      %vm995 = vcmask 719872
      %v997 = vsel %vm995, %v990, 0
      %v1000 = vsel %vm995, %v992, 0
      %v1003 = vsel %vm546, %v925, 0
      %v1006 = vsel %vm546, %v926, 0
      %v1009 = vsel %vm546, %v927, 0
      %v1012 = vsel %vm546, %v928, 0
      %1014 = vmatprep.subr.bf16.mxu0 %v553
      %1015 = vmatpush1.bf16.msra.mxu0 %v549
      %1016 = vmatprep.subr.bf16.mxu0 %v569
      %1017 = vmatpush1.bf16.msra.mxu0 %v565
      %1018 = vmatprep.subr.bf16.mxu0 %v585
      %1019 = vmatpush1.bf16.msra.mxu0 %v581
      %1020 = vmatprep.subr.bf16.mxu0 %v601
      %1021 = vmatpush1.bf16.msra.mxu0 %v597
      %1022 = vmatprep.subr.bf16.mxu0 %v617
      %1023 = vmatpush1.bf16.msra.mxu0 %v613
      %1024 = vmatprep.subr.bf16.mxu0 %v633
      %1025 = vmatpush1.bf16.msra.mxu0 %v629
      %1026 = vmatprep.subr.bf16.mxu0 %v649
      %1027 = vmatpush1.bf16.msra.mxu0 %v645
      %1028 = vmatprep.subr.bf16.mxu0 %v665
      %1029 = vmatpush1.bf16.msra.mxu0 %v661
      %1030 = vmatprep.subr.bf16.mxu0 %v906
      %1031 = vmatpush1.bf16.msra.mxu0 %v905
      %1032 = vmatprep.subr.bf16.mxu0 %v910
      %1033 = vmatpush1.bf16.msra.mxu0 %v909
      %1034 = vmatprep.subr.bf16.mxu0 %v914
      %1035 = vmatpush1.bf16.msra.mxu0 %v913
      %1036 = vmatprep.subr.bf16.mxu0 %v918
      %1037 = vmatpush1.bf16.msra.mxu0 %v917
      %1038 = vmatprep.subr.bf16.mxu0 %v922
      %1039 = vmatpush1.bf16.msra.mxu0 %v921
      %1040 = vmatprep.subr.bf16.mxu0 %v1006
      %1041 = vmatpush1.bf16.msra.mxu0 %v1003
      %1042 = vmatprep.subr.bf16.mxu0 0
      %1043 = vmatpush1.bf16.msra.mxu0 0
      %1044 = vmatprep.subr.bf16.mxu0 0
      %1045 = vmatpush1.bf16.msra.mxu0 0
      %1046 = vmatprep.mubr.bf16.mxu0 %v997
      %1047 = vmatmul.mubr.bf16.gmra.mrb[0].mxu0 %v989
      %v1048 = vpop.f32.mrb[0].mxu0
      %v1049 = vadd.f32 %v960, %v1048
      %v1050 = vpop.f32.mrb[0].mxu0
      %v1051 = vadd.f32 %v960, %v1050
      %v1052 = vpop.f32.mrb[0].mxu0
      %v1053 = vadd.f32 %v965, %v1052
      %v1054 = vpop.f32.mrb[0].mxu0
      %v1055 = vadd.f32 %v965, %v1054
      %1056 = vmatprep.mubr.bf16.mxu0 %v1000
      %1057 = vmatmul.mubr.bf16.gmra.mrb[0].mxu0 %v991
      %v1058 = vpop.f32.mrb[0].mxu0
      %v1059 = vadd.f32 %v970, %v1058
      %v1060 = vpop.f32.mrb[0].mxu0
      %v1061 = vadd.f32 %v970, %v1060
      %v1062 = vpop.f32.mrb[0].mxu0
      %v1063 = vadd.f32 %v975, %v1062
      %v1064 = vpop.f32.mrb[0].mxu0
      %v1065 = vadd.f32 %v975, %v1064
      %1066 = vdwg.mxu0
      %1067 = vmatprep.subr.bf16.mxu0 %v561
      %1068 = vmatpush1.bf16.msra.mxu0 %v557
      %1069 = vmatprep.subr.bf16.mxu0 %v577
      %1070 = vmatpush1.bf16.msra.mxu0 %v573
      %1071 = vmatprep.subr.bf16.mxu0 %v593
      %1072 = vmatpush1.bf16.msra.mxu0 %v589
      %1073 = vmatprep.subr.bf16.mxu0 %v609
      %1074 = vmatpush1.bf16.msra.mxu0 %v605
      %1075 = vmatprep.subr.bf16.mxu0 %v625
      %1076 = vmatpush1.bf16.msra.mxu0 %v621
      %1077 = vmatprep.subr.bf16.mxu0 %v641
      %1078 = vmatpush1.bf16.msra.mxu0 %v637
      %1079 = vmatprep.subr.bf16.mxu0 %v657
      %1080 = vmatpush1.bf16.msra.mxu0 %v653
      %1081 = vmatprep.subr.bf16.mxu0 %v673
      %1082 = vmatpush1.bf16.msra.mxu0 %v669
      %1083 = vmatprep.subr.bf16.mxu0 %v908
      %1084 = vmatpush1.bf16.msra.mxu0 %v907
      %1085 = vmatprep.subr.bf16.mxu0 %v912
      %1086 = vmatpush1.bf16.msra.mxu0 %v911
      %1087 = vmatprep.subr.bf16.mxu0 %v916
      %1088 = vmatpush1.bf16.msra.mxu0 %v915
      %1089 = vmatprep.subr.bf16.mxu0 %v920
      %1090 = vmatpush1.bf16.msra.mxu0 %v919
      %1091 = vmatprep.subr.bf16.mxu0 %v924
      %1092 = vmatpush1.bf16.msra.mxu0 %v923
      %1093 = vmatprep.subr.bf16.mxu0 %v1012
      %1094 = vmatpush1.bf16.msra.mxu0 %v1009
      %1095 = vmatprep.subr.bf16.mxu0 0
      %1096 = vmatpush1.bf16.msra.mxu0 0
      %1097 = vmatprep.subr.bf16.mxu0 0
      %1098 = vmatpush1.bf16.msra.mxu0 0
      %1099 = vmatprep.mubr.bf16.mxu0 %v997
      %1100 = vmatmul.mubr.bf16.gmra.mrb[0].mxu0 %v989
      %v1101 = vpop.f32.mrb[0].mxu0
      %v1102 = vadd.f32 %v960, %v1101
      %v1103 = vpop.f32.mrb[0].mxu0
      %v1104 = vadd.f32 %v960, %v1103
      %v1105 = vpop.f32.mrb[0].mxu0
      %v1106 = vadd.f32 %v965, %v1105
      %v1107 = vpop.f32.mrb[0].mxu0
      %v1108 = vadd.f32 %v965, %v1107
      %1109 = vmatprep.mubr.bf16.mxu0 %v1000
      %1110 = vmatmul.mubr.bf16.gmra.mrb[0].mxu0 %v991
      %v1111 = vpop.f32.mrb[0].mxu0
      %v1112 = vadd.f32 %v970, %v1111
      %v1113 = vpop.f32.mrb[0].mxu0
      %v1114 = vadd.f32 %v970, %v1113
      %v1115 = vpop.f32.mrb[0].mxu0
      %v1116 = vadd.f32 %v975, %v1115
      %v1117 = vpop.f32.mrb[0].mxu0
      %v1118 = vadd.f32 %v975, %v1117
      %1119 = vdwg.mxu0
      %v1120 = vpack.c.bf16 %v1053, %v1049
      %v1121 = vpack.c.bf16 %v1055, %v1051
      %v1122 = vpack.c.bf16 %v1106, %v1102
      %v1123 = vpack.c.bf16 %v1108, %v1104
      %v1124 = vpack.c.bf16 %v1063, %v1059
      %v1125 = vpack.c.bf16 %v1065, %v1061
      %v1126 = vpack.c.bf16 %v1116, %v1112
      %v1127 = vpack.c.bf16 %v1118, %v1114
      %v1136 = vunpack.c.l.b16 %v1120
      %v1137 = vunpack.c.l.b16 %v1121
      %v1138 = vunpack.c.l.b16 %v1122
      %v1139 = vunpack.c.l.b16 %v1123
      %v1140 = vunpack.c.h.b16 %v1120
      %v1141 = vunpack.c.h.b16 %v1121
      %v1142 = vunpack.c.h.b16 %v1122
      %v1143 = vunpack.c.h.b16 %v1123
      %v1144 = vunpack.c.l.b16 %v1124
      %v1145 = vunpack.c.l.b16 %v1125
      %v1146 = vunpack.c.l.b16 %v1126
      %v1147 = vunpack.c.l.b16 %v1127
      %v1148 = vunpack.c.h.b16 %v1124
      %v1149 = vunpack.c.h.b16 %v1125
      %v1150 = vunpack.c.h.b16 %v1126
      %v1151 = vunpack.c.h.b16 %v1127
      %v1152 = vpack.c.b16 %v1137, %v1136
      %v1153 = vpack.c.b16 %v1139, %v1138
      %v1154 = vpack.c.b16 %v1141, %v1140
      %v1155 = vpack.c.b16 %v1143, %v1142
      %v1156 = vpack.c.b16 %v1145, %v1144
      %v1157 = vpack.c.b16 %v1147, %v1146
      %v1158 = vpack.c.b16 %v1149, %v1148
      %v1159 = vpack.c.b16 %v1151, %v1150
      %1168 = vst [vmem:[%s300] sm:$0xff] %v1152
      %1169 = vst [vmem:[%s300 + $0x8] sm:$0xff] %v1153
      %1170 = vst [vmem:[%s300 + $0x10] sm:$0xff] %v1154
      %1171 = vst [vmem:[%s300 + $0x18] sm:$0xff] %v1155
      %1172 = vst [vmem:[%s300 + $0x20] sm:$0xff] %v1156
      %1173 = vst [vmem:[%s300 + $0x28] sm:$0xff] %v1157
      %1174 = vst [vmem:[%s300 + $0x30] sm:$0xff] %v1158
      %1175 = vst [vmem:[%s300 + $0x38] sm:$0xff] %v1159
      %s1176 = smul.u32 4, %s21
      %p1177 = scmp.lt.s32.totalorder %s19, 0
      %s1178 = scalar_select %p1177, %s19, 0
      %p1179 = scmp.lt.s32.totalorder %s20, 1
      %s1180 = scalar_select %p1179, %s20, 1
      %p1181 = scmp.lt.s32.totalorder %s1176, 3
      %s1182 = scalar_select %p1181, %s1176, 3
      %s1183 = smul.addr %s1182, 4
      %s1184 = smul.addr %s1180, 16
      %s1185 = sadd.s32 %s1183, %s1184
      %s1186 = smul.addr %s1178, 32
      %s1187 = sadd.s32 %s1185, %s1186
      %s1188 = smul.addr %s1187, 4
      %s1189 = scalar_lea.vmem %s3, %s1188
      // Predicated region
      $region33: #{e3dlstm_forward.15} parent=31 // pred_check
        %p1190 = pneg %p139
      $region34: #{e3dlstm_forward.15} parent=31 // pred_check_branch
        %1192 = sbr.rel (%p1190) target = $region36
      $region35: #{e3dlstm_forward.15} parent=31 // pred_region
        %s1193 = smul.u32 4, %s21
      $region36: #{e3dlstm_forward.15} parent=31 // pred_fallthru
        _
    $region32: #{e3dlstm_forward.15} parent=5 // pred_fallthru
      _
    %p1194 = scmp.le.s32.totalorder 2, %s9
    // Predicated region
    $region37: #{e3dlstm_forward.15} parent=5 // pred_check
      %p1195 = pneg %p1194
    $region38: #{e3dlstm_forward.15} parent=5 // pred_check_branch
      %1197 = sbr.rel (%p1195) target = $region40
    $region39: #{e3dlstm_forward.15} parent=5 // pred_region
      %s1198 = ssub.s32 %s9, 2
      // Predicated region
      $region41: #{e3dlstm_forward.15} parent=39 // pred_check
        %p1199 = pneg %p145
      $region42: #{e3dlstm_forward.15} parent=39 // pred_check_branch
        %1201 = sbr.rel (%p1199) target = $region44
      $region43: #{e3dlstm_forward.15} parent=39 // pred_region
        %s1202 = smul.u32 4, %s24
        %p1203 = scmp.lt.s32.totalorder %s22, 0
        %s1204 = scalar_select %p1203, %s22, 0
        %p1205 = scmp.lt.s32.totalorder %s23, 1
        %s1206 = scalar_select %p1205, %s23, 1
        %p1207 = scmp.lt.s32.totalorder %s1202, 3
        %s1208 = scalar_select %p1207, %s1202, 3
        %s1209 = smul.addr %s1208, 4
        %s1210 = smul.addr %s1206, 16
        %s1211 = sadd.s32 %s1209, %s1210
        %s1212 = smul.addr %s1204, 32
        %s1213 = sadd.s32 %s1211, %s1212
        %s1214 = smul.addr %s1213, 4
        %s1215 = scalar_lea.vmem %s3, %s1214
      $region44: #{e3dlstm_forward.15} parent=39 // pred_fallthru
        _
    $region40: #{e3dlstm_forward.15} parent=5 // pred_fallthru
      _
  $region6: #{e3dlstm_forward.15} parent=0 // loop_footer
    %s13 = sadd.s32 1, %s9
  $region7: #{e3dlstm_forward.15} parent=0 // loop_footer_branch
    %8 = sbr.rel target = $region3
  $region8: #{e3dlstm_forward.15} parent=0 // loop_exit
    _

// kernel: e3dlstm_forward.16
$region0: #{e3dlstm_forward.16}
  #allocation0 [shape = 'u32[]', space=smem, size = 0x4, offset = 0x4, fixed_abs, tag = 'smem constant byte address 0x4 - core index']
  #allocation1 [shape = 'u32[144,128]{1,0:T(1,128)}', space=vmem, size = 0x12000, scoped, tag = 'internal scratch']
  %s0 = inlined_call_operand.vmem [shape: bf16[1,2,8,512], index: 0, kind: input, shape index: {}]
  %s1 = inlined_call_operand.vmem [shape: bf16[1,24,216], index: 1, kind: input, shape index: {}]
  %s2 = inlined_call_operand.vmem [shape: f32[1,24,1], index: 2, kind: input, shape index: {}]
  %s3 = inlined_call_operand.vmem [shape: bf16[1,2,24,512], index: 3, kind: output, shape index: {}]
  %s4 = sld [smem:[#allocation0]]
  $region45: #{e3dlstm_forward.16} parent=0
    _
  %s6 = ssub.s32 1, %s4
  %s7 = scalar_select 0, %s6, %s4
  loop: start=0, step=1, limit=4
  $region2: #{e3dlstm_forward.16} parent=0 // loop_pre_header
    _
  $region3: #{e3dlstm_forward.16} parent=0 // loop_header
    %s9 = sphi 0, %s13
    %p10 = scmp.ge.s32.totalorder %s9, 4
    %s16 = sphi 0, %s35
    %s17 = sphi 0, %s31
    %s18 = sphi 0, %s27
    %s19 = sphi 0, %s16
    %s20 = sphi 0, %s17
    %s21 = sphi 0, %s18
    %s22 = sphi 0, %s19
    %s23 = sphi 0, %s20
    %s24 = sphi 0, %s21
    %s40 = sphi 0, %s42
    %s43 = sphi 0, %s40
    %s44 = sphi 0, %s43
    %s60 = sphi 0, %s44
    %s68 = sphi 0, %s70
    %s71 = sphi 0, %s68
    %s72 = sphi 0, %s71
    %s88 = sphi 0, %s72
    %s96 = sphi 0, %s98
    %s99 = sphi 0, %s96
    %s100 = sphi 0, %s99
    %s116 = sphi 0, %s100
    %s126 = sphi 0, %s128
    %s129 = sphi 0, %s126
    %s130 = sphi 0, %s129
    %s146 = sphi 0, %s130
  $region4: #{e3dlstm_forward.16} parent=0 // loop_header_branch
    %12 = sbr.rel (%p10) target = $region8
  $region5: #{e3dlstm_forward.16} parent=0 // loop_body
    %s14 = ssub.s32 %s9, 1
    %s15 = ssub.s32 %s9, 2
    %s25 = sadd.s32 1, %s18
    %p26 = scmp.ge.s32.totalorder %s25, 1
    %s27 = scalar_select %p26, 0, %s25
    %s28 = sadd.s32 1, %s17
    %s29 = scalar_select %p26, %s28, %s17
    %p30 = scmp.ge.s32.totalorder %s29, 2
    %s31 = scalar_select %p30, 0, %s29
    %s32 = sadd.s32 1, %s16
    %s33 = scalar_select %p30, %s32, %s16
    %p34 = scmp.ge.s32.totalorder %s33, 1
    %s35 = scalar_select %p34, 0, %s33
    %s36 = ssub.s32 %s16, %s35
    %s37 = ssub.s32 %s17, %s31
    %s38 = sor.u32 %s36, %s37
    %p39 = scmp.eq.s32.totalorder %s38, 0
    %s41 = sadd.s32 %s40, 1
    %s42 = scalar_select %p39, %s40, %s41
    %p45 = pneg %p39
    %p46 = scmp.eq.s32.totalorder %s9, 1
    %p47 = por %p45, %p46
    %p48 = scmp.ne.s32.totalorder %s40, %s43
    %p49 = scmp.eq.s32.totalorder %s9, 0
    %p50 = por %p48, %p49
    %p51 = scmp.ne.s32.totalorder %s40, %s43
    %p52 = scmp.eq.s32.totalorder %s14, 1
    %p53 = por %p51, %p52
    %p54 = scmp.ne.s32.totalorder %s43, %s44
    %p55 = scmp.eq.s32.totalorder %s14, 0
    %p56 = por %p54, %p55
    %p57 = scmp.ne.s32.totalorder %s43, %s44
    %p58 = scmp.eq.s32.totalorder %s15, 1
    %p59 = por %p57, %p58
    %p61 = scmp.ne.s32.totalorder %s44, %s60
    %p62 = scmp.eq.s32.totalorder %s15, 0
    %p63 = por %p61, %p62
    %s64 = ssub.s32 %s16, %s35
    %s65 = ssub.s32 %s18, %s27
    %s66 = sor.u32 %s64, %s65
    %p67 = scmp.eq.s32.totalorder %s66, 0
    %s69 = sadd.s32 %s68, 1
    %s70 = scalar_select %p67, %s68, %s69
    %p73 = pneg %p67
    %p74 = scmp.eq.s32.totalorder %s9, 1
    %p75 = por %p73, %p74
    %p76 = scmp.ne.s32.totalorder %s68, %s71
    %p77 = scmp.eq.s32.totalorder %s9, 0
    %p78 = por %p76, %p77
    %p79 = scmp.ne.s32.totalorder %s68, %s71
    %p80 = scmp.eq.s32.totalorder %s14, 1
    %p81 = por %p79, %p80
    %p82 = scmp.ne.s32.totalorder %s71, %s72
    %p83 = scmp.eq.s32.totalorder %s14, 0
    %p84 = por %p82, %p83
    %p85 = scmp.ne.s32.totalorder %s71, %s72
    %p86 = scmp.eq.s32.totalorder %s15, 1
    %p87 = por %p85, %p86
    %p89 = scmp.ne.s32.totalorder %s72, %s88
    %p90 = scmp.eq.s32.totalorder %s15, 0
    %p91 = por %p89, %p90
    %s92 = ssub.s32 %s16, %s35
    %s93 = ssub.s32 %s18, %s27
    %s94 = sor.u32 %s92, %s93
    %p95 = scmp.eq.s32.totalorder %s94, 0
    %s97 = sadd.s32 %s96, 1
    %s98 = scalar_select %p95, %s96, %s97
    %p101 = pneg %p95
    %p102 = scmp.eq.s32.totalorder %s9, 1
    %p103 = por %p101, %p102
    %p104 = scmp.ne.s32.totalorder %s96, %s99
    %p105 = scmp.eq.s32.totalorder %s9, 0
    %p106 = por %p104, %p105
    %p107 = scmp.ne.s32.totalorder %s96, %s99
    %p108 = scmp.eq.s32.totalorder %s14, 1
    %p109 = por %p107, %p108
    %p110 = scmp.ne.s32.totalorder %s99, %s100
    %p111 = scmp.eq.s32.totalorder %s14, 0
    %p112 = por %p110, %p111
    %p113 = scmp.ne.s32.totalorder %s99, %s100
    %p114 = scmp.eq.s32.totalorder %s15, 1
    %p115 = por %p113, %p114
    %p117 = scmp.ne.s32.totalorder %s100, %s116
    %p118 = scmp.eq.s32.totalorder %s15, 0
    %p119 = por %p117, %p118
    %s120 = ssub.s32 %s16, %s35
    %s121 = ssub.s32 %s17, %s31
    %s122 = sor.u32 %s120, %s121
    %s123 = ssub.s32 %s18, %s27
    %s124 = sor.u32 %s122, %s123
    %p125 = scmp.eq.s32.totalorder %s124, 0
    %s127 = sadd.s32 %s126, 1
    %s128 = scalar_select %p125, %s126, %s127
    %p131 = pneg %p125
    %p132 = scmp.eq.s32.totalorder %s9, 1
    %p133 = por %p131, %p132
    %p134 = scmp.ne.s32.totalorder %s126, %s129
    %p135 = scmp.eq.s32.totalorder %s9, 0
    %p136 = por %p134, %p135
    %p137 = scmp.ne.s32.totalorder %s126, %s129
    %p138 = scmp.eq.s32.totalorder %s14, 1
    %p139 = por %p137, %p138
    %p140 = scmp.ne.s32.totalorder %s129, %s130
    %p141 = scmp.eq.s32.totalorder %s14, 0
    %p142 = por %p140, %p141
    %p143 = scmp.ne.s32.totalorder %s129, %s130
    %p144 = scmp.eq.s32.totalorder %s15, 1
    %p145 = por %p143, %p144
    %p147 = scmp.ne.s32.totalorder %s130, %s146
    %p148 = scmp.eq.s32.totalorder %s15, 0
    %p149 = por %p147, %p148
    %p150 = scmp.le.s32.totalorder 1, %s9
    %p151 = scmp.lt.s32.totalorder %s9, 3
    %p152 = pnand %p150, %p151
    %p153 = pneg %p152
    // Predicated region
    $region9: #{e3dlstm_forward.16} parent=5 // pred_check
      _
    $region10: #{e3dlstm_forward.16} parent=5 // pred_check_branch
      %155 = sbr.rel (%p152) target = $region12
    $region11: #{e3dlstm_forward.16} parent=5 // pred_region
      %s156 = ssub.s32 %s9, 1
      // Predicated region
      $region13: #{e3dlstm_forward.16} parent=11 // pred_check
        %p157 = pneg %p84
      $region14: #{e3dlstm_forward.16} parent=11 // pred_check_branch
        %159 = sbr.rel (%p157) target = $region16
      $region15: #{e3dlstm_forward.16} parent=11 // pred_region
        %s160 = smul.u32 3, %s21
        %p161 = scmp.lt.s32.totalorder %s19, 0
        %s162 = scalar_select %p161, %s19, 0
        %p163 = scmp.lt.s32.totalorder %s160, 2
        %s164 = scalar_select %p163, %s160, 2
        %s165 = smul.addr %s164, 2
        %s166 = smul.addr %s162, 6
        %s167 = sadd.s32 %s165, %s166
        %s168 = smul.addr %s167, 4
        %s169 = scalar_lea.vmem %s1, %s168
        %s170 = smul.u32 3, %s21
      $region16: #{e3dlstm_forward.16} parent=11 // pred_fallthru
        _
      // Predicated region
      $region17: #{e3dlstm_forward.16} parent=11 // pred_check
        %p171 = pneg %p112
      $region18: #{e3dlstm_forward.16} parent=11 // pred_check_branch
        %173 = sbr.rel (%p171) target = $region20
      $region19: #{e3dlstm_forward.16} parent=11 // pred_region
        %s174 = smul.u32 3, %s21
        %p175 = scmp.lt.s32.totalorder %s19, 0
        %s176 = scalar_select %p175, %s19, 0
        %p177 = scmp.lt.s32.totalorder %s174, 2
        %s178 = scalar_select %p177, %s174, 2
        %s179 = smul.addr %s176, 3
        %s180 = sadd.s32 %s178, %s179
        %s181 = smul.addr %s180, 8
        %s182 = scalar_lea.vmem %s2, %s181
        %s183 = smul.u32 3, %s21
      $region20: #{e3dlstm_forward.16} parent=11 // pred_fallthru
        _
    $region12: #{e3dlstm_forward.16} parent=5 // pred_fallthru
      _
    %p184 = scmp.lt.s32.totalorder %s9, 2
    // Predicated region
    $region21: #{e3dlstm_forward.16} parent=5 // pred_check
      %p185 = pneg %p184
    $region22: #{e3dlstm_forward.16} parent=5 // pred_check_branch
      %187 = sbr.rel (%p185) target = $region24
    $region23: #{e3dlstm_forward.16} parent=5 // pred_region
      // Predicated region
      $region25: #{e3dlstm_forward.16} parent=23 // pred_check
        %p188 = pneg %p50
      $region26: #{e3dlstm_forward.16} parent=23 // pred_check_branch
        %190 = sbr.rel (%p188) target = $region28
      $region27: #{e3dlstm_forward.16} parent=23 // pred_region
        %p191 = scmp.lt.s32.totalorder %s16, 0
        %s192 = scalar_select %p191, %s16, 0
        %p193 = scmp.lt.s32.totalorder %s17, 1
        %s194 = scalar_select %p193, %s17, 1
        %s195 = smul.addr %s194, 4
        %s196 = smul.addr %s192, 8
        %s197 = sadd.s32 %s195, %s196
        %s198 = smul.addr %s197, 4
        %s199 = scalar_lea.vmem %s0, %s198
      $region28: #{e3dlstm_forward.16} parent=23 // pred_fallthru
        _
    $region24: #{e3dlstm_forward.16} parent=5 // pred_fallthru
      _
    %p200 = scmp.le.s32.totalorder 1, %s9
    %p201 = scmp.lt.s32.totalorder %s9, 3
    %p202 = pnand %p200, %p201
    %p203 = pneg %p202
    // Predicated region
    $region29: #{e3dlstm_forward.16} parent=5 // pred_check
      _
    $region30: #{e3dlstm_forward.16} parent=5 // pred_check_branch
      %205 = sbr.rel (%p202) target = $region32
    $region31: #{e3dlstm_forward.16} parent=5 // pred_region
      %s206 = ssub.s32 %s9, 1
      %p207 = scmp.lt.s32.totalorder %s19, 0
      %s208 = scalar_select %p207, %s19, 0
      %p209 = scmp.lt.s32.totalorder %s20, 1
      %s210 = scalar_select %p209, %s20, 1
      %s211 = smul.addr %s210, 4
      %s212 = smul.addr %s208, 8
      %s213 = sadd.s32 %s211, %s212
      %s214 = smul.addr %s213, 4
      %s215 = scalar_lea.vmem %s0, %s214
      %p216 = pneg %p56
      %p217 = pneg %p53
      %s218 = smul.u32 3, %s21
      %p219 = scmp.lt.s32.totalorder %s19, 0
      %s220 = scalar_select %p219, %s19, 0
      %p221 = scmp.lt.s32.totalorder %s218, 2
      %s222 = scalar_select %p221, %s218, 2
      %s223 = smul.addr %s222, 2
      %s224 = smul.addr %s220, 6
      %s225 = sadd.s32 %s223, %s224
      %s226 = smul.addr %s225, 4
      %s227 = scalar_lea.vmem %s1, %s226
      %p228 = pneg %p84
      %p229 = pneg %p81
      %s230 = smul.u32 3, %s21
      %p231 = scmp.lt.s32.totalorder %s19, 0
      %s232 = scalar_select %p231, %s19, 0
      %p233 = scmp.lt.s32.totalorder %s230, 2
      %s234 = scalar_select %p233, %s230, 2
      %s235 = smul.addr %s232, 3
      %s236 = sadd.s32 %s234, %s235
      %s237 = smul.addr %s236, 8
      %s238 = scalar_lea.vmem %s2, %s237
      %p239 = pneg %p112
      %p240 = pneg %p109
      %p241 = pneg %p142
      %p242 = pneg %p139
      %s243 = smul.u32 3, %s21
      %p244 = scmp.lt.s32.totalorder %s19, 0
      %s245 = scalar_select %p244, %s19, 0
      %p246 = scmp.lt.s32.totalorder %s20, 1
      %s247 = scalar_select %p246, %s20, 1
      %p248 = scmp.lt.s32.totalorder %s243, 2
      %s249 = scalar_select %p248, %s243, 2
      %s250 = smul.addr %s249, 4
      %s251 = smul.addr %s247, 12
      %s252 = sadd.s32 %s250, %s251
      %s253 = smul.addr %s245, 24
      %s254 = sadd.s32 %s252, %s253
      %s255 = smul.addr %s254, 4
      %s256 = scalar_lea.vmem %s3, %s255
      %p257 = scmp.lt.s32.totalorder %s19, 0
      %s258 = scalar_select %p257, %s19, 0
      %p259 = scmp.lt.s32.totalorder %s20, 1
      %s260 = scalar_select %p259, %s20, 1
      %s261 = smul.addr %s260, 4
      %s262 = smul.addr %s258, 8
      %s263 = sadd.s32 %s261, %s262
      %s264 = smul.addr %s263, 4
      %s265 = scalar_lea.vmem %s0, %s264
      %s266 = smul.u32 3, %s21
      %p267 = scmp.lt.s32.totalorder %s19, 0
      %s268 = scalar_select %p267, %s19, 0
      %p269 = scmp.lt.s32.totalorder %s266, 2
      %s270 = scalar_select %p269, %s266, 2
      %s271 = smul.addr %s270, 2
      %s272 = smul.addr %s268, 6
      %s273 = sadd.s32 %s271, %s272
      %s274 = smul.addr %s273, 4
      %s275 = scalar_lea.vmem %s1, %s274
      %s276 = smul.u32 3, %s21
      %s277 = smul.u32 3, %s21
      %p278 = scmp.lt.s32.totalorder %s19, 0
      %s279 = scalar_select %p278, %s19, 0
      %p280 = scmp.lt.s32.totalorder %s277, 2
      %s281 = scalar_select %p280, %s277, 2
      %s282 = smul.addr %s279, 3
      %s283 = sadd.s32 %s281, %s282
      %s284 = smul.addr %s283, 8
      %s285 = scalar_lea.vmem %s2, %s284
      %s286 = smul.u32 3, %s21
      %s287 = smul.u32 3, %s21
      %p288 = scmp.lt.s32.totalorder %s19, 0
      %s289 = scalar_select %p288, %s19, 0
      %p290 = scmp.lt.s32.totalorder %s20, 1
      %s291 = scalar_select %p290, %s20, 1
      %p292 = scmp.lt.s32.totalorder %s287, 2
      %s293 = scalar_select %p292, %s287, 2
      %s294 = smul.addr %s293, 4
      %s295 = smul.addr %s291, 12
      %s296 = sadd.s32 %s294, %s295
      %s297 = smul.addr %s289, 24
      %s298 = sadd.s32 %s296, %s297
      %s299 = smul.addr %s298, 4
      %s300 = scalar_lea.vmem %s3, %s299
      %s301 = smul.u32 3, %s21
      %v303 = vld [vmem:[%s265] sm:$0xff]
      %v304 = vld [vmem:[%s265 + $0x8] sm:$0xff]
      %v307 = vunpack.c.l.b16 %v303
      %v308 = vunpack.c.h.b16 %v303
      %v309 = vunpack.c.l.b16 %v304
      %v310 = vunpack.c.h.b16 %v304
      %v311 = vpack.c.b16 %v307, %v307
      %v312 = vpack.c.b16 %v308, %v308
      %v313 = vpack.c.b16 %v309, %v309
      %v314 = vpack.c.b16 %v310, %v310
      %v316 = vrot.slane %v311, 4
      %v317 = vrot.slane %v312, 4
      %v318 = vrot.slane %v313, 4
      %v319 = vrot.slane %v314, 4
      %v320 = vrot.slane 0, 4
      %321 = vrot.lane.b32.xlu0 %v316, 127
      %v322 = vpop.permute.xlu0 %321
      %323 = vrot.lane.b32.xlu0 %v317, 127
      %v324 = vpop.permute.xlu0 %323
      %325 = vrot.lane.b32.xlu0 %v318, 127
      %v326 = vpop.permute.xlu0 %325
      %327 = vrot.lane.b32.xlu0 %v319, 127
      %v328 = vpop.permute.xlu0 %327
      %329 = vrot.lane.b32.xlu0 %v320, 127
      %v330 = vpop.permute.xlu0 %329
      %vm331 = vcmask 1039360
      %v332 = vsel %vm331, %v322, %v324
      %v333 = vsel %vm331, %v324, %v326
      %v334 = vsel %vm331, %v326, %v328
      %v335 = vsel %vm331, %v328, %v330
      %336 = vrot.lane.b32.xlu0 %v311, 126
      %v337 = vpop.permute.xlu0 %336
      %338 = vrot.lane.b32.xlu0 %v312, 126
      %v339 = vpop.permute.xlu0 %338
      %340 = vrot.lane.b32.xlu0 %v313, 126
      %v341 = vpop.permute.xlu0 %340
      %342 = vrot.lane.b32.xlu0 %v314, 126
      %v343 = vpop.permute.xlu0 %342
      %344 = vrot.lane.b32.xlu0 0, 126
      %v345 = vpop.permute.xlu0 %344
      %vm346 = vcmask 1031168
      %v347 = vsel %vm346, %v337, %v339
      %v348 = vsel %vm346, %v339, %v341
      %v349 = vsel %vm346, %v341, %v343
      %v350 = vsel %vm346, %v343, %v345
      %351 = vrot.lane.b32.xlu0 %v316, 120
      %v352 = vpop.permute.xlu0 %351
      %353 = vrot.lane.b32.xlu0 %v317, 120
      %v354 = vpop.permute.xlu0 %353
      %355 = vrot.lane.b32.xlu0 %v318, 120
      %v356 = vpop.permute.xlu0 %355
      %357 = vrot.lane.b32.xlu0 %v319, 120
      %v358 = vpop.permute.xlu0 %357
      %359 = vrot.lane.b32.xlu0 %v320, 120
      %v360 = vpop.permute.xlu0 %359
      %vm361 = vcmask 982016
      %v362 = vsel %vm361, %v352, %v354
      %v363 = vsel %vm361, %v354, %v356
      %v364 = vsel %vm361, %v356, %v358
      %v365 = vsel %vm361, %v358, %v360
      %366 = vrot.lane.b32.xlu0 %v311, 119
      %v367 = vpop.permute.xlu0 %366
      %368 = vrot.lane.b32.xlu0 %v312, 119
      %v369 = vpop.permute.xlu0 %368
      %370 = vrot.lane.b32.xlu0 %v313, 119
      %v371 = vpop.permute.xlu0 %370
      %372 = vrot.lane.b32.xlu0 %v314, 119
      %v373 = vpop.permute.xlu0 %372
      %374 = vrot.lane.b32.xlu0 0, 119
      %v375 = vpop.permute.xlu0 %374
      %vm376 = vcmask 973824
      %v377 = vsel %vm376, %v367, %v369
      %v378 = vsel %vm376, %v369, %v371
      %v379 = vsel %vm376, %v371, %v373
      %v380 = vsel %vm376, %v373, %v375
      %381 = vrot.lane.b32.xlu0 %v316, 118
      %v382 = vpop.permute.xlu0 %381
      %383 = vrot.lane.b32.xlu0 %v317, 118
      %v384 = vpop.permute.xlu0 %383
      %385 = vrot.lane.b32.xlu0 %v318, 118
      %v386 = vpop.permute.xlu0 %385
      %387 = vrot.lane.b32.xlu0 %v319, 118
      %v388 = vpop.permute.xlu0 %387
      %389 = vrot.lane.b32.xlu0 %v320, 118
      %v390 = vpop.permute.xlu0 %389
      %vm391 = vcmask 965632
      %v392 = vsel %vm391, %v382, %v384
      %v393 = vsel %vm391, %v384, %v386
      %v394 = vsel %vm391, %v386, %v388
      %v395 = vsel %vm391, %v388, %v390
      %396 = vrot.lane.b32.xlu0 %v311, 112
      %v397 = vpop.permute.xlu0 %396
      %398 = vrot.lane.b32.xlu0 %v312, 112
      %v399 = vpop.permute.xlu0 %398
      %400 = vrot.lane.b32.xlu0 %v313, 112
      %v401 = vpop.permute.xlu0 %400
      %402 = vrot.lane.b32.xlu0 %v314, 112
      %v403 = vpop.permute.xlu0 %402
      %404 = vrot.lane.b32.xlu0 0, 112
      %v405 = vpop.permute.xlu0 %404
      %vm406 = vcmask 916480
      %v407 = vsel %vm406, %v397, %v399
      %v408 = vsel %vm406, %v399, %v401
      %v409 = vsel %vm406, %v401, %v403
      %v410 = vsel %vm406, %v403, %v405
      %411 = vrot.lane.b32.xlu0 %v316, 111
      %v412 = vpop.permute.xlu0 %411
      %413 = vrot.lane.b32.xlu0 %v317, 111
      %v414 = vpop.permute.xlu0 %413
      %415 = vrot.lane.b32.xlu0 %v318, 111
      %v416 = vpop.permute.xlu0 %415
      %417 = vrot.lane.b32.xlu0 %v319, 111
      %v418 = vpop.permute.xlu0 %417
      %419 = vrot.lane.b32.xlu0 %v320, 111
      %v420 = vpop.permute.xlu0 %419
      %vm421 = vcmask 908288
      %v422 = vsel %vm421, %v412, %v414
      %v423 = vsel %vm421, %v414, %v416
      %v424 = vsel %vm421, %v416, %v418
      %v425 = vsel %vm421, %v418, %v420
      %426 = vrot.lane.b32.xlu0 %v311, 110
      %v427 = vpop.permute.xlu0 %426
      %428 = vrot.lane.b32.xlu0 %v312, 110
      %v429 = vpop.permute.xlu0 %428
      %430 = vrot.lane.b32.xlu0 %v313, 110
      %v431 = vpop.permute.xlu0 %430
      %432 = vrot.lane.b32.xlu0 %v314, 110
      %v433 = vpop.permute.xlu0 %432
      %434 = vrot.lane.b32.xlu0 0, 110
      %v435 = vpop.permute.xlu0 %434
      %vm436 = vcmask 900096
      %v437 = vsel %vm436, %v427, %v429
      %v438 = vsel %vm436, %v429, %v431
      %v439 = vsel %vm436, %v431, %v433
      %v440 = vsel %vm436, %v433, %v435
      %441 = vrot.lane.b32.xlu0 %v316, 64
      %v442 = vpop.permute.xlu0 %441
      %443 = vrot.lane.b32.xlu0 %v317, 64
      %v444 = vpop.permute.xlu0 %443
      %445 = vrot.lane.b32.xlu0 %v318, 64
      %v446 = vpop.permute.xlu0 %445
      %447 = vrot.lane.b32.xlu0 %v319, 64
      %v448 = vpop.permute.xlu0 %447
      %449 = vrot.lane.b32.xlu0 %v320, 64
      %v450 = vpop.permute.xlu0 %449
      %vm451 = vcmask 523264
      %v452 = vsel %vm451, %v442, %v444
      %v453 = vsel %vm451, %v444, %v446
      %v454 = vsel %vm451, %v446, %v448
      %v455 = vsel %vm451, %v448, %v450
      %456 = vrot.lane.b32.xlu0 %v311, 63
      %v457 = vpop.permute.xlu0 %456
      %458 = vrot.lane.b32.xlu0 %v312, 63
      %v459 = vpop.permute.xlu0 %458
      %460 = vrot.lane.b32.xlu0 %v313, 63
      %v461 = vpop.permute.xlu0 %460
      %462 = vrot.lane.b32.xlu0 %v314, 63
      %v463 = vpop.permute.xlu0 %462
      %464 = vrot.lane.b32.xlu0 0, 63
      %v465 = vpop.permute.xlu0 %464
      %vm466 = vcmask 515072
      %v467 = vsel %vm466, %v457, %v459
      %v468 = vsel %vm466, %v459, %v461
      %v469 = vsel %vm466, %v461, %v463
      %v470 = vsel %vm466, %v463, %v465
      %471 = vrot.lane.b32.xlu0 %v316, 62
      %v472 = vpop.permute.xlu0 %471
      %473 = vrot.lane.b32.xlu0 %v317, 62
      %v474 = vpop.permute.xlu0 %473
      %475 = vrot.lane.b32.xlu0 %v318, 62
      %v476 = vpop.permute.xlu0 %475
      %477 = vrot.lane.b32.xlu0 %v319, 62
      %v478 = vpop.permute.xlu0 %477
      %479 = vrot.lane.b32.xlu0 %v320, 62
      %v480 = vpop.permute.xlu0 %479
      %vm481 = vcmask 506880
      %v482 = vsel %vm481, %v472, %v474
      %v483 = vsel %vm481, %v474, %v476
      %v484 = vsel %vm481, %v476, %v478
      %v485 = vsel %vm481, %v478, %v480
      %486 = vrot.lane.b32.xlu0 %v311, 56
      %v487 = vpop.permute.xlu0 %486
      %488 = vrot.lane.b32.xlu0 %v312, 56
      %v489 = vpop.permute.xlu0 %488
      %490 = vrot.lane.b32.xlu0 %v313, 56
      %v491 = vpop.permute.xlu0 %490
      %492 = vrot.lane.b32.xlu0 %v314, 56
      %v493 = vpop.permute.xlu0 %492
      %494 = vrot.lane.b32.xlu0 0, 56
      %v495 = vpop.permute.xlu0 %494
      %vm496 = vcmask 457728
      %v497 = vsel %vm496, %v487, %v489
      %v498 = vsel %vm496, %v489, %v491
      %v499 = vsel %vm496, %v491, %v493
      %v500 = vsel %vm496, %v493, %v495
      %501 = vrot.lane.b32.xlu0 %v316, 55
      %v502 = vpop.permute.xlu0 %501
      %503 = vrot.lane.b32.xlu0 %v317, 55
      %v504 = vpop.permute.xlu0 %503
      %505 = vrot.lane.b32.xlu0 %v318, 55
      %v506 = vpop.permute.xlu0 %505
      %507 = vrot.lane.b32.xlu0 %v319, 55
      %v508 = vpop.permute.xlu0 %507
      %509 = vrot.lane.b32.xlu0 %v320, 55
      %v510 = vpop.permute.xlu0 %509
      %vm511 = vcmask 449536
      %v512 = vsel %vm511, %v502, %v504
      %v513 = vsel %vm511, %v504, %v506
      %v514 = vsel %vm511, %v506, %v508
      %v515 = vsel %vm511, %v508, %v510
      %516 = vrot.lane.b32.xlu0 %v311, 54
      %v517 = vpop.permute.xlu0 %516
      %518 = vrot.lane.b32.xlu0 %v312, 54
      %v519 = vpop.permute.xlu0 %518
      %520 = vrot.lane.b32.xlu0 %v313, 54
      %v521 = vpop.permute.xlu0 %520
      %522 = vrot.lane.b32.xlu0 %v314, 54
      %v523 = vpop.permute.xlu0 %522
      %524 = vrot.lane.b32.xlu0 0, 54
      %v525 = vpop.permute.xlu0 %524
      %vm526 = vcmask 441344
      %v527 = vsel %vm526, %v517, %v519
      %v528 = vsel %vm526, %v519, %v521
      %v529 = vsel %vm526, %v521, %v523
      %v530 = vsel %vm526, %v523, %v525
      %531 = vrot.lane.b32.xlu0 %v316, 48
      %v532 = vpop.permute.xlu0 %531
      %533 = vrot.lane.b32.xlu0 %v317, 48
      %v534 = vpop.permute.xlu0 %533
      %535 = vrot.lane.b32.xlu0 %v318, 48
      %v536 = vpop.permute.xlu0 %535
      %537 = vrot.lane.b32.xlu0 %v319, 48
      %v538 = vpop.permute.xlu0 %537
      %539 = vrot.lane.b32.xlu0 %v320, 48
      %v540 = vpop.permute.xlu0 %539
      %vm541 = vcmask 392192
      %v542 = vsel %vm541, %v532, %v534
      %v543 = vsel %vm541, %v534, %v536
      %v544 = vsel %vm541, %v536, %v538
      %v545 = vsel %vm541, %v538, %v540
      %vm546 = vcmask 1043456
      %v549 = vsel %vm546, %v311, %v332
      %v553 = vsel %vm546, %v312, %v333
      %v557 = vsel %vm546, %v313, %v334
      %v561 = vsel %vm546, %v314, %v335
      %v565 = vsel %vm546, %v347, %v362
      %v569 = vsel %vm546, %v348, %v363
      %v573 = vsel %vm546, %v349, %v364
      %v577 = vsel %vm546, %v350, %v365
      %v581 = vsel %vm546, %v377, %v392
      %v585 = vsel %vm546, %v378, %v393
      %v589 = vsel %vm546, %v379, %v394
      %v593 = vsel %vm546, %v380, %v395
      %v597 = vsel %vm546, %v407, %v422
      %v601 = vsel %vm546, %v408, %v423
      %v605 = vsel %vm546, %v409, %v424
      %v609 = vsel %vm546, %v410, %v425
      %v613 = vsel %vm546, %v437, %v452
      %v617 = vsel %vm546, %v438, %v453
      %v621 = vsel %vm546, %v439, %v454
      %v625 = vsel %vm546, %v440, %v455
      %v629 = vsel %vm546, %v467, %v482
      %v633 = vsel %vm546, %v468, %v483
      %v637 = vsel %vm546, %v469, %v484
      %v641 = vsel %vm546, %v470, %v485
      %v645 = vsel %vm546, %v497, %v512
      %v649 = vsel %vm546, %v498, %v513
      %v653 = vsel %vm546, %v499, %v514
      %v657 = vsel %vm546, %v500, %v515
      %v661 = vsel %vm546, %v527, %v542
      %v665 = vsel %vm546, %v528, %v543
      %v669 = vsel %vm546, %v529, %v544
      %v673 = vsel %vm546, %v530, %v545
      %675 = vrot.lane.b32.xlu0 %v312, 81
      %v676 = vpop.permute.xlu0 %675
      %677 = vrot.lane.b32.xlu0 %v313, 81
      %v678 = vpop.permute.xlu0 %677
      %679 = vrot.lane.b32.xlu0 %v314, 81
      %v680 = vpop.permute.xlu0 %679
      %681 = vrot.lane.b32.xlu0 0, 81
      %v682 = vpop.permute.xlu0 %681
      %vm683 = vcmask 662528
      %v684 = vsel %vm683, %v676, %v678
      %v685 = vsel %vm683, %v678, %v680
      %v686 = vsel %vm683, %v680, %v682
      %687 = vrot.lane.b32.xlu0 %v317, 80
      %v688 = vpop.permute.xlu0 %687
      %689 = vrot.lane.b32.xlu0 %v318, 80
      %v690 = vpop.permute.xlu0 %689
      %691 = vrot.lane.b32.xlu0 %v319, 80
      %v692 = vpop.permute.xlu0 %691
      %693 = vrot.lane.b32.xlu0 %v320, 80
      %v694 = vpop.permute.xlu0 %693
      %vm695 = vcmask 654336
      %v696 = vsel %vm695, %v688, %v690
      %v697 = vsel %vm695, %v690, %v692
      %v698 = vsel %vm695, %v692, %v694
      %699 = vrot.lane.b32.xlu0 %v312, 79
      %v700 = vpop.permute.xlu0 %699
      %701 = vrot.lane.b32.xlu0 %v313, 79
      %v702 = vpop.permute.xlu0 %701
      %703 = vrot.lane.b32.xlu0 %v314, 79
      %v704 = vpop.permute.xlu0 %703
      %705 = vrot.lane.b32.xlu0 0, 79
      %v706 = vpop.permute.xlu0 %705
      %vm707 = vcmask 646144
      %v708 = vsel %vm707, %v700, %v702
      %v709 = vsel %vm707, %v702, %v704
      %v710 = vsel %vm707, %v704, %v706
      %711 = vrot.lane.b32.xlu0 %v317, 73
      %v712 = vpop.permute.xlu0 %711
      %713 = vrot.lane.b32.xlu0 %v318, 73
      %v714 = vpop.permute.xlu0 %713
      %715 = vrot.lane.b32.xlu0 %v319, 73
      %v716 = vpop.permute.xlu0 %715
      %717 = vrot.lane.b32.xlu0 %v320, 73
      %v718 = vpop.permute.xlu0 %717
      %vm719 = vcmask 596992
      %v720 = vsel %vm719, %v712, %v714
      %v721 = vsel %vm719, %v714, %v716
      %v722 = vsel %vm719, %v716, %v718
      %723 = vrot.lane.b32.xlu0 %v312, 72
      %v724 = vpop.permute.xlu0 %723
      %725 = vrot.lane.b32.xlu0 %v313, 72
      %v726 = vpop.permute.xlu0 %725
      %727 = vrot.lane.b32.xlu0 %v314, 72
      %v728 = vpop.permute.xlu0 %727
      %729 = vrot.lane.b32.xlu0 0, 72
      %v730 = vpop.permute.xlu0 %729
      %vm731 = vcmask 588800
      %v732 = vsel %vm731, %v724, %v726
      %v733 = vsel %vm731, %v726, %v728
      %v734 = vsel %vm731, %v728, %v730
      %735 = vrot.lane.b32.xlu0 %v317, 71
      %v736 = vpop.permute.xlu0 %735
      %737 = vrot.lane.b32.xlu0 %v318, 71
      %v738 = vpop.permute.xlu0 %737
      %739 = vrot.lane.b32.xlu0 %v319, 71
      %v740 = vpop.permute.xlu0 %739
      %741 = vrot.lane.b32.xlu0 %v320, 71
      %v742 = vpop.permute.xlu0 %741
      %vm743 = vcmask 580608
      %v744 = vsel %vm743, %v736, %v738
      %v745 = vsel %vm743, %v738, %v740
      %v746 = vsel %vm743, %v740, %v742
      %747 = vrot.lane.b32.xlu0 %v312, 65
      %v748 = vpop.permute.xlu0 %747
      %749 = vrot.lane.b32.xlu0 %v313, 65
      %v750 = vpop.permute.xlu0 %749
      %751 = vrot.lane.b32.xlu0 %v314, 65
      %v752 = vpop.permute.xlu0 %751
      %753 = vrot.lane.b32.xlu0 0, 65
      %v754 = vpop.permute.xlu0 %753
      %vm755 = vcmask 531456
      %v756 = vsel %vm755, %v748, %v750
      %v757 = vsel %vm755, %v750, %v752
      %v758 = vsel %vm755, %v752, %v754
      %v761 = vsel %vm546, 0, %v330
      %v764 = vsel %vm546, %v676, %v688
      %v767 = vsel %vm546, %v684, %v696
      %v770 = vsel %vm546, %v685, %v697
      %v773 = vsel %vm546, %v686, %v698
      %v776 = vsel %vm546, %v682, %v694
      %v779 = vsel %vm546, %v700, %v712
      %v782 = vsel %vm546, %v708, %v720
      %v785 = vsel %vm546, %v709, %v721
      %v788 = vsel %vm546, %v710, %v722
      %v791 = vsel %vm546, %v706, %v718
      %v794 = vsel %vm546, %v724, %v736
      %v797 = vsel %vm546, %v732, %v744
      %v800 = vsel %vm546, %v733, %v745
      %v803 = vsel %vm546, %v734, %v746
      %v806 = vsel %vm546, %v730, %v742
      %v809 = vsel %vm546, %v748, %v444
      %v811 = vsel %vm546, %v756, %v453
      %v813 = vsel %vm546, %v757, %v454
      %v815 = vsel %vm546, %v758, %v455
      %v818 = vsel %vm546, %v754, %v450
      %844 = vrot.lane.b32.xlu0 %v549, 47
      %v845 = vpop.permute.xlu0 %844
      %846 = vrot.lane.b32.xlu0 %v553, 47
      %v847 = vpop.permute.xlu0 %846
      %848 = vrot.lane.b32.xlu0 %v557, 47
      %v849 = vpop.permute.xlu0 %848
      %850 = vrot.lane.b32.xlu0 %v561, 47
      %v851 = vpop.permute.xlu0 %850
      %852 = vrot.lane.b32.xlu0 %v761, 47
      %v853 = vpop.permute.xlu0 %852
      %854 = vrot.lane.b32.xlu0 %v764, 47
      %v855 = vpop.permute.xlu0 %854
      %856 = vrot.lane.b32.xlu0 %v767, 47
      %v857 = vpop.permute.xlu0 %856
      %858 = vrot.lane.b32.xlu0 %v770, 47
      %v859 = vpop.permute.xlu0 %858
      %860 = vrot.lane.b32.xlu0 %v773, 47
      %v861 = vpop.permute.xlu0 %860
      %862 = vrot.lane.b32.xlu0 %v776, 47
      %v863 = vpop.permute.xlu0 %862
      %864 = vrot.lane.b32.xlu0 %v779, 47
      %v865 = vpop.permute.xlu0 %864
      %866 = vrot.lane.b32.xlu0 %v782, 47
      %v867 = vpop.permute.xlu0 %866
      %868 = vrot.lane.b32.xlu0 %v785, 47
      %v869 = vpop.permute.xlu0 %868
      %870 = vrot.lane.b32.xlu0 %v788, 47
      %v871 = vpop.permute.xlu0 %870
      %872 = vrot.lane.b32.xlu0 %v791, 47
      %v873 = vpop.permute.xlu0 %872
      %874 = vrot.lane.b32.xlu0 %v794, 47
      %v875 = vpop.permute.xlu0 %874
      %876 = vrot.lane.b32.xlu0 %v797, 47
      %v877 = vpop.permute.xlu0 %876
      %878 = vrot.lane.b32.xlu0 %v800, 47
      %v879 = vpop.permute.xlu0 %878
      %880 = vrot.lane.b32.xlu0 %v803, 47
      %v881 = vpop.permute.xlu0 %880
      %882 = vrot.lane.b32.xlu0 %v806, 47
      %v883 = vpop.permute.xlu0 %882
      %884 = vrot.lane.b32.xlu0 %v809, 47
      %v885 = vpop.permute.xlu0 %884
      %886 = vrot.lane.b32.xlu0 %v811, 47
      %v887 = vpop.permute.xlu0 %886
      %888 = vrot.lane.b32.xlu0 %v813, 47
      %v889 = vpop.permute.xlu0 %888
      %890 = vrot.lane.b32.xlu0 %v815, 47
      %v891 = vpop.permute.xlu0 %890
      %892 = vrot.lane.b32.xlu0 %v818, 47
      %v893 = vpop.permute.xlu0 %892
      %894 = vrot.lane.b32.xlu0 %v459, 47
      %v895 = vpop.permute.xlu0 %894
      %896 = vrot.lane.b32.xlu0 %v468, 47
      %v897 = vpop.permute.xlu0 %896
      %898 = vrot.lane.b32.xlu0 %v469, 47
      %v899 = vpop.permute.xlu0 %898
      %900 = vrot.lane.b32.xlu0 %v470, 47
      %v901 = vpop.permute.xlu0 %900
      %902 = vrot.lane.b32.xlu0 %v465, 47
      %v903 = vpop.permute.xlu0 %902
      %vm904 = vcmask 384000
      %v905 = vsel %vm904, %v845, %v847
      %v906 = vsel %vm904, %v847, %v849
      %v907 = vsel %vm904, %v849, %v851
      %v908 = vsel %vm904, %v851, %v853
      %v909 = vsel %vm904, %v855, %v857
      %v910 = vsel %vm904, %v857, %v859
      %v911 = vsel %vm904, %v859, %v861
      %v912 = vsel %vm904, %v861, %v863
      %v913 = vsel %vm904, %v865, %v867
      %v914 = vsel %vm904, %v867, %v869
      %v915 = vsel %vm904, %v869, %v871
      %v916 = vsel %vm904, %v871, %v873
      %v917 = vsel %vm904, %v875, %v877
      %v918 = vsel %vm904, %v877, %v879
      %v919 = vsel %vm904, %v879, %v881
      %v920 = vsel %vm904, %v881, %v883
      %v921 = vsel %vm904, %v885, %v887
      %v922 = vsel %vm904, %v887, %v889
      %v923 = vsel %vm904, %v889, %v891
      %v924 = vsel %vm904, %v891, %v893
      %v925 = vsel %vm904, %v895, %v897
      %v926 = vsel %vm904, %v897, %v899
      %v927 = vsel %vm904, %v899, %v901
      %v928 = vsel %vm904, %v901, %v903
      %v949 = vld [vmem:[%s275] sm:$0xff]
      %v950 = vld [vmem:[%s275 + $0x8] sm:$0xff]
      %v951 = vld [vmem:[%s275 + $0x10] sm:$0xff]
      %v952 = vld [vmem:[%s285] sm:$0xff]
      %v953 = vld [vmem:[%s285 + $0x8] sm:$0xff]
      %v954 = vld [vmem:[%s285 + $0x10] sm:$0xff]
      %956 = vset.pattern.permute.xlu0 0
      %957 = vperm.xlu0 %956, %v952
      %v958 = vpop.permute.xlu0 %957
      %961 = vset.pattern.permute.xlu0 0
      %962 = vperm.xlu0 %961, %v953
      %v963 = vpop.permute.xlu0 %962
      %966 = vset.pattern.permute.xlu0 0
      %967 = vperm.xlu0 %966, %v954
      %v968 = vpop.permute.xlu0 %967
      %v973 = vunpack.c.l.b16 %v949
      %v974 = vunpack.c.h.b16 %v949
      %v975 = vunpack.c.l.b16 %v950
      %v976 = vunpack.c.h.b16 %v950
      %v977 = vunpack.c.l.b16 %v951
      %v978 = vunpack.c.h.b16 %v951
      %v979 = vpack.c.b16 %v975, %v973
      %v980 = vpack.c.b16 %v976, %v974
      %v981 = vpack.c.b16 %v977, %v977
      %v982 = vpack.c.b16 %v978, %v978
      %vm985 = vcmask 719872
      %v987 = vsel %vm985, %v980, 0
      %v990 = vsel %vm985, %v982, 0
      %v993 = vsel %vm546, %v925, 0
      %v996 = vsel %vm546, %v926, 0
      %v999 = vsel %vm546, %v927, 0
      %v1002 = vsel %vm546, %v928, 0
      %1004 = vmatprep.subr.bf16.mxu0 %v553
      %1005 = vmatpush1.bf16.msra.mxu0 %v549
      %1006 = vmatprep.subr.bf16.mxu0 %v569
      %1007 = vmatpush1.bf16.msra.mxu0 %v565
      %1008 = vmatprep.subr.bf16.mxu0 %v585
      %1009 = vmatpush1.bf16.msra.mxu0 %v581
      %1010 = vmatprep.subr.bf16.mxu0 %v601
      %1011 = vmatpush1.bf16.msra.mxu0 %v597
      %1012 = vmatprep.subr.bf16.mxu0 %v617
      %1013 = vmatpush1.bf16.msra.mxu0 %v613
      %1014 = vmatprep.subr.bf16.mxu0 %v633
      %1015 = vmatpush1.bf16.msra.mxu0 %v629
      %1016 = vmatprep.subr.bf16.mxu0 %v649
      %1017 = vmatpush1.bf16.msra.mxu0 %v645
      %1018 = vmatprep.subr.bf16.mxu0 %v665
      %1019 = vmatpush1.bf16.msra.mxu0 %v661
      %1020 = vmatprep.subr.bf16.mxu0 %v906
      %1021 = vmatpush1.bf16.msra.mxu0 %v905
      %1022 = vmatprep.subr.bf16.mxu0 %v910
      %1023 = vmatpush1.bf16.msra.mxu0 %v909
      %1024 = vmatprep.subr.bf16.mxu0 %v914
      %1025 = vmatpush1.bf16.msra.mxu0 %v913
      %1026 = vmatprep.subr.bf16.mxu0 %v918
      %1027 = vmatpush1.bf16.msra.mxu0 %v917
      %1028 = vmatprep.subr.bf16.mxu0 %v922
      %1029 = vmatpush1.bf16.msra.mxu0 %v921
      %1030 = vmatprep.subr.bf16.mxu0 %v996
      %1031 = vmatpush1.bf16.msra.mxu0 %v993
      %1032 = vmatprep.subr.bf16.mxu0 0
      %1033 = vmatpush1.bf16.msra.mxu0 0
      %1034 = vmatprep.subr.bf16.mxu0 0
      %1035 = vmatpush1.bf16.msra.mxu0 0
      %1036 = vmatprep.mubr.bf16.mxu0 %v987
      %1037 = vmatmul.mubr.bf16.gmra.mrb[0].mxu0 %v979
      %v1038 = vpop.f32.mrb[0].mxu0
      %v1039 = vadd.f32 %v958, %v1038
      %v1040 = vpop.f32.mrb[0].mxu0
      %v1041 = vadd.f32 %v958, %v1040
      %v1042 = vpop.f32.mrb[0].mxu0
      %v1043 = vadd.f32 %v963, %v1042
      %v1044 = vpop.f32.mrb[0].mxu0
      %v1045 = vadd.f32 %v963, %v1044
      %1046 = vmatprep.mubr.bf16.mxu0 %v990
      %1047 = vmatmul.mubr.bf16.gmra.mrb[0].mxu0 %v981
      %v1048 = vpop.f32.mrb[0].mxu0
      %v1049 = vadd.f32 %v968, %v1048
      %v1050 = vpop.f32.mrb[0].mxu0
      %v1051 = vadd.f32 %v968, %v1050
      %v1052 = vpop.f32.mrb[0].mxu0
      %v1053 = vpop.f32.mrb[0].mxu0
      %1054 = vdwg.mxu0
      %1055 = vmatprep.subr.bf16.mxu0 %v561
      %1056 = vmatpush1.bf16.msra.mxu0 %v557
      %1057 = vmatprep.subr.bf16.mxu0 %v577
      %1058 = vmatpush1.bf16.msra.mxu0 %v573
      %1059 = vmatprep.subr.bf16.mxu0 %v593
      %1060 = vmatpush1.bf16.msra.mxu0 %v589
      %1061 = vmatprep.subr.bf16.mxu0 %v609
      %1062 = vmatpush1.bf16.msra.mxu0 %v605
      %1063 = vmatprep.subr.bf16.mxu0 %v625
      %1064 = vmatpush1.bf16.msra.mxu0 %v621
      %1065 = vmatprep.subr.bf16.mxu0 %v641
      %1066 = vmatpush1.bf16.msra.mxu0 %v637
      %1067 = vmatprep.subr.bf16.mxu0 %v657
      %1068 = vmatpush1.bf16.msra.mxu0 %v653
      %1069 = vmatprep.subr.bf16.mxu0 %v673
      %1070 = vmatpush1.bf16.msra.mxu0 %v669
      %1071 = vmatprep.subr.bf16.mxu0 %v908
      %1072 = vmatpush1.bf16.msra.mxu0 %v907
      %1073 = vmatprep.subr.bf16.mxu0 %v912
      %1074 = vmatpush1.bf16.msra.mxu0 %v911
      %1075 = vmatprep.subr.bf16.mxu0 %v916
      %1076 = vmatpush1.bf16.msra.mxu0 %v915
      %1077 = vmatprep.subr.bf16.mxu0 %v920
      %1078 = vmatpush1.bf16.msra.mxu0 %v919
      %1079 = vmatprep.subr.bf16.mxu0 %v924
      %1080 = vmatpush1.bf16.msra.mxu0 %v923
      %1081 = vmatprep.subr.bf16.mxu0 %v1002
      %1082 = vmatpush1.bf16.msra.mxu0 %v999
      %1083 = vmatprep.subr.bf16.mxu0 0
      %1084 = vmatpush1.bf16.msra.mxu0 0
      %1085 = vmatprep.subr.bf16.mxu0 0
      %1086 = vmatpush1.bf16.msra.mxu0 0
      %1087 = vmatprep.mubr.bf16.mxu0 %v987
      %1088 = vmatmul.mubr.bf16.gmra.mrb[0].mxu0 %v979
      %v1089 = vpop.f32.mrb[0].mxu0
      %v1090 = vadd.f32 %v958, %v1089
      %v1091 = vpop.f32.mrb[0].mxu0
      %v1092 = vadd.f32 %v958, %v1091
      %v1093 = vpop.f32.mrb[0].mxu0
      %v1094 = vadd.f32 %v963, %v1093
      %v1095 = vpop.f32.mrb[0].mxu0
      %v1096 = vadd.f32 %v963, %v1095
      %1097 = vmatprep.mubr.bf16.mxu0 %v990
      %1098 = vmatmul.mubr.bf16.gmra.mrb[0].mxu0 %v981
      %v1099 = vpop.f32.mrb[0].mxu0
      %v1100 = vadd.f32 %v968, %v1099
      %v1101 = vpop.f32.mrb[0].mxu0
      %v1102 = vadd.f32 %v968, %v1101
      %v1103 = vpop.f32.mrb[0].mxu0
      %v1104 = vpop.f32.mrb[0].mxu0
      %1105 = vdwg.mxu0
      %v1106 = vpack.c.bf16 %v1043, %v1039
      %v1107 = vpack.c.bf16 %v1045, %v1041
      %v1108 = vpack.c.bf16 %v1094, %v1090
      %v1109 = vpack.c.bf16 %v1096, %v1092
      %v1110 = vpack.c.bf16 %v1049, %v1049
      %v1111 = vpack.c.bf16 %v1051, %v1051
      %v1112 = vpack.c.bf16 %v1100, %v1100
      %v1113 = vpack.c.bf16 %v1102, %v1102
      %v1122 = vunpack.c.l.b16 %v1106
      %v1123 = vunpack.c.l.b16 %v1107
      %v1124 = vunpack.c.l.b16 %v1108
      %v1125 = vunpack.c.l.b16 %v1109
      %v1126 = vunpack.c.h.b16 %v1106
      %v1127 = vunpack.c.h.b16 %v1107
      %v1128 = vunpack.c.h.b16 %v1108
      %v1129 = vunpack.c.h.b16 %v1109
      %v1130 = vunpack.c.l.b16 %v1110
      %v1131 = vunpack.c.l.b16 %v1111
      %v1132 = vunpack.c.l.b16 %v1112
      %v1133 = vunpack.c.l.b16 %v1113
      %v1134 = vpack.c.b16 %v1123, %v1122
      %v1135 = vpack.c.b16 %v1125, %v1124
      %v1136 = vpack.c.b16 %v1127, %v1126
      %v1137 = vpack.c.b16 %v1129, %v1128
      %v1138 = vpack.c.b16 %v1131, %v1130
      %v1139 = vpack.c.b16 %v1133, %v1132
      %1146 = vst [vmem:[%s300] sm:$0xff] %v1134
      %1147 = vst [vmem:[%s300 + $0x8] sm:$0xff] %v1135
      %1148 = vst [vmem:[%s300 + $0x10] sm:$0xff] %v1136
      %1149 = vst [vmem:[%s300 + $0x18] sm:$0xff] %v1137
      %1150 = vst [vmem:[%s300 + $0x20] sm:$0xff] %v1138
      %1151 = vst [vmem:[%s300 + $0x28] sm:$0xff] %v1139
      %s1152 = smul.u32 3, %s21
      %p1153 = scmp.lt.s32.totalorder %s19, 0
      %s1154 = scalar_select %p1153, %s19, 0
      %p1155 = scmp.lt.s32.totalorder %s20, 1
      %s1156 = scalar_select %p1155, %s20, 1
      %p1157 = scmp.lt.s32.totalorder %s1152, 2
      %s1158 = scalar_select %p1157, %s1152, 2
      %s1159 = smul.addr %s1158, 4
      %s1160 = smul.addr %s1156, 12
      %s1161 = sadd.s32 %s1159, %s1160
      %s1162 = smul.addr %s1154, 24
      %s1163 = sadd.s32 %s1161, %s1162
      %s1164 = smul.addr %s1163, 4
      %s1165 = scalar_lea.vmem %s3, %s1164
      // Predicated region
      $region33: #{e3dlstm_forward.16} parent=31 // pred_check
        %p1166 = pneg %p139
      $region34: #{e3dlstm_forward.16} parent=31 // pred_check_branch
        %1168 = sbr.rel (%p1166) target = $region36
      $region35: #{e3dlstm_forward.16} parent=31 // pred_region
        %s1169 = smul.u32 3, %s21
      $region36: #{e3dlstm_forward.16} parent=31 // pred_fallthru
        _
    $region32: #{e3dlstm_forward.16} parent=5 // pred_fallthru
      _
    %p1170 = scmp.le.s32.totalorder 2, %s9
    // Predicated region
    $region37: #{e3dlstm_forward.16} parent=5 // pred_check
      %p1171 = pneg %p1170
    $region38: #{e3dlstm_forward.16} parent=5 // pred_check_branch
      %1173 = sbr.rel (%p1171) target = $region40
    $region39: #{e3dlstm_forward.16} parent=5 // pred_region
      %s1174 = ssub.s32 %s9, 2
      // Predicated region
      $region41: #{e3dlstm_forward.16} parent=39 // pred_check
        %p1175 = pneg %p145
      $region42: #{e3dlstm_forward.16} parent=39 // pred_check_branch
        %1177 = sbr.rel (%p1175) target = $region44
      $region43: #{e3dlstm_forward.16} parent=39 // pred_region
        %s1178 = smul.u32 3, %s24
        %p1179 = scmp.lt.s32.totalorder %s22, 0
        %s1180 = scalar_select %p1179, %s22, 0
        %p1181 = scmp.lt.s32.totalorder %s23, 1
        %s1182 = scalar_select %p1181, %s23, 1
        %p1183 = scmp.lt.s32.totalorder %s1178, 2
        %s1184 = scalar_select %p1183, %s1178, 2
        %s1185 = smul.addr %s1184, 4
        %s1186 = smul.addr %s1182, 12
        %s1187 = sadd.s32 %s1185, %s1186
        %s1188 = smul.addr %s1180, 24
        %s1189 = sadd.s32 %s1187, %s1188
        %s1190 = smul.addr %s1189, 4
        %s1191 = scalar_lea.vmem %s3, %s1190
      $region44: #{e3dlstm_forward.16} parent=39 // pred_fallthru
        _
    $region40: #{e3dlstm_forward.16} parent=5 // pred_fallthru
      _
  $region6: #{e3dlstm_forward.16} parent=0 // loop_footer
    %s13 = sadd.s32 1, %s9
  $region7: #{e3dlstm_forward.16} parent=0 // loop_footer_branch
    %8 = sbr.rel target = $region3
  $region8: #{e3dlstm_forward.16} parent=0 // loop_exit
    _

// kernel: e3dlstm_forward.17
$region0: #{e3dlstm_forward.17}
  #allocation0 [shape = 'u32[]', space=smem, size = 0x4, offset = 0x4, fixed_abs, tag = 'smem constant byte address 0x4 - core index']
  #allocation1 [shape = 'u32[144,128]{1,0:T(1,128)}', space=vmem, size = 0x12000, scoped, tag = 'internal scratch']
  %s0 = inlined_call_operand.vmem [shape: bf16[2,7,8,512], index: 0, kind: input, shape index: {}]
  %s1 = inlined_call_operand.vmem [shape: bf16[2,4,8,512], index: 1, kind: input, shape index: {}]
  %s2 = inlined_call_operand.vmem [shape: bf16[2,3,8,512], index: 2, kind: input, shape index: {}]
  %s3 = inlined_call_operand.vmem [shape: bf16[2,8,512], index: 3, kind: input, shape index: {}]
  %s4 = inlined_call_operand.vmem [shape: bf16[2,4,8,512], index: 4, kind: output, shape index: {}]
  %s5 = sld [smem:[#allocation0]]
  $region49: #{e3dlstm_forward.17} parent=0
    _
  %s7 = ssub.s32 1, %s5
  %s8 = scalar_select 0, %s7, %s5
  loop: start=0, step=1, limit=4
  $region2: #{e3dlstm_forward.17} parent=0 // loop_pre_header
    _
  $region3: #{e3dlstm_forward.17} parent=0 // loop_header
    %s10 = sphi 0, %s14
    %p11 = scmp.ge.s32.totalorder %s10, 4
    %s17 = sphi 0, %s29
    %s18 = sphi 0, %s25
    %s19 = sphi 0, %s17
    %s20 = sphi 0, %s18
    %s21 = sphi 0, %s19
    %s22 = sphi 0, %s20
    %s34 = sphi 0, %s36
    %s37 = sphi 0, %s34
    %s38 = sphi 0, %s37
    %s54 = sphi 0, %s38
    %s62 = sphi 0, %s64
    %s65 = sphi 0, %s62
    %s66 = sphi 0, %s65
    %s82 = sphi 0, %s66
    %s90 = sphi 0, %s92
    %s93 = sphi 0, %s90
    %s94 = sphi 0, %s93
    %s110 = sphi 0, %s94
    %s118 = sphi 0, %s120
    %s121 = sphi 0, %s118
    %s122 = sphi 0, %s121
    %s138 = sphi 0, %s122
    %s146 = sphi 0, %s148
    %s149 = sphi 0, %s146
    %s150 = sphi 0, %s149
    %s166 = sphi 0, %s150
  $region4: #{e3dlstm_forward.17} parent=0 // loop_header_branch
    %13 = sbr.rel (%p11) target = $region8
  $region5: #{e3dlstm_forward.17} parent=0 // loop_body
    %s15 = ssub.s32 %s10, 1
    %s16 = ssub.s32 %s10, 2
    %s23 = sadd.s32 1, %s18
    %p24 = scmp.ge.s32.totalorder %s23, 1
    %s25 = scalar_select %p24, 0, %s23
    %s26 = sadd.s32 1, %s17
    %s27 = scalar_select %p24, %s26, %s17
    %p28 = scmp.ge.s32.totalorder %s27, 2
    %s29 = scalar_select %p28, 0, %s27
    %s30 = ssub.s32 %s17, %s29
    %s31 = ssub.s32 %s18, %s25
    %s32 = sor.u32 %s30, %s31
    %p33 = scmp.eq.s32.totalorder %s32, 0
    %s35 = sadd.s32 %s34, 1
    %s36 = scalar_select %p33, %s34, %s35
    %p39 = pneg %p33
    %p40 = scmp.eq.s32.totalorder %s10, 1
    %p41 = por %p39, %p40
    %p42 = scmp.ne.s32.totalorder %s34, %s37
    %p43 = scmp.eq.s32.totalorder %s10, 0
    %p44 = por %p42, %p43
    %p45 = scmp.ne.s32.totalorder %s34, %s37
    %p46 = scmp.eq.s32.totalorder %s15, 1
    %p47 = por %p45, %p46
    %p48 = scmp.ne.s32.totalorder %s37, %s38
    %p49 = scmp.eq.s32.totalorder %s15, 0
    %p50 = por %p48, %p49
    %p51 = scmp.ne.s32.totalorder %s37, %s38
    %p52 = scmp.eq.s32.totalorder %s16, 1
    %p53 = por %p51, %p52
    %p55 = scmp.ne.s32.totalorder %s38, %s54
    %p56 = scmp.eq.s32.totalorder %s16, 0
    %p57 = por %p55, %p56
    %s58 = ssub.s32 %s17, %s29
    %s59 = ssub.s32 %s18, %s25
    %s60 = sor.u32 %s58, %s59
    %p61 = scmp.eq.s32.totalorder %s60, 0
    %s63 = sadd.s32 %s62, 1
    %s64 = scalar_select %p61, %s62, %s63
    %p67 = pneg %p61
    %p68 = scmp.eq.s32.totalorder %s10, 1
    %p69 = por %p67, %p68
    %p70 = scmp.ne.s32.totalorder %s62, %s65
    %p71 = scmp.eq.s32.totalorder %s10, 0
    %p72 = por %p70, %p71
    %p73 = scmp.ne.s32.totalorder %s62, %s65
    %p74 = scmp.eq.s32.totalorder %s15, 1
    %p75 = por %p73, %p74
    %p76 = scmp.ne.s32.totalorder %s65, %s66
    %p77 = scmp.eq.s32.totalorder %s15, 0
    %p78 = por %p76, %p77
    %p79 = scmp.ne.s32.totalorder %s65, %s66
    %p80 = scmp.eq.s32.totalorder %s16, 1
    %p81 = por %p79, %p80
    %p83 = scmp.ne.s32.totalorder %s66, %s82
    %p84 = scmp.eq.s32.totalorder %s16, 0
    %p85 = por %p83, %p84
    %s86 = ssub.s32 %s17, %s29
    %s87 = ssub.s32 %s18, %s25
    %s88 = sor.u32 %s86, %s87
    %p89 = scmp.eq.s32.totalorder %s88, 0
    %s91 = sadd.s32 %s90, 1
    %s92 = scalar_select %p89, %s90, %s91
    %p95 = pneg %p89
    %p96 = scmp.eq.s32.totalorder %s10, 1
    %p97 = por %p95, %p96
    %p98 = scmp.ne.s32.totalorder %s90, %s93
    %p99 = scmp.eq.s32.totalorder %s10, 0
    %p100 = por %p98, %p99
    %p101 = scmp.ne.s32.totalorder %s90, %s93
    %p102 = scmp.eq.s32.totalorder %s15, 1
    %p103 = por %p101, %p102
    %p104 = scmp.ne.s32.totalorder %s93, %s94
    %p105 = scmp.eq.s32.totalorder %s15, 0
    %p106 = por %p104, %p105
    %p107 = scmp.ne.s32.totalorder %s93, %s94
    %p108 = scmp.eq.s32.totalorder %s16, 1
    %p109 = por %p107, %p108
    %p111 = scmp.ne.s32.totalorder %s94, %s110
    %p112 = scmp.eq.s32.totalorder %s16, 0
    %p113 = por %p111, %p112
    %s114 = ssub.s32 %s17, %s29
    %s115 = ssub.s32 %s18, %s25
    %s116 = sor.u32 %s114, %s115
    %p117 = scmp.eq.s32.totalorder %s116, 0
    %s119 = sadd.s32 %s118, 1
    %s120 = scalar_select %p117, %s118, %s119
    %p123 = pneg %p117
    %p124 = scmp.eq.s32.totalorder %s10, 1
    %p125 = por %p123, %p124
    %p126 = scmp.ne.s32.totalorder %s118, %s121
    %p127 = scmp.eq.s32.totalorder %s10, 0
    %p128 = por %p126, %p127
    %p129 = scmp.ne.s32.totalorder %s118, %s121
    %p130 = scmp.eq.s32.totalorder %s15, 1
    %p131 = por %p129, %p130
    %p132 = scmp.ne.s32.totalorder %s121, %s122
    %p133 = scmp.eq.s32.totalorder %s15, 0
    %p134 = por %p132, %p133
    %p135 = scmp.ne.s32.totalorder %s121, %s122
    %p136 = scmp.eq.s32.totalorder %s16, 1
    %p137 = por %p135, %p136
    %p139 = scmp.ne.s32.totalorder %s122, %s138
    %p140 = scmp.eq.s32.totalorder %s16, 0
    %p141 = por %p139, %p140
    %s142 = ssub.s32 %s17, %s29
    %s143 = ssub.s32 %s18, %s25
    %s144 = sor.u32 %s142, %s143
    %p145 = scmp.eq.s32.totalorder %s144, 0
    %s147 = sadd.s32 %s146, 1
    %s148 = scalar_select %p145, %s146, %s147
    %p151 = pneg %p145
    %p152 = scmp.eq.s32.totalorder %s10, 1
    %p153 = por %p151, %p152
    %p154 = scmp.ne.s32.totalorder %s146, %s149
    %p155 = scmp.eq.s32.totalorder %s10, 0
    %p156 = por %p154, %p155
    %p157 = scmp.ne.s32.totalorder %s146, %s149
    %p158 = scmp.eq.s32.totalorder %s15, 1
    %p159 = por %p157, %p158
    %p160 = scmp.ne.s32.totalorder %s149, %s150
    %p161 = scmp.eq.s32.totalorder %s15, 0
    %p162 = por %p160, %p161
    %p163 = scmp.ne.s32.totalorder %s149, %s150
    %p164 = scmp.eq.s32.totalorder %s16, 1
    %p165 = por %p163, %p164
    %p167 = scmp.ne.s32.totalorder %s150, %s166
    %p168 = scmp.eq.s32.totalorder %s16, 0
    %p169 = por %p167, %p168
    %p170 = scmp.le.s32.totalorder 1, %s10
    %p171 = scmp.lt.s32.totalorder %s10, 3
    %p172 = pnand %p170, %p171
    %p173 = pneg %p172
    // Predicated region
    $region9: #{e3dlstm_forward.17} parent=5 // pred_check
      _
    $region10: #{e3dlstm_forward.17} parent=5 // pred_check_branch
      %175 = sbr.rel (%p172) target = $region12
    $region11: #{e3dlstm_forward.17} parent=5 // pred_region
      %s176 = ssub.s32 %s10, 1
    $region12: #{e3dlstm_forward.17} parent=5 // pred_fallthru
      _
    %p177 = scmp.lt.s32.totalorder %s10, 2
    // Predicated region
    $region13: #{e3dlstm_forward.17} parent=5 // pred_check
      %p178 = pneg %p177
    $region14: #{e3dlstm_forward.17} parent=5 // pred_check_branch
      %180 = sbr.rel (%p178) target = $region16
    $region15: #{e3dlstm_forward.17} parent=5 // pred_region
      // Predicated region
      $region17: #{e3dlstm_forward.17} parent=15 // pred_check
        %p181 = pneg %p44
      $region18: #{e3dlstm_forward.17} parent=15 // pred_check_branch
        %183 = sbr.rel (%p181) target = $region20
      $region19: #{e3dlstm_forward.17} parent=15 // pred_region
        %p184 = scmp.lt.s32.totalorder %s17, 1
        %s185 = scalar_select %p184, %s17, 1
        %p186 = scmp.lt.s32.totalorder %s18, 0
        %s187 = scalar_select %p186, %s18, 0
        %s188 = smul.addr %s187, 4
        %s189 = smul.addr %s185, 28
        %s190 = sadd.s32 %s188, %s189
        %s191 = smul.addr %s190, 4
        %s192 = scalar_lea.vmem %s0, %s191
      $region20: #{e3dlstm_forward.17} parent=15 // pred_fallthru
        _
      // Predicated region
      $region21: #{e3dlstm_forward.17} parent=15 // pred_check
        %p193 = pneg %p72
      $region22: #{e3dlstm_forward.17} parent=15 // pred_check_branch
        %195 = sbr.rel (%p193) target = $region24
      $region23: #{e3dlstm_forward.17} parent=15 // pred_region
        %p196 = scmp.lt.s32.totalorder %s17, 1
        %s197 = scalar_select %p196, %s17, 1
        %p198 = scmp.lt.s32.totalorder %s18, 0
        %s199 = scalar_select %p198, %s18, 0
        %s200 = smul.addr %s199, 4
        %s201 = smul.addr %s197, 16
        %s202 = sadd.s32 %s200, %s201
        %s203 = smul.addr %s202, 4
        %s204 = scalar_lea.vmem %s1, %s203
      $region24: #{e3dlstm_forward.17} parent=15 // pred_fallthru
        _
      // Predicated region
      $region25: #{e3dlstm_forward.17} parent=15 // pred_check
        %p205 = pneg %p100
      $region26: #{e3dlstm_forward.17} parent=15 // pred_check_branch
        %207 = sbr.rel (%p205) target = $region28
      $region27: #{e3dlstm_forward.17} parent=15 // pred_region
        %p208 = scmp.lt.s32.totalorder %s17, 1
        %s209 = scalar_select %p208, %s17, 1
        %p210 = scmp.lt.s32.totalorder %s18, 0
        %s211 = scalar_select %p210, %s18, 0
        %s212 = smul.addr %s211, 4
        %s213 = smul.addr %s209, 12
        %s214 = sadd.s32 %s212, %s213
        %s215 = smul.addr %s214, 4
        %s216 = scalar_lea.vmem %s2, %s215
      $region28: #{e3dlstm_forward.17} parent=15 // pred_fallthru
        _
      // Predicated region
      $region29: #{e3dlstm_forward.17} parent=15 // pred_check
        %p217 = pneg %p128
      $region30: #{e3dlstm_forward.17} parent=15 // pred_check_branch
        %219 = sbr.rel (%p217) target = $region32
      $region31: #{e3dlstm_forward.17} parent=15 // pred_region
        %p220 = scmp.lt.s32.totalorder %s17, 1
        %s221 = scalar_select %p220, %s17, 1
        %p222 = scmp.lt.s32.totalorder %s18, 0
        %s223 = scalar_select %p222, %s18, 0
        %s224 = smul.addr %s223, 4
        %s225 = smul.addr %s221, 4
        %s226 = sadd.s32 %s224, %s225
        %s227 = smul.addr %s226, 4
        %s228 = scalar_lea.vmem %s3, %s227
      $region32: #{e3dlstm_forward.17} parent=15 // pred_fallthru
        _
    $region16: #{e3dlstm_forward.17} parent=5 // pred_fallthru
      _
    %p229 = scmp.le.s32.totalorder 1, %s10
    %p230 = scmp.lt.s32.totalorder %s10, 3
    %p231 = pnand %p229, %p230
    %p232 = pneg %p231
    // Predicated region
    $region33: #{e3dlstm_forward.17} parent=5 // pred_check
      _
    $region34: #{e3dlstm_forward.17} parent=5 // pred_check_branch
      %234 = sbr.rel (%p231) target = $region36
    $region35: #{e3dlstm_forward.17} parent=5 // pred_region
      %s235 = ssub.s32 %s10, 1
      %p236 = scmp.lt.s32.totalorder %s19, 1
      %s237 = scalar_select %p236, %s19, 1
      %p238 = scmp.lt.s32.totalorder %s20, 0
      %s239 = scalar_select %p238, %s20, 0
      %s240 = smul.addr %s239, 4
      %s241 = smul.addr %s237, 28
      %s242 = sadd.s32 %s240, %s241
      %s243 = smul.addr %s242, 4
      %s244 = scalar_lea.vmem %s0, %s243
      %p245 = pneg %p50
      %p246 = pneg %p47
      %p247 = scmp.lt.s32.totalorder %s19, 1
      %s248 = scalar_select %p247, %s19, 1
      %p249 = scmp.lt.s32.totalorder %s20, 0
      %s250 = scalar_select %p249, %s20, 0
      %s251 = smul.addr %s250, 4
      %s252 = smul.addr %s248, 16
      %s253 = sadd.s32 %s251, %s252
      %s254 = smul.addr %s253, 4
      %s255 = scalar_lea.vmem %s1, %s254
      %p256 = pneg %p78
      %p257 = pneg %p75
      %p258 = scmp.lt.s32.totalorder %s19, 1
      %s259 = scalar_select %p258, %s19, 1
      %p260 = scmp.lt.s32.totalorder %s20, 0
      %s261 = scalar_select %p260, %s20, 0
      %s262 = smul.addr %s261, 4
      %s263 = smul.addr %s259, 12
      %s264 = sadd.s32 %s262, %s263
      %s265 = smul.addr %s264, 4
      %s266 = scalar_lea.vmem %s2, %s265
      %p267 = pneg %p106
      %p268 = pneg %p103
      %p269 = scmp.lt.s32.totalorder %s19, 1
      %s270 = scalar_select %p269, %s19, 1
      %p271 = scmp.lt.s32.totalorder %s20, 0
      %s272 = scalar_select %p271, %s20, 0
      %s273 = smul.addr %s272, 4
      %s274 = smul.addr %s270, 4
      %s275 = sadd.s32 %s273, %s274
      %s276 = smul.addr %s275, 4
      %s277 = scalar_lea.vmem %s3, %s276
      %p278 = pneg %p134
      %p279 = pneg %p131
      %p280 = pneg %p162
      %p281 = pneg %p159
      %p282 = scmp.lt.s32.totalorder %s19, 1
      %s283 = scalar_select %p282, %s19, 1
      %p284 = scmp.lt.s32.totalorder %s20, 0
      %s285 = scalar_select %p284, %s20, 0
      %s286 = smul.addr %s285, 4
      %s287 = smul.addr %s283, 16
      %s288 = sadd.s32 %s286, %s287
      %s289 = smul.addr %s288, 4
      %s290 = scalar_lea.vmem %s4, %s289
      %p291 = scmp.lt.s32.totalorder %s19, 1
      %s292 = scalar_select %p291, %s19, 1
      %p293 = scmp.lt.s32.totalorder %s20, 0
      %s294 = scalar_select %p293, %s20, 0
      %s295 = smul.addr %s294, 4
      %s296 = smul.addr %s292, 28
      %s297 = sadd.s32 %s295, %s296
      %s298 = smul.addr %s297, 4
      %s299 = scalar_lea.vmem %s0, %s298
      %p300 = scmp.lt.s32.totalorder %s19, 1
      %s301 = scalar_select %p300, %s19, 1
      %p302 = scmp.lt.s32.totalorder %s20, 0
      %s303 = scalar_select %p302, %s20, 0
      %s304 = smul.addr %s303, 4
      %s305 = smul.addr %s301, 16
      %s306 = sadd.s32 %s304, %s305
      %s307 = smul.addr %s306, 4
      %s308 = scalar_lea.vmem %s1, %s307
      %p309 = scmp.lt.s32.totalorder %s19, 1
      %s310 = scalar_select %p309, %s19, 1
      %p311 = scmp.lt.s32.totalorder %s20, 0
      %s312 = scalar_select %p311, %s20, 0
      %s313 = smul.addr %s312, 4
      %s314 = smul.addr %s310, 12
      %s315 = sadd.s32 %s313, %s314
      %s316 = smul.addr %s315, 4
      %s317 = scalar_lea.vmem %s2, %s316
      %p318 = scmp.lt.s32.totalorder %s19, 1
      %s319 = scalar_select %p318, %s19, 1
      %p320 = scmp.lt.s32.totalorder %s20, 0
      %s321 = scalar_select %p320, %s20, 0
      %s322 = smul.addr %s321, 4
      %s323 = smul.addr %s319, 4
      %s324 = sadd.s32 %s322, %s323
      %s325 = smul.addr %s324, 4
      %s326 = scalar_lea.vmem %s3, %s325
      %p327 = scmp.lt.s32.totalorder %s19, 1
      %s328 = scalar_select %p327, %s19, 1
      %p329 = scmp.lt.s32.totalorder %s20, 0
      %s330 = scalar_select %p329, %s20, 0
      %s331 = smul.addr %s330, 4
      %s332 = smul.addr %s328, 16
      %s333 = sadd.s32 %s331, %s332
      %s334 = smul.addr %s333, 4
      %s335 = scalar_lea.vmem %s4, %s334
      %v336 = vld [vmem:[%s299] sm:$0xff]
      %v337 = vld [vmem:[%s299 + $0x8] sm:$0xff]
      %v338 = vunpack.c.l.bf16 %v336
      %v339 = vunpack.c.h.bf16 %v336
      %v340 = vunpack.c.l.bf16 %v337
      %v341 = vunpack.c.h.bf16 %v337
      %v342 = vld [vmem:[%s308] sm:$0xff]
      %v343 = vld [vmem:[%s308 + $0x8] sm:$0xff]
      %v344 = vunpack.c.l.bf16 %v342
      %v345 = vunpack.c.h.bf16 %v342
      %v346 = vunpack.c.l.bf16 %v343
      %v347 = vunpack.c.h.bf16 %v343
      %v348 = vadd.f32 %v338, %v344
      %v349 = vadd.f32 %v339, %v345
      %v350 = vadd.f32 %v340, %v346
      %v351 = vadd.f32 %v341, %v347
      %v352 = vadd.f32 %v348, %v349
      %v353 = vadd.f32 %v352, %v350
      %v354 = vadd.f32 %v353, %v351
      %355 = vadd.xlane.f32.xlu0 %v354
      %v356 = vpop.xlane.xlu0 %355
      %v357 = vmul.f32 %v356, 0.001953125
      %v358 = vmul.f32 %v348, %v348
      %v359 = vmul.f32 %v349, %v349
      %v360 = vmul.f32 %v350, %v350
      %v361 = vmul.f32 %v351, %v351
      %v362 = vadd.f32 %v358, %v359
      %v363 = vadd.f32 %v362, %v360
      %v364 = vadd.f32 %v363, %v361
      %365 = vadd.xlane.f32.xlu0 %v364
      %v366 = vpop.xlane.xlu0 %365
      %v367 = vmul.f32 %v366, 0.001953125
      %v368 = vmul.f32 %v357, %v357
      %v369 = vsub.f32 %v367, %v368
      %v370 = vmax.f32 %v369, 0.0
      %v371 = vsub.f32 %v348, %v357
      %v372 = vsub.f32 %v349, %v357
      %v373 = vsub.f32 %v350, %v357
      %v374 = vsub.f32 %v351, %v357
      %v375 = vadd.f32 %v370, 1e-05
      %v376 = vrsqrt.pop %v375
      %v377 = vmul.f32 %v371, %v376
      %v378 = vmul.f32 %v372, %v376
      %v379 = vmul.f32 %v373, %v376
      %v380 = vmul.f32 %v374, %v376
      %v381 = vxor.u32 %v377, 2147483648
      %v382 = vxor.u32 %v378, 2147483648
      %v383 = vxor.u32 %v379, 2147483648
      %v384 = vxor.u32 %v380, 2147483648
      %v385 = vmul.f32 %v381, 1.442695
      %v386 = vpow.pop %v385
      %v387 = vmul.f32 %v382, 1.442695
      %v388 = vpow.pop %v387
      %v389 = vmul.f32 %v383, 1.442695
      %v390 = vpow.pop %v389
      %v391 = vmul.f32 %v384, 1.442695
      %v392 = vpow.pop %v391
      %v393 = vadd.f32 %v386, 1.0
      %v394 = vadd.f32 %v388, 1.0
      %v395 = vadd.f32 %v390, 1.0
      %v396 = vadd.f32 %v392, 1.0
      %v397 = vrcp.pop %v393
      %v398 = vmul.f32 1.0, %v397
      %v399 = vrcp.pop %v394
      %v400 = vmul.f32 1.0, %v399
      %v401 = vrcp.pop %v395
      %v402 = vmul.f32 1.0, %v401
      %v403 = vrcp.pop %v396
      %v404 = vmul.f32 1.0, %v403
      %s405 = scalar_lea.vmem %s299, 16
      %v406 = vld [vmem:[%s405] sm:$0xff]
      %v407 = vld [vmem:[%s405 + $0x8] sm:$0xff]
      %v408 = vunpack.c.l.bf16 %v406
      %v409 = vunpack.c.h.bf16 %v406
      %v410 = vunpack.c.l.bf16 %v407
      %v411 = vunpack.c.h.bf16 %v407
      %s412 = scalar_lea.vmem %s308, 16
      %v413 = vld [vmem:[%s412] sm:$0xff]
      %v414 = vld [vmem:[%s412 + $0x8] sm:$0xff]
      %v415 = vunpack.c.l.bf16 %v413
      %v416 = vunpack.c.h.bf16 %v413
      %v417 = vunpack.c.l.bf16 %v414
      %v418 = vunpack.c.h.bf16 %v414
      %v419 = vadd.f32 %v408, %v415
      %v420 = vadd.f32 %v409, %v416
      %v421 = vadd.f32 %v410, %v417
      %v422 = vadd.f32 %v411, %v418
      %v423 = vadd.f32 %v419, %v420
      %v424 = vadd.f32 %v423, %v421
      %v425 = vadd.f32 %v424, %v422
      %426 = vadd.xlane.f32.xlu0 %v425
      %v427 = vpop.xlane.xlu0 %426
      %v428 = vmul.f32 %v427, 0.001953125
      %v429 = vmul.f32 %v419, %v419
      %v430 = vmul.f32 %v420, %v420
      %v431 = vmul.f32 %v421, %v421
      %v432 = vmul.f32 %v422, %v422
      %v433 = vadd.f32 %v429, %v430
      %v434 = vadd.f32 %v433, %v431
      %v435 = vadd.f32 %v434, %v432
      %436 = vadd.xlane.f32.xlu0 %v435
      %v437 = vpop.xlane.xlu0 %436
      %v438 = vmul.f32 %v437, 0.001953125
      %v439 = vmul.f32 %v428, %v428
      %v440 = vsub.f32 %v438, %v439
      %v441 = vmax.f32 %v440, 0.0
      %v442 = vsub.f32 %v419, %v428
      %v443 = vsub.f32 %v420, %v428
      %v444 = vsub.f32 %v421, %v428
      %v445 = vsub.f32 %v422, %v428
      %v446 = vadd.f32 %v441, 1e-05
      %v447 = vrsqrt.pop %v446
      %v448 = vmul.f32 %v442, %v447
      %v449 = vmul.f32 %v443, %v447
      %v450 = vmul.f32 %v444, %v447
      %v451 = vmul.f32 %v445, %v447
      %v452 = vxor.u32 %v448, 2147483648
      %v453 = vxor.u32 %v449, 2147483648
      %v454 = vxor.u32 %v450, 2147483648
      %v455 = vxor.u32 %v451, 2147483648
      %v456 = vmul.f32 %v452, 1.442695
      %v457 = vpow.pop %v456
      %v458 = vmul.f32 %v453, 1.442695
      %v459 = vpow.pop %v458
      %v460 = vmul.f32 %v454, 1.442695
      %v461 = vpow.pop %v460
      %v462 = vmul.f32 %v455, 1.442695
      %v463 = vpow.pop %v462
      %v464 = vadd.f32 %v457, 1.0
      %v465 = vadd.f32 %v459, 1.0
      %v466 = vadd.f32 %v461, 1.0
      %v467 = vadd.f32 %v463, 1.0
      %v468 = vrcp.pop %v464
      %v469 = vmul.f32 1.0, %v468
      %v470 = vrcp.pop %v465
      %v471 = vmul.f32 1.0, %v470
      %v472 = vrcp.pop %v466
      %v473 = vmul.f32 1.0, %v472
      %v474 = vrcp.pop %v467
      %v475 = vmul.f32 1.0, %v474
      %s476 = scalar_lea.vmem %s299, 32
      %v477 = vld [vmem:[%s476] sm:$0xff]
      %v478 = vld [vmem:[%s476 + $0x8] sm:$0xff]
      %v479 = vunpack.c.l.bf16 %v477
      %v480 = vunpack.c.h.bf16 %v477
      %v481 = vunpack.c.l.bf16 %v478
      %v482 = vunpack.c.h.bf16 %v478
      %s483 = scalar_lea.vmem %s308, 32
      %v484 = vld [vmem:[%s483] sm:$0xff]
      %v485 = vld [vmem:[%s483 + $0x8] sm:$0xff]
      %v486 = vunpack.c.l.bf16 %v484
      %v487 = vunpack.c.h.bf16 %v484
      %v488 = vunpack.c.l.bf16 %v485
      %v489 = vunpack.c.h.bf16 %v485
      %v490 = vadd.f32 %v479, %v486
      %v491 = vadd.f32 %v480, %v487
      %v492 = vadd.f32 %v481, %v488
      %v493 = vadd.f32 %v482, %v489
      %v494 = vadd.f32 %v490, %v491
      %v495 = vadd.f32 %v494, %v492
      %v496 = vadd.f32 %v495, %v493
      %497 = vadd.xlane.f32.xlu0 %v496
      %v498 = vpop.xlane.xlu0 %497
      %v499 = vmul.f32 %v498, 0.001953125
      %v500 = vmul.f32 %v490, %v490
      %v501 = vmul.f32 %v491, %v491
      %v502 = vmul.f32 %v492, %v492
      %v503 = vmul.f32 %v493, %v493
      %v504 = vadd.f32 %v500, %v501
      %v505 = vadd.f32 %v504, %v502
      %v506 = vadd.f32 %v505, %v503
      %507 = vadd.xlane.f32.xlu0 %v506
      %v508 = vpop.xlane.xlu0 %507
      %v509 = vmul.f32 %v508, 0.001953125
      %v510 = vmul.f32 %v499, %v499
      %v511 = vsub.f32 %v509, %v510
      %v512 = vmax.f32 %v511, 0.0
      %v513 = vsub.f32 %v490, %v499
      %v514 = vsub.f32 %v491, %v499
      %v515 = vsub.f32 %v492, %v499
      %v516 = vsub.f32 %v493, %v499
      %v517 = vadd.f32 %v512, 1e-05
      %v518 = vrsqrt.pop %v517
      %v519 = vmul.f32 %v513, %v518
      %v520 = vmul.f32 %v514, %v518
      %v521 = vmul.f32 %v515, %v518
      %v522 = vmul.f32 %v516, %v518
      %v523 = vtanh.pop %v519
      %v524 = vtanh.pop %v520
      %v525 = vtanh.pop %v521
      %v526 = vtanh.pop %v522
      %v527 = vpack.c.bf16 %v398, %v398
      %v528 = vpack.c.bf16 %v400, %v400
      %v529 = vpack.c.bf16 %v402, %v402
      %v530 = vpack.c.bf16 %v404, %v404
      %v535 = vunpack.c.l.b16 %v527
      %v536 = vunpack.c.l.b16 %v528
      %v537 = vunpack.c.l.b16 %v529
      %v538 = vunpack.c.l.b16 %v530
      %v539 = vpack.c.b16 %v536, %v535
      %v540 = vpack.c.b16 %v538, %v537
      %543 = vst [vmem:[%s335] sm:$0xff] %v539
      %544 = vst [vmem:[%s335 + $0x8] sm:$0xff] %v540
      %v545 = vmul.f32 %v469, %v523
      %v546 = vmul.f32 %v471, %v524
      %v547 = vmul.f32 %v473, %v525
      %v548 = vmul.f32 %v475, %v526
      %v549 = vpack.c.bf16 %v545, %v545
      %v550 = vpack.c.bf16 %v546, %v546
      %v551 = vpack.c.bf16 %v547, %v547
      %v552 = vpack.c.bf16 %v548, %v548
      %v557 = vunpack.c.l.b16 %v549
      %v558 = vunpack.c.l.b16 %v550
      %v559 = vunpack.c.l.b16 %v551
      %v560 = vunpack.c.l.b16 %v552
      %v561 = vpack.c.b16 %v558, %v557
      %v562 = vpack.c.b16 %v560, %v559
      %s565 = scalar_lea.vmem %s335, 16
      %566 = vst [vmem:[%s565] sm:$0xff] %v561
      %567 = vst [vmem:[%s565 + $0x8] sm:$0xff] %v562
      %s568 = scalar_lea.vmem %s299, 48
      %v569 = vld [vmem:[%s568] sm:$0xff]
      %v570 = vld [vmem:[%s568 + $0x8] sm:$0xff]
      %v571 = vunpack.c.l.bf16 %v569
      %v572 = vunpack.c.h.bf16 %v569
      %v573 = vunpack.c.l.bf16 %v570
      %v574 = vunpack.c.h.bf16 %v570
      %v575 = vld [vmem:[%s317] sm:$0xff]
      %v576 = vld [vmem:[%s317 + $0x8] sm:$0xff]
      %v577 = vunpack.c.l.bf16 %v575
      %v578 = vunpack.c.h.bf16 %v575
      %v579 = vunpack.c.l.bf16 %v576
      %v580 = vunpack.c.h.bf16 %v576
      %v581 = vadd.f32 %v571, %v577
      %v582 = vadd.f32 %v572, %v578
      %v583 = vadd.f32 %v573, %v579
      %v584 = vadd.f32 %v574, %v580
      %v585 = vadd.f32 %v581, %v582
      %v586 = vadd.f32 %v585, %v583
      %v587 = vadd.f32 %v586, %v584
      %588 = vadd.xlane.f32.xlu0 %v587
      %v589 = vpop.xlane.xlu0 %588
      %v590 = vmul.f32 %v589, 0.001953125
      %v591 = vmul.f32 %v581, %v581
      %v592 = vmul.f32 %v582, %v582
      %v593 = vmul.f32 %v583, %v583
      %v594 = vmul.f32 %v584, %v584
      %v595 = vadd.f32 %v591, %v592
      %v596 = vadd.f32 %v595, %v593
      %v597 = vadd.f32 %v596, %v594
      %598 = vadd.xlane.f32.xlu0 %v597
      %v599 = vpop.xlane.xlu0 %598
      %v600 = vmul.f32 %v599, 0.001953125
      %v601 = vmul.f32 %v590, %v590
      %v602 = vsub.f32 %v600, %v601
      %v603 = vmax.f32 %v602, 0.0
      %v604 = vsub.f32 %v581, %v590
      %v605 = vsub.f32 %v582, %v590
      %v606 = vsub.f32 %v583, %v590
      %v607 = vsub.f32 %v584, %v590
      %v608 = vadd.f32 %v603, 1e-05
      %v609 = vrsqrt.pop %v608
      %v610 = vmul.f32 %v604, %v609
      %v611 = vmul.f32 %v605, %v609
      %v612 = vmul.f32 %v606, %v609
      %v613 = vmul.f32 %v607, %v609
      %v614 = vxor.u32 %v610, 2147483648
      %v615 = vxor.u32 %v611, 2147483648
      %v616 = vxor.u32 %v612, 2147483648
      %v617 = vxor.u32 %v613, 2147483648
      %v618 = vmul.f32 %v614, 1.442695
      %v619 = vpow.pop %v618
      %v620 = vmul.f32 %v615, 1.442695
      %v621 = vpow.pop %v620
      %v622 = vmul.f32 %v616, 1.442695
      %v623 = vpow.pop %v622
      %v624 = vmul.f32 %v617, 1.442695
      %v625 = vpow.pop %v624
      %v626 = vadd.f32 %v619, 1.0
      %v627 = vadd.f32 %v621, 1.0
      %v628 = vadd.f32 %v623, 1.0
      %v629 = vadd.f32 %v625, 1.0
      %v630 = vrcp.pop %v626
      %v631 = vmul.f32 1.0, %v630
      %v632 = vrcp.pop %v627
      %v633 = vmul.f32 1.0, %v632
      %v634 = vrcp.pop %v628
      %v635 = vmul.f32 1.0, %v634
      %v636 = vrcp.pop %v629
      %v637 = vmul.f32 1.0, %v636
      %s638 = scalar_lea.vmem %s299, 64
      %v639 = vld [vmem:[%s638] sm:$0xff]
      %v640 = vld [vmem:[%s638 + $0x8] sm:$0xff]
      %v641 = vunpack.c.l.bf16 %v639
      %v642 = vunpack.c.h.bf16 %v639
      %v643 = vunpack.c.l.bf16 %v640
      %v644 = vunpack.c.h.bf16 %v640
      %s645 = scalar_lea.vmem %s317, 16
      %v646 = vld [vmem:[%s645] sm:$0xff]
      %v647 = vld [vmem:[%s645 + $0x8] sm:$0xff]
      %v648 = vunpack.c.l.bf16 %v646
      %v649 = vunpack.c.h.bf16 %v646
      %v650 = vunpack.c.l.bf16 %v647
      %v651 = vunpack.c.h.bf16 %v647
      %v652 = vadd.f32 %v641, %v648
      %v653 = vadd.f32 %v642, %v649
      %v654 = vadd.f32 %v643, %v650
      %v655 = vadd.f32 %v644, %v651
      %v656 = vadd.f32 %v652, %v653
      %v657 = vadd.f32 %v656, %v654
      %v658 = vadd.f32 %v657, %v655
      %659 = vadd.xlane.f32.xlu0 %v658
      %v660 = vpop.xlane.xlu0 %659
      %v661 = vmul.f32 %v660, 0.001953125
      %v662 = vmul.f32 %v652, %v652
      %v663 = vmul.f32 %v653, %v653
      %v664 = vmul.f32 %v654, %v654
      %v665 = vmul.f32 %v655, %v655
      %v666 = vadd.f32 %v662, %v663
      %v667 = vadd.f32 %v666, %v664
      %v668 = vadd.f32 %v667, %v665
      %669 = vadd.xlane.f32.xlu0 %v668
      %v670 = vpop.xlane.xlu0 %669
      %v671 = vmul.f32 %v670, 0.001953125
      %v672 = vmul.f32 %v661, %v661
      %v673 = vsub.f32 %v671, %v672
      %v674 = vmax.f32 %v673, 0.0
      %v675 = vsub.f32 %v652, %v661
      %v676 = vsub.f32 %v653, %v661
      %v677 = vsub.f32 %v654, %v661
      %v678 = vsub.f32 %v655, %v661
      %v679 = vadd.f32 %v674, 1e-05
      %v680 = vrsqrt.pop %v679
      %v681 = vmul.f32 %v675, %v680
      %v682 = vmul.f32 %v676, %v680
      %v683 = vmul.f32 %v677, %v680
      %v684 = vmul.f32 %v678, %v680
      %v685 = vtanh.pop %v681
      %v686 = vtanh.pop %v682
      %v687 = vtanh.pop %v683
      %v688 = vtanh.pop %v684
      %s689 = scalar_lea.vmem %s299, 80
      %v690 = vld [vmem:[%s689] sm:$0xff]
      %v691 = vld [vmem:[%s689 + $0x8] sm:$0xff]
      %v692 = vunpack.c.l.bf16 %v690
      %v693 = vunpack.c.h.bf16 %v690
      %v694 = vunpack.c.l.bf16 %v691
      %v695 = vunpack.c.h.bf16 %v691
      %s696 = scalar_lea.vmem %s317, 32
      %v697 = vld [vmem:[%s696] sm:$0xff]
      %v698 = vld [vmem:[%s696 + $0x8] sm:$0xff]
      %v699 = vunpack.c.l.bf16 %v697
      %v700 = vunpack.c.h.bf16 %v697
      %v701 = vunpack.c.l.bf16 %v698
      %v702 = vunpack.c.h.bf16 %v698
      %v703 = vadd.f32 %v692, %v699
      %v704 = vadd.f32 %v693, %v700
      %v705 = vadd.f32 %v694, %v701
      %v706 = vadd.f32 %v695, %v702
      %v707 = vadd.f32 %v703, %v704
      %v708 = vadd.f32 %v707, %v705
      %v709 = vadd.f32 %v708, %v706
      %710 = vadd.xlane.f32.xlu0 %v709
      %v711 = vpop.xlane.xlu0 %710
      %v712 = vmul.f32 %v711, 0.001953125
      %v713 = vmul.f32 %v703, %v703
      %v714 = vmul.f32 %v704, %v704
      %v715 = vmul.f32 %v705, %v705
      %v716 = vmul.f32 %v706, %v706
      %v717 = vadd.f32 %v713, %v714
      %v718 = vadd.f32 %v717, %v715
      %v719 = vadd.f32 %v718, %v716
      %720 = vadd.xlane.f32.xlu0 %v719
      %v721 = vpop.xlane.xlu0 %720
      %v722 = vmul.f32 %v721, 0.001953125
      %v723 = vmul.f32 %v712, %v712
      %v724 = vsub.f32 %v722, %v723
      %v725 = vmax.f32 %v724, 0.0
      %v726 = vsub.f32 %v703, %v712
      %v727 = vsub.f32 %v704, %v712
      %v728 = vsub.f32 %v705, %v712
      %v729 = vsub.f32 %v706, %v712
      %v730 = vadd.f32 %v725, 1e-05
      %v731 = vrsqrt.pop %v730
      %v732 = vmul.f32 %v726, %v731
      %v733 = vmul.f32 %v727, %v731
      %v734 = vmul.f32 %v728, %v731
      %v735 = vmul.f32 %v729, %v731
      %v736 = vxor.u32 %v732, 2147483648
      %v737 = vxor.u32 %v733, 2147483648
      %v738 = vxor.u32 %v734, 2147483648
      %v739 = vxor.u32 %v735, 2147483648
      %v740 = vmul.f32 %v736, 1.442695
      %v741 = vpow.pop %v740
      %v742 = vmul.f32 %v737, 1.442695
      %v743 = vpow.pop %v742
      %v744 = vmul.f32 %v738, 1.442695
      %v745 = vpow.pop %v744
      %v746 = vmul.f32 %v739, 1.442695
      %v747 = vpow.pop %v746
      %v748 = vadd.f32 %v741, 1.0
      %v749 = vadd.f32 %v743, 1.0
      %v750 = vadd.f32 %v745, 1.0
      %v751 = vadd.f32 %v747, 1.0
      %v752 = vrcp.pop %v748
      %v753 = vmul.f32 1.0, %v752
      %v754 = vrcp.pop %v749
      %v755 = vmul.f32 1.0, %v754
      %v756 = vrcp.pop %v750
      %v757 = vmul.f32 1.0, %v756
      %v758 = vrcp.pop %v751
      %v759 = vmul.f32 1.0, %v758
      %v760 = vmul.f32 %v631, %v685
      %v761 = vmul.f32 %v633, %v686
      %v762 = vmul.f32 %v635, %v687
      %v763 = vmul.f32 %v637, %v688
      %v764 = vld [vmem:[%s326] sm:$0xff]
      %v765 = vld [vmem:[%s326 + $0x8] sm:$0xff]
      %v766 = vunpack.c.l.bf16 %v764
      %v767 = vunpack.c.h.bf16 %v764
      %v768 = vunpack.c.l.bf16 %v765
      %v769 = vunpack.c.h.bf16 %v765
      %v770 = vmul.f32 %v753, %v766
      %v771 = vmul.f32 %v755, %v767
      %v772 = vmul.f32 %v757, %v768
      %v773 = vmul.f32 %v759, %v769
      %v774 = vadd.f32 %v760, %v770
      %v775 = vadd.f32 %v761, %v771
      %v776 = vadd.f32 %v762, %v772
      %v777 = vadd.f32 %v763, %v773
      %v778 = vpack.c.bf16 %v774, %v774
      %v779 = vpack.c.bf16 %v775, %v775
      %v780 = vpack.c.bf16 %v776, %v776
      %v781 = vpack.c.bf16 %v777, %v777
      %v786 = vunpack.c.l.b16 %v778
      %v787 = vunpack.c.l.b16 %v779
      %v788 = vunpack.c.l.b16 %v780
      %v789 = vunpack.c.l.b16 %v781
      %v790 = vpack.c.b16 %v787, %v786
      %v791 = vpack.c.b16 %v789, %v788
      %s794 = scalar_lea.vmem %s335, 32
      %795 = vst [vmem:[%s794] sm:$0xff] %v790
      %796 = vst [vmem:[%s794 + $0x8] sm:$0xff] %v791
      %s797 = scalar_lea.vmem %s299, 96
      %v798 = vld [vmem:[%s797] sm:$0xff]
      %v799 = vld [vmem:[%s797 + $0x8] sm:$0xff]
      %v800 = vunpack.c.l.bf16 %v798
      %v801 = vunpack.c.h.bf16 %v798
      %v802 = vunpack.c.l.bf16 %v799
      %v803 = vunpack.c.h.bf16 %v799
      %s804 = scalar_lea.vmem %s308, 48
      %v805 = vld [vmem:[%s804] sm:$0xff]
      %v806 = vld [vmem:[%s804 + $0x8] sm:$0xff]
      %v807 = vunpack.c.l.bf16 %v805
      %v808 = vunpack.c.h.bf16 %v805
      %v809 = vunpack.c.l.bf16 %v806
      %v810 = vunpack.c.h.bf16 %v806
      %v811 = vadd.f32 %v800, %v807
      %v812 = vadd.f32 %v801, %v808
      %v813 = vadd.f32 %v802, %v809
      %v814 = vadd.f32 %v803, %v810
      %v815 = vpack.c.bf16 %v811, %v811
      %v816 = vpack.c.bf16 %v812, %v812
      %v817 = vpack.c.bf16 %v813, %v813
      %v818 = vpack.c.bf16 %v814, %v814
      %v823 = vunpack.c.l.b16 %v815
      %v824 = vunpack.c.l.b16 %v816
      %v825 = vunpack.c.l.b16 %v817
      %v826 = vunpack.c.l.b16 %v818
      %v827 = vpack.c.b16 %v824, %v823
      %v828 = vpack.c.b16 %v826, %v825
      %s831 = scalar_lea.vmem %s335, 48
      %832 = vst [vmem:[%s831] sm:$0xff] %v827
      %833 = vst [vmem:[%s831 + $0x8] sm:$0xff] %v828
      %p834 = scmp.lt.s32.totalorder %s19, 1
      %s835 = scalar_select %p834, %s19, 1
      %p836 = scmp.lt.s32.totalorder %s20, 0
      %s837 = scalar_select %p836, %s20, 0
      %s838 = smul.addr %s837, 4
      %s839 = smul.addr %s835, 16
      %s840 = sadd.s32 %s838, %s839
      %s841 = smul.addr %s840, 4
      %s842 = scalar_lea.vmem %s4, %s841
      // Predicated region
      $region37: #{e3dlstm_forward.17} parent=35 // pred_check
        %p843 = pneg %p159
      $region38: #{e3dlstm_forward.17} parent=35 // pred_check_branch
        %845 = sbr.rel (%p843) target = $region40
      $region39: #{e3dlstm_forward.17} parent=35 // pred_region
        _
      $region40: #{e3dlstm_forward.17} parent=35 // pred_fallthru
        _
    $region36: #{e3dlstm_forward.17} parent=5 // pred_fallthru
      _
    %p846 = scmp.le.s32.totalorder 2, %s10
    // Predicated region
    $region41: #{e3dlstm_forward.17} parent=5 // pred_check
      %p847 = pneg %p846
    $region42: #{e3dlstm_forward.17} parent=5 // pred_check_branch
      %849 = sbr.rel (%p847) target = $region44
    $region43: #{e3dlstm_forward.17} parent=5 // pred_region
      %s850 = ssub.s32 %s10, 2
      // Predicated region
      $region45: #{e3dlstm_forward.17} parent=43 // pred_check
        %p851 = pneg %p165
      $region46: #{e3dlstm_forward.17} parent=43 // pred_check_branch
        %853 = sbr.rel (%p851) target = $region48
      $region47: #{e3dlstm_forward.17} parent=43 // pred_region
        %p854 = scmp.lt.s32.totalorder %s21, 1
        %s855 = scalar_select %p854, %s21, 1
        %p856 = scmp.lt.s32.totalorder %s22, 0
        %s857 = scalar_select %p856, %s22, 0
        %s858 = smul.addr %s857, 4
        %s859 = smul.addr %s855, 16
        %s860 = sadd.s32 %s858, %s859
        %s861 = smul.addr %s860, 4
        %s862 = scalar_lea.vmem %s4, %s861
      $region48: #{e3dlstm_forward.17} parent=43 // pred_fallthru
        _
    $region44: #{e3dlstm_forward.17} parent=5 // pred_fallthru
      _
  $region6: #{e3dlstm_forward.17} parent=0 // loop_footer
    %s14 = sadd.s32 1, %s10
  $region7: #{e3dlstm_forward.17} parent=0 // loop_footer_branch
    %9 = sbr.rel target = $region3
  $region8: #{e3dlstm_forward.17} parent=0 // loop_exit
    _

// kernel: e3dlstm_forward.18
$region0: #{e3dlstm_forward.18}
  #allocation0 [shape = 'u32[]', space=smem, size = 0x4, offset = 0x4, fixed_abs, tag = 'smem constant byte address 0x4 - core index']
  #allocation1 [shape = 'u32[144,128]{1,0:T(1,128)}', space=vmem, size = 0x12000, scoped, tag = 'internal scratch']
  %s0 = inlined_call_operand.vmem [shape: bf16[2,4,8,512], index: 0, kind: input, shape index: {}]
  %s1 = inlined_call_operand.vmem [shape: f32[2,2,8,512], index: 1, kind: input, shape index: {}]
  %s2 = inlined_call_operand.vmem [shape: f32[2,2,1,1], index: 2, kind: input, shape index: {}]
  %s3 = inlined_call_operand.vmem [shape: f32[8,512], index: 3, kind: input, shape index: {}]
  %s4 = inlined_call_operand.vmem [shape: f32[8,512], index: 4, kind: input, shape index: {}]
  %s5 = inlined_call_operand.vmem [shape: f32[2,8,512], index: 5, kind: output, shape index: {}]
  %s6 = sld [smem:[#allocation0]]
  $region76: #{e3dlstm_forward.18} parent=0
    _
  %s8 = ssub.s32 1, %s6
  %s9 = scalar_select 0, %s8, %s6
  $region1: #{e3dlstm_forward.18} parent=0
    #allocation2 [shape = 'u8[65536]{0}', space=vmem, size = 0x10000, scoped, tag = 'input window, operand 1']
    loop: start=0, step=1, limit=4
    $region2: #{e3dlstm_forward.18} parent=1 // loop_pre_header
      _
    $region3: #{e3dlstm_forward.18} parent=1 // loop_header
      %s11 = sphi 0, %s15
      %p12 = scmp.ge.s32.totalorder %s11, 4
      %s21 = sphi 0, %s23
      %s24 = sphi 0, %s21
      %s25 = sphi 0, %s24
      %s41 = sphi 0, %s25
      %s47 = sphi 0, %s49
      %s50 = sphi 0, %s47
      %s51 = sphi 0, %s50
      %s67 = sphi 0, %s51
      %s73 = sphi 0, %s75
      %s76 = sphi 0, %s73
      %s77 = sphi 0, %s76
      %s93 = sphi 0, %s77
      %s97 = sphi 0, %s97
      %s99 = sphi 0, %s97
      %s100 = sphi 0, %s99
      %s114 = sphi 0, %s100
      %s118 = sphi 0, %s118
      %s120 = sphi 0, %s118
      %s121 = sphi 0, %s120
      %s135 = sphi 0, %s121
      %s141 = sphi 0, %s143
      %s144 = sphi 0, %s141
      %s145 = sphi 0, %s144
      %s161 = sphi 0, %s145
    $region4: #{e3dlstm_forward.18} parent=1 // loop_header_branch
      %14 = sbr.rel (%p12) target = $region8
    $region5: #{e3dlstm_forward.18} parent=1 // loop_body
      %s16 = ssub.s32 %s11, 1
      %s17 = ssub.s32 %s11, 2
      %s18 = sadd.s32 %s11, 1
      %s19 = ssub.s32 %s11, %s18
      %p20 = scmp.eq.s32.totalorder %s19, 0
      %s22 = sadd.s32 %s21, 1
      %s23 = scalar_select %p20, %s21, %s22
      %p26 = pneg %p20
      %p27 = scmp.eq.s32.totalorder %s11, 1
      %p28 = por %p26, %p27
      %p29 = scmp.ne.s32.totalorder %s21, %s24
      %p30 = scmp.eq.s32.totalorder %s11, 0
      %p31 = por %p29, %p30
      %p32 = scmp.ne.s32.totalorder %s21, %s24
      %p33 = scmp.eq.s32.totalorder %s16, 1
      %p34 = por %p32, %p33
      %p35 = scmp.ne.s32.totalorder %s24, %s25
      %p36 = scmp.eq.s32.totalorder %s16, 0
      %p37 = por %p35, %p36
      %p38 = scmp.ne.s32.totalorder %s24, %s25
      %p39 = scmp.eq.s32.totalorder %s17, 1
      %p40 = por %p38, %p39
      %p42 = scmp.ne.s32.totalorder %s25, %s41
      %p43 = scmp.eq.s32.totalorder %s17, 0
      %p44 = por %p42, %p43
      %s45 = ssub.s32 %s11, %s18
      %p46 = scmp.eq.s32.totalorder %s45, 0
      %s48 = sadd.s32 %s47, 1
      %s49 = scalar_select %p46, %s47, %s48
      %p52 = pneg %p46
      %p53 = scmp.eq.s32.totalorder %s11, 1
      %p54 = por %p52, %p53
      %p55 = scmp.ne.s32.totalorder %s47, %s50
      %p56 = scmp.eq.s32.totalorder %s11, 0
      %p57 = por %p55, %p56
      %p58 = scmp.ne.s32.totalorder %s47, %s50
      %p59 = scmp.eq.s32.totalorder %s16, 1
      %p60 = por %p58, %p59
      %p61 = scmp.ne.s32.totalorder %s50, %s51
      %p62 = scmp.eq.s32.totalorder %s16, 0
      %p63 = por %p61, %p62
      %p64 = scmp.ne.s32.totalorder %s50, %s51
      %p65 = scmp.eq.s32.totalorder %s17, 1
      %p66 = por %p64, %p65
      %p68 = scmp.ne.s32.totalorder %s51, %s67
      %p69 = scmp.eq.s32.totalorder %s17, 0
      %p70 = por %p68, %p69
      %s71 = ssub.s32 %s11, %s18
      %p72 = scmp.eq.s32.totalorder %s71, 0
      %s74 = sadd.s32 %s73, 1
      %s75 = scalar_select %p72, %s73, %s74
      %p78 = pneg %p72
      %p79 = scmp.eq.s32.totalorder %s11, 1
      %p80 = por %p78, %p79
      %p81 = scmp.ne.s32.totalorder %s73, %s76
      %p82 = scmp.eq.s32.totalorder %s11, 0
      %p83 = por %p81, %p82
      %p84 = scmp.ne.s32.totalorder %s73, %s76
      %p85 = scmp.eq.s32.totalorder %s16, 1
      %p86 = por %p84, %p85
      %p87 = scmp.ne.s32.totalorder %s76, %s77
      %p88 = scmp.eq.s32.totalorder %s16, 0
      %p89 = por %p87, %p88
      %p90 = scmp.ne.s32.totalorder %s76, %s77
      %p91 = scmp.eq.s32.totalorder %s17, 1
      %p92 = por %p90, %p91
      %p94 = scmp.ne.s32.totalorder %s77, %s93
      %p95 = scmp.eq.s32.totalorder %s17, 0
      %p96 = por %p94, %p95
      %s98 = sadd.s32 %s97, 1
      %p101 = scmp.eq.s32.totalorder %s11, 1
      %p102 = scmp.ne.s32.totalorder %s97, %s99
      %p103 = scmp.eq.s32.totalorder %s11, 0
      %p104 = por %p102, %p103
      %p105 = scmp.ne.s32.totalorder %s97, %s99
      %p106 = scmp.eq.s32.totalorder %s16, 1
      %p107 = por %p105, %p106
      %p108 = scmp.ne.s32.totalorder %s99, %s100
      %p109 = scmp.eq.s32.totalorder %s16, 0
      %p110 = por %p108, %p109
      %p111 = scmp.ne.s32.totalorder %s99, %s100
      %p112 = scmp.eq.s32.totalorder %s17, 1
      %p113 = por %p111, %p112
      %p115 = scmp.ne.s32.totalorder %s100, %s114
      %p116 = scmp.eq.s32.totalorder %s17, 0
      %p117 = por %p115, %p116
      %s119 = sadd.s32 %s118, 1
      %p122 = scmp.eq.s32.totalorder %s11, 1
      %p123 = scmp.ne.s32.totalorder %s118, %s120
      %p124 = scmp.eq.s32.totalorder %s11, 0
      %p125 = por %p123, %p124
      %p126 = scmp.ne.s32.totalorder %s118, %s120
      %p127 = scmp.eq.s32.totalorder %s16, 1
      %p128 = por %p126, %p127
      %p129 = scmp.ne.s32.totalorder %s120, %s121
      %p130 = scmp.eq.s32.totalorder %s16, 0
      %p131 = por %p129, %p130
      %p132 = scmp.ne.s32.totalorder %s120, %s121
      %p133 = scmp.eq.s32.totalorder %s17, 1
      %p134 = por %p132, %p133
      %p136 = scmp.ne.s32.totalorder %s121, %s135
      %p137 = scmp.eq.s32.totalorder %s17, 0
      %p138 = por %p136, %p137
      %s139 = ssub.s32 %s11, %s18
      %p140 = scmp.eq.s32.totalorder %s139, 0
      %s142 = sadd.s32 %s141, 1
      %s143 = scalar_select %p140, %s141, %s142
      %p146 = pneg %p140
      %p147 = scmp.eq.s32.totalorder %s11, 1
      %p148 = por %p146, %p147
      %p149 = scmp.ne.s32.totalorder %s141, %s144
      %p150 = scmp.eq.s32.totalorder %s11, 0
      %p151 = por %p149, %p150
      %p152 = scmp.ne.s32.totalorder %s141, %s144
      %p153 = scmp.eq.s32.totalorder %s16, 1
      %p154 = por %p152, %p153
      %p155 = scmp.ne.s32.totalorder %s144, %s145
      %p156 = scmp.eq.s32.totalorder %s16, 0
      %p157 = por %p155, %p156
      %p158 = scmp.ne.s32.totalorder %s144, %s145
      %p159 = scmp.eq.s32.totalorder %s17, 1
      %p160 = por %p158, %p159
      %p162 = scmp.ne.s32.totalorder %s145, %s161
      %p163 = scmp.eq.s32.totalorder %s17, 0
      %p164 = por %p162, %p163
      %p165 = scmp.le.s32.totalorder 1, %s11
      %p166 = scmp.lt.s32.totalorder %s11, 3
      %p167 = pnand %p165, %p166
      %p168 = pneg %p167
      // Predicated region
      $region9: #{e3dlstm_forward.18} parent=5 // pred_check
        _
      $region10: #{e3dlstm_forward.18} parent=5 // pred_check_branch
        %170 = sbr.rel (%p167) target = $region12
      $region11: #{e3dlstm_forward.18} parent=5 // pred_region
        %s171 = ssub.s32 %s11, 1
        // Predicated region
        $region13: #{e3dlstm_forward.18} parent=11 // pred_check
          %p172 = pneg %p110
        $region14: #{e3dlstm_forward.18} parent=11 // pred_check_branch
          %174 = sbr.rel (%p172) target = $region16
        $region15: #{e3dlstm_forward.18} parent=11 // pred_region
          _
        $region16: #{e3dlstm_forward.18} parent=11 // pred_fallthru
          _
        // Predicated region
        $region17: #{e3dlstm_forward.18} parent=11 // pred_check
          %p175 = pneg %p131
        $region18: #{e3dlstm_forward.18} parent=11 // pred_check_branch
          %177 = sbr.rel (%p175) target = $region20
        $region19: #{e3dlstm_forward.18} parent=11 // pred_region
          _
        $region20: #{e3dlstm_forward.18} parent=11 // pred_fallthru
          _
      $region12: #{e3dlstm_forward.18} parent=5 // pred_fallthru
        _
      %p178 = scmp.lt.s32.totalorder %s11, 2
      // Predicated region
      $region21: #{e3dlstm_forward.18} parent=5 // pred_check
        %p179 = pneg %p178
      $region22: #{e3dlstm_forward.18} parent=5 // pred_check_branch
        %181 = sbr.rel (%p179) target = $region24
      $region23: #{e3dlstm_forward.18} parent=5 // pred_region
        // Predicated region
        $region25: #{e3dlstm_forward.18} parent=23 // pred_check
          %p182 = pneg %p31
        $region26: #{e3dlstm_forward.18} parent=23 // pred_check_branch
          %184 = sbr.rel (%p182) target = $region28
        $region27: #{e3dlstm_forward.18} parent=23 // pred_region
          %p185 = scmp.lt.s32.totalorder %s11, 1
          %s186 = scalar_select %p185, %s11, 1
          %s187 = smul.addr %s186, 16
          %s188 = sadd.s32 4, %s187
          %s189 = smul.addr %s188, 4
          %s190 = scalar_lea.vmem %s0, %s189
        $region28: #{e3dlstm_forward.18} parent=23 // pred_fallthru
          _
        // Predicated region
        $region29: #{e3dlstm_forward.18} parent=23 // pred_check
          %p191 = pneg %p57
        $region30: #{e3dlstm_forward.18} parent=23 // pred_check_branch
          %193 = sbr.rel (%p191) target = $region32
        $region31: #{e3dlstm_forward.18} parent=23 // pred_region
          %s194 = sand.u32 %s47, 1
          %s195 = sand.u32 %s47, 1
          %s196 = smul.addr %s195, 64
          %s197 = scalar_lea.vmem [#allocation2], %s196
          %s198 = smul.addr %s11, 4
          %s199 = smul.addr %s198, 8
          %s200 = scalar_lea.vmem %s1, %s199
          // Predicated region
          $region33: #{e3dlstm_forward.18} parent=31 // pred_check
            _
          $region34: #{e3dlstm_forward.18} parent=31 // pred_check_branch
            %202 = sbr.rel (0) target = $region36
          $region35: #{e3dlstm_forward.18} parent=31 // pred_region
            // Predicated region
            $region37: #{e3dlstm_forward.18} parent=35 // pred_check
              _
            $region38: #{e3dlstm_forward.18} parent=35 // pred_check_branch
              %204 = sbr.rel (0) target = $region40
            $region39: #{e3dlstm_forward.18} parent=35 // pred_region
              loop: start=0, step=1, limit=1
              $region41: #{e3dlstm_forward.18} parent=39 // loop_pre_header
                _
              $region42: #{e3dlstm_forward.18} parent=39 // loop_header
                %s206 = sphi 0, %s210
                %p207 = scmp.ge.s32.totalorder %s206, 1
                %s211 = sphi %s200, %s200
                %s212 = sphi %s197, %s197
              $region43: #{e3dlstm_forward.18} parent=39 // loop_header_branch
                %209 = sbr.rel (%p207) target = $region47
              $region44: #{e3dlstm_forward.18} parent=39 // loop_body
                %v213 = vld [vmem:[%s211] sm:$0xff]
                %214 = vst [vmem:[%s212] sm:$0xff] %v213
                %v215 = vld [vmem:[%s211 + $0x8] sm:$0xff]
                %216 = vst [vmem:[%s212 + $0x8] sm:$0xff] %v215
                %v217 = vld [vmem:[%s211 + $0x10] sm:$0xff]
                %218 = vst [vmem:[%s212 + $0x10] sm:$0xff] %v217
                %v219 = vld [vmem:[%s211 + $0x18] sm:$0xff]
                %220 = vst [vmem:[%s212 + $0x18] sm:$0xff] %v219
                %v221 = vld [vmem:[%s211 + $0x40] sm:$0xff]
                %222 = vst [vmem:[%s212 + $0x20] sm:$0xff] %v221
                %v223 = vld [vmem:[%s211 + $0x48] sm:$0xff]
                %224 = vst [vmem:[%s212 + $0x28] sm:$0xff] %v223
                %v225 = vld [vmem:[%s211 + $0x50] sm:$0xff]
                %226 = vst [vmem:[%s212 + $0x30] sm:$0xff] %v225
                %v227 = vld [vmem:[%s211 + $0x58] sm:$0xff]
                %228 = vst [vmem:[%s212 + $0x38] sm:$0xff] %v227
              $region45: #{e3dlstm_forward.18} parent=39 // loop_footer
                %s210 = sadd.s32 1, %s206
              $region46: #{e3dlstm_forward.18} parent=39 // loop_footer_branch
                %205 = sbr.rel target = $region42
              $region47: #{e3dlstm_forward.18} parent=39 // loop_exit
                _
            $region40: #{e3dlstm_forward.18} parent=35 // pred_fallthru
              _
            // Predicated region
            $region48: #{e3dlstm_forward.18} parent=35 // pred_check
              _
            $region49: #{e3dlstm_forward.18} parent=35 // pred_check_branch
              %230 = sbr.rel target = $region51
            $region50: #{e3dlstm_forward.18} parent=35 // pred_region
              _
            $region51: #{e3dlstm_forward.18} parent=35 // pred_fallthru
              _
          $region36: #{e3dlstm_forward.18} parent=31 // pred_fallthru
            _
          %231 = vnop
        $region32: #{e3dlstm_forward.18} parent=23 // pred_fallthru
          _
        // Predicated region
        $region52: #{e3dlstm_forward.18} parent=23 // pred_check
          %p232 = pneg %p83
        $region53: #{e3dlstm_forward.18} parent=23 // pred_check_branch
          %234 = sbr.rel (%p232) target = $region55
        $region54: #{e3dlstm_forward.18} parent=23 // pred_region
          %p235 = scmp.lt.s32.totalorder %s11, 1
          %s236 = scalar_select %p235, %s11, 1
          %s237 = smul.addr %s236, 2
          %s238 = scalar_lea.vmem %s2, %s237
        $region55: #{e3dlstm_forward.18} parent=23 // pred_fallthru
          _
      $region24: #{e3dlstm_forward.18} parent=5 // pred_fallthru
        _
      %p239 = scmp.le.s32.totalorder 1, %s11
      %p240 = scmp.lt.s32.totalorder %s11, 3
      %p241 = pnand %p239, %p240
      %p242 = pneg %p241
      // Predicated region
      $region56: #{e3dlstm_forward.18} parent=5 // pred_check
        _
      $region57: #{e3dlstm_forward.18} parent=5 // pred_check_branch
        %244 = sbr.rel (%p241) target = $region59
      $region58: #{e3dlstm_forward.18} parent=5 // pred_region
        %s245 = ssub.s32 %s11, 1
        %s246 = sand.u32 %s50, 1
        %s247 = sand.u32 %s50, 1
        %s248 = smul.addr %s247, 64
        %s249 = scalar_lea.vmem [#allocation2], %s248
        // Predicated region
        $region60: #{e3dlstm_forward.18} parent=58 // pred_check
          %p250 = pneg %p63
        $region61: #{e3dlstm_forward.18} parent=58 // pred_check_branch
          %252 = sbr.rel (%p250) target = $region63
        $region62: #{e3dlstm_forward.18} parent=58 // pred_region
          _
        $region63: #{e3dlstm_forward.18} parent=58 // pred_fallthru
          _
        %p253 = scmp.lt.s32.totalorder %s16, 1
        %s254 = scalar_select %p253, %s16, 1
        %s255 = smul.addr %s254, 16
        %s256 = sadd.s32 4, %s255
        %s257 = smul.addr %s256, 4
        %s258 = scalar_lea.vmem %s0, %s257
        %p259 = pneg %p37
        %p260 = pneg %p34
        %s261 = sand.u32 %s50, 1
        %s262 = sand.u32 %s50, 1
        %s263 = smul.addr %s262, 64
        %s264 = scalar_lea.vmem [#allocation2], %s263
        %p265 = pneg %p63
        %p266 = pneg %p60
        %p267 = scmp.lt.s32.totalorder %s16, 1
        %s268 = scalar_select %p267, %s16, 1
        %s269 = smul.addr %s268, 2
        %s270 = scalar_lea.vmem %s2, %s269
        %p271 = pneg %p89
        %p272 = pneg %p86
        %p273 = pneg %p110
        %p274 = pneg %p107
        %p275 = pneg %p131
        %p276 = pneg %p128
        %p277 = pneg %p157
        %p278 = pneg %p154
        %p279 = scmp.lt.s32.totalorder %s16, 1
        %s280 = scalar_select %p279, %s16, 1
        %s281 = smul.addr %s280, 4
        %s282 = smul.addr %s281, 8
        %s283 = scalar_lea.vmem %s5, %s282
        %p284 = scmp.lt.s32.totalorder %s16, 1
        %s285 = scalar_select %p284, %s16, 1
        %s286 = smul.addr %s285, 16
        %s287 = sadd.s32 4, %s286
        %s288 = smul.addr %s287, 4
        %s289 = scalar_lea.vmem %s0, %s288
        %p290 = scmp.lt.s32.totalorder %s16, 1
        %s291 = scalar_select %p290, %s16, 1
        %s292 = smul.addr %s291, 2
        %s293 = scalar_lea.vmem %s2, %s292
        %p294 = scmp.lt.s32.totalorder %s16, 1
        %s295 = scalar_select %p294, %s16, 1
        %s296 = smul.addr %s295, 4
        %s297 = smul.addr %s296, 8
        %s298 = scalar_lea.vmem %s5, %s297
        %v299 = vld [vmem:[%s289] sm:$0xff]
        %v300 = vld [vmem:[%s289 + $0x8] sm:$0xff]
        %v301 = vunpack.c.l.bf16 %v299
        %v302 = vunpack.c.h.bf16 %v299
        %v303 = vunpack.c.l.bf16 %v300
        %v304 = vunpack.c.h.bf16 %v300
        %v305 = vld [vmem:[%s249] sm:$0xff]
        %v306 = vld [vmem:[%s249 + $0x8] sm:$0xff]
        %v307 = vld [vmem:[%s249 + $0x10] sm:$0xff]
        %v308 = vld [vmem:[%s249 + $0x18] sm:$0xff]
        %v309 = vld [vmem:[%s249 + $0x20] sm:$0xff]
        %v310 = vld [vmem:[%s249 + $0x28] sm:$0xff]
        %v311 = vld [vmem:[%s249 + $0x30] sm:$0xff]
        %v312 = vld [vmem:[%s249 + $0x38] sm:$0xff]
        %v313 = vld [vmem:[%s293] sm:$0x1]
        %v314 = vld [vmem:[%s293 + $0x1] sm:$0x1]
        %v317 = vlaneseq
        %v318 = vshrl.u32 %v317, 7
        %v319 = vsub.s32 0, %v318
        %v320 = vrot.slane %v313, %v319
        %v321 = vlaneseq
        %v322 = vshrl.u32 %v321, 7
        %v323 = vsub.s32 0, %v322
        %v324 = vrot.slane %v314, %v323
        %325 = vset.pattern.permute.xlu0 0
        %326 = vperm.xlu0 %325, %v320
        %v327 = vpop.permute.xlu0 %326
        %329 = vset.pattern.permute.xlu0 0
        %330 = vperm.xlu0 %329, %v324
        %v331 = vpop.permute.xlu0 %330
        %v333 = vmul.f32 %v327, %v305
        %v334 = vmul.f32 %v327, %v306
        %v335 = vmul.f32 %v327, %v307
        %v336 = vmul.f32 %v327, %v308
        %v337 = vmul.f32 %v331, %v309
        %v338 = vmul.f32 %v331, %v310
        %v339 = vmul.f32 %v331, %v311
        %v340 = vmul.f32 %v331, %v312
        %v341 = vadd.f32 %v333, %v337
        %v342 = vadd.f32 %v334, %v338
        %v343 = vadd.f32 %v335, %v339
        %v344 = vadd.f32 %v336, %v340
        %v345 = vadd.f32 %v309, %v341
        %v346 = vadd.f32 %v310, %v342
        %v347 = vadd.f32 %v311, %v343
        %v348 = vadd.f32 %v312, %v344
        %v349 = vadd.f32 %v345, %v346
        %v350 = vadd.f32 %v349, %v347
        %v351 = vadd.f32 %v350, %v348
        %352 = vadd.xlane.f32.xlu0 %v351
        %v353 = vpop.xlane.xlu0 %352
        %v354 = vrot.slane %v353, 4
        %v355 = vadd.f32 %v353, %v354
        %v356 = vrot.slane %v355, 2
        %v357 = vadd.f32 %v355, %v356
        %v358 = vrot.slane %v357, 1
        %v359 = vadd.f32 %v357, %v358
        %s360 = vtos %v359
        %s361 = smul.f32 %s360, 0.00024414063
        %v362 = vmul.f32 %v345, %v345
        %v363 = vmul.f32 %v346, %v346
        %v364 = vmul.f32 %v347, %v347
        %v365 = vmul.f32 %v348, %v348
        %v366 = vadd.f32 %v362, %v363
        %v367 = vadd.f32 %v366, %v364
        %v368 = vadd.f32 %v367, %v365
        %369 = vadd.xlane.f32.xlu0 %v368
        %v370 = vpop.xlane.xlu0 %369
        %v371 = vrot.slane %v370, 4
        %v372 = vadd.f32 %v370, %v371
        %v373 = vrot.slane %v372, 2
        %v374 = vadd.f32 %v372, %v373
        %v375 = vrot.slane %v374, 1
        %v376 = vadd.f32 %v374, %v375
        %s377 = vtos %v376
        %s378 = smul.f32 %s377, 0.00024414063
        %s379 = smul.f32 %s361, %s361
        %s380 = ssub.f32 %s378, %s379
        %s381 = smax.f32 %s380, 0.0
        %v382 = vstv %s361
        %v383 = vsub.f32 %v345, %v382
        %v384 = vsub.f32 %v346, %v382
        %v385 = vsub.f32 %v347, %v382
        %v386 = vsub.f32 %v348, %v382
        %s387 = sadd.f32 %s381, 1e-05
        %v388 = vstv %s387
        %v389 = vrsqrt.pop %v388
        %s390 = vtos %v389
        %v391 = vstv %s390
        %v392 = vmul.f32 %v383, %v391
        %v393 = vmul.f32 %v384, %v391
        %v394 = vmul.f32 %v385, %v391
        %v395 = vmul.f32 %v386, %v391
        %v396 = vld [vmem:[%s3] sm:$0xff]
        %v397 = vld [vmem:[%s3 + $0x8] sm:$0xff]
        %v398 = vld [vmem:[%s3 + $0x10] sm:$0xff]
        %v399 = vld [vmem:[%s3 + $0x18] sm:$0xff]
        %v400 = vmul.f32 %v396, %v392
        %v401 = vmul.f32 %v397, %v393
        %v402 = vmul.f32 %v398, %v394
        %v403 = vmul.f32 %v399, %v395
        %v404 = vadd.f32 %v301, %v400
        %v405 = vadd.f32 %v302, %v401
        %v406 = vadd.f32 %v303, %v402
        %v407 = vadd.f32 %v304, %v403
        %v408 = vld [vmem:[%s4] sm:$0xff]
        %v409 = vld [vmem:[%s4 + $0x8] sm:$0xff]
        %v410 = vld [vmem:[%s4 + $0x10] sm:$0xff]
        %v411 = vld [vmem:[%s4 + $0x18] sm:$0xff]
        %v412 = vadd.f32 %v404, %v408
        %v413 = vadd.f32 %v405, %v409
        %v414 = vadd.f32 %v406, %v410
        %v415 = vadd.f32 %v407, %v411
        %416 = vst [vmem:[%s298] sm:$0xff] %v412
        %417 = vst [vmem:[%s298 + $0x8] sm:$0xff] %v413
        %418 = vst [vmem:[%s298 + $0x10] sm:$0xff] %v414
        %419 = vst [vmem:[%s298 + $0x18] sm:$0xff] %v415
        %p420 = scmp.lt.s32.totalorder %s16, 1
        %s421 = scalar_select %p420, %s16, 1
        %s422 = smul.addr %s421, 4
        %s423 = smul.addr %s422, 8
        %s424 = scalar_lea.vmem %s5, %s423
        // Predicated region
        $region64: #{e3dlstm_forward.18} parent=58 // pred_check
          %p425 = pneg %p154
        $region65: #{e3dlstm_forward.18} parent=58 // pred_check_branch
          %427 = sbr.rel (%p425) target = $region67
        $region66: #{e3dlstm_forward.18} parent=58 // pred_region
          _
        $region67: #{e3dlstm_forward.18} parent=58 // pred_fallthru
          _
      $region59: #{e3dlstm_forward.18} parent=5 // pred_fallthru
        _
      %p428 = scmp.le.s32.totalorder 2, %s11
      // Predicated region
      $region68: #{e3dlstm_forward.18} parent=5 // pred_check
        %p429 = pneg %p428
      $region69: #{e3dlstm_forward.18} parent=5 // pred_check_branch
        %431 = sbr.rel (%p429) target = $region71
      $region70: #{e3dlstm_forward.18} parent=5 // pred_region
        %s432 = ssub.s32 %s11, 2
        // Predicated region
        $region72: #{e3dlstm_forward.18} parent=70 // pred_check
          %p433 = pneg %p160
        $region73: #{e3dlstm_forward.18} parent=70 // pred_check_branch
          %435 = sbr.rel (%p433) target = $region75
        $region74: #{e3dlstm_forward.18} parent=70 // pred_region
          %p436 = scmp.lt.s32.totalorder %s17, 1
          %s437 = scalar_select %p436, %s17, 1
          %s438 = smul.addr %s437, 4
          %s439 = smul.addr %s438, 8
          %s440 = scalar_lea.vmem %s5, %s439
        $region75: #{e3dlstm_forward.18} parent=70 // pred_fallthru
          _
      $region71: #{e3dlstm_forward.18} parent=5 // pred_fallthru
        _
    $region6: #{e3dlstm_forward.18} parent=1 // loop_footer
      %s15 = sadd.s32 1, %s11
    $region7: #{e3dlstm_forward.18} parent=1 // loop_footer_branch
      %10 = sbr.rel target = $region3
    $region8: #{e3dlstm_forward.18} parent=1 // loop_exit
      _

// kernel: e3dlstm_forward.19
$region0: #{e3dlstm_forward.19}
  #allocation0 [shape = 'u32[]', space=smem, size = 0x4, offset = 0x4, fixed_abs, tag = 'smem constant byte address 0x4 - core index']
  #allocation1 [shape = 'u32[144,128]{1,0:T(1,128)}', space=vmem, size = 0x12000, scoped, tag = 'internal scratch']
  %s0 = inlined_call_operand.vmem [shape: bf16[2,2,8,512], index: 0, kind: input, shape index: {}]
  %s1 = inlined_call_operand.vmem [shape: bf16[2,8,216], index: 1, kind: input, shape index: {}]
  %s2 = inlined_call_operand.vmem [shape: f32[2,8,1], index: 2, kind: input, shape index: {}]
  %s3 = inlined_call_operand.vmem [shape: bf16[2,2,8,512], index: 3, kind: output, shape index: {}]
  %s4 = sld [smem:[#allocation0]]
  $region45: #{e3dlstm_forward.19} parent=0
    _
  %s6 = ssub.s32 1, %s4
  %s7 = scalar_select 0, %s6, %s4
  loop: start=0, step=1, limit=6
  $region2: #{e3dlstm_forward.19} parent=0 // loop_pre_header
    _
  $region3: #{e3dlstm_forward.19} parent=0 // loop_header
    %s9 = sphi 0, %s13
    %p10 = scmp.ge.s32.totalorder %s9, 6
    %s16 = sphi 0, %s35
    %s17 = sphi 0, %s31
    %s18 = sphi 0, %s27
    %s19 = sphi 0, %s16
    %s20 = sphi 0, %s17
    %s21 = sphi 0, %s18
    %s22 = sphi 0, %s19
    %s23 = sphi 0, %s20
    %s24 = sphi 0, %s21
    %s40 = sphi 0, %s42
    %s43 = sphi 0, %s40
    %s44 = sphi 0, %s43
    %s60 = sphi 0, %s44
    %s68 = sphi 0, %s70
    %s71 = sphi 0, %s68
    %s72 = sphi 0, %s71
    %s88 = sphi 0, %s72
    %s96 = sphi 0, %s98
    %s99 = sphi 0, %s96
    %s100 = sphi 0, %s99
    %s116 = sphi 0, %s100
    %s126 = sphi 0, %s128
    %s129 = sphi 0, %s126
    %s130 = sphi 0, %s129
    %s146 = sphi 0, %s130
  $region4: #{e3dlstm_forward.19} parent=0 // loop_header_branch
    %12 = sbr.rel (%p10) target = $region8
  $region5: #{e3dlstm_forward.19} parent=0 // loop_body
    %s14 = ssub.s32 %s9, 1
    %s15 = ssub.s32 %s9, 2
    %s25 = sadd.s32 1, %s18
    %p26 = scmp.ge.s32.totalorder %s25, 1
    %s27 = scalar_select %p26, 0, %s25
    %s28 = sadd.s32 1, %s17
    %s29 = scalar_select %p26, %s28, %s17
    %p30 = scmp.ge.s32.totalorder %s29, 2
    %s31 = scalar_select %p30, 0, %s29
    %s32 = sadd.s32 1, %s16
    %s33 = scalar_select %p30, %s32, %s16
    %p34 = scmp.ge.s32.totalorder %s33, 2
    %s35 = scalar_select %p34, 0, %s33
    %s36 = ssub.s32 %s16, %s35
    %s37 = ssub.s32 %s17, %s31
    %s38 = sor.u32 %s36, %s37
    %p39 = scmp.eq.s32.totalorder %s38, 0
    %s41 = sadd.s32 %s40, 1
    %s42 = scalar_select %p39, %s40, %s41
    %p45 = pneg %p39
    %p46 = scmp.eq.s32.totalorder %s9, 3
    %p47 = por %p45, %p46
    %p48 = scmp.ne.s32.totalorder %s40, %s43
    %p49 = scmp.eq.s32.totalorder %s9, 0
    %p50 = por %p48, %p49
    %p51 = scmp.ne.s32.totalorder %s40, %s43
    %p52 = scmp.eq.s32.totalorder %s14, 3
    %p53 = por %p51, %p52
    %p54 = scmp.ne.s32.totalorder %s43, %s44
    %p55 = scmp.eq.s32.totalorder %s14, 0
    %p56 = por %p54, %p55
    %p57 = scmp.ne.s32.totalorder %s43, %s44
    %p58 = scmp.eq.s32.totalorder %s15, 3
    %p59 = por %p57, %p58
    %p61 = scmp.ne.s32.totalorder %s44, %s60
    %p62 = scmp.eq.s32.totalorder %s15, 0
    %p63 = por %p61, %p62
    %s64 = ssub.s32 %s16, %s35
    %s65 = ssub.s32 %s18, %s27
    %s66 = sor.u32 %s64, %s65
    %p67 = scmp.eq.s32.totalorder %s66, 0
    %s69 = sadd.s32 %s68, 1
    %s70 = scalar_select %p67, %s68, %s69
    %p73 = pneg %p67
    %p74 = scmp.eq.s32.totalorder %s9, 3
    %p75 = por %p73, %p74
    %p76 = scmp.ne.s32.totalorder %s68, %s71
    %p77 = scmp.eq.s32.totalorder %s9, 0
    %p78 = por %p76, %p77
    %p79 = scmp.ne.s32.totalorder %s68, %s71
    %p80 = scmp.eq.s32.totalorder %s14, 3
    %p81 = por %p79, %p80
    %p82 = scmp.ne.s32.totalorder %s71, %s72
    %p83 = scmp.eq.s32.totalorder %s14, 0
    %p84 = por %p82, %p83
    %p85 = scmp.ne.s32.totalorder %s71, %s72
    %p86 = scmp.eq.s32.totalorder %s15, 3
    %p87 = por %p85, %p86
    %p89 = scmp.ne.s32.totalorder %s72, %s88
    %p90 = scmp.eq.s32.totalorder %s15, 0
    %p91 = por %p89, %p90
    %s92 = ssub.s32 %s16, %s35
    %s93 = ssub.s32 %s18, %s27
    %s94 = sor.u32 %s92, %s93
    %p95 = scmp.eq.s32.totalorder %s94, 0
    %s97 = sadd.s32 %s96, 1
    %s98 = scalar_select %p95, %s96, %s97
    %p101 = pneg %p95
    %p102 = scmp.eq.s32.totalorder %s9, 3
    %p103 = por %p101, %p102
    %p104 = scmp.ne.s32.totalorder %s96, %s99
    %p105 = scmp.eq.s32.totalorder %s9, 0
    %p106 = por %p104, %p105
    %p107 = scmp.ne.s32.totalorder %s96, %s99
    %p108 = scmp.eq.s32.totalorder %s14, 3
    %p109 = por %p107, %p108
    %p110 = scmp.ne.s32.totalorder %s99, %s100
    %p111 = scmp.eq.s32.totalorder %s14, 0
    %p112 = por %p110, %p111
    %p113 = scmp.ne.s32.totalorder %s99, %s100
    %p114 = scmp.eq.s32.totalorder %s15, 3
    %p115 = por %p113, %p114
    %p117 = scmp.ne.s32.totalorder %s100, %s116
    %p118 = scmp.eq.s32.totalorder %s15, 0
    %p119 = por %p117, %p118
    %s120 = ssub.s32 %s16, %s35
    %s121 = ssub.s32 %s17, %s31
    %s122 = sor.u32 %s120, %s121
    %s123 = ssub.s32 %s18, %s27
    %s124 = sor.u32 %s122, %s123
    %p125 = scmp.eq.s32.totalorder %s124, 0
    %s127 = sadd.s32 %s126, 1
    %s128 = scalar_select %p125, %s126, %s127
    %p131 = pneg %p125
    %p132 = scmp.eq.s32.totalorder %s9, 3
    %p133 = por %p131, %p132
    %p134 = scmp.ne.s32.totalorder %s126, %s129
    %p135 = scmp.eq.s32.totalorder %s9, 0
    %p136 = por %p134, %p135
    %p137 = scmp.ne.s32.totalorder %s126, %s129
    %p138 = scmp.eq.s32.totalorder %s14, 3
    %p139 = por %p137, %p138
    %p140 = scmp.ne.s32.totalorder %s129, %s130
    %p141 = scmp.eq.s32.totalorder %s14, 0
    %p142 = por %p140, %p141
    %p143 = scmp.ne.s32.totalorder %s129, %s130
    %p144 = scmp.eq.s32.totalorder %s15, 3
    %p145 = por %p143, %p144
    %p147 = scmp.ne.s32.totalorder %s130, %s146
    %p148 = scmp.eq.s32.totalorder %s15, 0
    %p149 = por %p147, %p148
    %p150 = scmp.le.s32.totalorder 1, %s9
    %p151 = scmp.lt.s32.totalorder %s9, 5
    %p152 = pnand %p150, %p151
    %p153 = pneg %p152
    // Predicated region
    $region9: #{e3dlstm_forward.19} parent=5 // pred_check
      _
    $region10: #{e3dlstm_forward.19} parent=5 // pred_check_branch
      %155 = sbr.rel (%p152) target = $region12
    $region11: #{e3dlstm_forward.19} parent=5 // pred_region
      %s156 = ssub.s32 %s9, 1
    $region12: #{e3dlstm_forward.19} parent=5 // pred_fallthru
      _
    %p157 = scmp.lt.s32.totalorder %s9, 4
    // Predicated region
    $region13: #{e3dlstm_forward.19} parent=5 // pred_check
      %p158 = pneg %p157
    $region14: #{e3dlstm_forward.19} parent=5 // pred_check_branch
      %160 = sbr.rel (%p158) target = $region16
    $region15: #{e3dlstm_forward.19} parent=5 // pred_region
      // Predicated region
      $region17: #{e3dlstm_forward.19} parent=15 // pred_check
        %p161 = pneg %p50
      $region18: #{e3dlstm_forward.19} parent=15 // pred_check_branch
        %163 = sbr.rel (%p161) target = $region20
      $region19: #{e3dlstm_forward.19} parent=15 // pred_region
        %p164 = scmp.lt.s32.totalorder %s16, 1
        %s165 = scalar_select %p164, %s16, 1
        %p166 = scmp.lt.s32.totalorder %s17, 1
        %s167 = scalar_select %p166, %s17, 1
        %s168 = smul.addr %s167, 4
        %s169 = smul.addr %s165, 8
        %s170 = sadd.s32 %s168, %s169
        %s171 = smul.addr %s170, 4
        %s172 = scalar_lea.vmem %s0, %s171
      $region20: #{e3dlstm_forward.19} parent=15 // pred_fallthru
        _
      // Predicated region
      $region21: #{e3dlstm_forward.19} parent=15 // pred_check
        %p173 = pneg %p78
      $region22: #{e3dlstm_forward.19} parent=15 // pred_check_branch
        %175 = sbr.rel (%p173) target = $region24
      $region23: #{e3dlstm_forward.19} parent=15 // pred_region
        %p176 = scmp.lt.s32.totalorder %s16, 1
        %s177 = scalar_select %p176, %s16, 1
        %p178 = scmp.lt.s32.totalorder %s18, 0
        %s179 = scalar_select %p178, %s18, 0
        %s180 = smul.addr %s179, 2
        %s181 = smul.addr %s177, 2
        %s182 = sadd.s32 %s180, %s181
        %s183 = smul.addr %s182, 4
        %s184 = scalar_lea.vmem %s1, %s183
      $region24: #{e3dlstm_forward.19} parent=15 // pred_fallthru
        _
      // Predicated region
      $region25: #{e3dlstm_forward.19} parent=15 // pred_check
        %p185 = pneg %p106
      $region26: #{e3dlstm_forward.19} parent=15 // pred_check_branch
        %187 = sbr.rel (%p185) target = $region28
      $region27: #{e3dlstm_forward.19} parent=15 // pred_region
        %p188 = scmp.lt.s32.totalorder %s16, 1
        %s189 = scalar_select %p188, %s16, 1
        %p190 = scmp.lt.s32.totalorder %s18, 0
        %s191 = scalar_select %p190, %s18, 0
        %s192 = sadd.s32 %s191, %s189
        %s193 = smul.addr %s192, 8
        %s194 = scalar_lea.vmem %s2, %s193
      $region28: #{e3dlstm_forward.19} parent=15 // pred_fallthru
        _
    $region16: #{e3dlstm_forward.19} parent=5 // pred_fallthru
      _
    %p195 = scmp.le.s32.totalorder 1, %s9
    %p196 = scmp.lt.s32.totalorder %s9, 5
    %p197 = pnand %p195, %p196
    %p198 = pneg %p197
    // Predicated region
    $region29: #{e3dlstm_forward.19} parent=5 // pred_check
      _
    $region30: #{e3dlstm_forward.19} parent=5 // pred_check_branch
      %200 = sbr.rel (%p197) target = $region32
    $region31: #{e3dlstm_forward.19} parent=5 // pred_region
      %s201 = ssub.s32 %s9, 1
      %p202 = scmp.lt.s32.totalorder %s19, 1
      %s203 = scalar_select %p202, %s19, 1
      %p204 = scmp.lt.s32.totalorder %s20, 1
      %s205 = scalar_select %p204, %s20, 1
      %s206 = smul.addr %s205, 4
      %s207 = smul.addr %s203, 8
      %s208 = sadd.s32 %s206, %s207
      %s209 = smul.addr %s208, 4
      %s210 = scalar_lea.vmem %s0, %s209
      %p211 = pneg %p56
      %p212 = pneg %p53
      %p213 = scmp.lt.s32.totalorder %s19, 1
      %s214 = scalar_select %p213, %s19, 1
      %p215 = scmp.lt.s32.totalorder %s21, 0
      %s216 = scalar_select %p215, %s21, 0
      %s217 = smul.addr %s216, 2
      %s218 = smul.addr %s214, 2
      %s219 = sadd.s32 %s217, %s218
      %s220 = smul.addr %s219, 4
      %s221 = scalar_lea.vmem %s1, %s220
      %p222 = pneg %p84
      %p223 = pneg %p81
      %p224 = scmp.lt.s32.totalorder %s19, 1
      %s225 = scalar_select %p224, %s19, 1
      %p226 = scmp.lt.s32.totalorder %s21, 0
      %s227 = scalar_select %p226, %s21, 0
      %s228 = sadd.s32 %s227, %s225
      %s229 = smul.addr %s228, 8
      %s230 = scalar_lea.vmem %s2, %s229
      %p231 = pneg %p112
      %p232 = pneg %p109
      %p233 = pneg %p142
      %p234 = pneg %p139
      %p235 = scmp.lt.s32.totalorder %s19, 1
      %s236 = scalar_select %p235, %s19, 1
      %p237 = scmp.lt.s32.totalorder %s20, 1
      %s238 = scalar_select %p237, %s20, 1
      %p239 = scmp.lt.s32.totalorder %s21, 0
      %s240 = scalar_select %p239, %s21, 0
      %s241 = smul.addr %s240, 4
      %s242 = smul.addr %s238, 4
      %s243 = sadd.s32 %s241, %s242
      %s244 = smul.addr %s236, 8
      %s245 = sadd.s32 %s243, %s244
      %s246 = smul.addr %s245, 4
      %s247 = scalar_lea.vmem %s3, %s246
      %p248 = scmp.lt.s32.totalorder %s19, 1
      %s249 = scalar_select %p248, %s19, 1
      %p250 = scmp.lt.s32.totalorder %s20, 1
      %s251 = scalar_select %p250, %s20, 1
      %s252 = smul.addr %s251, 4
      %s253 = smul.addr %s249, 8
      %s254 = sadd.s32 %s252, %s253
      %s255 = smul.addr %s254, 4
      %s256 = scalar_lea.vmem %s0, %s255
      %p257 = scmp.lt.s32.totalorder %s19, 1
      %s258 = scalar_select %p257, %s19, 1
      %p259 = scmp.lt.s32.totalorder %s21, 0
      %s260 = scalar_select %p259, %s21, 0
      %s261 = smul.addr %s260, 2
      %s262 = smul.addr %s258, 2
      %s263 = sadd.s32 %s261, %s262
      %s264 = smul.addr %s263, 4
      %s265 = scalar_lea.vmem %s1, %s264
      %p266 = scmp.lt.s32.totalorder %s19, 1
      %s267 = scalar_select %p266, %s19, 1
      %p268 = scmp.lt.s32.totalorder %s21, 0
      %s269 = scalar_select %p268, %s21, 0
      %s270 = sadd.s32 %s269, %s267
      %s271 = smul.addr %s270, 8
      %s272 = scalar_lea.vmem %s2, %s271
      %p273 = scmp.lt.s32.totalorder %s19, 1
      %s274 = scalar_select %p273, %s19, 1
      %p275 = scmp.lt.s32.totalorder %s20, 1
      %s276 = scalar_select %p275, %s20, 1
      %p277 = scmp.lt.s32.totalorder %s21, 0
      %s278 = scalar_select %p277, %s21, 0
      %s279 = smul.addr %s278, 4
      %s280 = smul.addr %s276, 4
      %s281 = sadd.s32 %s279, %s280
      %s282 = smul.addr %s274, 8
      %s283 = sadd.s32 %s281, %s282
      %s284 = smul.addr %s283, 4
      %s285 = scalar_lea.vmem %s3, %s284
      %v287 = vld [vmem:[%s256] sm:$0xff]
      %v288 = vld [vmem:[%s256 + $0x8] sm:$0xff]
      %v291 = vunpack.c.l.b16 %v287
      %v292 = vunpack.c.h.b16 %v287
      %v293 = vunpack.c.l.b16 %v288
      %v294 = vunpack.c.h.b16 %v288
      %v295 = vpack.c.b16 %v291, %v291
      %v296 = vpack.c.b16 %v292, %v292
      %v297 = vpack.c.b16 %v293, %v293
      %v298 = vpack.c.b16 %v294, %v294
      %v300 = vrot.slane %v295, 4
      %v301 = vrot.slane %v296, 4
      %v302 = vrot.slane %v297, 4
      %v303 = vrot.slane %v298, 4
      %v304 = vrot.slane 0, 4
      %305 = vrot.lane.b32.xlu0 %v300, 127
      %v306 = vpop.permute.xlu0 %305
      %307 = vrot.lane.b32.xlu0 %v301, 127
      %v308 = vpop.permute.xlu0 %307
      %309 = vrot.lane.b32.xlu0 %v302, 127
      %v310 = vpop.permute.xlu0 %309
      %311 = vrot.lane.b32.xlu0 %v303, 127
      %v312 = vpop.permute.xlu0 %311
      %313 = vrot.lane.b32.xlu0 %v304, 127
      %v314 = vpop.permute.xlu0 %313
      %vm315 = vcmask 1039360
      %v316 = vsel %vm315, %v306, %v308
      %v317 = vsel %vm315, %v308, %v310
      %v318 = vsel %vm315, %v310, %v312
      %v319 = vsel %vm315, %v312, %v314
      %320 = vrot.lane.b32.xlu0 %v295, 126
      %v321 = vpop.permute.xlu0 %320
      %322 = vrot.lane.b32.xlu0 %v296, 126
      %v323 = vpop.permute.xlu0 %322
      %324 = vrot.lane.b32.xlu0 %v297, 126
      %v325 = vpop.permute.xlu0 %324
      %326 = vrot.lane.b32.xlu0 %v298, 126
      %v327 = vpop.permute.xlu0 %326
      %328 = vrot.lane.b32.xlu0 0, 126
      %v329 = vpop.permute.xlu0 %328
      %vm330 = vcmask 1031168
      %v331 = vsel %vm330, %v321, %v323
      %v332 = vsel %vm330, %v323, %v325
      %v333 = vsel %vm330, %v325, %v327
      %v334 = vsel %vm330, %v327, %v329
      %335 = vrot.lane.b32.xlu0 %v300, 120
      %v336 = vpop.permute.xlu0 %335
      %337 = vrot.lane.b32.xlu0 %v301, 120
      %v338 = vpop.permute.xlu0 %337
      %339 = vrot.lane.b32.xlu0 %v302, 120
      %v340 = vpop.permute.xlu0 %339
      %341 = vrot.lane.b32.xlu0 %v303, 120
      %v342 = vpop.permute.xlu0 %341
      %343 = vrot.lane.b32.xlu0 %v304, 120
      %v344 = vpop.permute.xlu0 %343
      %vm345 = vcmask 982016
      %v346 = vsel %vm345, %v336, %v338
      %v347 = vsel %vm345, %v338, %v340
      %v348 = vsel %vm345, %v340, %v342
      %v349 = vsel %vm345, %v342, %v344
      %350 = vrot.lane.b32.xlu0 %v295, 119
      %v351 = vpop.permute.xlu0 %350
      %352 = vrot.lane.b32.xlu0 %v296, 119
      %v353 = vpop.permute.xlu0 %352
      %354 = vrot.lane.b32.xlu0 %v297, 119
      %v355 = vpop.permute.xlu0 %354
      %356 = vrot.lane.b32.xlu0 %v298, 119
      %v357 = vpop.permute.xlu0 %356
      %358 = vrot.lane.b32.xlu0 0, 119
      %v359 = vpop.permute.xlu0 %358
      %vm360 = vcmask 973824
      %v361 = vsel %vm360, %v351, %v353
      %v362 = vsel %vm360, %v353, %v355
      %v363 = vsel %vm360, %v355, %v357
      %v364 = vsel %vm360, %v357, %v359
      %365 = vrot.lane.b32.xlu0 %v300, 118
      %v366 = vpop.permute.xlu0 %365
      %367 = vrot.lane.b32.xlu0 %v301, 118
      %v368 = vpop.permute.xlu0 %367
      %369 = vrot.lane.b32.xlu0 %v302, 118
      %v370 = vpop.permute.xlu0 %369
      %371 = vrot.lane.b32.xlu0 %v303, 118
      %v372 = vpop.permute.xlu0 %371
      %373 = vrot.lane.b32.xlu0 %v304, 118
      %v374 = vpop.permute.xlu0 %373
      %vm375 = vcmask 965632
      %v376 = vsel %vm375, %v366, %v368
      %v377 = vsel %vm375, %v368, %v370
      %v378 = vsel %vm375, %v370, %v372
      %v379 = vsel %vm375, %v372, %v374
      %380 = vrot.lane.b32.xlu0 %v295, 112
      %v381 = vpop.permute.xlu0 %380
      %382 = vrot.lane.b32.xlu0 %v296, 112
      %v383 = vpop.permute.xlu0 %382
      %384 = vrot.lane.b32.xlu0 %v297, 112
      %v385 = vpop.permute.xlu0 %384
      %386 = vrot.lane.b32.xlu0 %v298, 112
      %v387 = vpop.permute.xlu0 %386
      %388 = vrot.lane.b32.xlu0 0, 112
      %v389 = vpop.permute.xlu0 %388
      %vm390 = vcmask 916480
      %v391 = vsel %vm390, %v381, %v383
      %v392 = vsel %vm390, %v383, %v385
      %v393 = vsel %vm390, %v385, %v387
      %v394 = vsel %vm390, %v387, %v389
      %395 = vrot.lane.b32.xlu0 %v300, 111
      %v396 = vpop.permute.xlu0 %395
      %397 = vrot.lane.b32.xlu0 %v301, 111
      %v398 = vpop.permute.xlu0 %397
      %399 = vrot.lane.b32.xlu0 %v302, 111
      %v400 = vpop.permute.xlu0 %399
      %401 = vrot.lane.b32.xlu0 %v303, 111
      %v402 = vpop.permute.xlu0 %401
      %403 = vrot.lane.b32.xlu0 %v304, 111
      %v404 = vpop.permute.xlu0 %403
      %vm405 = vcmask 908288
      %v406 = vsel %vm405, %v396, %v398
      %v407 = vsel %vm405, %v398, %v400
      %v408 = vsel %vm405, %v400, %v402
      %v409 = vsel %vm405, %v402, %v404
      %410 = vrot.lane.b32.xlu0 %v295, 110
      %v411 = vpop.permute.xlu0 %410
      %412 = vrot.lane.b32.xlu0 %v296, 110
      %v413 = vpop.permute.xlu0 %412
      %414 = vrot.lane.b32.xlu0 %v297, 110
      %v415 = vpop.permute.xlu0 %414
      %416 = vrot.lane.b32.xlu0 %v298, 110
      %v417 = vpop.permute.xlu0 %416
      %418 = vrot.lane.b32.xlu0 0, 110
      %v419 = vpop.permute.xlu0 %418
      %vm420 = vcmask 900096
      %v421 = vsel %vm420, %v411, %v413
      %v422 = vsel %vm420, %v413, %v415
      %v423 = vsel %vm420, %v415, %v417
      %v424 = vsel %vm420, %v417, %v419
      %425 = vrot.lane.b32.xlu0 %v300, 64
      %v426 = vpop.permute.xlu0 %425
      %427 = vrot.lane.b32.xlu0 %v301, 64
      %v428 = vpop.permute.xlu0 %427
      %429 = vrot.lane.b32.xlu0 %v302, 64
      %v430 = vpop.permute.xlu0 %429
      %431 = vrot.lane.b32.xlu0 %v303, 64
      %v432 = vpop.permute.xlu0 %431
      %433 = vrot.lane.b32.xlu0 %v304, 64
      %v434 = vpop.permute.xlu0 %433
      %vm435 = vcmask 523264
      %v436 = vsel %vm435, %v426, %v428
      %v437 = vsel %vm435, %v428, %v430
      %v438 = vsel %vm435, %v430, %v432
      %v439 = vsel %vm435, %v432, %v434
      %440 = vrot.lane.b32.xlu0 %v295, 63
      %v441 = vpop.permute.xlu0 %440
      %442 = vrot.lane.b32.xlu0 %v296, 63
      %v443 = vpop.permute.xlu0 %442
      %444 = vrot.lane.b32.xlu0 %v297, 63
      %v445 = vpop.permute.xlu0 %444
      %446 = vrot.lane.b32.xlu0 %v298, 63
      %v447 = vpop.permute.xlu0 %446
      %448 = vrot.lane.b32.xlu0 0, 63
      %v449 = vpop.permute.xlu0 %448
      %vm450 = vcmask 515072
      %v451 = vsel %vm450, %v441, %v443
      %v452 = vsel %vm450, %v443, %v445
      %v453 = vsel %vm450, %v445, %v447
      %v454 = vsel %vm450, %v447, %v449
      %455 = vrot.lane.b32.xlu0 %v300, 62
      %v456 = vpop.permute.xlu0 %455
      %457 = vrot.lane.b32.xlu0 %v301, 62
      %v458 = vpop.permute.xlu0 %457
      %459 = vrot.lane.b32.xlu0 %v302, 62
      %v460 = vpop.permute.xlu0 %459
      %461 = vrot.lane.b32.xlu0 %v303, 62
      %v462 = vpop.permute.xlu0 %461
      %463 = vrot.lane.b32.xlu0 %v304, 62
      %v464 = vpop.permute.xlu0 %463
      %vm465 = vcmask 506880
      %v466 = vsel %vm465, %v456, %v458
      %v467 = vsel %vm465, %v458, %v460
      %v468 = vsel %vm465, %v460, %v462
      %v469 = vsel %vm465, %v462, %v464
      %470 = vrot.lane.b32.xlu0 %v295, 56
      %v471 = vpop.permute.xlu0 %470
      %472 = vrot.lane.b32.xlu0 %v296, 56
      %v473 = vpop.permute.xlu0 %472
      %474 = vrot.lane.b32.xlu0 %v297, 56
      %v475 = vpop.permute.xlu0 %474
      %476 = vrot.lane.b32.xlu0 %v298, 56
      %v477 = vpop.permute.xlu0 %476
      %478 = vrot.lane.b32.xlu0 0, 56
      %v479 = vpop.permute.xlu0 %478
      %vm480 = vcmask 457728
      %v481 = vsel %vm480, %v471, %v473
      %v482 = vsel %vm480, %v473, %v475
      %v483 = vsel %vm480, %v475, %v477
      %v484 = vsel %vm480, %v477, %v479
      %485 = vrot.lane.b32.xlu0 %v300, 55
      %v486 = vpop.permute.xlu0 %485
      %487 = vrot.lane.b32.xlu0 %v301, 55
      %v488 = vpop.permute.xlu0 %487
      %489 = vrot.lane.b32.xlu0 %v302, 55
      %v490 = vpop.permute.xlu0 %489
      %491 = vrot.lane.b32.xlu0 %v303, 55
      %v492 = vpop.permute.xlu0 %491
      %493 = vrot.lane.b32.xlu0 %v304, 55
      %v494 = vpop.permute.xlu0 %493
      %vm495 = vcmask 449536
      %v496 = vsel %vm495, %v486, %v488
      %v497 = vsel %vm495, %v488, %v490
      %v498 = vsel %vm495, %v490, %v492
      %v499 = vsel %vm495, %v492, %v494
      %500 = vrot.lane.b32.xlu0 %v295, 54
      %v501 = vpop.permute.xlu0 %500
      %502 = vrot.lane.b32.xlu0 %v296, 54
      %v503 = vpop.permute.xlu0 %502
      %504 = vrot.lane.b32.xlu0 %v297, 54
      %v505 = vpop.permute.xlu0 %504
      %506 = vrot.lane.b32.xlu0 %v298, 54
      %v507 = vpop.permute.xlu0 %506
      %508 = vrot.lane.b32.xlu0 0, 54
      %v509 = vpop.permute.xlu0 %508
      %vm510 = vcmask 441344
      %v511 = vsel %vm510, %v501, %v503
      %v512 = vsel %vm510, %v503, %v505
      %v513 = vsel %vm510, %v505, %v507
      %v514 = vsel %vm510, %v507, %v509
      %515 = vrot.lane.b32.xlu0 %v300, 48
      %v516 = vpop.permute.xlu0 %515
      %517 = vrot.lane.b32.xlu0 %v301, 48
      %v518 = vpop.permute.xlu0 %517
      %519 = vrot.lane.b32.xlu0 %v302, 48
      %v520 = vpop.permute.xlu0 %519
      %521 = vrot.lane.b32.xlu0 %v303, 48
      %v522 = vpop.permute.xlu0 %521
      %523 = vrot.lane.b32.xlu0 %v304, 48
      %v524 = vpop.permute.xlu0 %523
      %vm525 = vcmask 392192
      %v526 = vsel %vm525, %v516, %v518
      %v527 = vsel %vm525, %v518, %v520
      %v528 = vsel %vm525, %v520, %v522
      %v529 = vsel %vm525, %v522, %v524
      %vm530 = vcmask 1043456
      %v533 = vsel %vm530, %v295, %v316
      %v537 = vsel %vm530, %v296, %v317
      %v541 = vsel %vm530, %v297, %v318
      %v545 = vsel %vm530, %v298, %v319
      %v549 = vsel %vm530, %v331, %v346
      %v553 = vsel %vm530, %v332, %v347
      %v557 = vsel %vm530, %v333, %v348
      %v561 = vsel %vm530, %v334, %v349
      %v565 = vsel %vm530, %v361, %v376
      %v569 = vsel %vm530, %v362, %v377
      %v573 = vsel %vm530, %v363, %v378
      %v577 = vsel %vm530, %v364, %v379
      %v581 = vsel %vm530, %v391, %v406
      %v585 = vsel %vm530, %v392, %v407
      %v589 = vsel %vm530, %v393, %v408
      %v593 = vsel %vm530, %v394, %v409
      %v597 = vsel %vm530, %v421, %v436
      %v601 = vsel %vm530, %v422, %v437
      %v605 = vsel %vm530, %v423, %v438
      %v609 = vsel %vm530, %v424, %v439
      %v613 = vsel %vm530, %v451, %v466
      %v617 = vsel %vm530, %v452, %v467
      %v621 = vsel %vm530, %v453, %v468
      %v625 = vsel %vm530, %v454, %v469
      %v629 = vsel %vm530, %v481, %v496
      %v633 = vsel %vm530, %v482, %v497
      %v637 = vsel %vm530, %v483, %v498
      %v641 = vsel %vm530, %v484, %v499
      %v645 = vsel %vm530, %v511, %v526
      %v649 = vsel %vm530, %v512, %v527
      %v653 = vsel %vm530, %v513, %v528
      %v657 = vsel %vm530, %v514, %v529
      %659 = vrot.lane.b32.xlu0 %v296, 81
      %v660 = vpop.permute.xlu0 %659
      %661 = vrot.lane.b32.xlu0 %v297, 81
      %v662 = vpop.permute.xlu0 %661
      %663 = vrot.lane.b32.xlu0 %v298, 81
      %v664 = vpop.permute.xlu0 %663
      %665 = vrot.lane.b32.xlu0 0, 81
      %v666 = vpop.permute.xlu0 %665
      %vm667 = vcmask 662528
      %v668 = vsel %vm667, %v660, %v662
      %v669 = vsel %vm667, %v662, %v664
      %v670 = vsel %vm667, %v664, %v666
      %671 = vrot.lane.b32.xlu0 %v301, 80
      %v672 = vpop.permute.xlu0 %671
      %673 = vrot.lane.b32.xlu0 %v302, 80
      %v674 = vpop.permute.xlu0 %673
      %675 = vrot.lane.b32.xlu0 %v303, 80
      %v676 = vpop.permute.xlu0 %675
      %677 = vrot.lane.b32.xlu0 %v304, 80
      %v678 = vpop.permute.xlu0 %677
      %vm679 = vcmask 654336
      %v680 = vsel %vm679, %v672, %v674
      %v681 = vsel %vm679, %v674, %v676
      %v682 = vsel %vm679, %v676, %v678
      %683 = vrot.lane.b32.xlu0 %v296, 79
      %v684 = vpop.permute.xlu0 %683
      %685 = vrot.lane.b32.xlu0 %v297, 79
      %v686 = vpop.permute.xlu0 %685
      %687 = vrot.lane.b32.xlu0 %v298, 79
      %v688 = vpop.permute.xlu0 %687
      %689 = vrot.lane.b32.xlu0 0, 79
      %v690 = vpop.permute.xlu0 %689
      %vm691 = vcmask 646144
      %v692 = vsel %vm691, %v684, %v686
      %v693 = vsel %vm691, %v686, %v688
      %v694 = vsel %vm691, %v688, %v690
      %695 = vrot.lane.b32.xlu0 %v301, 73
      %v696 = vpop.permute.xlu0 %695
      %697 = vrot.lane.b32.xlu0 %v302, 73
      %v698 = vpop.permute.xlu0 %697
      %699 = vrot.lane.b32.xlu0 %v303, 73
      %v700 = vpop.permute.xlu0 %699
      %701 = vrot.lane.b32.xlu0 %v304, 73
      %v702 = vpop.permute.xlu0 %701
      %vm703 = vcmask 596992
      %v704 = vsel %vm703, %v696, %v698
      %v705 = vsel %vm703, %v698, %v700
      %v706 = vsel %vm703, %v700, %v702
      %707 = vrot.lane.b32.xlu0 %v296, 72
      %v708 = vpop.permute.xlu0 %707
      %709 = vrot.lane.b32.xlu0 %v297, 72
      %v710 = vpop.permute.xlu0 %709
      %711 = vrot.lane.b32.xlu0 %v298, 72
      %v712 = vpop.permute.xlu0 %711
      %713 = vrot.lane.b32.xlu0 0, 72
      %v714 = vpop.permute.xlu0 %713
      %vm715 = vcmask 588800
      %v716 = vsel %vm715, %v708, %v710
      %v717 = vsel %vm715, %v710, %v712
      %v718 = vsel %vm715, %v712, %v714
      %719 = vrot.lane.b32.xlu0 %v301, 71
      %v720 = vpop.permute.xlu0 %719
      %721 = vrot.lane.b32.xlu0 %v302, 71
      %v722 = vpop.permute.xlu0 %721
      %723 = vrot.lane.b32.xlu0 %v303, 71
      %v724 = vpop.permute.xlu0 %723
      %725 = vrot.lane.b32.xlu0 %v304, 71
      %v726 = vpop.permute.xlu0 %725
      %vm727 = vcmask 580608
      %v728 = vsel %vm727, %v720, %v722
      %v729 = vsel %vm727, %v722, %v724
      %v730 = vsel %vm727, %v724, %v726
      %731 = vrot.lane.b32.xlu0 %v296, 65
      %v732 = vpop.permute.xlu0 %731
      %733 = vrot.lane.b32.xlu0 %v297, 65
      %v734 = vpop.permute.xlu0 %733
      %735 = vrot.lane.b32.xlu0 %v298, 65
      %v736 = vpop.permute.xlu0 %735
      %737 = vrot.lane.b32.xlu0 0, 65
      %v738 = vpop.permute.xlu0 %737
      %vm739 = vcmask 531456
      %v740 = vsel %vm739, %v732, %v734
      %v741 = vsel %vm739, %v734, %v736
      %v742 = vsel %vm739, %v736, %v738
      %v745 = vsel %vm530, 0, %v314
      %v748 = vsel %vm530, %v660, %v672
      %v751 = vsel %vm530, %v668, %v680
      %v754 = vsel %vm530, %v669, %v681
      %v757 = vsel %vm530, %v670, %v682
      %v760 = vsel %vm530, %v666, %v678
      %v763 = vsel %vm530, %v684, %v696
      %v766 = vsel %vm530, %v692, %v704
      %v769 = vsel %vm530, %v693, %v705
      %v772 = vsel %vm530, %v694, %v706
      %v775 = vsel %vm530, %v690, %v702
      %v778 = vsel %vm530, %v708, %v720
      %v781 = vsel %vm530, %v716, %v728
      %v784 = vsel %vm530, %v717, %v729
      %v787 = vsel %vm530, %v718, %v730
      %v790 = vsel %vm530, %v714, %v726
      %v793 = vsel %vm530, %v732, %v428
      %v795 = vsel %vm530, %v740, %v437
      %v797 = vsel %vm530, %v741, %v438
      %v799 = vsel %vm530, %v742, %v439
      %v802 = vsel %vm530, %v738, %v434
      %828 = vrot.lane.b32.xlu0 %v533, 47
      %v829 = vpop.permute.xlu0 %828
      %830 = vrot.lane.b32.xlu0 %v537, 47
      %v831 = vpop.permute.xlu0 %830
      %832 = vrot.lane.b32.xlu0 %v541, 47
      %v833 = vpop.permute.xlu0 %832
      %834 = vrot.lane.b32.xlu0 %v545, 47
      %v835 = vpop.permute.xlu0 %834
      %836 = vrot.lane.b32.xlu0 %v745, 47
      %v837 = vpop.permute.xlu0 %836
      %838 = vrot.lane.b32.xlu0 %v748, 47
      %v839 = vpop.permute.xlu0 %838
      %840 = vrot.lane.b32.xlu0 %v751, 47
      %v841 = vpop.permute.xlu0 %840
      %842 = vrot.lane.b32.xlu0 %v754, 47
      %v843 = vpop.permute.xlu0 %842
      %844 = vrot.lane.b32.xlu0 %v757, 47
      %v845 = vpop.permute.xlu0 %844
      %846 = vrot.lane.b32.xlu0 %v760, 47
      %v847 = vpop.permute.xlu0 %846
      %848 = vrot.lane.b32.xlu0 %v763, 47
      %v849 = vpop.permute.xlu0 %848
      %850 = vrot.lane.b32.xlu0 %v766, 47
      %v851 = vpop.permute.xlu0 %850
      %852 = vrot.lane.b32.xlu0 %v769, 47
      %v853 = vpop.permute.xlu0 %852
      %854 = vrot.lane.b32.xlu0 %v772, 47
      %v855 = vpop.permute.xlu0 %854
      %856 = vrot.lane.b32.xlu0 %v775, 47
      %v857 = vpop.permute.xlu0 %856
      %858 = vrot.lane.b32.xlu0 %v778, 47
      %v859 = vpop.permute.xlu0 %858
      %860 = vrot.lane.b32.xlu0 %v781, 47
      %v861 = vpop.permute.xlu0 %860
      %862 = vrot.lane.b32.xlu0 %v784, 47
      %v863 = vpop.permute.xlu0 %862
      %864 = vrot.lane.b32.xlu0 %v787, 47
      %v865 = vpop.permute.xlu0 %864
      %866 = vrot.lane.b32.xlu0 %v790, 47
      %v867 = vpop.permute.xlu0 %866
      %868 = vrot.lane.b32.xlu0 %v793, 47
      %v869 = vpop.permute.xlu0 %868
      %870 = vrot.lane.b32.xlu0 %v795, 47
      %v871 = vpop.permute.xlu0 %870
      %872 = vrot.lane.b32.xlu0 %v797, 47
      %v873 = vpop.permute.xlu0 %872
      %874 = vrot.lane.b32.xlu0 %v799, 47
      %v875 = vpop.permute.xlu0 %874
      %876 = vrot.lane.b32.xlu0 %v802, 47
      %v877 = vpop.permute.xlu0 %876
      %878 = vrot.lane.b32.xlu0 %v443, 47
      %v879 = vpop.permute.xlu0 %878
      %880 = vrot.lane.b32.xlu0 %v452, 47
      %v881 = vpop.permute.xlu0 %880
      %882 = vrot.lane.b32.xlu0 %v453, 47
      %v883 = vpop.permute.xlu0 %882
      %884 = vrot.lane.b32.xlu0 %v454, 47
      %v885 = vpop.permute.xlu0 %884
      %886 = vrot.lane.b32.xlu0 %v449, 47
      %v887 = vpop.permute.xlu0 %886
      %vm888 = vcmask 384000
      %v889 = vsel %vm888, %v829, %v831
      %v890 = vsel %vm888, %v831, %v833
      %v891 = vsel %vm888, %v833, %v835
      %v892 = vsel %vm888, %v835, %v837
      %v893 = vsel %vm888, %v839, %v841
      %v894 = vsel %vm888, %v841, %v843
      %v895 = vsel %vm888, %v843, %v845
      %v896 = vsel %vm888, %v845, %v847
      %v897 = vsel %vm888, %v849, %v851
      %v898 = vsel %vm888, %v851, %v853
      %v899 = vsel %vm888, %v853, %v855
      %v900 = vsel %vm888, %v855, %v857
      %v901 = vsel %vm888, %v859, %v861
      %v902 = vsel %vm888, %v861, %v863
      %v903 = vsel %vm888, %v863, %v865
      %v904 = vsel %vm888, %v865, %v867
      %v905 = vsel %vm888, %v869, %v871
      %v906 = vsel %vm888, %v871, %v873
      %v907 = vsel %vm888, %v873, %v875
      %v908 = vsel %vm888, %v875, %v877
      %v909 = vsel %vm888, %v879, %v881
      %v910 = vsel %vm888, %v881, %v883
      %v911 = vsel %vm888, %v883, %v885
      %v912 = vsel %vm888, %v885, %v887
      %v933 = vld [vmem:[%s265] sm:$0xff]
      %v934 = vld [vmem:[%s272] sm:$0xff]
      %936 = vset.pattern.permute.xlu0 0
      %937 = vperm.xlu0 %936, %v934
      %v938 = vpop.permute.xlu0 %937
      %v941 = vunpack.c.l.b16 %v933
      %v942 = vunpack.c.h.b16 %v933
      %v943 = vpack.c.b16 %v941, %v941
      %v944 = vpack.c.b16 %v942, %v942
      %vm946 = vcmask 719872
      %v948 = vsel %vm946, %v944, 0
      %v951 = vsel %vm530, %v909, 0
      %v954 = vsel %vm530, %v910, 0
      %v957 = vsel %vm530, %v911, 0
      %v960 = vsel %vm530, %v912, 0
      %962 = vmatprep.subr.bf16.mxu0 %v537
      %963 = vmatpush1.bf16.msra.mxu0 %v533
      %964 = vmatprep.subr.bf16.mxu0 %v553
      %965 = vmatpush1.bf16.msra.mxu0 %v549
      %966 = vmatprep.subr.bf16.mxu0 %v569
      %967 = vmatpush1.bf16.msra.mxu0 %v565
      %968 = vmatprep.subr.bf16.mxu0 %v585
      %969 = vmatpush1.bf16.msra.mxu0 %v581
      %970 = vmatprep.subr.bf16.mxu0 %v601
      %971 = vmatpush1.bf16.msra.mxu0 %v597
      %972 = vmatprep.subr.bf16.mxu0 %v617
      %973 = vmatpush1.bf16.msra.mxu0 %v613
      %974 = vmatprep.subr.bf16.mxu0 %v633
      %975 = vmatpush1.bf16.msra.mxu0 %v629
      %976 = vmatprep.subr.bf16.mxu0 %v649
      %977 = vmatpush1.bf16.msra.mxu0 %v645
      %978 = vmatprep.subr.bf16.mxu0 %v890
      %979 = vmatpush1.bf16.msra.mxu0 %v889
      %980 = vmatprep.subr.bf16.mxu0 %v894
      %981 = vmatpush1.bf16.msra.mxu0 %v893
      %982 = vmatprep.subr.bf16.mxu0 %v898
      %983 = vmatpush1.bf16.msra.mxu0 %v897
      %984 = vmatprep.subr.bf16.mxu0 %v902
      %985 = vmatpush1.bf16.msra.mxu0 %v901
      %986 = vmatprep.subr.bf16.mxu0 %v906
      %987 = vmatpush1.bf16.msra.mxu0 %v905
      %988 = vmatprep.subr.bf16.mxu0 %v954
      %989 = vmatpush1.bf16.msra.mxu0 %v951
      %990 = vmatprep.subr.bf16.mxu0 0
      %991 = vmatpush1.bf16.msra.mxu0 0
      %992 = vmatprep.subr.bf16.mxu0 0
      %993 = vmatpush1.bf16.msra.mxu0 0
      %994 = vmatprep.mubr.bf16.mxu0 %v948
      %995 = vmatmul.mubr.bf16.gmra.mrb[0].mxu0 %v943
      %v996 = vpop.f32.mrb[0].mxu0
      %v997 = vadd.f32 %v938, %v996
      %v998 = vpop.f32.mrb[0].mxu0
      %v999 = vadd.f32 %v938, %v998
      %v1000 = vpop.f32.mrb[0].mxu0
      %v1001 = vpop.f32.mrb[0].mxu0
      %1002 = vdwg.mxu0
      %1003 = vmatprep.subr.bf16.mxu0 %v545
      %1004 = vmatpush1.bf16.msra.mxu0 %v541
      %1005 = vmatprep.subr.bf16.mxu0 %v561
      %1006 = vmatpush1.bf16.msra.mxu0 %v557
      %1007 = vmatprep.subr.bf16.mxu0 %v577
      %1008 = vmatpush1.bf16.msra.mxu0 %v573
      %1009 = vmatprep.subr.bf16.mxu0 %v593
      %1010 = vmatpush1.bf16.msra.mxu0 %v589
      %1011 = vmatprep.subr.bf16.mxu0 %v609
      %1012 = vmatpush1.bf16.msra.mxu0 %v605
      %1013 = vmatprep.subr.bf16.mxu0 %v625
      %1014 = vmatpush1.bf16.msra.mxu0 %v621
      %1015 = vmatprep.subr.bf16.mxu0 %v641
      %1016 = vmatpush1.bf16.msra.mxu0 %v637
      %1017 = vmatprep.subr.bf16.mxu0 %v657
      %1018 = vmatpush1.bf16.msra.mxu0 %v653
      %1019 = vmatprep.subr.bf16.mxu0 %v892
      %1020 = vmatpush1.bf16.msra.mxu0 %v891
      %1021 = vmatprep.subr.bf16.mxu0 %v896
      %1022 = vmatpush1.bf16.msra.mxu0 %v895
      %1023 = vmatprep.subr.bf16.mxu0 %v900
      %1024 = vmatpush1.bf16.msra.mxu0 %v899
      %1025 = vmatprep.subr.bf16.mxu0 %v904
      %1026 = vmatpush1.bf16.msra.mxu0 %v903
      %1027 = vmatprep.subr.bf16.mxu0 %v908
      %1028 = vmatpush1.bf16.msra.mxu0 %v907
      %1029 = vmatprep.subr.bf16.mxu0 %v960
      %1030 = vmatpush1.bf16.msra.mxu0 %v957
      %1031 = vmatprep.subr.bf16.mxu0 0
      %1032 = vmatpush1.bf16.msra.mxu0 0
      %1033 = vmatprep.subr.bf16.mxu0 0
      %1034 = vmatpush1.bf16.msra.mxu0 0
      %1035 = vmatprep.mubr.bf16.mxu0 %v948
      %1036 = vmatmul.mubr.bf16.gmra.mrb[0].mxu0 %v943
      %v1037 = vpop.f32.mrb[0].mxu0
      %v1038 = vadd.f32 %v938, %v1037
      %v1039 = vpop.f32.mrb[0].mxu0
      %v1040 = vadd.f32 %v938, %v1039
      %v1041 = vpop.f32.mrb[0].mxu0
      %v1042 = vpop.f32.mrb[0].mxu0
      %1043 = vdwg.mxu0
      %v1044 = vpack.c.bf16 %v997, %v997
      %v1045 = vpack.c.bf16 %v999, %v999
      %v1046 = vpack.c.bf16 %v1038, %v1038
      %v1047 = vpack.c.bf16 %v1040, %v1040
      %v1052 = vunpack.c.l.b16 %v1044
      %v1053 = vunpack.c.l.b16 %v1045
      %v1054 = vunpack.c.l.b16 %v1046
      %v1055 = vunpack.c.l.b16 %v1047
      %v1056 = vpack.c.b16 %v1053, %v1052
      %v1057 = vpack.c.b16 %v1055, %v1054
      %1060 = vst [vmem:[%s285] sm:$0xff] %v1056
      %1061 = vst [vmem:[%s285 + $0x8] sm:$0xff] %v1057
      %p1062 = scmp.lt.s32.totalorder %s19, 1
      %s1063 = scalar_select %p1062, %s19, 1
      %p1064 = scmp.lt.s32.totalorder %s20, 1
      %s1065 = scalar_select %p1064, %s20, 1
      %p1066 = scmp.lt.s32.totalorder %s21, 0
      %s1067 = scalar_select %p1066, %s21, 0
      %s1068 = smul.addr %s1067, 4
      %s1069 = smul.addr %s1065, 4
      %s1070 = sadd.s32 %s1068, %s1069
      %s1071 = smul.addr %s1063, 8
      %s1072 = sadd.s32 %s1070, %s1071
      %s1073 = smul.addr %s1072, 4
      %s1074 = scalar_lea.vmem %s3, %s1073
      // Predicated region
      $region33: #{e3dlstm_forward.19} parent=31 // pred_check
        %p1075 = pneg %p139
      $region34: #{e3dlstm_forward.19} parent=31 // pred_check_branch
        %1077 = sbr.rel (%p1075) target = $region36
      $region35: #{e3dlstm_forward.19} parent=31 // pred_region
        _
      $region36: #{e3dlstm_forward.19} parent=31 // pred_fallthru
        _
    $region32: #{e3dlstm_forward.19} parent=5 // pred_fallthru
      _
    %p1078 = scmp.le.s32.totalorder 2, %s9
    // Predicated region
    $region37: #{e3dlstm_forward.19} parent=5 // pred_check
      %p1079 = pneg %p1078
    $region38: #{e3dlstm_forward.19} parent=5 // pred_check_branch
      %1081 = sbr.rel (%p1079) target = $region40
    $region39: #{e3dlstm_forward.19} parent=5 // pred_region
      %s1082 = ssub.s32 %s9, 2
      // Predicated region
      $region41: #{e3dlstm_forward.19} parent=39 // pred_check
        %p1083 = pneg %p145
      $region42: #{e3dlstm_forward.19} parent=39 // pred_check_branch
        %1085 = sbr.rel (%p1083) target = $region44
      $region43: #{e3dlstm_forward.19} parent=39 // pred_region
        %p1086 = scmp.lt.s32.totalorder %s22, 1
        %s1087 = scalar_select %p1086, %s22, 1
        %p1088 = scmp.lt.s32.totalorder %s23, 1
        %s1089 = scalar_select %p1088, %s23, 1
        %p1090 = scmp.lt.s32.totalorder %s24, 0
        %s1091 = scalar_select %p1090, %s24, 0
        %s1092 = smul.addr %s1091, 4
        %s1093 = smul.addr %s1089, 4
        %s1094 = sadd.s32 %s1092, %s1093
        %s1095 = smul.addr %s1087, 8
        %s1096 = sadd.s32 %s1094, %s1095
        %s1097 = smul.addr %s1096, 4
        %s1098 = scalar_lea.vmem %s3, %s1097
      $region44: #{e3dlstm_forward.19} parent=39 // pred_fallthru
        _
    $region40: #{e3dlstm_forward.19} parent=5 // pred_fallthru
      _
  $region6: #{e3dlstm_forward.19} parent=0 // loop_footer
    %s13 = sadd.s32 1, %s9
  $region7: #{e3dlstm_forward.19} parent=0 // loop_footer_branch
    %8 = sbr.rel target = $region3
  $region8: #{e3dlstm_forward.19} parent=0 // loop_exit
    _

// kernel: e3dlstm_forward.20
$region0: #{e3dlstm_forward.20}
  #allocation0 [shape = 'u32[]', space=smem, size = 0x4, offset = 0x4, fixed_abs, tag = 'smem constant byte address 0x4 - core index']
  #allocation1 [shape = 'u32[144,128]{1,0:T(1,128)}', space=vmem, size = 0x12000, scoped, tag = 'internal scratch']
  %s0 = inlined_call_operand.vmem [shape: bf16[2,4,8,512], index: 0, kind: input, shape index: {}]
  %s1 = inlined_call_operand.vmem [shape: bf16[2,2,8,512], index: 1, kind: input, shape index: {}]
  %s2 = inlined_call_operand.vmem [shape: f32[2,8,512], index: 2, kind: input, shape index: {}]
  %s3 = inlined_call_operand.vmem [shape: bf16[2,8,8], index: 3, kind: input, shape index: {}]
  %s4 = inlined_call_operand.vmem [shape: f32[8,1], index: 4, kind: input, shape index: {}]
  %s5 = inlined_call_operand.vmem [shape: f32[2,8,512], index: 5, kind: output, shape index: {}]
  %s6 = sld [smem:[#allocation0]]
  $region76: #{e3dlstm_forward.20} parent=0
    _
  %s8 = ssub.s32 1, %s6
  %s9 = scalar_select 0, %s8, %s6
  $region1: #{e3dlstm_forward.20} parent=0
    #allocation2 [shape = 'u8[32768]{0}', space=vmem, size = 0x8000, scoped, tag = 'input window, operand 1']
    loop: start=0, step=1, limit=4
    $region2: #{e3dlstm_forward.20} parent=1 // loop_pre_header
      _
    $region3: #{e3dlstm_forward.20} parent=1 // loop_header
      %s11 = sphi 0, %s15
      %p12 = scmp.ge.s32.totalorder %s11, 4
      %s21 = sphi 0, %s23
      %s24 = sphi 0, %s21
      %s25 = sphi 0, %s24
      %s41 = sphi 0, %s25
      %s47 = sphi 0, %s49
      %s50 = sphi 0, %s47
      %s51 = sphi 0, %s50
      %s67 = sphi 0, %s51
      %s73 = sphi 0, %s75
      %s76 = sphi 0, %s73
      %s77 = sphi 0, %s76
      %s93 = sphi 0, %s77
      %s97 = sphi 0, %s97
      %s99 = sphi 0, %s97
      %s100 = sphi 0, %s99
      %s114 = sphi 0, %s100
      %s118 = sphi 0, %s118
      %s120 = sphi 0, %s118
      %s121 = sphi 0, %s120
      %s135 = sphi 0, %s121
      %s141 = sphi 0, %s143
      %s144 = sphi 0, %s141
      %s145 = sphi 0, %s144
      %s161 = sphi 0, %s145
    $region4: #{e3dlstm_forward.20} parent=1 // loop_header_branch
      %14 = sbr.rel (%p12) target = $region8
    $region5: #{e3dlstm_forward.20} parent=1 // loop_body
      %s16 = ssub.s32 %s11, 1
      %s17 = ssub.s32 %s11, 2
      %s18 = sadd.s32 %s11, 1
      %s19 = ssub.s32 %s11, %s18
      %p20 = scmp.eq.s32.totalorder %s19, 0
      %s22 = sadd.s32 %s21, 1
      %s23 = scalar_select %p20, %s21, %s22
      %p26 = pneg %p20
      %p27 = scmp.eq.s32.totalorder %s11, 1
      %p28 = por %p26, %p27
      %p29 = scmp.ne.s32.totalorder %s21, %s24
      %p30 = scmp.eq.s32.totalorder %s11, 0
      %p31 = por %p29, %p30
      %p32 = scmp.ne.s32.totalorder %s21, %s24
      %p33 = scmp.eq.s32.totalorder %s16, 1
      %p34 = por %p32, %p33
      %p35 = scmp.ne.s32.totalorder %s24, %s25
      %p36 = scmp.eq.s32.totalorder %s16, 0
      %p37 = por %p35, %p36
      %p38 = scmp.ne.s32.totalorder %s24, %s25
      %p39 = scmp.eq.s32.totalorder %s17, 1
      %p40 = por %p38, %p39
      %p42 = scmp.ne.s32.totalorder %s25, %s41
      %p43 = scmp.eq.s32.totalorder %s17, 0
      %p44 = por %p42, %p43
      %s45 = ssub.s32 %s11, %s18
      %p46 = scmp.eq.s32.totalorder %s45, 0
      %s48 = sadd.s32 %s47, 1
      %s49 = scalar_select %p46, %s47, %s48
      %p52 = pneg %p46
      %p53 = scmp.eq.s32.totalorder %s11, 1
      %p54 = por %p52, %p53
      %p55 = scmp.ne.s32.totalorder %s47, %s50
      %p56 = scmp.eq.s32.totalorder %s11, 0
      %p57 = por %p55, %p56
      %p58 = scmp.ne.s32.totalorder %s47, %s50
      %p59 = scmp.eq.s32.totalorder %s16, 1
      %p60 = por %p58, %p59
      %p61 = scmp.ne.s32.totalorder %s50, %s51
      %p62 = scmp.eq.s32.totalorder %s16, 0
      %p63 = por %p61, %p62
      %p64 = scmp.ne.s32.totalorder %s50, %s51
      %p65 = scmp.eq.s32.totalorder %s17, 1
      %p66 = por %p64, %p65
      %p68 = scmp.ne.s32.totalorder %s51, %s67
      %p69 = scmp.eq.s32.totalorder %s17, 0
      %p70 = por %p68, %p69
      %s71 = ssub.s32 %s11, %s18
      %p72 = scmp.eq.s32.totalorder %s71, 0
      %s74 = sadd.s32 %s73, 1
      %s75 = scalar_select %p72, %s73, %s74
      %p78 = pneg %p72
      %p79 = scmp.eq.s32.totalorder %s11, 1
      %p80 = por %p78, %p79
      %p81 = scmp.ne.s32.totalorder %s73, %s76
      %p82 = scmp.eq.s32.totalorder %s11, 0
      %p83 = por %p81, %p82
      %p84 = scmp.ne.s32.totalorder %s73, %s76
      %p85 = scmp.eq.s32.totalorder %s16, 1
      %p86 = por %p84, %p85
      %p87 = scmp.ne.s32.totalorder %s76, %s77
      %p88 = scmp.eq.s32.totalorder %s16, 0
      %p89 = por %p87, %p88
      %p90 = scmp.ne.s32.totalorder %s76, %s77
      %p91 = scmp.eq.s32.totalorder %s17, 1
      %p92 = por %p90, %p91
      %p94 = scmp.ne.s32.totalorder %s77, %s93
      %p95 = scmp.eq.s32.totalorder %s17, 0
      %p96 = por %p94, %p95
      %s98 = sadd.s32 %s97, 1
      %p101 = scmp.eq.s32.totalorder %s11, 1
      %p102 = scmp.ne.s32.totalorder %s97, %s99
      %p103 = scmp.eq.s32.totalorder %s11, 0
      %p104 = por %p102, %p103
      %p105 = scmp.ne.s32.totalorder %s97, %s99
      %p106 = scmp.eq.s32.totalorder %s16, 1
      %p107 = por %p105, %p106
      %p108 = scmp.ne.s32.totalorder %s99, %s100
      %p109 = scmp.eq.s32.totalorder %s16, 0
      %p110 = por %p108, %p109
      %p111 = scmp.ne.s32.totalorder %s99, %s100
      %p112 = scmp.eq.s32.totalorder %s17, 1
      %p113 = por %p111, %p112
      %p115 = scmp.ne.s32.totalorder %s100, %s114
      %p116 = scmp.eq.s32.totalorder %s17, 0
      %p117 = por %p115, %p116
      %s119 = sadd.s32 %s118, 1
      %p122 = scmp.eq.s32.totalorder %s11, 1
      %p123 = scmp.ne.s32.totalorder %s118, %s120
      %p124 = scmp.eq.s32.totalorder %s11, 0
      %p125 = por %p123, %p124
      %p126 = scmp.ne.s32.totalorder %s118, %s120
      %p127 = scmp.eq.s32.totalorder %s16, 1
      %p128 = por %p126, %p127
      %p129 = scmp.ne.s32.totalorder %s120, %s121
      %p130 = scmp.eq.s32.totalorder %s16, 0
      %p131 = por %p129, %p130
      %p132 = scmp.ne.s32.totalorder %s120, %s121
      %p133 = scmp.eq.s32.totalorder %s17, 1
      %p134 = por %p132, %p133
      %p136 = scmp.ne.s32.totalorder %s121, %s135
      %p137 = scmp.eq.s32.totalorder %s17, 0
      %p138 = por %p136, %p137
      %s139 = ssub.s32 %s11, %s18
      %p140 = scmp.eq.s32.totalorder %s139, 0
      %s142 = sadd.s32 %s141, 1
      %s143 = scalar_select %p140, %s141, %s142
      %p146 = pneg %p140
      %p147 = scmp.eq.s32.totalorder %s11, 1
      %p148 = por %p146, %p147
      %p149 = scmp.ne.s32.totalorder %s141, %s144
      %p150 = scmp.eq.s32.totalorder %s11, 0
      %p151 = por %p149, %p150
      %p152 = scmp.ne.s32.totalorder %s141, %s144
      %p153 = scmp.eq.s32.totalorder %s16, 1
      %p154 = por %p152, %p153
      %p155 = scmp.ne.s32.totalorder %s144, %s145
      %p156 = scmp.eq.s32.totalorder %s16, 0
      %p157 = por %p155, %p156
      %p158 = scmp.ne.s32.totalorder %s144, %s145
      %p159 = scmp.eq.s32.totalorder %s17, 1
      %p160 = por %p158, %p159
      %p162 = scmp.ne.s32.totalorder %s145, %s161
      %p163 = scmp.eq.s32.totalorder %s17, 0
      %p164 = por %p162, %p163
      %p165 = scmp.le.s32.totalorder 1, %s11
      %p166 = scmp.lt.s32.totalorder %s11, 3
      %p167 = pnand %p165, %p166
      %p168 = pneg %p167
      // Predicated region
      $region9: #{e3dlstm_forward.20} parent=5 // pred_check
        _
      $region10: #{e3dlstm_forward.20} parent=5 // pred_check_branch
        %170 = sbr.rel (%p167) target = $region12
      $region11: #{e3dlstm_forward.20} parent=5 // pred_region
        %s171 = ssub.s32 %s11, 1
        // Predicated region
        $region13: #{e3dlstm_forward.20} parent=11 // pred_check
          %p172 = pneg %p110
        $region14: #{e3dlstm_forward.20} parent=11 // pred_check_branch
          %174 = sbr.rel (%p172) target = $region16
        $region15: #{e3dlstm_forward.20} parent=11 // pred_region
          _
        $region16: #{e3dlstm_forward.20} parent=11 // pred_fallthru
          _
        // Predicated region
        $region17: #{e3dlstm_forward.20} parent=11 // pred_check
          %p175 = pneg %p131
        $region18: #{e3dlstm_forward.20} parent=11 // pred_check_branch
          %177 = sbr.rel (%p175) target = $region20
        $region19: #{e3dlstm_forward.20} parent=11 // pred_region
          _
        $region20: #{e3dlstm_forward.20} parent=11 // pred_fallthru
          _
      $region12: #{e3dlstm_forward.20} parent=5 // pred_fallthru
        _
      %p178 = scmp.lt.s32.totalorder %s11, 2
      // Predicated region
      $region21: #{e3dlstm_forward.20} parent=5 // pred_check
        %p179 = pneg %p178
      $region22: #{e3dlstm_forward.20} parent=5 // pred_check_branch
        %181 = sbr.rel (%p179) target = $region24
      $region23: #{e3dlstm_forward.20} parent=5 // pred_region
        // Predicated region
        $region25: #{e3dlstm_forward.20} parent=23 // pred_check
          %p182 = pneg %p31
        $region26: #{e3dlstm_forward.20} parent=23 // pred_check_branch
          %184 = sbr.rel (%p182) target = $region28
        $region27: #{e3dlstm_forward.20} parent=23 // pred_region
          %p185 = scmp.lt.s32.totalorder %s11, 1
          %s186 = scalar_select %p185, %s11, 1
          %s187 = smul.addr %s186, 16
          %s188 = sadd.s32 8, %s187
          %s189 = smul.addr %s188, 4
          %s190 = scalar_lea.vmem %s0, %s189
        $region28: #{e3dlstm_forward.20} parent=23 // pred_fallthru
          _
        // Predicated region
        $region29: #{e3dlstm_forward.20} parent=23 // pred_check
          %p191 = pneg %p57
        $region30: #{e3dlstm_forward.20} parent=23 // pred_check_branch
          %193 = sbr.rel (%p191) target = $region32
        $region31: #{e3dlstm_forward.20} parent=23 // pred_region
          %s194 = sand.u32 %s47, 1
          %s195 = sand.u32 %s47, 1
          %s196 = smul.addr %s195, 32
          %s197 = scalar_lea.vmem [#allocation2], %s196
          %s198 = smul.addr %s11, 4
          %s199 = smul.addr %s198, 4
          %s200 = scalar_lea.vmem %s1, %s199
          // Predicated region
          $region33: #{e3dlstm_forward.20} parent=31 // pred_check
            _
          $region34: #{e3dlstm_forward.20} parent=31 // pred_check_branch
            %202 = sbr.rel (0) target = $region36
          $region35: #{e3dlstm_forward.20} parent=31 // pred_region
            // Predicated region
            $region37: #{e3dlstm_forward.20} parent=35 // pred_check
              _
            $region38: #{e3dlstm_forward.20} parent=35 // pred_check_branch
              %204 = sbr.rel (0) target = $region40
            $region39: #{e3dlstm_forward.20} parent=35 // pred_region
              loop: start=0, step=1, limit=1
              $region41: #{e3dlstm_forward.20} parent=39 // loop_pre_header
                _
              $region42: #{e3dlstm_forward.20} parent=39 // loop_header
                %s206 = sphi 0, %s210
                %p207 = scmp.ge.s32.totalorder %s206, 1
                %s211 = sphi %s200, %s200
                %s212 = sphi %s197, %s197
              $region43: #{e3dlstm_forward.20} parent=39 // loop_header_branch
                %209 = sbr.rel (%p207) target = $region47
              $region44: #{e3dlstm_forward.20} parent=39 // loop_body
                %v213 = vld [vmem:[%s211] sm:$0xff]
                %214 = vst [vmem:[%s212] sm:$0xff] %v213
                %v215 = vld [vmem:[%s211 + $0x8] sm:$0xff]
                %216 = vst [vmem:[%s212 + $0x8] sm:$0xff] %v215
                %v217 = vld [vmem:[%s211 + $0x20] sm:$0xff]
                %218 = vst [vmem:[%s212 + $0x10] sm:$0xff] %v217
                %v219 = vld [vmem:[%s211 + $0x28] sm:$0xff]
                %220 = vst [vmem:[%s212 + $0x18] sm:$0xff] %v219
              $region45: #{e3dlstm_forward.20} parent=39 // loop_footer
                %s210 = sadd.s32 1, %s206
              $region46: #{e3dlstm_forward.20} parent=39 // loop_footer_branch
                %205 = sbr.rel target = $region42
              $region47: #{e3dlstm_forward.20} parent=39 // loop_exit
                _
            $region40: #{e3dlstm_forward.20} parent=35 // pred_fallthru
              _
            // Predicated region
            $region48: #{e3dlstm_forward.20} parent=35 // pred_check
              _
            $region49: #{e3dlstm_forward.20} parent=35 // pred_check_branch
              %222 = sbr.rel target = $region51
            $region50: #{e3dlstm_forward.20} parent=35 // pred_region
              _
            $region51: #{e3dlstm_forward.20} parent=35 // pred_fallthru
              _
          $region36: #{e3dlstm_forward.20} parent=31 // pred_fallthru
            _
          %223 = vnop
        $region32: #{e3dlstm_forward.20} parent=23 // pred_fallthru
          _
        // Predicated region
        $region52: #{e3dlstm_forward.20} parent=23 // pred_check
          %p224 = pneg %p83
        $region53: #{e3dlstm_forward.20} parent=23 // pred_check_branch
          %226 = sbr.rel (%p224) target = $region55
        $region54: #{e3dlstm_forward.20} parent=23 // pred_region
          %p227 = scmp.lt.s32.totalorder %s11, 1
          %s228 = scalar_select %p227, %s11, 1
          %s229 = smul.addr %s228, 4
          %s230 = smul.addr %s229, 8
          %s231 = scalar_lea.vmem %s2, %s230
        $region55: #{e3dlstm_forward.20} parent=23 // pred_fallthru
          _
      $region24: #{e3dlstm_forward.20} parent=5 // pred_fallthru
        _
      %p232 = scmp.le.s32.totalorder 1, %s11
      %p233 = scmp.lt.s32.totalorder %s11, 3
      %p234 = pnand %p232, %p233
      %p235 = pneg %p234
      // Predicated region
      $region56: #{e3dlstm_forward.20} parent=5 // pred_check
        _
      $region57: #{e3dlstm_forward.20} parent=5 // pred_check_branch
        %237 = sbr.rel (%p234) target = $region59
      $region58: #{e3dlstm_forward.20} parent=5 // pred_region
        %s238 = ssub.s32 %s11, 1
        %s239 = sand.u32 %s50, 1
        %s240 = sand.u32 %s50, 1
        %s241 = smul.addr %s240, 32
        %s242 = scalar_lea.vmem [#allocation2], %s241
        // Predicated region
        $region60: #{e3dlstm_forward.20} parent=58 // pred_check
          %p243 = pneg %p63
        $region61: #{e3dlstm_forward.20} parent=58 // pred_check_branch
          %245 = sbr.rel (%p243) target = $region63
        $region62: #{e3dlstm_forward.20} parent=58 // pred_region
          _
        $region63: #{e3dlstm_forward.20} parent=58 // pred_fallthru
          _
        %p246 = scmp.lt.s32.totalorder %s16, 1
        %s247 = scalar_select %p246, %s16, 1
        %s248 = smul.addr %s247, 16
        %s249 = sadd.s32 8, %s248
        %s250 = smul.addr %s249, 4
        %s251 = scalar_lea.vmem %s0, %s250
        %p252 = pneg %p37
        %p253 = pneg %p34
        %s254 = sand.u32 %s50, 1
        %s255 = sand.u32 %s50, 1
        %s256 = smul.addr %s255, 32
        %s257 = scalar_lea.vmem [#allocation2], %s256
        %p258 = pneg %p63
        %p259 = pneg %p60
        %p260 = scmp.lt.s32.totalorder %s16, 1
        %s261 = scalar_select %p260, %s16, 1
        %s262 = smul.addr %s261, 4
        %s263 = smul.addr %s262, 8
        %s264 = scalar_lea.vmem %s2, %s263
        %p265 = pneg %p89
        %p266 = pneg %p86
        %p267 = pneg %p110
        %p268 = pneg %p107
        %p269 = pneg %p131
        %p270 = pneg %p128
        %p271 = pneg %p157
        %p272 = pneg %p154
        %p273 = scmp.lt.s32.totalorder %s16, 1
        %s274 = scalar_select %p273, %s16, 1
        %s275 = smul.addr %s274, 4
        %s276 = smul.addr %s275, 8
        %s277 = scalar_lea.vmem %s5, %s276
        %p278 = scmp.lt.s32.totalorder %s16, 1
        %s279 = scalar_select %p278, %s16, 1
        %s280 = smul.addr %s279, 16
        %s281 = sadd.s32 8, %s280
        %s282 = smul.addr %s281, 4
        %s283 = scalar_lea.vmem %s0, %s282
        %p284 = scmp.lt.s32.totalorder %s16, 1
        %s285 = scalar_select %p284, %s16, 1
        %s286 = smul.addr %s285, 4
        %s287 = smul.addr %s286, 8
        %s288 = scalar_lea.vmem %s2, %s287
        %p289 = scmp.lt.s32.totalorder %s16, 1
        %s290 = scalar_select %p289, %s16, 1
        %s291 = smul.addr %s290, 4
        %s292 = smul.addr %s291, 8
        %s293 = scalar_lea.vmem %s5, %s292
        %v295 = vld [vmem:[%s283] sm:$0xff]
        %v296 = vld [vmem:[%s283 + $0x8] sm:$0xff]
        %s297 = scalar_lea.vmem %s283, 16
        %v298 = vld [vmem:[%s297] sm:$0xff]
        %v299 = vld [vmem:[%s297 + $0x8] sm:$0xff]
        %v300 = vunpack.c.l.bf16 %v298
        %v301 = vunpack.c.h.bf16 %v298
        %v302 = vunpack.c.l.bf16 %v299
        %v303 = vunpack.c.h.bf16 %v299
        %v304 = vld [vmem:[%s242] sm:$0xff]
        %v305 = vld [vmem:[%s242 + $0x8] sm:$0xff]
        %v306 = vunpack.c.l.bf16 %v304
        %v307 = vunpack.c.h.bf16 %v304
        %v308 = vunpack.c.l.bf16 %v305
        %v309 = vunpack.c.h.bf16 %v305
        %s310 = scalar_lea.vmem %s242, 16 [#allocation2]
        %v311 = vld [vmem:[%s310] sm:$0xff]
        %v312 = vld [vmem:[%s310 + $0x8] sm:$0xff]
        %v313 = vunpack.c.l.bf16 %v311
        %v314 = vunpack.c.h.bf16 %v311
        %v315 = vunpack.c.l.bf16 %v312
        %v316 = vunpack.c.h.bf16 %v312
        %v317 = vadd.f32 %v300, %v306
        %v318 = vadd.f32 %v301, %v307
        %v319 = vadd.f32 %v302, %v308
        %v320 = vadd.f32 %v303, %v309
        %v321 = vadd.f32 %v317, %v313
        %v322 = vadd.f32 %v318, %v314
        %v323 = vadd.f32 %v319, %v315
        %v324 = vadd.f32 %v320, %v316
        %v325 = vadd.f32 %v321, %v322
        %v326 = vadd.f32 %v325, %v323
        %v327 = vadd.f32 %v326, %v324
        %328 = vadd.xlane.f32.xlu0 %v327
        %v329 = vpop.xlane.xlu0 %328
        %v330 = vmul.f32 %v329, 0.001953125
        %v331 = vmul.f32 %v321, %v321
        %v332 = vmul.f32 %v322, %v322
        %v333 = vmul.f32 %v323, %v323
        %v334 = vmul.f32 %v324, %v324
        %v335 = vadd.f32 %v331, %v332
        %v336 = vadd.f32 %v335, %v333
        %v337 = vadd.f32 %v336, %v334
        %338 = vadd.xlane.f32.xlu0 %v337
        %v339 = vpop.xlane.xlu0 %338
        %v340 = vmul.f32 %v339, 0.001953125
        %v341 = vmul.f32 %v330, %v330
        %v342 = vsub.f32 %v340, %v341
        %v343 = vmax.f32 %v342, 0.0
        %v344 = vsub.f32 %v321, %v330
        %v345 = vsub.f32 %v322, %v330
        %v346 = vsub.f32 %v323, %v330
        %v347 = vsub.f32 %v324, %v330
        %v348 = vadd.f32 %v343, 1e-05
        %v349 = vrsqrt.pop %v348
        %v350 = vmul.f32 %v344, %v349
        %v351 = vmul.f32 %v345, %v349
        %v352 = vmul.f32 %v346, %v349
        %v353 = vmul.f32 %v347, %v349
        %v354 = vxor.u32 %v350, 2147483648
        %v355 = vxor.u32 %v351, 2147483648
        %v356 = vxor.u32 %v352, 2147483648
        %v357 = vxor.u32 %v353, 2147483648
        %v358 = vmul.f32 %v354, 1.442695
        %v359 = vpow.pop %v358
        %v360 = vmul.f32 %v355, 1.442695
        %v361 = vpow.pop %v360
        %v362 = vmul.f32 %v356, 1.442695
        %v363 = vpow.pop %v362
        %v364 = vmul.f32 %v357, 1.442695
        %v365 = vpow.pop %v364
        %v366 = vadd.f32 %v359, 1.0
        %v367 = vadd.f32 %v361, 1.0
        %v368 = vadd.f32 %v363, 1.0
        %v369 = vadd.f32 %v365, 1.0
        %v370 = vrcp.pop %v366
        %v371 = vmul.f32 1.0, %v370
        %v372 = vrcp.pop %v367
        %v373 = vmul.f32 1.0, %v372
        %v374 = vrcp.pop %v368
        %v375 = vmul.f32 1.0, %v374
        %v376 = vrcp.pop %v369
        %v377 = vmul.f32 1.0, %v376
        %v378 = vld [vmem:[%s3] sm:$0xf]
        %v379 = vld [vmem:[%s288] sm:$0xff]
        %v380 = vld [vmem:[%s288 + $0x8] sm:$0xff]
        %v381 = vld [vmem:[%s288 + $0x10] sm:$0xff]
        %v382 = vld [vmem:[%s288 + $0x18] sm:$0xff]
        %v383 = vpack.c.bf16 %v379, %v379
        %v384 = vpack.c.bf16 %v380, %v380
        %v385 = vpack.c.bf16 %v381, %v381
        %v386 = vpack.c.bf16 %v382, %v382
        %s387 = scalar_lea.vmem %s3, 4
        %v388 = vld [vmem:[%s387] sm:$0xf]
        %v391 = vunpack.c.l.b16 %v295
        %v392 = vunpack.c.h.b16 %v295
        %v393 = vunpack.c.l.b16 %v296
        %v394 = vunpack.c.h.b16 %v296
        %v395 = vpack.c.b16 %v391, %v391
        %v396 = vpack.c.b16 %v392, %v392
        %v397 = vpack.c.b16 %v393, %v393
        %v398 = vpack.c.b16 %v394, %v394
        %vm399 = vcmask 64512
        %v401 = vsel %vm399, %v388, 0
        %vm403 = vcmask 1043456
        %v405 = vsel %vm403, %v395, 0
        %v408 = vsel %vm403, %v396, 0
        %v411 = vsel %vm403, %v397, 0
        %v414 = vsel %vm403, %v398, 0
        %416 = vmatprep.subr.bf16.mxu0 %v408
        %417 = vmatpush1.bf16.msra.mxu0 %v405
        %418 = vmatprep.subr.bf16.mxu0 0
        %419 = vmatpush1.bf16.msra.mxu0 0
        %420 = vmatprep.subr.bf16.mxu0 0
        %421 = vmatpush1.bf16.msra.mxu0 0
        %422 = vmatprep.subr.bf16.mxu0 0
        %423 = vmatpush1.bf16.msra.mxu0 0
        %424 = vmatprep.subr.bf16.mxu0 0
        %425 = vmatpush1.bf16.msra.mxu0 0
        %426 = vmatprep.subr.bf16.mxu0 0
        %427 = vmatpush1.bf16.msra.mxu0 0
        %428 = vmatprep.subr.bf16.mxu0 0
        %429 = vmatpush1.bf16.msra.mxu0 0
        %430 = vmatprep.subr.bf16.mxu0 0
        %431 = vmatpush1.bf16.msra.mxu0 0
        %432 = vmatprep.subr.bf16.mxu0 0
        %433 = vmatpush1.bf16.msra.mxu0 0
        %434 = vmatprep.subr.bf16.mxu0 0
        %435 = vmatpush1.bf16.msra.mxu0 0
        %436 = vmatprep.subr.bf16.mxu0 0
        %437 = vmatpush1.bf16.msra.mxu0 0
        %438 = vmatprep.subr.bf16.mxu0 0
        %439 = vmatpush1.bf16.msra.mxu0 0
        %440 = vmatprep.subr.bf16.mxu0 0
        %441 = vmatpush1.bf16.msra.mxu0 0
        %442 = vmatprep.subr.bf16.mxu0 0
        %443 = vmatpush1.bf16.msra.mxu0 0
        %444 = vmatprep.subr.bf16.mxu0 0
        %445 = vmatpush1.bf16.msra.mxu0 0
        %446 = vmatprep.subr.bf16.mxu0 0
        %447 = vmatpush1.bf16.msra.mxu0 0
        %448 = vmatprep.mubr.bf16.mxu0 0
        %449 = vmatmul.mubr.bf16.gmra.mrb[0].mxu0 %v401
        %v450 = vpop.f32.mrb[0].mxu0
        %v451 = vadd.f32 0.0, %v450
        %v452 = vpop.f32.mrb[0].mxu0
        %v453 = vadd.f32 0.0, %v452
        %v454 = vpop.f32.mrb[0].mxu0
        %v455 = vpop.f32.mrb[0].mxu0
        %456 = vdwg.mxu0
        %457 = vmatprep.subr.bf16.mxu0 %v414
        %458 = vmatpush1.bf16.msra.mxu0 %v411
        %459 = vmatprep.subr.bf16.mxu0 0
        %460 = vmatpush1.bf16.msra.mxu0 0
        %461 = vmatprep.subr.bf16.mxu0 0
        %462 = vmatpush1.bf16.msra.mxu0 0
        %463 = vmatprep.subr.bf16.mxu0 0
        %464 = vmatpush1.bf16.msra.mxu0 0
        %465 = vmatprep.subr.bf16.mxu0 0
        %466 = vmatpush1.bf16.msra.mxu0 0
        %467 = vmatprep.subr.bf16.mxu0 0
        %468 = vmatpush1.bf16.msra.mxu0 0
        %469 = vmatprep.subr.bf16.mxu0 0
        %470 = vmatpush1.bf16.msra.mxu0 0
        %471 = vmatprep.subr.bf16.mxu0 0
        %472 = vmatpush1.bf16.msra.mxu0 0
        %473 = vmatprep.subr.bf16.mxu0 0
        %474 = vmatpush1.bf16.msra.mxu0 0
        %475 = vmatprep.subr.bf16.mxu0 0
        %476 = vmatpush1.bf16.msra.mxu0 0
        %477 = vmatprep.subr.bf16.mxu0 0
        %478 = vmatpush1.bf16.msra.mxu0 0
        %479 = vmatprep.subr.bf16.mxu0 0
        %480 = vmatpush1.bf16.msra.mxu0 0
        %481 = vmatprep.subr.bf16.mxu0 0
        %482 = vmatpush1.bf16.msra.mxu0 0
        %483 = vmatprep.subr.bf16.mxu0 0
        %484 = vmatpush1.bf16.msra.mxu0 0
        %485 = vmatprep.subr.bf16.mxu0 0
        %486 = vmatpush1.bf16.msra.mxu0 0
        %487 = vmatprep.subr.bf16.mxu0 0
        %488 = vmatpush1.bf16.msra.mxu0 0
        %489 = vmatprep.mubr.bf16.mxu0 0
        %490 = vmatmul.mubr.bf16.gmra.mrb[0].mxu0 %v401
        %v491 = vpop.f32.mrb[0].mxu0
        %v492 = vadd.f32 0.0, %v491
        %v493 = vpop.f32.mrb[0].mxu0
        %v494 = vadd.f32 0.0, %v493
        %v495 = vpop.f32.mrb[0].mxu0
        %v496 = vpop.f32.mrb[0].mxu0
        %497 = vdwg.mxu0
        %v499 = vsel %vm399, %v378, 0
        %v502 = vsel %vm403, %v383, 0
        %v505 = vsel %vm403, %v384, 0
        %v508 = vsel %vm403, %v385, 0
        %v511 = vsel %vm403, %v386, 0
        %513 = vmatprep.subr.bf16.mxu0 %v505
        %514 = vmatpush1.bf16.msra.mxu0 %v502
        %515 = vmatprep.subr.bf16.mxu0 0
        %516 = vmatpush1.bf16.msra.mxu0 0
        %517 = vmatprep.subr.bf16.mxu0 0
        %518 = vmatpush1.bf16.msra.mxu0 0
        %519 = vmatprep.subr.bf16.mxu0 0
        %520 = vmatpush1.bf16.msra.mxu0 0
        %521 = vmatprep.subr.bf16.mxu0 0
        %522 = vmatpush1.bf16.msra.mxu0 0
        %523 = vmatprep.subr.bf16.mxu0 0
        %524 = vmatpush1.bf16.msra.mxu0 0
        %525 = vmatprep.subr.bf16.mxu0 0
        %526 = vmatpush1.bf16.msra.mxu0 0
        %527 = vmatprep.subr.bf16.mxu0 0
        %528 = vmatpush1.bf16.msra.mxu0 0
        %529 = vmatprep.subr.bf16.mxu0 0
        %530 = vmatpush1.bf16.msra.mxu0 0
        %531 = vmatprep.subr.bf16.mxu0 0
        %532 = vmatpush1.bf16.msra.mxu0 0
        %533 = vmatprep.subr.bf16.mxu0 0
        %534 = vmatpush1.bf16.msra.mxu0 0
        %535 = vmatprep.subr.bf16.mxu0 0
        %536 = vmatpush1.bf16.msra.mxu0 0
        %537 = vmatprep.subr.bf16.mxu0 0
        %538 = vmatpush1.bf16.msra.mxu0 0
        %539 = vmatprep.subr.bf16.mxu0 0
        %540 = vmatpush1.bf16.msra.mxu0 0
        %541 = vmatprep.subr.bf16.mxu0 0
        %542 = vmatpush1.bf16.msra.mxu0 0
        %543 = vmatprep.subr.bf16.mxu0 0
        %544 = vmatpush1.bf16.msra.mxu0 0
        %545 = vmatprep.mubr.bf16.mxu0 0
        %546 = vmatmul.mubr.bf16.gmra.mrb[0].mxu0 %v499
        %v547 = vpop.f32.mrb[0].mxu0
        %v548 = vadd.f32 %v451, %v547
        %v549 = vpop.f32.mrb[0].mxu0
        %v550 = vadd.f32 %v453, %v549
        %v551 = vpop.f32.mrb[0].mxu0
        %v552 = vpop.f32.mrb[0].mxu0
        %553 = vdwg.mxu0
        %554 = vmatprep.subr.bf16.mxu0 %v511
        %555 = vmatpush1.bf16.msra.mxu0 %v508
        %556 = vmatprep.subr.bf16.mxu0 0
        %557 = vmatpush1.bf16.msra.mxu0 0
        %558 = vmatprep.subr.bf16.mxu0 0
        %559 = vmatpush1.bf16.msra.mxu0 0
        %560 = vmatprep.subr.bf16.mxu0 0
        %561 = vmatpush1.bf16.msra.mxu0 0
        %562 = vmatprep.subr.bf16.mxu0 0
        %563 = vmatpush1.bf16.msra.mxu0 0
        %564 = vmatprep.subr.bf16.mxu0 0
        %565 = vmatpush1.bf16.msra.mxu0 0
        %566 = vmatprep.subr.bf16.mxu0 0
        %567 = vmatpush1.bf16.msra.mxu0 0
        %568 = vmatprep.subr.bf16.mxu0 0
        %569 = vmatpush1.bf16.msra.mxu0 0
        %570 = vmatprep.subr.bf16.mxu0 0
        %571 = vmatpush1.bf16.msra.mxu0 0
        %572 = vmatprep.subr.bf16.mxu0 0
        %573 = vmatpush1.bf16.msra.mxu0 0
        %574 = vmatprep.subr.bf16.mxu0 0
        %575 = vmatpush1.bf16.msra.mxu0 0
        %576 = vmatprep.subr.bf16.mxu0 0
        %577 = vmatpush1.bf16.msra.mxu0 0
        %578 = vmatprep.subr.bf16.mxu0 0
        %579 = vmatpush1.bf16.msra.mxu0 0
        %580 = vmatprep.subr.bf16.mxu0 0
        %581 = vmatpush1.bf16.msra.mxu0 0
        %582 = vmatprep.subr.bf16.mxu0 0
        %583 = vmatpush1.bf16.msra.mxu0 0
        %584 = vmatprep.subr.bf16.mxu0 0
        %585 = vmatpush1.bf16.msra.mxu0 0
        %586 = vmatprep.mubr.bf16.mxu0 0
        %587 = vmatmul.mubr.bf16.gmra.mrb[0].mxu0 %v499
        %v588 = vpop.f32.mrb[0].mxu0
        %v589 = vadd.f32 %v492, %v588
        %v590 = vpop.f32.mrb[0].mxu0
        %v591 = vadd.f32 %v494, %v590
        %v592 = vpop.f32.mrb[0].mxu0
        %v593 = vpop.f32.mrb[0].mxu0
        %594 = vdwg.mxu0
        %v595 = vld [vmem:[%s4] sm:$0xff]
        %597 = vset.pattern.permute.xlu0 0
        %598 = vperm.xlu0 %597, %v595
        %v599 = vpop.permute.xlu0 %598
        %v601 = vadd.f32 %v548, %v599
        %v602 = vadd.f32 %v550, %v599
        %v603 = vadd.f32 %v589, %v599
        %v604 = vadd.f32 %v591, %v599
        %v605 = vtanh.pop %v601
        %v606 = vtanh.pop %v602
        %v607 = vtanh.pop %v603
        %v608 = vtanh.pop %v604
        %v609 = vmul.f32 %v371, %v605
        %v610 = vmul.f32 %v373, %v606
        %v611 = vmul.f32 %v375, %v607
        %v612 = vmul.f32 %v377, %v608
        %613 = vst [vmem:[%s293] sm:$0xff] %v609
        %614 = vst [vmem:[%s293 + $0x8] sm:$0xff] %v610
        %615 = vst [vmem:[%s293 + $0x10] sm:$0xff] %v611
        %616 = vst [vmem:[%s293 + $0x18] sm:$0xff] %v612
        %p617 = scmp.lt.s32.totalorder %s16, 1
        %s618 = scalar_select %p617, %s16, 1
        %s619 = smul.addr %s618, 4
        %s620 = smul.addr %s619, 8
        %s621 = scalar_lea.vmem %s5, %s620
        // Predicated region
        $region64: #{e3dlstm_forward.20} parent=58 // pred_check
          %p622 = pneg %p154
        $region65: #{e3dlstm_forward.20} parent=58 // pred_check_branch
          %624 = sbr.rel (%p622) target = $region67
        $region66: #{e3dlstm_forward.20} parent=58 // pred_region
          _
        $region67: #{e3dlstm_forward.20} parent=58 // pred_fallthru
          _
      $region59: #{e3dlstm_forward.20} parent=5 // pred_fallthru
        _
      %p625 = scmp.le.s32.totalorder 2, %s11
      // Predicated region
      $region68: #{e3dlstm_forward.20} parent=5 // pred_check
        %p626 = pneg %p625
      $region69: #{e3dlstm_forward.20} parent=5 // pred_check_branch
        %628 = sbr.rel (%p626) target = $region71
      $region70: #{e3dlstm_forward.20} parent=5 // pred_region
        %s629 = ssub.s32 %s11, 2
        // Predicated region
        $region72: #{e3dlstm_forward.20} parent=70 // pred_check
          %p630 = pneg %p160
        $region73: #{e3dlstm_forward.20} parent=70 // pred_check_branch
          %632 = sbr.rel (%p630) target = $region75
        $region74: #{e3dlstm_forward.20} parent=70 // pred_region
          %p633 = scmp.lt.s32.totalorder %s17, 1
          %s634 = scalar_select %p633, %s17, 1
          %s635 = smul.addr %s634, 4
          %s636 = smul.addr %s635, 8
          %s637 = scalar_lea.vmem %s5, %s636
        $region75: #{e3dlstm_forward.20} parent=70 // pred_fallthru
          _
      $region71: #{e3dlstm_forward.20} parent=5 // pred_fallthru
        _
    $region6: #{e3dlstm_forward.20} parent=1 // loop_footer
      %s15 = sadd.s32 1, %s11
    $region7: #{e3dlstm_forward.20} parent=1 // loop_footer_branch
      %10 = sbr.rel target = $region3
    $region8: #{e3dlstm_forward.20} parent=1 // loop_exit
      _

// kernel: e3dlstm_forward.25
$region0: #{e3dlstm_forward.25}
  #allocation0 [shape = 'u32[]', space=smem, size = 0x4, offset = 0x4, fixed_abs, tag = 'smem constant byte address 0x4 - core index']
  #allocation1 [shape = 'u32[144,128]{1,0:T(1,128)}', space=vmem, size = 0x12000, scoped, tag = 'internal scratch']
  %s0 = inlined_call_operand.vmem [shape: bf16[2,4,8,512], index: 0, kind: input, shape index: {}]
  %s1 = inlined_call_operand.vmem [shape: f32[2,2,8,512], index: 1, kind: input, shape index: {}]
  %s2 = inlined_call_operand.vmem [shape: f32[2,2,1,1], index: 2, kind: input, shape index: {}]
  %s3 = inlined_call_operand.vmem [shape: f32[8,512], index: 3, kind: input, shape index: {}]
  %s4 = inlined_call_operand.vmem [shape: f32[8,512], index: 4, kind: input, shape index: {}]
  %s5 = inlined_call_operand.vmem [shape: f32[2,8,512], index: 5, kind: output, shape index: {}]
  %s6 = sld [smem:[#allocation0]]
  $region76: #{e3dlstm_forward.25} parent=0
    _
  %s8 = ssub.s32 1, %s6
  %s9 = scalar_select 0, %s8, %s6
  $region1: #{e3dlstm_forward.25} parent=0
    #allocation2 [shape = 'u8[65536]{0}', space=vmem, size = 0x10000, scoped, tag = 'input window, operand 1']
    loop: start=0, step=1, limit=4
    $region2: #{e3dlstm_forward.25} parent=1 // loop_pre_header
      _
    $region3: #{e3dlstm_forward.25} parent=1 // loop_header
      %s11 = sphi 0, %s15
      %p12 = scmp.ge.s32.totalorder %s11, 4
      %s21 = sphi 0, %s23
      %s24 = sphi 0, %s21
      %s25 = sphi 0, %s24
      %s41 = sphi 0, %s25
      %s47 = sphi 0, %s49
      %s50 = sphi 0, %s47
      %s51 = sphi 0, %s50
      %s67 = sphi 0, %s51
      %s73 = sphi 0, %s75
      %s76 = sphi 0, %s73
      %s77 = sphi 0, %s76
      %s93 = sphi 0, %s77
      %s97 = sphi 0, %s97
      %s99 = sphi 0, %s97
      %s100 = sphi 0, %s99
      %s114 = sphi 0, %s100
      %s118 = sphi 0, %s118
      %s120 = sphi 0, %s118
      %s121 = sphi 0, %s120
      %s135 = sphi 0, %s121
      %s141 = sphi 0, %s143
      %s144 = sphi 0, %s141
      %s145 = sphi 0, %s144
      %s161 = sphi 0, %s145
    $region4: #{e3dlstm_forward.25} parent=1 // loop_header_branch
      %14 = sbr.rel (%p12) target = $region8
    $region5: #{e3dlstm_forward.25} parent=1 // loop_body
      %s16 = ssub.s32 %s11, 1
      %s17 = ssub.s32 %s11, 2
      %s18 = sadd.s32 %s11, 1
      %s19 = ssub.s32 %s11, %s18
      %p20 = scmp.eq.s32.totalorder %s19, 0
      %s22 = sadd.s32 %s21, 1
      %s23 = scalar_select %p20, %s21, %s22
      %p26 = pneg %p20
      %p27 = scmp.eq.s32.totalorder %s11, 1
      %p28 = por %p26, %p27
      %p29 = scmp.ne.s32.totalorder %s21, %s24
      %p30 = scmp.eq.s32.totalorder %s11, 0
      %p31 = por %p29, %p30
      %p32 = scmp.ne.s32.totalorder %s21, %s24
      %p33 = scmp.eq.s32.totalorder %s16, 1
      %p34 = por %p32, %p33
      %p35 = scmp.ne.s32.totalorder %s24, %s25
      %p36 = scmp.eq.s32.totalorder %s16, 0
      %p37 = por %p35, %p36
      %p38 = scmp.ne.s32.totalorder %s24, %s25
      %p39 = scmp.eq.s32.totalorder %s17, 1
      %p40 = por %p38, %p39
      %p42 = scmp.ne.s32.totalorder %s25, %s41
      %p43 = scmp.eq.s32.totalorder %s17, 0
      %p44 = por %p42, %p43
      %s45 = ssub.s32 %s11, %s18
      %p46 = scmp.eq.s32.totalorder %s45, 0
      %s48 = sadd.s32 %s47, 1
      %s49 = scalar_select %p46, %s47, %s48
      %p52 = pneg %p46
      %p53 = scmp.eq.s32.totalorder %s11, 1
      %p54 = por %p52, %p53
      %p55 = scmp.ne.s32.totalorder %s47, %s50
      %p56 = scmp.eq.s32.totalorder %s11, 0
      %p57 = por %p55, %p56
      %p58 = scmp.ne.s32.totalorder %s47, %s50
      %p59 = scmp.eq.s32.totalorder %s16, 1
      %p60 = por %p58, %p59
      %p61 = scmp.ne.s32.totalorder %s50, %s51
      %p62 = scmp.eq.s32.totalorder %s16, 0
      %p63 = por %p61, %p62
      %p64 = scmp.ne.s32.totalorder %s50, %s51
      %p65 = scmp.eq.s32.totalorder %s17, 1
      %p66 = por %p64, %p65
      %p68 = scmp.ne.s32.totalorder %s51, %s67
      %p69 = scmp.eq.s32.totalorder %s17, 0
      %p70 = por %p68, %p69
      %s71 = ssub.s32 %s11, %s18
      %p72 = scmp.eq.s32.totalorder %s71, 0
      %s74 = sadd.s32 %s73, 1
      %s75 = scalar_select %p72, %s73, %s74
      %p78 = pneg %p72
      %p79 = scmp.eq.s32.totalorder %s11, 1
      %p80 = por %p78, %p79
      %p81 = scmp.ne.s32.totalorder %s73, %s76
      %p82 = scmp.eq.s32.totalorder %s11, 0
      %p83 = por %p81, %p82
      %p84 = scmp.ne.s32.totalorder %s73, %s76
      %p85 = scmp.eq.s32.totalorder %s16, 1
      %p86 = por %p84, %p85
      %p87 = scmp.ne.s32.totalorder %s76, %s77
      %p88 = scmp.eq.s32.totalorder %s16, 0
      %p89 = por %p87, %p88
      %p90 = scmp.ne.s32.totalorder %s76, %s77
      %p91 = scmp.eq.s32.totalorder %s17, 1
      %p92 = por %p90, %p91
      %p94 = scmp.ne.s32.totalorder %s77, %s93
      %p95 = scmp.eq.s32.totalorder %s17, 0
      %p96 = por %p94, %p95
      %s98 = sadd.s32 %s97, 1
      %p101 = scmp.eq.s32.totalorder %s11, 1
      %p102 = scmp.ne.s32.totalorder %s97, %s99
      %p103 = scmp.eq.s32.totalorder %s11, 0
      %p104 = por %p102, %p103
      %p105 = scmp.ne.s32.totalorder %s97, %s99
      %p106 = scmp.eq.s32.totalorder %s16, 1
      %p107 = por %p105, %p106
      %p108 = scmp.ne.s32.totalorder %s99, %s100
      %p109 = scmp.eq.s32.totalorder %s16, 0
      %p110 = por %p108, %p109
      %p111 = scmp.ne.s32.totalorder %s99, %s100
      %p112 = scmp.eq.s32.totalorder %s17, 1
      %p113 = por %p111, %p112
      %p115 = scmp.ne.s32.totalorder %s100, %s114
      %p116 = scmp.eq.s32.totalorder %s17, 0
      %p117 = por %p115, %p116
      %s119 = sadd.s32 %s118, 1
      %p122 = scmp.eq.s32.totalorder %s11, 1
      %p123 = scmp.ne.s32.totalorder %s118, %s120
      %p124 = scmp.eq.s32.totalorder %s11, 0
      %p125 = por %p123, %p124
      %p126 = scmp.ne.s32.totalorder %s118, %s120
      %p127 = scmp.eq.s32.totalorder %s16, 1
      %p128 = por %p126, %p127
      %p129 = scmp.ne.s32.totalorder %s120, %s121
      %p130 = scmp.eq.s32.totalorder %s16, 0
      %p131 = por %p129, %p130
      %p132 = scmp.ne.s32.totalorder %s120, %s121
      %p133 = scmp.eq.s32.totalorder %s17, 1
      %p134 = por %p132, %p133
      %p136 = scmp.ne.s32.totalorder %s121, %s135
      %p137 = scmp.eq.s32.totalorder %s17, 0
      %p138 = por %p136, %p137
      %s139 = ssub.s32 %s11, %s18
      %p140 = scmp.eq.s32.totalorder %s139, 0
      %s142 = sadd.s32 %s141, 1
      %s143 = scalar_select %p140, %s141, %s142
      %p146 = pneg %p140
      %p147 = scmp.eq.s32.totalorder %s11, 1
      %p148 = por %p146, %p147
      %p149 = scmp.ne.s32.totalorder %s141, %s144
      %p150 = scmp.eq.s32.totalorder %s11, 0
      %p151 = por %p149, %p150
      %p152 = scmp.ne.s32.totalorder %s141, %s144
      %p153 = scmp.eq.s32.totalorder %s16, 1
      %p154 = por %p152, %p153
      %p155 = scmp.ne.s32.totalorder %s144, %s145
      %p156 = scmp.eq.s32.totalorder %s16, 0
      %p157 = por %p155, %p156
      %p158 = scmp.ne.s32.totalorder %s144, %s145
      %p159 = scmp.eq.s32.totalorder %s17, 1
      %p160 = por %p158, %p159
      %p162 = scmp.ne.s32.totalorder %s145, %s161
      %p163 = scmp.eq.s32.totalorder %s17, 0
      %p164 = por %p162, %p163
      %p165 = scmp.le.s32.totalorder 1, %s11
      %p166 = scmp.lt.s32.totalorder %s11, 3
      %p167 = pnand %p165, %p166
      %p168 = pneg %p167
      // Predicated region
      $region9: #{e3dlstm_forward.25} parent=5 // pred_check
        _
      $region10: #{e3dlstm_forward.25} parent=5 // pred_check_branch
        %170 = sbr.rel (%p167) target = $region12
      $region11: #{e3dlstm_forward.25} parent=5 // pred_region
        %s171 = ssub.s32 %s11, 1
        // Predicated region
        $region13: #{e3dlstm_forward.25} parent=11 // pred_check
          %p172 = pneg %p110
        $region14: #{e3dlstm_forward.25} parent=11 // pred_check_branch
          %174 = sbr.rel (%p172) target = $region16
        $region15: #{e3dlstm_forward.25} parent=11 // pred_region
          _
        $region16: #{e3dlstm_forward.25} parent=11 // pred_fallthru
          _
        // Predicated region
        $region17: #{e3dlstm_forward.25} parent=11 // pred_check
          %p175 = pneg %p131
        $region18: #{e3dlstm_forward.25} parent=11 // pred_check_branch
          %177 = sbr.rel (%p175) target = $region20
        $region19: #{e3dlstm_forward.25} parent=11 // pred_region
          _
        $region20: #{e3dlstm_forward.25} parent=11 // pred_fallthru
          _
      $region12: #{e3dlstm_forward.25} parent=5 // pred_fallthru
        _
      %p178 = scmp.lt.s32.totalorder %s11, 2
      // Predicated region
      $region21: #{e3dlstm_forward.25} parent=5 // pred_check
        %p179 = pneg %p178
      $region22: #{e3dlstm_forward.25} parent=5 // pred_check_branch
        %181 = sbr.rel (%p179) target = $region24
      $region23: #{e3dlstm_forward.25} parent=5 // pred_region
        // Predicated region
        $region25: #{e3dlstm_forward.25} parent=23 // pred_check
          %p182 = pneg %p31
        $region26: #{e3dlstm_forward.25} parent=23 // pred_check_branch
          %184 = sbr.rel (%p182) target = $region28
        $region27: #{e3dlstm_forward.25} parent=23 // pred_region
          %p185 = scmp.lt.s32.totalorder %s11, 1
          %s186 = scalar_select %p185, %s11, 1
          %s187 = smul.addr %s186, 16
          %s188 = sadd.s32 4, %s187
          %s189 = smul.addr %s188, 4
          %s190 = scalar_lea.vmem %s0, %s189
        $region28: #{e3dlstm_forward.25} parent=23 // pred_fallthru
          _
        // Predicated region
        $region29: #{e3dlstm_forward.25} parent=23 // pred_check
          %p191 = pneg %p57
        $region30: #{e3dlstm_forward.25} parent=23 // pred_check_branch
          %193 = sbr.rel (%p191) target = $region32
        $region31: #{e3dlstm_forward.25} parent=23 // pred_region
          %s194 = sand.u32 %s47, 1
          %s195 = sand.u32 %s47, 1
          %s196 = smul.addr %s195, 64
          %s197 = scalar_lea.vmem [#allocation2], %s196
          %s198 = smul.addr %s11, 4
          %s199 = smul.addr %s198, 8
          %s200 = scalar_lea.vmem %s1, %s199
          // Predicated region
          $region33: #{e3dlstm_forward.25} parent=31 // pred_check
            _
          $region34: #{e3dlstm_forward.25} parent=31 // pred_check_branch
            %202 = sbr.rel (0) target = $region36
          $region35: #{e3dlstm_forward.25} parent=31 // pred_region
            // Predicated region
            $region37: #{e3dlstm_forward.25} parent=35 // pred_check
              _
            $region38: #{e3dlstm_forward.25} parent=35 // pred_check_branch
              %204 = sbr.rel (0) target = $region40
            $region39: #{e3dlstm_forward.25} parent=35 // pred_region
              loop: start=0, step=1, limit=1
              $region41: #{e3dlstm_forward.25} parent=39 // loop_pre_header
                _
              $region42: #{e3dlstm_forward.25} parent=39 // loop_header
                %s206 = sphi 0, %s210
                %p207 = scmp.ge.s32.totalorder %s206, 1
                %s211 = sphi %s200, %s200
                %s212 = sphi %s197, %s197
              $region43: #{e3dlstm_forward.25} parent=39 // loop_header_branch
                %209 = sbr.rel (%p207) target = $region47
              $region44: #{e3dlstm_forward.25} parent=39 // loop_body
                %v213 = vld [vmem:[%s211] sm:$0xff]
                %214 = vst [vmem:[%s212] sm:$0xff] %v213
                %v215 = vld [vmem:[%s211 + $0x8] sm:$0xff]
                %216 = vst [vmem:[%s212 + $0x8] sm:$0xff] %v215
                %v217 = vld [vmem:[%s211 + $0x10] sm:$0xff]
                %218 = vst [vmem:[%s212 + $0x10] sm:$0xff] %v217
                %v219 = vld [vmem:[%s211 + $0x18] sm:$0xff]
                %220 = vst [vmem:[%s212 + $0x18] sm:$0xff] %v219
                %v221 = vld [vmem:[%s211 + $0x40] sm:$0xff]
                %222 = vst [vmem:[%s212 + $0x20] sm:$0xff] %v221
                %v223 = vld [vmem:[%s211 + $0x48] sm:$0xff]
                %224 = vst [vmem:[%s212 + $0x28] sm:$0xff] %v223
                %v225 = vld [vmem:[%s211 + $0x50] sm:$0xff]
                %226 = vst [vmem:[%s212 + $0x30] sm:$0xff] %v225
                %v227 = vld [vmem:[%s211 + $0x58] sm:$0xff]
                %228 = vst [vmem:[%s212 + $0x38] sm:$0xff] %v227
              $region45: #{e3dlstm_forward.25} parent=39 // loop_footer
                %s210 = sadd.s32 1, %s206
              $region46: #{e3dlstm_forward.25} parent=39 // loop_footer_branch
                %205 = sbr.rel target = $region42
              $region47: #{e3dlstm_forward.25} parent=39 // loop_exit
                _
            $region40: #{e3dlstm_forward.25} parent=35 // pred_fallthru
              _
            // Predicated region
            $region48: #{e3dlstm_forward.25} parent=35 // pred_check
              _
            $region49: #{e3dlstm_forward.25} parent=35 // pred_check_branch
              %230 = sbr.rel target = $region51
            $region50: #{e3dlstm_forward.25} parent=35 // pred_region
              _
            $region51: #{e3dlstm_forward.25} parent=35 // pred_fallthru
              _
          $region36: #{e3dlstm_forward.25} parent=31 // pred_fallthru
            _
          %231 = vnop
        $region32: #{e3dlstm_forward.25} parent=23 // pred_fallthru
          _
        // Predicated region
        $region52: #{e3dlstm_forward.25} parent=23 // pred_check
          %p232 = pneg %p83
        $region53: #{e3dlstm_forward.25} parent=23 // pred_check_branch
          %234 = sbr.rel (%p232) target = $region55
        $region54: #{e3dlstm_forward.25} parent=23 // pred_region
          %p235 = scmp.lt.s32.totalorder %s11, 1
          %s236 = scalar_select %p235, %s11, 1
          %s237 = smul.addr %s236, 2
          %s238 = scalar_lea.vmem %s2, %s237
        $region55: #{e3dlstm_forward.25} parent=23 // pred_fallthru
          _
      $region24: #{e3dlstm_forward.25} parent=5 // pred_fallthru
        _
      %p239 = scmp.le.s32.totalorder 1, %s11
      %p240 = scmp.lt.s32.totalorder %s11, 3
      %p241 = pnand %p239, %p240
      %p242 = pneg %p241
      // Predicated region
      $region56: #{e3dlstm_forward.25} parent=5 // pred_check
        _
      $region57: #{e3dlstm_forward.25} parent=5 // pred_check_branch
        %244 = sbr.rel (%p241) target = $region59
      $region58: #{e3dlstm_forward.25} parent=5 // pred_region
        %s245 = ssub.s32 %s11, 1
        %s246 = sand.u32 %s50, 1
        %s247 = sand.u32 %s50, 1
        %s248 = smul.addr %s247, 64
        %s249 = scalar_lea.vmem [#allocation2], %s248
        // Predicated region
        $region60: #{e3dlstm_forward.25} parent=58 // pred_check
          %p250 = pneg %p63
        $region61: #{e3dlstm_forward.25} parent=58 // pred_check_branch
          %252 = sbr.rel (%p250) target = $region63
        $region62: #{e3dlstm_forward.25} parent=58 // pred_region
          _
        $region63: #{e3dlstm_forward.25} parent=58 // pred_fallthru
          _
        %p253 = scmp.lt.s32.totalorder %s16, 1
        %s254 = scalar_select %p253, %s16, 1
        %s255 = smul.addr %s254, 16
        %s256 = sadd.s32 4, %s255
        %s257 = smul.addr %s256, 4
        %s258 = scalar_lea.vmem %s0, %s257
        %p259 = pneg %p37
        %p260 = pneg %p34
        %s261 = sand.u32 %s50, 1
        %s262 = sand.u32 %s50, 1
        %s263 = smul.addr %s262, 64
        %s264 = scalar_lea.vmem [#allocation2], %s263
        %p265 = pneg %p63
        %p266 = pneg %p60
        %p267 = scmp.lt.s32.totalorder %s16, 1
        %s268 = scalar_select %p267, %s16, 1
        %s269 = smul.addr %s268, 2
        %s270 = scalar_lea.vmem %s2, %s269
        %p271 = pneg %p89
        %p272 = pneg %p86
        %p273 = pneg %p110
        %p274 = pneg %p107
        %p275 = pneg %p131
        %p276 = pneg %p128
        %p277 = pneg %p157
        %p278 = pneg %p154
        %p279 = scmp.lt.s32.totalorder %s16, 1
        %s280 = scalar_select %p279, %s16, 1
        %s281 = smul.addr %s280, 4
        %s282 = smul.addr %s281, 8
        %s283 = scalar_lea.vmem %s5, %s282
        %p284 = scmp.lt.s32.totalorder %s16, 1
        %s285 = scalar_select %p284, %s16, 1
        %s286 = smul.addr %s285, 16
        %s287 = sadd.s32 4, %s286
        %s288 = smul.addr %s287, 4
        %s289 = scalar_lea.vmem %s0, %s288
        %p290 = scmp.lt.s32.totalorder %s16, 1
        %s291 = scalar_select %p290, %s16, 1
        %s292 = smul.addr %s291, 2
        %s293 = scalar_lea.vmem %s2, %s292
        %p294 = scmp.lt.s32.totalorder %s16, 1
        %s295 = scalar_select %p294, %s16, 1
        %s296 = smul.addr %s295, 4
        %s297 = smul.addr %s296, 8
        %s298 = scalar_lea.vmem %s5, %s297
        %v299 = vld [vmem:[%s289] sm:$0xff]
        %v300 = vld [vmem:[%s289 + $0x8] sm:$0xff]
        %v301 = vunpack.c.l.bf16 %v299
        %v302 = vunpack.c.h.bf16 %v299
        %v303 = vunpack.c.l.bf16 %v300
        %v304 = vunpack.c.h.bf16 %v300
        %v305 = vld [vmem:[%s249] sm:$0xff]
        %v306 = vld [vmem:[%s249 + $0x8] sm:$0xff]
        %v307 = vld [vmem:[%s249 + $0x10] sm:$0xff]
        %v308 = vld [vmem:[%s249 + $0x18] sm:$0xff]
        %v309 = vld [vmem:[%s249 + $0x20] sm:$0xff]
        %v310 = vld [vmem:[%s249 + $0x28] sm:$0xff]
        %v311 = vld [vmem:[%s249 + $0x30] sm:$0xff]
        %v312 = vld [vmem:[%s249 + $0x38] sm:$0xff]
        %v313 = vld [vmem:[%s293] sm:$0x1]
        %v314 = vld [vmem:[%s293 + $0x1] sm:$0x1]
        %v317 = vlaneseq
        %v318 = vshrl.u32 %v317, 7
        %v319 = vsub.s32 0, %v318
        %v320 = vrot.slane %v313, %v319
        %v321 = vlaneseq
        %v322 = vshrl.u32 %v321, 7
        %v323 = vsub.s32 0, %v322
        %v324 = vrot.slane %v314, %v323
        %325 = vset.pattern.permute.xlu0 0
        %326 = vperm.xlu0 %325, %v320
        %v327 = vpop.permute.xlu0 %326
        %329 = vset.pattern.permute.xlu0 0
        %330 = vperm.xlu0 %329, %v324
        %v331 = vpop.permute.xlu0 %330
        %v333 = vmul.f32 %v327, %v305
        %v334 = vmul.f32 %v327, %v306
        %v335 = vmul.f32 %v327, %v307
        %v336 = vmul.f32 %v327, %v308
        %v337 = vmul.f32 %v331, %v309
        %v338 = vmul.f32 %v331, %v310
        %v339 = vmul.f32 %v331, %v311
        %v340 = vmul.f32 %v331, %v312
        %v341 = vadd.f32 %v333, %v337
        %v342 = vadd.f32 %v334, %v338
        %v343 = vadd.f32 %v335, %v339
        %v344 = vadd.f32 %v336, %v340
        %v345 = vadd.f32 %v305, %v341
        %v346 = vadd.f32 %v306, %v342
        %v347 = vadd.f32 %v307, %v343
        %v348 = vadd.f32 %v308, %v344
        %v349 = vadd.f32 %v345, %v346
        %v350 = vadd.f32 %v349, %v347
        %v351 = vadd.f32 %v350, %v348
        %352 = vadd.xlane.f32.xlu0 %v351
        %v353 = vpop.xlane.xlu0 %352
        %v354 = vrot.slane %v353, 4
        %v355 = vadd.f32 %v353, %v354
        %v356 = vrot.slane %v355, 2
        %v357 = vadd.f32 %v355, %v356
        %v358 = vrot.slane %v357, 1
        %v359 = vadd.f32 %v357, %v358
        %s360 = vtos %v359
        %s361 = smul.f32 %s360, 0.00024414063
        %v362 = vmul.f32 %v345, %v345
        %v363 = vmul.f32 %v346, %v346
        %v364 = vmul.f32 %v347, %v347
        %v365 = vmul.f32 %v348, %v348
        %v366 = vadd.f32 %v362, %v363
        %v367 = vadd.f32 %v366, %v364
        %v368 = vadd.f32 %v367, %v365
        %369 = vadd.xlane.f32.xlu0 %v368
        %v370 = vpop.xlane.xlu0 %369
        %v371 = vrot.slane %v370, 4
        %v372 = vadd.f32 %v370, %v371
        %v373 = vrot.slane %v372, 2
        %v374 = vadd.f32 %v372, %v373
        %v375 = vrot.slane %v374, 1
        %v376 = vadd.f32 %v374, %v375
        %s377 = vtos %v376
        %s378 = smul.f32 %s377, 0.00024414063
        %s379 = smul.f32 %s361, %s361
        %s380 = ssub.f32 %s378, %s379
        %s381 = smax.f32 %s380, 0.0
        %v382 = vstv %s361
        %v383 = vsub.f32 %v345, %v382
        %v384 = vsub.f32 %v346, %v382
        %v385 = vsub.f32 %v347, %v382
        %v386 = vsub.f32 %v348, %v382
        %s387 = sadd.f32 %s381, 1e-05
        %v388 = vstv %s387
        %v389 = vrsqrt.pop %v388
        %s390 = vtos %v389
        %v391 = vstv %s390
        %v392 = vmul.f32 %v383, %v391
        %v393 = vmul.f32 %v384, %v391
        %v394 = vmul.f32 %v385, %v391
        %v395 = vmul.f32 %v386, %v391
        %v396 = vld [vmem:[%s3] sm:$0xff]
        %v397 = vld [vmem:[%s3 + $0x8] sm:$0xff]
        %v398 = vld [vmem:[%s3 + $0x10] sm:$0xff]
        %v399 = vld [vmem:[%s3 + $0x18] sm:$0xff]
        %v400 = vmul.f32 %v396, %v392
        %v401 = vmul.f32 %v397, %v393
        %v402 = vmul.f32 %v398, %v394
        %v403 = vmul.f32 %v399, %v395
        %v404 = vadd.f32 %v301, %v400
        %v405 = vadd.f32 %v302, %v401
        %v406 = vadd.f32 %v303, %v402
        %v407 = vadd.f32 %v304, %v403
        %v408 = vld [vmem:[%s4] sm:$0xff]
        %v409 = vld [vmem:[%s4 + $0x8] sm:$0xff]
        %v410 = vld [vmem:[%s4 + $0x10] sm:$0xff]
        %v411 = vld [vmem:[%s4 + $0x18] sm:$0xff]
        %v412 = vadd.f32 %v404, %v408
        %v413 = vadd.f32 %v405, %v409
        %v414 = vadd.f32 %v406, %v410
        %v415 = vadd.f32 %v407, %v411
        %416 = vst [vmem:[%s298] sm:$0xff] %v412
        %417 = vst [vmem:[%s298 + $0x8] sm:$0xff] %v413
        %418 = vst [vmem:[%s298 + $0x10] sm:$0xff] %v414
        %419 = vst [vmem:[%s298 + $0x18] sm:$0xff] %v415
        %p420 = scmp.lt.s32.totalorder %s16, 1
        %s421 = scalar_select %p420, %s16, 1
        %s422 = smul.addr %s421, 4
        %s423 = smul.addr %s422, 8
        %s424 = scalar_lea.vmem %s5, %s423
        // Predicated region
        $region64: #{e3dlstm_forward.25} parent=58 // pred_check
          %p425 = pneg %p154
        $region65: #{e3dlstm_forward.25} parent=58 // pred_check_branch
          %427 = sbr.rel (%p425) target = $region67
        $region66: #{e3dlstm_forward.25} parent=58 // pred_region
          _
        $region67: #{e3dlstm_forward.25} parent=58 // pred_fallthru
          _
      $region59: #{e3dlstm_forward.25} parent=5 // pred_fallthru
        _
      %p428 = scmp.le.s32.totalorder 2, %s11
      // Predicated region
      $region68: #{e3dlstm_forward.25} parent=5 // pred_check
        %p429 = pneg %p428
      $region69: #{e3dlstm_forward.25} parent=5 // pred_check_branch
        %431 = sbr.rel (%p429) target = $region71
      $region70: #{e3dlstm_forward.25} parent=5 // pred_region
        %s432 = ssub.s32 %s11, 2
        // Predicated region
        $region72: #{e3dlstm_forward.25} parent=70 // pred_check
          %p433 = pneg %p160
        $region73: #{e3dlstm_forward.25} parent=70 // pred_check_branch
          %435 = sbr.rel (%p433) target = $region75
        $region74: #{e3dlstm_forward.25} parent=70 // pred_region
          %p436 = scmp.lt.s32.totalorder %s17, 1
          %s437 = scalar_select %p436, %s17, 1
          %s438 = smul.addr %s437, 4
          %s439 = smul.addr %s438, 8
          %s440 = scalar_lea.vmem %s5, %s439
        $region75: #{e3dlstm_forward.25} parent=70 // pred_fallthru
          _
      $region71: #{e3dlstm_forward.25} parent=5 // pred_fallthru
        _
    $region6: #{e3dlstm_forward.25} parent=1 // loop_footer
      %s15 = sadd.s32 1, %s11
    $region7: #{e3dlstm_forward.25} parent=1 // loop_footer_branch
      %10 = sbr.rel target = $region3
    $region8: #{e3dlstm_forward.25} parent=1 // loop_exit
      _

</llo_original>
